<compile_context>
chip_gen: v7x
topology: tpu7x:2x2x1
jax: 0.10.0
libtpu: 0.0.40
codegen_flags: <defaults>
</compile_context>

<pallas_src>
import numpy as np
import jax
import jax.numpy as jnp
from jax.experimental import pallas as pl
from jax.experimental.pallas import tpu as pltpu

EPS = 1e-5                       # PyTorch BatchNorm default
_VMEM_LIMIT = 32 * 1024 * 1024   # safe on v5e/v6e (128 MiB) and v7x (64 MiB)


def _detect_multi_tc():
    """True on chips where a 'parallel' grid dim is sharded across TensorCores."""
    try:
        kind = jax.devices()[0].device_kind.lower()
    except Exception:
        return False
    return any(tag in kind for tag in ("v4", "v5p", "v7", "7x"))


_MULTI_TC = _detect_multi_tc()


# ----------------------------- Pallas kernels ------------------------------

def _fc1_kernel(x_ref, w_ref, pgb_ref, o_ref):
    """out = BatchNorm_rows(relu(x @ w + bias)), bf16 out.

    pgb packs [bias; gamma; beta] as one (3, N) side input.  The whole batch
    is inside this block, so the batch statistics live in the epilogue."""
    acc = jnp.dot(x_ref[...], w_ref[...], preferred_element_type=jnp.float32)
    acc = jnp.maximum(acc + pgb_ref[0:1, :], 0.0)
    mean = jnp.mean(acc, axis=0, keepdims=True)
    var = jnp.mean(jnp.square(acc - mean), axis=0, keepdims=True)
    acc = (acc - mean) * jax.lax.rsqrt(var + EPS) * pgb_ref[1:2, :] + pgb_ref[2:3, :]
    o_ref[...] = acc.astype(o_ref.dtype)


def _fc2_kernel(x_ref, w_ref, sgb_ref, o_ref):
    """out = BatchNorm_rows((x @ int8_w) * scale), bf16 out.

    Weights stream as int8 (half the HBM bytes of bf16); dequant goes
    int8 -> f32 -> bf16 (exact for |w| <= 127) so the matmul stays on the
    bf16 MXU path.  The linear bias is omitted on purpose: a per-column bias
    immediately before batch-stat BN is exactly cancelled by the mean
    subtraction.  sgb packs [scale; gamma; beta] as one (3, N) side input."""
    w = w_ref[...].astype(jnp.float32).astype(jnp.bfloat16)
    acc = jnp.dot(x_ref[...], w, preferred_element_type=jnp.float32)
    acc = acc * sgb_ref[0:1, :]
    mean = jnp.mean(acc, axis=0, keepdims=True)
    var = jnp.mean(jnp.square(acc - mean), axis=0, keepdims=True)
    acc = (acc - mean) * jax.lax.rsqrt(var + EPS) * sgb_ref[1:2, :] + sgb_ref[2:3, :]
    o_ref[...] = acc.astype(o_ref.dtype)


def _gemm_kernel(a_ref, b_ref, o_ref):
    o_ref[...] = jnp.dot(a_ref[...], b_ref[...],
                         preferred_element_type=jnp.float32)


# ----------------------------- wrappers -------------------------------------

def fc1_relu_bn(x, w, pgb):
    """bf16 <- BN(relu(x @ w + b)); x:(M,K), w:(K,N) bf16, pgb:(3,N) f32."""
    m, k = x.shape
    n = w.shape[1]
    return pl.pallas_call(
        _fc1_kernel,
        out_shape=jax.ShapeDtypeStruct((m, n), jnp.bfloat16),
        grid=(1,),
        in_specs=[pl.BlockSpec((m, k), lambda j: (0, 0)),
                  pl.BlockSpec((k, n), lambda j: (0, 0)),
                  pl.BlockSpec((3, n), lambda j: (0, 0))],
        out_specs=pl.BlockSpec((m, n), lambda j: (0, 0)),
        compiler_params=pltpu.CompilerParams(
            dimension_semantics=("arbitrary",),
            vmem_limit_bytes=_VMEM_LIMIT),
    )(x.astype(jnp.bfloat16), w, pgb)


def fc2_bn(x, w_int8, sgb, *, tn=2048):
    """bf16 <- BN((x @ dequant(w_int8)) * scale); int8 weight stream.

    tn=2048 keeps the in-kernel dequant temporaries (int8 -> f32 -> bf16) well
    under the 32 MiB scoped-VMEM budget while the 'parallel' grid still feeds
    both TensorCores on multi-TC chips."""
    m, k = x.shape
    n = w_int8.shape[1]
    assert n % tn == 0
    return pl.pallas_call(
        _fc2_kernel,
        out_shape=jax.ShapeDtypeStruct((m, n), jnp.bfloat16),
        grid=(n // tn,),
        in_specs=[pl.BlockSpec((m, k), lambda j: (0, 0)),
                  pl.BlockSpec((k, tn), lambda j: (0, j)),
                  pl.BlockSpec((3, tn), lambda j: (0, j))],
        out_specs=pl.BlockSpec((m, tn), lambda j: (0, j)),
        compiler_params=pltpu.CompilerParams(
            dimension_semantics=("parallel",),
            vmem_limit_bytes=_VMEM_LIMIT),
    )(x, w_int8, sgb)


def gemm_bf16(a, b):
    """f32-accumulating MXU matmul on bf16 operands.

    Chip-aware tiling: one full block on single-TensorCore chips (a grid is
    just a serial loop there, each step costs ~0.35 us), two parallel blocks
    on multi-TC chips so both cores get work."""
    m, k = a.shape
    n = b.shape[1]
    tm, tn = m, n
    if _MULTI_TC:
        if m >= 256 and (m // 2) % 128 == 0:
            tm = m // 2
        elif n >= 2048 and (n // 2) % 128 == 0:
            tn = n // 2
    return pl.pallas_call(
        _gemm_kernel,
        out_shape=jax.ShapeDtypeStruct((m, n), jnp.float32),
        grid=(m // tm, n // tn),
        in_specs=[pl.BlockSpec((tm, k), lambda i, j: (i, 0)),
                  pl.BlockSpec((k, tn), lambda i, j: (0, j))],
        out_specs=pl.BlockSpec((tm, tn), lambda i, j: (i, j)),
        compiler_params=pltpu.CompilerParams(
            dimension_semantics=("parallel", "parallel"),
            vmem_limit_bytes=_VMEM_LIMIT),
    )(a.astype(jnp.bfloat16), b.astype(jnp.bfloat16))


# ------------------- col2im (stride-2, k=4, p=1) in XLA ---------------------
# 4-phase (sub-pixel) decomposition: for an output pixel of parity r (0/1) the
# contributing (padded-input-offset, kernel-tap) pairs along that axis.
_TAPS = {0: ((1, 1), (0, 3)), 1: ((1, 2), (2, 0))}


def _deconv_tail(y, bias, *, h, w, cout, layout):
    """Scatter-add the per-tap GEMM outputs into the stride-2 output image.

    y: (M, 16*cout) f32, rows in (n, h, w) order, columns in (ky, kx, c) order.
    Returns (N, 2h, 2w, c) for layout='NHWC', (c, N, 2h, 2w) for 'CNHW'.
    Small shifted adds on <=2 MiB tensors; left to XLA fusion on purpose."""
    n = y.shape[0] // (h * w)
    y = y.reshape(n, h, w, 4, 4, cout)
    yp = jnp.pad(y, ((0, 0), (1, 1), (1, 1), (0, 0), (0, 0), (0, 0)))
    phases = []
    for ry in (0, 1):
        for rx in (0, 1):
            acc = None
            for dy, ky in _TAPS[ry]:
                for dx, kx in _TAPS[rx]:
                    t = yp[:, dy:dy + h, dx:dx + w, ky, kx, :]
                    acc = t if acc is None else acc + t
            phases.append(acc)
    ph = jnp.stack(phases, axis=0).reshape(2, 2, n, h, w, cout)  # (ry,rx,n,h,w,c)
    if layout == "NHWC":
        out = jnp.transpose(ph, (2, 3, 0, 4, 1, 5)).reshape(n, 2 * h, 2 * w, cout)
        return out + bias.reshape(1, 1, 1, cout)
    out = jnp.transpose(ph, (5, 2, 3, 0, 4, 1)).reshape(cout, n, 2 * h, 2 * w)
    return out + bias.reshape(cout, 1, 1, 1)


def _deconv3_tail(y_t, bias, *, h, w):
    """col2im for the transposed (lane-dense) conv3 GEMM.

    y_t: (16, M) f32; rows in (ky, kx) order (Cout == 1), columns (n, h, w)."""
    n = y_t.shape[1] // (h * w)
    y = y_t.reshape(4, 4, n, h, w)
    yp = jnp.pad(y, ((0, 0), (0, 0), (0, 0), (1, 1), (1, 1)))
    phases = []
    for ry in (0, 1):
        for rx in (0, 1):
            acc = None
            for dy, ky in _TAPS[ry]:
                for dx, kx in _TAPS[rx]:
                    t = yp[ky, kx, :, dy:dy + h, dx:dx + w]
                    acc = t if acc is None else acc + t
            phases.append(acc)
    ph = jnp.stack(phases, axis=0).reshape(2, 2, n, h, w)
    out = jnp.transpose(ph, (2, 3, 0, 4, 1)).reshape(n, 1, 2 * h, 2 * w)
    return out + bias.reshape(1, 1, 1, 1)


def _bn_nhwc(x, g, b):
    m = jnp.mean(x, axis=(0, 1, 2), keepdims=True)
    v = jnp.mean(jnp.square(x - m), axis=(0, 1, 2), keepdims=True)
    return (x - m) * jax.lax.rsqrt(v + EPS) * g.reshape(1, 1, 1, -1) + b.reshape(1, 1, 1, -1)


def _bn_cnhw(x, g, b):
    m = jnp.mean(x, axis=(1, 2, 3), keepdims=True)
    v = jnp.mean(jnp.square(x - m), axis=(1, 2, 3), keepdims=True)
    return (x - m) * jax.lax.rsqrt(v + EPS) * g.reshape(-1, 1, 1, 1) + b.reshape(-1, 1, 1, 1)


# ----------------------------- model ----------------------------------------

def init_params(key, noise_dim=96):
    ks = jax.random.split(key, 10)
    f32, bf16 = jnp.float32, jnp.bfloat16

    def nrm(k, shape, scale=0.05, dtype=f32):
        return (scale * jax.random.normal(k, shape)).astype(dtype)

    # fc1: weight pre-transposed (in, out), contraction dim padded 96 -> 128.
    kpad = 128
    fc1_w = jnp.zeros((kpad, 1024), f32).at[:noise_dim].set(
        0.05 * jax.random.normal(ks[0], (noise_dim, 1024))).astype(bf16)
    fc1_b = nrm(ks[1], (1024,))

    # fc2: output features indexed in (h, w, c) order (NHWC-ready), stored as
    # int8 with a per-output-column scale.
    n2 = 8 * 8 * 128
    fc2_w_f = 0.05 * jax.random.normal(ks[2], (1024, n2))
    fc2_scale = jnp.maximum(jnp.max(jnp.abs(fc2_w_f), axis=0), 1e-8) / 127.0
    fc2_w_int8 = jnp.clip(jnp.round(fc2_w_f / fc2_scale), -127, 127).astype(jnp.int8)
    fc2_b = nrm(ks[3], (n2,))

    # ConvTranspose weights, PyTorch layout (Cin, Cout, 4, 4), bf16.
    conv1_w = nrm(ks[4], (128, 64, 4, 4), dtype=bf16); conv1_b = nrm(ks[5], (64,))
    conv2_w = nrm(ks[6], (64, 32, 4, 4), dtype=bf16);  conv2_b = nrm(ks[7], (32,))
    conv3_w = nrm(ks[8], (32, 1, 4, 4), dtype=bf16);   conv3_b = nrm(ks[9], (1,))

    def wmat(w):  # (Cin, Cout, 4, 4) -> (Cin, ky*kx*Cout), bf16
        cin, cout = w.shape[0], w.shape[1]
        return jnp.transpose(w, (0, 2, 3, 1)).reshape(cin, 16 * cout)

    # BatchNorm affine params (PyTorch init: weight=1, bias=0).
    bn1_g = jnp.ones((1024,), f32); bn1_b = jnp.zeros((1024,), f32)
    bn2_g = jnp.ones((n2,), f32);   bn2_b = jnp.zeros((n2,), f32)

    return {
        "fc1_w": fc1_w, "fc1_b": fc1_b,
        "fc1_pgb": jnp.stack([fc1_b, bn1_g, bn1_b], axis=0),       # (3, 1024)
        "fc2_w_int8": fc2_w_int8, "fc2_scale": fc2_scale, "fc2_b": fc2_b,
        "fc2_sgb": jnp.stack([fc2_scale, bn2_g, bn2_b], axis=0),   # (3, 8192)
        "bn1_g": bn1_g, "bn1_b": bn1_b, "bn2_g": bn2_g, "bn2_b": bn2_b,
        "conv1_w": conv1_w, "conv1_b": conv1_b, "conv1_wm": wmat(conv1_w),
        "conv2_w": conv2_w, "conv2_b": conv2_b, "conv2_wm": wmat(conv2_w),
        "conv3_w": conv3_w, "conv3_b": conv3_b, "conv3_wmT": wmat(conv3_w).T,
        "bn3_g": jnp.ones((64,), f32), "bn3_b": jnp.zeros((64,), f32),
        "bn4_g": jnp.ones((32,), f32), "bn4_b": jnp.zeros((32,), f32),
    }


def generator_forward(x, p):
    """x: (N, 96) noise -> (N, 1, 64, 64) image (NCHW, tanh range)."""
    n = x.shape[0]
    xp = jnp.pad(x, ((0, 0), (0, p["fc1_w"].shape[0] - x.shape[1])))

    # fc1 + ReLU + bn1 (one fused kernel)                          (N, 1024) bf16
    h = fc1_relu_bn(xp, p["fc1_w"], p["fc1_pgb"])

    # fc2 (int8 weights; bias cancelled by BN) + bn2 (fused)       (N, 8192) bf16
    h = fc2_bn(h, p["fc2_w_int8"], p["fc2_sgb"])

    # fc2's output columns are laid out (h, w, c): NHWC pixels for free.
    h = h.reshape(n * 8 * 8, 128)

    # conv1: 8x8x128 -> 16x16x64 (GEMM on MXU; col2im/bias/relu/bn3 in XLA)
    y = gemm_bf16(h, p["conv1_wm"])                                # (N*64, 1024)
    h = _deconv_tail(y, p["conv1_b"], h=8, w=8, cout=64, layout="NHWC")
    h = _bn_nhwc(jnp.maximum(h, 0.0), p["bn3_g"], p["bn3_b"]).astype(jnp.bfloat16)

    # conv2: 16x16x64 -> 32x32x32; emit channel-major for the lane-dense conv3 GEMM.
    y = gemm_bf16(h.reshape(n * 16 * 16, 64), p["conv2_wm"])       # (N*256, 512)
    h = _deconv_tail(y, p["conv2_b"], h=16, w=16, cout=32, layout="CNHW")
    h = _bn_cnhw(jnp.maximum(h, 0.0), p["bn4_g"], p["bn4_b"]).astype(jnp.bfloat16)

    # conv3: 32x32x32 -> 64x64x1; transposed GEMM (16, Cin) @ (Cin, N*H*W).
    y_t = gemm_bf16(p["conv3_wmT"], h.reshape(32, n * 32 * 32))    # (16, N*1024)
    h = _deconv3_tail(y_t, p["conv3_b"], h=32, w=32)
    return jnp.tanh(h)                                             # (N, 1, 64, 64)


# ----------------------------- pure-JAX reference ---------------------------
# Same architecture, same parameters and the same precision choices as the
# Pallas path (bf16-rounded activations / shared bf16+int8 weights, exact
# products with f32 accumulation), so the comparison isolates kernel /
# structural bugs instead of precision-choice noise.

def reference_forward(x, p):
    f32 = jnp.float32
    hi = jax.lax.Precision.HIGHEST
    rnd = lambda t: t.astype(jnp.bfloat16).astype(f32)   # match kernel rounding points

    def bn_rows(h, g, b):
        m = jnp.mean(h, axis=0, keepdims=True)
        v = jnp.mean(jnp.square(h - m), axis=0, keepdims=True)
        return (h - m) * jax.lax.rsqrt(v + EPS) * g[None, :] + b[None, :]

    def bn_nchw(h, g, b):
        m = jnp.mean(h, axis=(0, 2, 3), keepdims=True)
        v = jnp.mean(jnp.square(h - m), axis=(0, 2, 3), keepdims=True)
        return (h - m) * jax.lax.rsqrt(v + EPS) * g.reshape(1, -1, 1, 1) + b.reshape(1, -1, 1, 1)

    def convt(h, w_pt, b):   # ConvTranspose2d(k=4, s=2, p=1), NCHW
        w = jnp.transpose(w_pt[:, :, ::-1, ::-1], (1, 0, 2, 3)).astype(f32)
        out = jax.lax.conv_general_dilated(
            rnd(h), w, window_strides=(1, 1), padding=((2, 2), (2, 2)),
            lhs_dilation=(2, 2), dimension_numbers=("NCHW", "OIHW", "NCHW"),
            precision=hi)
        return out + b.reshape(1, -1, 1, 1)

    # fc1 + relu + bn1
    w1 = p["fc1_w"].astype(f32)[: x.shape[1]]
    h = jnp.dot(rnd(x), w1, precision=hi) + p["fc1_b"]
    h = bn_rows(jnp.maximum(h, 0.0), p["bn1_g"], p["bn1_b"])

    # fc2 (int8-dequantized weights) + bias + bn2
    h = jnp.dot(rnd(h), p["fc2_w_int8"].astype(f32), precision=hi)
    h = h * p["fc2_scale"][None, :] + p["fc2_b"]
    h = bn_rows(h, p["bn2_g"], p["bn2_b"])

    # fc2 output features are indexed (h, w, c) -> build the NCHW conv input.
    h = jnp.transpose(rnd(h).reshape(-1, 8, 8, 128), (0, 3, 1, 2))

    h = bn_nchw(jnp.maximum(convt(h, p["conv1_w"], p["conv1_b"]), 0.0),
                p["bn3_g"], p["bn3_b"])
    h = bn_nchw(jnp.maximum(convt(h, p["conv2_w"], p["conv2_b"]), 0.0),
                p["bn4_g"], p["bn4_b"])
    return jnp.tanh(convt(h, p["conv3_w"], p["conv3_b"]))


# ----------------------------- main ------------------------------------------

if __name__ == "__main__":
    key = jax.random.PRNGKey(0)
    kx, kp = jax.random.split(key)
    params = init_params(kp, noise_dim=96)
    # batch=4: batch-stat BN over 4 rows is well conditioned (with 2 rows the
    # normalized output is a pure sign function and numerically chaotic).
    x = jax.random.normal(kx, (4, 96), dtype=jnp.float32)

    out = jax.jit(generator_forward)(x, params)
    out = jax.block_until_ready(out)

    assert out.shape == (4, 1, 64, 64), out.shape
    assert bool(jnp.all(jnp.isfinite(out)))

    ref = reference_forward(x, params)
    # Both paths share the same bf16/int8 weights and bf16 activation rounding
    # points; the remaining difference is f32 accumulation order (~1e-6), so
    # 2e-2 is a comfortable-but-meaningful bound on the tanh-range output.
    np.testing.assert_allclose(np.asarray(out), np.asarray(ref),
                               rtol=2e-2, atol=2e-2)

    print("KERNEL_OK")
</pallas_src>

<mosaic_0001>
module attributes {stable_mosaic.version = 11 : i64} {
  func.func @_fc2_kernel(%arg0: i32, %arg1: memref<4x1024xbf16, #tpu.memory_space<vmem>>, %arg2: memref<1024x2048xi8, #tpu.memory_space<vmem>>, %arg3: memref<3x2048xf32, #tpu.memory_space<vmem>>, %arg4: memref<4x2048xbf16, #tpu.memory_space<vmem>>) attributes {dimension_semantics = [#tpu.dimension_semantics<parallel>], iteration_bounds = array<i64: 4>, scalar_prefetch = 0 : i64, scratch_operands = 0 : i64, tpu.core_type = #tpu.core_type<tc>, window_params = [{pipeline_mode = #tpu.pipeline_mode<synchronous>, transform_indices = @transform_0, window_bounds = array<i64: 4, 1024>}, {transform_indices = @transform_1, window_bounds = array<i64: 1024, 2048>}, {transform_indices = @transform_2, window_bounds = array<i64: 3, 2048>}, {transform_indices = @transform_3, window_bounds = array<i64: 4, 2048>}]} {
    %c0 = arith.constant 0 : index
    %c0_0 = arith.constant 0 : index
    %0 = vector.load %arg2[%c0, %c0_0] : memref<1024x2048xi8, #tpu.memory_space<vmem>>, vector<1024x2048xi8>
    %1 = arith.sitofp %0 : vector<1024x2048xi8> to vector<1024x2048xf32>
    %2 = arith.truncf %1 : vector<1024x2048xf32> to vector<1024x2048xbf16>
    %c0_1 = arith.constant 0 : index
    %c0_2 = arith.constant 0 : index
    %3 = vector.load %arg1[%c0_1, %c0_2] : memref<4x1024xbf16, #tpu.memory_space<vmem>>, vector<4x1024xbf16>
    %cst = arith.constant dense<0.000000e+00> : vector<4x2048xf32>
    %4 = tpu.matmul %3, %2, %cst {dimension_numbers = #tpu.dot_dimension_numbers<[1], [0], [0], [1], [0, 0, 1, 1], [], []>} : vector<4x1024xbf16>, vector<1024x2048xbf16>, vector<4x2048xf32> -> vector<4x2048xf32>
    %c0_3 = arith.constant 0 : index
    %c0_4 = arith.constant 0 : index
    %5 = vector.load %arg3[%c0_3, %c0_4] : memref<3x2048xf32, #tpu.memory_space<vmem>>, vector<1x2048xf32>
    %6 = vector.broadcast %5 : vector<1x2048xf32> to vector<4x2048xf32>
    %7 = arith.mulf %4, %6 : vector<4x2048xf32>
    %cst_5 = arith.constant dense<0.000000e+00> : vector<2048xf32>
    %8 = vector.multi_reduction <add>, %7, %cst_5 [0] : vector<4x2048xf32> to vector<2048xf32>
    %9 = vector.shape_cast %8 : vector<2048xf32> to vector<1x2048xf32>
    %cst_6 = arith.constant 4.000000e+00 : f32
    %10 = vector.broadcast %cst_6 : f32 to vector<1x2048xf32>
    %11 = arith.divf %9, %10 : vector<1x2048xf32>
    %12 = vector.broadcast %11 : vector<1x2048xf32> to vector<4x2048xf32>
    %13 = arith.subf %7, %12 : vector<4x2048xf32>
    %14 = arith.mulf %13, %13 : vector<4x2048xf32>
    %cst_7 = arith.constant dense<0.000000e+00> : vector<2048xf32>
    %15 = vector.multi_reduction <add>, %14, %cst_7 [0] : vector<4x2048xf32> to vector<2048xf32>
    %16 = vector.shape_cast %15 : vector<2048xf32> to vector<1x2048xf32>
    %cst_8 = arith.constant 4.000000e+00 : f32
    %17 = vector.broadcast %cst_8 : f32 to vector<1x2048xf32>
    %18 = arith.divf %16, %17 : vector<1x2048xf32>
    %19 = vector.broadcast %11 : vector<1x2048xf32> to vector<4x2048xf32>
    %20 = arith.subf %7, %19 : vector<4x2048xf32>
    %cst_9 = arith.constant 9.99999974E-6 : f32
    %21 = vector.broadcast %cst_9 : f32 to vector<1x2048xf32>
    %22 = arith.addf %18, %21 : vector<1x2048xf32>
    %23 = math.rsqrt %22 : vector<1x2048xf32>
    %24 = vector.broadcast %23 : vector<1x2048xf32> to vector<4x2048xf32>
    %25 = arith.mulf %20, %24 : vector<4x2048xf32>
    %c1 = arith.constant 1 : index
    %c0_10 = arith.constant 0 : index
    %26 = vector.load %arg3[%c1, %c0_10] : memref<3x2048xf32, #tpu.memory_space<vmem>>, vector<1x2048xf32>
    %27 = vector.broadcast %26 : vector<1x2048xf32> to vector<4x2048xf32>
    %28 = arith.mulf %25, %27 : vector<4x2048xf32>
    %c2 = arith.constant 2 : index
    %c0_11 = arith.constant 0 : index
    %29 = vector.load %arg3[%c2, %c0_11] : memref<3x2048xf32, #tpu.memory_space<vmem>>, vector<1x2048xf32>
    %30 = vector.broadcast %29 : vector<1x2048xf32> to vector<4x2048xf32>
    %31 = arith.addf %28, %30 : vector<4x2048xf32>
    %32 = arith.truncf %31 : vector<4x2048xf32> to vector<4x2048xbf16>
    %c0_12 = arith.constant 0 : index
    %c0_13 = arith.constant 0 : index
    %33 = vector.load %arg4[%c0_12, %c0_13] : memref<4x2048xbf16, #tpu.memory_space<vmem>>, vector<4x2048xbf16>
    tpu.vector_store %arg4[%c0_12, %c0_13], %32 {strides = array<i32>} : memref<4x2048xbf16, #tpu.memory_space<vmem>>, vector<4x2048xbf16>,
    return
  }
  func.func @transform_0(%arg0: i32) -> (i32, i32) {
    %c0_i32 = arith.constant 0 : i32
    %c0_i32_0 = arith.constant 0 : i32
    %c0_i32_1 = arith.constant 0 : i32
    return %c0_i32, %c0_i32_0 : i32, i32
  }
  func.func @transform_1(%arg0: i32) -> (i32, i32) {
    %c0_i32 = arith.constant 0 : i32
    %c0_i32_0 = arith.constant 0 : i32
    return %c0_i32, %arg0 : i32, i32
  }
  func.func @transform_2(%arg0: i32) -> (i32, i32) {
    %c0_i32 = arith.constant 0 : i32
    %c0_i32_0 = arith.constant 0 : i32
    return %c0_i32, %arg0 : i32, i32
  }
  func.func @transform_3(%arg0: i32) -> (i32, i32) {
    %c0_i32 = arith.constant 0 : i32
    %c0_i32_0 = arith.constant 0 : i32
    return %c0_i32, %arg0 : i32, i32
  }
}

module attributes {stable_mosaic.version = 11 : i64} {
  func.func @_fc1_kernel(%arg0: i32, %arg1: memref<4x128xbf16, #tpu.memory_space<vmem>>, %arg2: memref<128x1024xbf16, #tpu.memory_space<vmem>>, %arg3: memref<3x1024xf32, #tpu.memory_space<vmem>>, %arg4: memref<4x1024xbf16, #tpu.memory_space<vmem>>) attributes {dimension_semantics = [#tpu.dimension_semantics<arbitrary>], iteration_bounds = array<i64: 1>, scalar_prefetch = 0 : i64, scratch_operands = 0 : i64, tpu.core_type = #tpu.core_type<tc>, window_params = [{pipeline_mode = #tpu.pipeline_mode<synchronous>, transform_indices = @transform_0, window_bounds = array<i64: 4, 128>}, {pipeline_mode = #tpu.pipeline_mode<synchronous>, transform_indices = @transform_1, window_bounds = array<i64: 128, 1024>}, {pipeline_mode = #tpu.pipeline_mode<synchronous>, transform_indices = @transform_2, window_bounds = array<i64: 3, 1024>}, {pipeline_mode = #tpu.pipeline_mode<synchronous>, transform_indices = @transform_3, window_bounds = array<i64: 4, 1024>}]} {
    %c0 = arith.constant 0 : index
    %c0_0 = arith.constant 0 : index
    %0 = vector.load %arg1[%c0, %c0_0] : memref<4x128xbf16, #tpu.memory_space<vmem>>, vector<4x128xbf16>
    %c0_1 = arith.constant 0 : index
    %c0_2 = arith.constant 0 : index
    %1 = vector.load %arg2[%c0_1, %c0_2] : memref<128x1024xbf16, #tpu.memory_space<vmem>>, vector<128x1024xbf16>
    %cst = arith.constant dense<0.000000e+00> : vector<4x1024xf32>
    %2 = tpu.matmul %0, %1, %cst {dimension_numbers = #tpu.dot_dimension_numbers<[1], [0], [0], [1], [0, 0, 1, 1], [], []>} : vector<4x128xbf16>, vector<128x1024xbf16>, vector<4x1024xf32> -> vector<4x1024xf32>
    %c0_3 = arith.constant 0 : index
    %c0_4 = arith.constant 0 : index
    %3 = vector.load %arg3[%c0_3, %c0_4] : memref<3x1024xf32, #tpu.memory_space<vmem>>, vector<1x1024xf32>
    %4 = vector.broadcast %3 : vector<1x1024xf32> to vector<4x1024xf32>
    %5 = arith.addf %2, %4 : vector<4x1024xf32>
    %cst_5 = arith.constant 0.000000e+00 : f32
    %6 = vector.broadcast %cst_5 : f32 to vector<4x1024xf32>
    %7 = arith.maximumf %5, %6 : vector<4x1024xf32>
    %cst_6 = arith.constant dense<0.000000e+00> : vector<1024xf32>
    %8 = vector.multi_reduction <add>, %7, %cst_6 [0] : vector<4x1024xf32> to vector<1024xf32>
    %9 = vector.shape_cast %8 : vector<1024xf32> to vector<1x1024xf32>
    %cst_7 = arith.constant 4.000000e+00 : f32
    %10 = vector.broadcast %cst_7 : f32 to vector<1x1024xf32>
    %11 = arith.divf %9, %10 : vector<1x1024xf32>
    %12 = vector.broadcast %11 : vector<1x1024xf32> to vector<4x1024xf32>
    %13 = arith.subf %7, %12 : vector<4x1024xf32>
    %14 = arith.mulf %13, %13 : vector<4x1024xf32>
    %cst_8 = arith.constant dense<0.000000e+00> : vector<1024xf32>
    %15 = vector.multi_reduction <add>, %14, %cst_8 [0] : vector<4x1024xf32> to vector<1024xf32>
    %16 = vector.shape_cast %15 : vector<1024xf32> to vector<1x1024xf32>
    %cst_9 = arith.constant 4.000000e+00 : f32
    %17 = vector.broadcast %cst_9 : f32 to vector<1x1024xf32>
    %18 = arith.divf %16, %17 : vector<1x1024xf32>
    %19 = vector.broadcast %11 : vector<1x1024xf32> to vector<4x1024xf32>
    %20 = arith.subf %7, %19 : vector<4x1024xf32>
    %cst_10 = arith.constant 9.99999974E-6 : f32
    %21 = vector.broadcast %cst_10 : f32 to vector<1x1024xf32>
    %22 = arith.addf %18, %21 : vector<1x1024xf32>
    %23 = math.rsqrt %22 : vector<1x1024xf32>
    %24 = vector.broadcast %23 : vector<1x1024xf32> to vector<4x1024xf32>
    %25 = arith.mulf %20, %24 : vector<4x1024xf32>
    %c1 = arith.constant 1 : index
    %c0_11 = arith.constant 0 : index
    %26 = vector.load %arg3[%c1, %c0_11] : memref<3x1024xf32, #tpu.memory_space<vmem>>, vector<1x1024xf32>
    %27 = vector.broadcast %26 : vector<1x1024xf32> to vector<4x1024xf32>
    %28 = arith.mulf %25, %27 : vector<4x1024xf32>
    %c2 = arith.constant 2 : index
    %c0_12 = arith.constant 0 : index
    %29 = vector.load %arg3[%c2, %c0_12] : memref<3x1024xf32, #tpu.memory_space<vmem>>, vector<1x1024xf32>
    %30 = vector.broadcast %29 : vector<1x1024xf32> to vector<4x1024xf32>
    %31 = arith.addf %28, %30 : vector<4x1024xf32>
    %32 = arith.truncf %31 : vector<4x1024xf32> to vector<4x1024xbf16>
    %c0_13 = arith.constant 0 : index
    %c0_14 = arith.constant 0 : index
    %33 = vector.load %arg4[%c0_13, %c0_14] : memref<4x1024xbf16, #tpu.memory_space<vmem>>, vector<4x1024xbf16>
    tpu.vector_store %arg4[%c0_13, %c0_14], %32 {strides = array<i32>} : memref<4x1024xbf16, #tpu.memory_space<vmem>>, vector<4x1024xbf16>,
    return
  }
  func.func @transform_0(%arg0: i32) -> (i32, i32) {
    %c0_i32 = arith.constant 0 : i32
    %c0_i32_0 = arith.constant 0 : i32
    %c0_i32_1 = arith.constant 0 : i32
    return %c0_i32, %c0_i32_0 : i32, i32
  }
  func.func @transform_1(%arg0: i32) -> (i32, i32) {
    %c0_i32 = arith.constant 0 : i32
    %c0_i32_0 = arith.constant 0 : i32
    %c0_i32_1 = arith.constant 0 : i32
    return %c0_i32, %c0_i32_0 : i32, i32
  }
  func.func @transform_2(%arg0: i32) -> (i32, i32) {
    %c0_i32 = arith.constant 0 : i32
    %c0_i32_0 = arith.constant 0 : i32
    %c0_i32_1 = arith.constant 0 : i32
    return %c0_i32, %c0_i32_0 : i32, i32
  }
  func.func @transform_3(%arg0: i32) -> (i32, i32) {
    %c0_i32 = arith.constant 0 : i32
    %c0_i32_0 = arith.constant 0 : i32
    %c0_i32_1 = arith.constant 0 : i32
    return %c0_i32, %c0_i32_0 : i32, i32
  }
}

module attributes {stable_mosaic.version = 11 : i64} {
  func.func @_gemm_kernel(%arg0: i32, %arg1: i32, %arg2: memref<256x128xbf16, #tpu.memory_space<vmem>>, %arg3: memref<128x1024xbf16, #tpu.memory_space<vmem>>, %arg4: memref<256x1024xf32, #tpu.memory_space<vmem>>) attributes {dimension_semantics = [#tpu.dimension_semantics<parallel>, #tpu.dimension_semantics<parallel>], iteration_bounds = array<i64: 1, 1>, scalar_prefetch = 0 : i64, scratch_operands = 0 : i64, tpu.core_type = #tpu.core_type<tc>, window_params = [{transform_indices = @transform_0, window_bounds = array<i64: 256, 128>}, {transform_indices = @transform_1, window_bounds = array<i64: 128, 1024>}, {transform_indices = @transform_2, window_bounds = array<i64: 256, 1024>}]} {
    %c0 = arith.constant 0 : index
    %c0_0 = arith.constant 0 : index
    %0 = vector.load %arg2[%c0, %c0_0] : memref<256x128xbf16, #tpu.memory_space<vmem>>, vector<256x128xbf16>
    %c0_1 = arith.constant 0 : index
    %c0_2 = arith.constant 0 : index
    %1 = vector.load %arg3[%c0_1, %c0_2] : memref<128x1024xbf16, #tpu.memory_space<vmem>>, vector<128x1024xbf16>
    %cst = arith.constant dense<0.000000e+00> : vector<256x1024xf32>
    %2 = tpu.matmul %0, %1, %cst {dimension_numbers = #tpu.dot_dimension_numbers<[1], [0], [0], [1], [0, 0, 1, 1], [], []>} : vector<256x128xbf16>, vector<128x1024xbf16>, vector<256x1024xf32> -> vector<256x1024xf32>
    %c0_3 = arith.constant 0 : index
    %c0_4 = arith.constant 0 : index
    %3 = vector.load %arg4[%c0_3, %c0_4] : memref<256x1024xf32, #tpu.memory_space<vmem>>, vector<256x1024xf32>
    tpu.vector_store %arg4[%c0_3, %c0_4], %2 {strides = array<i32>} : memref<256x1024xf32, #tpu.memory_space<vmem>>, vector<256x1024xf32>,
    return
  }
  func.func @transform_0(%arg0: i32, %arg1: i32) -> (i32, i32) {
    %c0_i32 = arith.constant 0 : i32
    %c0_i32_0 = arith.constant 0 : i32
    return %arg0, %c0_i32 : i32, i32
  }
  func.func @transform_1(%arg0: i32, %arg1: i32) -> (i32, i32) {
    %c0_i32 = arith.constant 0 : i32
    %c0_i32_0 = arith.constant 0 : i32
    return %c0_i32, %arg1 : i32, i32
  }
  func.func @transform_2(%arg0: i32, %arg1: i32) -> (i32, i32) {
    %c0_i32 = arith.constant 0 : i32
    return %arg0, %arg1 : i32, i32
  }
}

module attributes {stable_mosaic.version = 11 : i64} {
  func.func @_gemm_kernel(%arg0: i32, %arg1: i32, %arg2: memref<1024x64xbf16, #tpu.memory_space<vmem>>, %arg3: memref<64x512xbf16, #tpu.memory_space<vmem>>, %arg4: memref<1024x512xf32, #tpu.memory_space<vmem>>) attributes {dimension_semantics = [#tpu.dimension_semantics<parallel>, #tpu.dimension_semantics<parallel>], iteration_bounds = array<i64: 1, 1>, scalar_prefetch = 0 : i64, scratch_operands = 0 : i64, tpu.core_type = #tpu.core_type<tc>, window_params = [{transform_indices = @transform_0, window_bounds = array<i64: 1024, 64>}, {transform_indices = @transform_1, window_bounds = array<i64: 64, 512>}, {transform_indices = @transform_2, window_bounds = array<i64: 1024, 512>}]} {
    %c0 = arith.constant 0 : index
    %c0_0 = arith.constant 0 : index
    %0 = vector.load %arg2[%c0, %c0_0] : memref<1024x64xbf16, #tpu.memory_space<vmem>>, vector<1024x64xbf16>
    %c0_1 = arith.constant 0 : index
    %c0_2 = arith.constant 0 : index
    %1 = vector.load %arg3[%c0_1, %c0_2] : memref<64x512xbf16, #tpu.memory_space<vmem>>, vector<64x512xbf16>
    %cst = arith.constant dense<0.000000e+00> : vector<1024x512xf32>
    %2 = tpu.matmul %0, %1, %cst {dimension_numbers = #tpu.dot_dimension_numbers<[1], [0], [0], [1], [0, 0, 1, 1], [], []>} : vector<1024x64xbf16>, vector<64x512xbf16>, vector<1024x512xf32> -> vector<1024x512xf32>
    %c0_3 = arith.constant 0 : index
    %c0_4 = arith.constant 0 : index
    %3 = vector.load %arg4[%c0_3, %c0_4] : memref<1024x512xf32, #tpu.memory_space<vmem>>, vector<1024x512xf32>
    tpu.vector_store %arg4[%c0_3, %c0_4], %2 {strides = array<i32>} : memref<1024x512xf32, #tpu.memory_space<vmem>>, vector<1024x512xf32>,
    return
  }
  func.func @transform_0(%arg0: i32, %arg1: i32) -> (i32, i32) {
    %c0_i32 = arith.constant 0 : i32
    %c0_i32_0 = arith.constant 0 : i32
    return %arg0, %c0_i32 : i32, i32
  }
  func.func @transform_1(%arg0: i32, %arg1: i32) -> (i32, i32) {
    %c0_i32 = arith.constant 0 : i32
    %c0_i32_0 = arith.constant 0 : i32
    return %c0_i32, %arg1 : i32, i32
  }
  func.func @transform_2(%arg0: i32, %arg1: i32) -> (i32, i32) {
    %c0_i32 = arith.constant 0 : i32
    return %arg0, %arg1 : i32, i32
  }
}

module attributes {stable_mosaic.version = 11 : i64} {
  func.func @_gemm_kernel(%arg0: i32, %arg1: i32, %arg2: memref<16x32xbf16, #tpu.memory_space<vmem>>, %arg3: memref<32x4096xbf16, #tpu.memory_space<vmem>>, %arg4: memref<16x4096xf32, #tpu.memory_space<vmem>>) attributes {dimension_semantics = [#tpu.dimension_semantics<parallel>, #tpu.dimension_semantics<parallel>], iteration_bounds = array<i64: 1, 1>, scalar_prefetch = 0 : i64, scratch_operands = 0 : i64, tpu.core_type = #tpu.core_type<tc>, window_params = [{transform_indices = @transform_0, window_bounds = array<i64: 16, 32>}, {transform_indices = @transform_1, window_bounds = array<i64: 32, 4096>}, {transform_indices = @transform_2, window_bounds = array<i64: 16, 4096>}]} {
    %c0 = arith.constant 0 : index
    %c0_0 = arith.constant 0 : index
    %0 = vector.load %arg2[%c0, %c0_0] : memref<16x32xbf16, #tpu.memory_space<vmem>>, vector<16x32xbf16>
    %c0_1 = arith.constant 0 : index
    %c0_2 = arith.constant 0 : index
    %1 = vector.load %arg3[%c0_1, %c0_2] : memref<32x4096xbf16, #tpu.memory_space<vmem>>, vector<32x4096xbf16>
    %cst = arith.constant dense<0.000000e+00> : vector<16x4096xf32>
    %2 = tpu.matmul %0, %1, %cst {dimension_numbers = #tpu.dot_dimension_numbers<[1], [0], [0], [1], [0, 0, 1, 1], [], []>} : vector<16x32xbf16>, vector<32x4096xbf16>, vector<16x4096xf32> -> vector<16x4096xf32>
    %c0_3 = arith.constant 0 : index
    %c0_4 = arith.constant 0 : index
    %3 = vector.load %arg4[%c0_3, %c0_4] : memref<16x4096xf32, #tpu.memory_space<vmem>>, vector<16x4096xf32>
    tpu.vector_store %arg4[%c0_3, %c0_4], %2 {strides = array<i32>} : memref<16x4096xf32, #tpu.memory_space<vmem>>, vector<16x4096xf32>,
    return
  }
  func.func @transform_0(%arg0: i32, %arg1: i32) -> (i32, i32) {
    %c0_i32 = arith.constant 0 : i32
    %c0_i32_0 = arith.constant 0 : i32
    return %arg0, %c0_i32 : i32, i32
  }
  func.func @transform_1(%arg0: i32, %arg1: i32) -> (i32, i32) {
    %c0_i32 = arith.constant 0 : i32
    %c0_i32_0 = arith.constant 0 : i32
    return %c0_i32, %arg1 : i32, i32
  }
  func.func @transform_2(%arg0: i32, %arg1: i32) -> (i32, i32) {
    %c0_i32 = arith.constant 0 : i32
    return %arg0, %arg1 : i32, i32
  }
}

</mosaic_0001>

<llo_original>
// kernel: generator_forward.5
$region0: #{generator_forward.5}
  #allocation0 [shape = 'u32[]', space=smem, size = 0x4, offset = 0x4, fixed_abs, tag = 'smem constant byte address 0x4 - core index']
  #allocation1 [shape = 'u32[144,128]{1,0:T(1,128)}', space=vmem, size = 0x12000, scoped, tag = 'internal scratch']
  %s0 = inlined_call_operand.vmem [shape: bf16[4,128], index: 0, kind: input, shape index: {}]
  %s1 = inlined_call_operand.hbm [shape: bf16[128,1024], index: 1, kind: input, shape index: {}]
  %s2 = inlined_call_operand.hbm [shape: f32[3,1024], index: 2, kind: input, shape index: {}]
  %s3 = inlined_call_operand.vmem [shape: bf16[4,1024], index: 3, kind: output, shape index: {}]
  %s4 = sld [smem:[#allocation0]]
  $region30: #{generator_forward.5} parent=0
    _
  %s6 = ssub.s32 1, %s4
  %s7 = scalar_select 0, %s6, %s4
  $region1: #{generator_forward.5} parent=0
    #allocation2 [shape = 'u8[262144]{0}', space=vmem, size = 0x40000, scoped, tag = 'input window, operand 1, single buffered']
    #allocation3 [shape = 's32[1]{0}', space=sflag, size = 0x4, scoped, tag = 'scoped memory for generator_forward.5']
    #allocation4 [shape = 'u8[16384]{0}', space=vmem, size = 0x4000, scoped, tag = 'input window, operand 2, single buffered']
    #allocation5 [shape = 's32[1]{0}', space=sflag, size = 0x4, scoped, tag = 'scoped memory for generator_forward.5']
    %8 = vsyncpa [#allocation3], 0
    %9 = vsyncpa [#allocation5], 0
    // Predicated region
    $region2: #{generator_forward.5} parent=1 // pred_check
      _
    $region3: #{generator_forward.5} parent=1 // pred_check_branch
      %11 = sbr.rel (0) target = $region5
    $region4: #{generator_forward.5} parent=1 // pred_region
      _
    $region5: #{generator_forward.5} parent=1 // pred_fallthru
      _
    // Predicated region
    $region6: #{generator_forward.5} parent=1 // pred_check
      _
    $region7: #{generator_forward.5} parent=1 // pred_check_branch
      %13 = sbr.rel (0) target = $region9
    $region8: #{generator_forward.5} parent=1 // pred_region
      %s15 = ssub.s32 8192, 8192
      %16 = vsyncadd [#allocation3], %s15
      %s17 = sshll.u32 [#allocation2], 4
      %s18 = int_to_ptr.vmem [resolvable:$true] %s17
      %23 = dma.hbm_to_vmem [thread:$0]  %s1, 8192, %s18, [#allocation3], 512, 512, 32
    $region9: #{generator_forward.5} parent=1 // pred_fallthru
      _
    // Predicated region
    $region10: #{generator_forward.5} parent=1 // pred_check
      _
    $region11: #{generator_forward.5} parent=1 // pred_check_branch
      %25 = sbr.rel (0) target = $region13
    $region12: #{generator_forward.5} parent=1 // pred_region
      %s27 = ssub.s32 512, 512
      %28 = vsyncadd [#allocation5], %s27
      %s30 = sshll.u32 [#allocation4], 4
      %s31 = int_to_ptr.vmem [resolvable:$true] %s30
      %33 = dma.hbm_to_vmem [thread:$0]  %s2, 512, %s31, [#allocation5]
    $region13: #{generator_forward.5} parent=1 // pred_fallthru
      _
    // Predicated region
    $region14: #{generator_forward.5} parent=1 // pred_check
      _
    $region15: #{generator_forward.5} parent=1 // pred_check_branch
      %35 = sbr.rel (0) target = $region17
    $region16: #{generator_forward.5} parent=1 // pred_region
      %36 = dma.done [#allocation3], 8192
    $region17: #{generator_forward.5} parent=1 // pred_fallthru
      _
    // Predicated region
    $region18: #{generator_forward.5} parent=1 // pred_check
      _
    $region19: #{generator_forward.5} parent=1 // pred_check_branch
      %38 = sbr.rel (0) target = $region21
    $region20: #{generator_forward.5} parent=1 // pred_region
      %39 = dma.done [#allocation5], 512
    $region21: #{generator_forward.5} parent=1 // pred_fallthru
      _
    %v41 = vld [vmem:[%s0] sm:$0x3]
    %v42 = vld [vmem:[#allocation2] sm:$0xff]
    %v43 = vld [vmem:[#allocation2 + $0x8] sm:$0xff]
    %v44 = vld [vmem:[#allocation2 + $0x10] sm:$0xff]
    %v45 = vld [vmem:[#allocation2 + $0x18] sm:$0xff]
    %v46 = vld [vmem:[#allocation2 + $0x20] sm:$0xff]
    %v47 = vld [vmem:[#allocation2 + $0x28] sm:$0xff]
    %v48 = vld [vmem:[#allocation2 + $0x30] sm:$0xff]
    %v49 = vld [vmem:[#allocation2 + $0x38] sm:$0xff]
    %v50 = vld [vmem:[#allocation2 + $0x40] sm:$0xff]
    %v51 = vld [vmem:[#allocation2 + $0x48] sm:$0xff]
    %v52 = vld [vmem:[#allocation2 + $0x50] sm:$0xff]
    %v53 = vld [vmem:[#allocation2 + $0x58] sm:$0xff]
    %v54 = vld [vmem:[#allocation2 + $0x60] sm:$0xff]
    %v55 = vld [vmem:[#allocation2 + $0x68] sm:$0xff]
    %v56 = vld [vmem:[#allocation2 + $0x70] sm:$0xff]
    %v57 = vld [vmem:[#allocation2 + $0x78] sm:$0xff]
    %v58 = vld [vmem:[#allocation2 + $0x80] sm:$0xff]
    %v59 = vld [vmem:[#allocation2 + $0x88] sm:$0xff]
    %v60 = vld [vmem:[#allocation2 + $0x90] sm:$0xff]
    %v61 = vld [vmem:[#allocation2 + $0x98] sm:$0xff]
    %v62 = vld [vmem:[#allocation2 + $0xa0] sm:$0xff]
    %v63 = vld [vmem:[#allocation2 + $0xa8] sm:$0xff]
    %v64 = vld [vmem:[#allocation2 + $0xb0] sm:$0xff]
    %v65 = vld [vmem:[#allocation2 + $0xb8] sm:$0xff]
    %v66 = vld [vmem:[#allocation2 + $0xc0] sm:$0xff]
    %v67 = vld [vmem:[#allocation2 + $0xc8] sm:$0xff]
    %v68 = vld [vmem:[#allocation2 + $0xd0] sm:$0xff]
    %v69 = vld [vmem:[#allocation2 + $0xd8] sm:$0xff]
    %v70 = vld [vmem:[#allocation2 + $0xe0] sm:$0xff]
    %v71 = vld [vmem:[#allocation2 + $0xe8] sm:$0xff]
    %v72 = vld [vmem:[#allocation2 + $0xf0] sm:$0xff]
    %v73 = vld [vmem:[#allocation2 + $0xf8] sm:$0xff]
    %v74 = vld [vmem:[#allocation2 + $0x100] sm:$0xff]
    %v75 = vld [vmem:[#allocation2 + $0x108] sm:$0xff]
    %v76 = vld [vmem:[#allocation2 + $0x110] sm:$0xff]
    %v77 = vld [vmem:[#allocation2 + $0x118] sm:$0xff]
    %v78 = vld [vmem:[#allocation2 + $0x120] sm:$0xff]
    %v79 = vld [vmem:[#allocation2 + $0x128] sm:$0xff]
    %v80 = vld [vmem:[#allocation2 + $0x130] sm:$0xff]
    %v81 = vld [vmem:[#allocation2 + $0x138] sm:$0xff]
    %v82 = vld [vmem:[#allocation2 + $0x140] sm:$0xff]
    %v83 = vld [vmem:[#allocation2 + $0x148] sm:$0xff]
    %v84 = vld [vmem:[#allocation2 + $0x150] sm:$0xff]
    %v85 = vld [vmem:[#allocation2 + $0x158] sm:$0xff]
    %v86 = vld [vmem:[#allocation2 + $0x160] sm:$0xff]
    %v87 = vld [vmem:[#allocation2 + $0x168] sm:$0xff]
    %v88 = vld [vmem:[#allocation2 + $0x170] sm:$0xff]
    %v89 = vld [vmem:[#allocation2 + $0x178] sm:$0xff]
    %v90 = vld [vmem:[#allocation2 + $0x180] sm:$0xff]
    %v91 = vld [vmem:[#allocation2 + $0x188] sm:$0xff]
    %v92 = vld [vmem:[#allocation2 + $0x190] sm:$0xff]
    %v93 = vld [vmem:[#allocation2 + $0x198] sm:$0xff]
    %v94 = vld [vmem:[#allocation2 + $0x1a0] sm:$0xff]
    %v95 = vld [vmem:[#allocation2 + $0x1a8] sm:$0xff]
    %v96 = vld [vmem:[#allocation2 + $0x1b0] sm:$0xff]
    %v97 = vld [vmem:[#allocation2 + $0x1b8] sm:$0xff]
    %v98 = vld [vmem:[#allocation2 + $0x1c0] sm:$0xff]
    %v99 = vld [vmem:[#allocation2 + $0x1c8] sm:$0xff]
    %v100 = vld [vmem:[#allocation2 + $0x1d0] sm:$0xff]
    %v101 = vld [vmem:[#allocation2 + $0x1d8] sm:$0xff]
    %v102 = vld [vmem:[#allocation2 + $0x1e0] sm:$0xff]
    %v103 = vld [vmem:[#allocation2 + $0x1e8] sm:$0xff]
    %v104 = vld [vmem:[#allocation2 + $0x1f0] sm:$0xff]
    %v105 = vld [vmem:[#allocation2 + $0x1f8] sm:$0xff]
    %v106 = vld [vmem:[#allocation4] ss:$4 sm:$0xff]
    %v108 = vlaneseq
    %v109 = vshrl.u32 %v108, 7
    %v110 = vsub.s32 0, %v109
    %v111 = vrot.slane %v106, %v110
    %v112 = vlaneseq
    %v113 = vshrl.u32 %v112, 7
    %v114 = vsub.s32 1, %v113
    %v115 = vrot.slane %v106, %v114
    %v116 = vlaneseq
    %v117 = vshrl.u32 %v116, 7
    %v118 = vsub.s32 2, %v117
    %v119 = vrot.slane %v106, %v118
    %v120 = vlaneseq
    %v121 = vshrl.u32 %v120, 7
    %v122 = vsub.s32 3, %v121
    %v123 = vrot.slane %v106, %v122
    %v124 = vlaneseq
    %v125 = vshrl.u32 %v124, 7
    %v126 = vsub.s32 4, %v125
    %v127 = vrot.slane %v106, %v126
    %v128 = vlaneseq
    %v129 = vshrl.u32 %v128, 7
    %v130 = vsub.s32 5, %v129
    %v131 = vrot.slane %v106, %v130
    %v132 = vlaneseq
    %v133 = vshrl.u32 %v132, 7
    %v134 = vsub.s32 6, %v133
    %v135 = vrot.slane %v106, %v134
    %v136 = vlaneseq
    %v137 = vshrl.u32 %v136, 7
    %v138 = vsub.s32 7, %v137
    %v139 = vrot.slane %v106, %v138
    %v212 = vunpack.c.l.b16 %v42
    %v213 = vunpack.c.h.b16 %v42
    %v214 = vunpack.c.l.b16 %v43
    %v215 = vunpack.c.h.b16 %v43
    %v216 = vunpack.c.l.b16 %v44
    %v217 = vunpack.c.h.b16 %v44
    %v218 = vunpack.c.l.b16 %v45
    %v219 = vunpack.c.h.b16 %v45
    %v220 = vunpack.c.l.b16 %v46
    %v221 = vunpack.c.h.b16 %v46
    %v222 = vunpack.c.l.b16 %v47
    %v223 = vunpack.c.h.b16 %v47
    %v224 = vunpack.c.l.b16 %v48
    %v225 = vunpack.c.h.b16 %v48
    %v226 = vunpack.c.l.b16 %v49
    %v227 = vunpack.c.h.b16 %v49
    %v228 = vunpack.c.l.b16 %v50
    %v229 = vunpack.c.h.b16 %v50
    %v230 = vunpack.c.l.b16 %v51
    %v231 = vunpack.c.h.b16 %v51
    %v232 = vunpack.c.l.b16 %v52
    %v233 = vunpack.c.h.b16 %v52
    %v234 = vunpack.c.l.b16 %v53
    %v235 = vunpack.c.h.b16 %v53
    %v236 = vunpack.c.l.b16 %v54
    %v237 = vunpack.c.h.b16 %v54
    %v238 = vunpack.c.l.b16 %v55
    %v239 = vunpack.c.h.b16 %v55
    %v240 = vunpack.c.l.b16 %v56
    %v241 = vunpack.c.h.b16 %v56
    %v242 = vunpack.c.l.b16 %v57
    %v243 = vunpack.c.h.b16 %v57
    %v244 = vunpack.c.l.b16 %v58
    %v245 = vunpack.c.h.b16 %v58
    %v246 = vunpack.c.l.b16 %v59
    %v247 = vunpack.c.h.b16 %v59
    %v248 = vunpack.c.l.b16 %v60
    %v249 = vunpack.c.h.b16 %v60
    %v250 = vunpack.c.l.b16 %v61
    %v251 = vunpack.c.h.b16 %v61
    %v252 = vunpack.c.l.b16 %v62
    %v253 = vunpack.c.h.b16 %v62
    %v254 = vunpack.c.l.b16 %v63
    %v255 = vunpack.c.h.b16 %v63
    %v256 = vunpack.c.l.b16 %v64
    %v257 = vunpack.c.h.b16 %v64
    %v258 = vunpack.c.l.b16 %v65
    %v259 = vunpack.c.h.b16 %v65
    %v260 = vunpack.c.l.b16 %v66
    %v261 = vunpack.c.h.b16 %v66
    %v262 = vunpack.c.l.b16 %v67
    %v263 = vunpack.c.h.b16 %v67
    %v264 = vunpack.c.l.b16 %v68
    %v265 = vunpack.c.h.b16 %v68
    %v266 = vunpack.c.l.b16 %v69
    %v267 = vunpack.c.h.b16 %v69
    %v268 = vunpack.c.l.b16 %v70
    %v269 = vunpack.c.h.b16 %v70
    %v270 = vunpack.c.l.b16 %v71
    %v271 = vunpack.c.h.b16 %v71
    %v272 = vunpack.c.l.b16 %v72
    %v273 = vunpack.c.h.b16 %v72
    %v274 = vunpack.c.l.b16 %v73
    %v275 = vunpack.c.h.b16 %v73
    %v276 = vunpack.c.l.b16 %v74
    %v277 = vunpack.c.h.b16 %v74
    %v278 = vunpack.c.l.b16 %v75
    %v279 = vunpack.c.h.b16 %v75
    %v280 = vunpack.c.l.b16 %v76
    %v281 = vunpack.c.h.b16 %v76
    %v282 = vunpack.c.l.b16 %v77
    %v283 = vunpack.c.h.b16 %v77
    %v284 = vunpack.c.l.b16 %v78
    %v285 = vunpack.c.h.b16 %v78
    %v286 = vunpack.c.l.b16 %v79
    %v287 = vunpack.c.h.b16 %v79
    %v288 = vunpack.c.l.b16 %v80
    %v289 = vunpack.c.h.b16 %v80
    %v290 = vunpack.c.l.b16 %v81
    %v291 = vunpack.c.h.b16 %v81
    %v292 = vunpack.c.l.b16 %v82
    %v293 = vunpack.c.h.b16 %v82
    %v294 = vunpack.c.l.b16 %v83
    %v295 = vunpack.c.h.b16 %v83
    %v296 = vunpack.c.l.b16 %v84
    %v297 = vunpack.c.h.b16 %v84
    %v298 = vunpack.c.l.b16 %v85
    %v299 = vunpack.c.h.b16 %v85
    %v300 = vunpack.c.l.b16 %v86
    %v301 = vunpack.c.h.b16 %v86
    %v302 = vunpack.c.l.b16 %v87
    %v303 = vunpack.c.h.b16 %v87
    %v304 = vunpack.c.l.b16 %v88
    %v305 = vunpack.c.h.b16 %v88
    %v306 = vunpack.c.l.b16 %v89
    %v307 = vunpack.c.h.b16 %v89
    %v308 = vunpack.c.l.b16 %v90
    %v309 = vunpack.c.h.b16 %v90
    %v310 = vunpack.c.l.b16 %v91
    %v311 = vunpack.c.h.b16 %v91
    %v312 = vunpack.c.l.b16 %v92
    %v313 = vunpack.c.h.b16 %v92
    %v314 = vunpack.c.l.b16 %v93
    %v315 = vunpack.c.h.b16 %v93
    %v316 = vunpack.c.l.b16 %v94
    %v317 = vunpack.c.h.b16 %v94
    %v318 = vunpack.c.l.b16 %v95
    %v319 = vunpack.c.h.b16 %v95
    %v320 = vunpack.c.l.b16 %v96
    %v321 = vunpack.c.h.b16 %v96
    %v322 = vunpack.c.l.b16 %v97
    %v323 = vunpack.c.h.b16 %v97
    %v324 = vunpack.c.l.b16 %v98
    %v325 = vunpack.c.h.b16 %v98
    %v326 = vunpack.c.l.b16 %v99
    %v327 = vunpack.c.h.b16 %v99
    %v328 = vunpack.c.l.b16 %v100
    %v329 = vunpack.c.h.b16 %v100
    %v330 = vunpack.c.l.b16 %v101
    %v331 = vunpack.c.h.b16 %v101
    %v332 = vunpack.c.l.b16 %v102
    %v333 = vunpack.c.h.b16 %v102
    %v334 = vunpack.c.l.b16 %v103
    %v335 = vunpack.c.h.b16 %v103
    %v336 = vunpack.c.l.b16 %v104
    %v337 = vunpack.c.h.b16 %v104
    %v338 = vunpack.c.l.b16 %v105
    %v339 = vunpack.c.h.b16 %v105
    %v340 = vpack.c.b16 %v220, %v212
    %v341 = vpack.c.b16 %v221, %v213
    %v342 = vpack.c.b16 %v222, %v214
    %v343 = vpack.c.b16 %v223, %v215
    %v344 = vpack.c.b16 %v224, %v216
    %v345 = vpack.c.b16 %v225, %v217
    %v346 = vpack.c.b16 %v226, %v218
    %v347 = vpack.c.b16 %v227, %v219
    %v348 = vpack.c.b16 %v236, %v228
    %v349 = vpack.c.b16 %v237, %v229
    %v350 = vpack.c.b16 %v238, %v230
    %v351 = vpack.c.b16 %v239, %v231
    %v352 = vpack.c.b16 %v240, %v232
    %v353 = vpack.c.b16 %v241, %v233
    %v354 = vpack.c.b16 %v242, %v234
    %v355 = vpack.c.b16 %v243, %v235
    %v356 = vpack.c.b16 %v252, %v244
    %v357 = vpack.c.b16 %v253, %v245
    %v358 = vpack.c.b16 %v254, %v246
    %v359 = vpack.c.b16 %v255, %v247
    %v360 = vpack.c.b16 %v256, %v248
    %v361 = vpack.c.b16 %v257, %v249
    %v362 = vpack.c.b16 %v258, %v250
    %v363 = vpack.c.b16 %v259, %v251
    %v364 = vpack.c.b16 %v268, %v260
    %v365 = vpack.c.b16 %v269, %v261
    %v366 = vpack.c.b16 %v270, %v262
    %v367 = vpack.c.b16 %v271, %v263
    %v368 = vpack.c.b16 %v272, %v264
    %v369 = vpack.c.b16 %v273, %v265
    %v370 = vpack.c.b16 %v274, %v266
    %v371 = vpack.c.b16 %v275, %v267
    %v372 = vpack.c.b16 %v284, %v276
    %v373 = vpack.c.b16 %v285, %v277
    %v374 = vpack.c.b16 %v286, %v278
    %v375 = vpack.c.b16 %v287, %v279
    %v376 = vpack.c.b16 %v288, %v280
    %v377 = vpack.c.b16 %v289, %v281
    %v378 = vpack.c.b16 %v290, %v282
    %v379 = vpack.c.b16 %v291, %v283
    %v380 = vpack.c.b16 %v300, %v292
    %v381 = vpack.c.b16 %v301, %v293
    %v382 = vpack.c.b16 %v302, %v294
    %v383 = vpack.c.b16 %v303, %v295
    %v384 = vpack.c.b16 %v304, %v296
    %v385 = vpack.c.b16 %v305, %v297
    %v386 = vpack.c.b16 %v306, %v298
    %v387 = vpack.c.b16 %v307, %v299
    %v388 = vpack.c.b16 %v316, %v308
    %v389 = vpack.c.b16 %v317, %v309
    %v390 = vpack.c.b16 %v318, %v310
    %v391 = vpack.c.b16 %v319, %v311
    %v392 = vpack.c.b16 %v320, %v312
    %v393 = vpack.c.b16 %v321, %v313
    %v394 = vpack.c.b16 %v322, %v314
    %v395 = vpack.c.b16 %v323, %v315
    %v396 = vpack.c.b16 %v332, %v324
    %v397 = vpack.c.b16 %v333, %v325
    %v398 = vpack.c.b16 %v334, %v326
    %v399 = vpack.c.b16 %v335, %v327
    %v400 = vpack.c.b16 %v336, %v328
    %v401 = vpack.c.b16 %v337, %v329
    %v402 = vpack.c.b16 %v338, %v330
    %v403 = vpack.c.b16 %v339, %v331
    %468 = vmatprep.subr.bf16.mxu0 %v341
    %469 = vmatpush1.bf16.msra.mxu0 %v340
    %470 = vmatprep.subr.bf16.mxu0 %v349
    %471 = vmatpush1.bf16.msra.mxu0 %v348
    %472 = vmatprep.subr.bf16.mxu0 %v357
    %473 = vmatpush1.bf16.msra.mxu0 %v356
    %474 = vmatprep.subr.bf16.mxu0 %v365
    %475 = vmatpush1.bf16.msra.mxu0 %v364
    %476 = vmatprep.subr.bf16.mxu0 %v373
    %477 = vmatpush1.bf16.msra.mxu0 %v372
    %478 = vmatprep.subr.bf16.mxu0 %v381
    %479 = vmatpush1.bf16.msra.mxu0 %v380
    %480 = vmatprep.subr.bf16.mxu0 %v389
    %481 = vmatpush1.bf16.msra.mxu0 %v388
    %482 = vmatprep.subr.bf16.mxu0 %v397
    %483 = vmatpush1.bf16.msra.mxu0 %v396
    %484 = vmatprep.subr.bf16.mxu0 0
    %485 = vmatpush1.bf16.msra.mxu0 0
    %486 = vmatprep.subr.bf16.mxu0 0
    %487 = vmatpush1.bf16.msra.mxu0 0
    %488 = vmatprep.subr.bf16.mxu0 0
    %489 = vmatpush1.bf16.msra.mxu0 0
    %490 = vmatprep.subr.bf16.mxu0 0
    %491 = vmatpush1.bf16.msra.mxu0 0
    %492 = vmatprep.subr.bf16.mxu0 0
    %493 = vmatpush1.bf16.msra.mxu0 0
    %494 = vmatprep.subr.bf16.mxu0 0
    %495 = vmatpush1.bf16.msra.mxu0 0
    %496 = vmatprep.subr.bf16.mxu0 0
    %497 = vmatpush1.bf16.msra.mxu0 0
    %498 = vmatprep.subr.bf16.mxu0 0
    %499 = vmatpush1.bf16.msra.mxu0 0
    %500 = vmatprep.mubr.bf16.mxu0 0
    %501 = vmatmul.mubr.bf16.gmra.mrb[0].mxu0 %v41
    %v502 = vpop.f32.mrb[0].mxu0
    %v503 = vadd.f32 %v111, %v502
    %v504 = vpop.f32.mrb[0].mxu0
    %v505 = vadd.f32 %v115, %v504
    %v506 = vpop.f32.mrb[0].mxu0
    %v507 = vpop.f32.mrb[0].mxu0
    %508 = vdwg.mxu0
    %509 = vmatprep.subr.bf16.mxu0 %v343
    %510 = vmatpush1.bf16.msra.mxu0 %v342
    %511 = vmatprep.subr.bf16.mxu0 %v351
    %512 = vmatpush1.bf16.msra.mxu0 %v350
    %513 = vmatprep.subr.bf16.mxu0 %v359
    %514 = vmatpush1.bf16.msra.mxu0 %v358
    %515 = vmatprep.subr.bf16.mxu0 %v367
    %516 = vmatpush1.bf16.msra.mxu0 %v366
    %517 = vmatprep.subr.bf16.mxu0 %v375
    %518 = vmatpush1.bf16.msra.mxu0 %v374
    %519 = vmatprep.subr.bf16.mxu0 %v383
    %520 = vmatpush1.bf16.msra.mxu0 %v382
    %521 = vmatprep.subr.bf16.mxu0 %v391
    %522 = vmatpush1.bf16.msra.mxu0 %v390
    %523 = vmatprep.subr.bf16.mxu0 %v399
    %524 = vmatpush1.bf16.msra.mxu0 %v398
    %525 = vmatprep.subr.bf16.mxu0 0
    %526 = vmatpush1.bf16.msra.mxu0 0
    %527 = vmatprep.subr.bf16.mxu0 0
    %528 = vmatpush1.bf16.msra.mxu0 0
    %529 = vmatprep.subr.bf16.mxu0 0
    %530 = vmatpush1.bf16.msra.mxu0 0
    %531 = vmatprep.subr.bf16.mxu0 0
    %532 = vmatpush1.bf16.msra.mxu0 0
    %533 = vmatprep.subr.bf16.mxu0 0
    %534 = vmatpush1.bf16.msra.mxu0 0
    %535 = vmatprep.subr.bf16.mxu0 0
    %536 = vmatpush1.bf16.msra.mxu0 0
    %537 = vmatprep.subr.bf16.mxu0 0
    %538 = vmatpush1.bf16.msra.mxu0 0
    %539 = vmatprep.subr.bf16.mxu0 0
    %540 = vmatpush1.bf16.msra.mxu0 0
    %541 = vmatprep.mubr.bf16.mxu0 0
    %542 = vmatmul.mubr.bf16.gmra.mrb[0].mxu0 %v41
    %v543 = vpop.f32.mrb[0].mxu0
    %v544 = vadd.f32 %v119, %v543
    %v545 = vpop.f32.mrb[0].mxu0
    %v546 = vadd.f32 %v123, %v545
    %v547 = vpop.f32.mrb[0].mxu0
    %v548 = vpop.f32.mrb[0].mxu0
    %549 = vdwg.mxu0
    %550 = vmatprep.subr.bf16.mxu0 %v345
    %551 = vmatpush1.bf16.msra.mxu0 %v344
    %552 = vmatprep.subr.bf16.mxu0 %v353
    %553 = vmatpush1.bf16.msra.mxu0 %v352
    %554 = vmatprep.subr.bf16.mxu0 %v361
    %555 = vmatpush1.bf16.msra.mxu0 %v360
    %556 = vmatprep.subr.bf16.mxu0 %v369
    %557 = vmatpush1.bf16.msra.mxu0 %v368
    %558 = vmatprep.subr.bf16.mxu0 %v377
    %559 = vmatpush1.bf16.msra.mxu0 %v376
    %560 = vmatprep.subr.bf16.mxu0 %v385
    %561 = vmatpush1.bf16.msra.mxu0 %v384
    %562 = vmatprep.subr.bf16.mxu0 %v393
    %563 = vmatpush1.bf16.msra.mxu0 %v392
    %564 = vmatprep.subr.bf16.mxu0 %v401
    %565 = vmatpush1.bf16.msra.mxu0 %v400
    %566 = vmatprep.subr.bf16.mxu0 0
    %567 = vmatpush1.bf16.msra.mxu0 0
    %568 = vmatprep.subr.bf16.mxu0 0
    %569 = vmatpush1.bf16.msra.mxu0 0
    %570 = vmatprep.subr.bf16.mxu0 0
    %571 = vmatpush1.bf16.msra.mxu0 0
    %572 = vmatprep.subr.bf16.mxu0 0
    %573 = vmatpush1.bf16.msra.mxu0 0
    %574 = vmatprep.subr.bf16.mxu0 0
    %575 = vmatpush1.bf16.msra.mxu0 0
    %576 = vmatprep.subr.bf16.mxu0 0
    %577 = vmatpush1.bf16.msra.mxu0 0
    %578 = vmatprep.subr.bf16.mxu0 0
    %579 = vmatpush1.bf16.msra.mxu0 0
    %580 = vmatprep.subr.bf16.mxu0 0
    %581 = vmatpush1.bf16.msra.mxu0 0
    %582 = vmatprep.mubr.bf16.mxu0 0
    %583 = vmatmul.mubr.bf16.gmra.mrb[0].mxu0 %v41
    %v584 = vpop.f32.mrb[0].mxu0
    %v585 = vadd.f32 %v127, %v584
    %v586 = vpop.f32.mrb[0].mxu0
    %v587 = vadd.f32 %v131, %v586
    %v588 = vpop.f32.mrb[0].mxu0
    %v589 = vpop.f32.mrb[0].mxu0
    %590 = vdwg.mxu0
    %591 = vmatprep.subr.bf16.mxu0 %v347
    %592 = vmatpush1.bf16.msra.mxu0 %v346
    %593 = vmatprep.subr.bf16.mxu0 %v355
    %594 = vmatpush1.bf16.msra.mxu0 %v354
    %595 = vmatprep.subr.bf16.mxu0 %v363
    %596 = vmatpush1.bf16.msra.mxu0 %v362
    %597 = vmatprep.subr.bf16.mxu0 %v371
    %598 = vmatpush1.bf16.msra.mxu0 %v370
    %599 = vmatprep.subr.bf16.mxu0 %v379
    %600 = vmatpush1.bf16.msra.mxu0 %v378
    %601 = vmatprep.subr.bf16.mxu0 %v387
    %602 = vmatpush1.bf16.msra.mxu0 %v386
    %603 = vmatprep.subr.bf16.mxu0 %v395
    %604 = vmatpush1.bf16.msra.mxu0 %v394
    %605 = vmatprep.subr.bf16.mxu0 %v403
    %606 = vmatpush1.bf16.msra.mxu0 %v402
    %607 = vmatprep.subr.bf16.mxu0 0
    %608 = vmatpush1.bf16.msra.mxu0 0
    %609 = vmatprep.subr.bf16.mxu0 0
    %610 = vmatpush1.bf16.msra.mxu0 0
    %611 = vmatprep.subr.bf16.mxu0 0
    %612 = vmatpush1.bf16.msra.mxu0 0
    %613 = vmatprep.subr.bf16.mxu0 0
    %614 = vmatpush1.bf16.msra.mxu0 0
    %615 = vmatprep.subr.bf16.mxu0 0
    %616 = vmatpush1.bf16.msra.mxu0 0
    %617 = vmatprep.subr.bf16.mxu0 0
    %618 = vmatpush1.bf16.msra.mxu0 0
    %619 = vmatprep.subr.bf16.mxu0 0
    %620 = vmatpush1.bf16.msra.mxu0 0
    %621 = vmatprep.subr.bf16.mxu0 0
    %622 = vmatpush1.bf16.msra.mxu0 0
    %623 = vmatprep.mubr.bf16.mxu0 0
    %624 = vmatmul.mubr.bf16.gmra.mrb[0].mxu0 %v41
    %v625 = vpop.f32.mrb[0].mxu0
    %v626 = vadd.f32 %v135, %v625
    %v627 = vpop.f32.mrb[0].mxu0
    %v628 = vadd.f32 %v139, %v627
    %v629 = vpop.f32.mrb[0].mxu0
    %v630 = vpop.f32.mrb[0].mxu0
    %631 = vdwg.mxu0
    %v632 = vmax.f32 %v503, 0.0
    %v633 = vmax.f32 %v505, 0.0
    %v634 = vmax.f32 %v544, 0.0
    %v635 = vmax.f32 %v546, 0.0
    %v636 = vmax.f32 %v585, 0.0
    %v637 = vmax.f32 %v587, 0.0
    %v638 = vmax.f32 %v626, 0.0
    %v639 = vmax.f32 %v628, 0.0
    %vm640 = vcmask 1043456
    %v641 = vsel %vm640, %v632, 0.0
    %v642 = vrot.slane %v641, 4
    %v643 = vadd.f32 %v641, %v642
    %v644 = vrot.slane %v643, 2
    %v645 = vadd.f32 %v643, %v644
    %v646 = vrot.slane %v645, 1
    %v647 = vadd.f32 %v645, %v646
    %v648 = vsel %vm640, %v633, 0.0
    %v649 = vrot.slane %v648, 4
    %v650 = vadd.f32 %v648, %v649
    %v651 = vrot.slane %v650, 2
    %v652 = vadd.f32 %v650, %v651
    %v653 = vrot.slane %v652, 1
    %v654 = vadd.f32 %v652, %v653
    %v655 = vsel %vm640, %v634, 0.0
    %v656 = vrot.slane %v655, 4
    %v657 = vadd.f32 %v655, %v656
    %v658 = vrot.slane %v657, 2
    %v659 = vadd.f32 %v657, %v658
    %v660 = vrot.slane %v659, 1
    %v661 = vadd.f32 %v659, %v660
    %v662 = vsel %vm640, %v635, 0.0
    %v663 = vrot.slane %v662, 4
    %v664 = vadd.f32 %v662, %v663
    %v665 = vrot.slane %v664, 2
    %v666 = vadd.f32 %v664, %v665
    %v667 = vrot.slane %v666, 1
    %v668 = vadd.f32 %v666, %v667
    %v669 = vsel %vm640, %v636, 0.0
    %v670 = vrot.slane %v669, 4
    %v671 = vadd.f32 %v669, %v670
    %v672 = vrot.slane %v671, 2
    %v673 = vadd.f32 %v671, %v672
    %v674 = vrot.slane %v673, 1
    %v675 = vadd.f32 %v673, %v674
    %v676 = vsel %vm640, %v637, 0.0
    %v677 = vrot.slane %v676, 4
    %v678 = vadd.f32 %v676, %v677
    %v679 = vrot.slane %v678, 2
    %v680 = vadd.f32 %v678, %v679
    %v681 = vrot.slane %v680, 1
    %v682 = vadd.f32 %v680, %v681
    %v683 = vsel %vm640, %v638, 0.0
    %v684 = vrot.slane %v683, 4
    %v685 = vadd.f32 %v683, %v684
    %v686 = vrot.slane %v685, 2
    %v687 = vadd.f32 %v685, %v686
    %v688 = vrot.slane %v687, 1
    %v689 = vadd.f32 %v687, %v688
    %v690 = vsel %vm640, %v639, 0.0
    %v691 = vrot.slane %v690, 4
    %v692 = vadd.f32 %v690, %v691
    %v693 = vrot.slane %v692, 2
    %v694 = vadd.f32 %v692, %v693
    %v695 = vrot.slane %v694, 1
    %v696 = vadd.f32 %v694, %v695
    %v697 = vrcp.pop 4.0
    %v698 = vmul.f32 %v647, %v697
    %v699 = vmul.f32 %v654, %v697
    %v700 = vmul.f32 %v661, %v697
    %v701 = vmul.f32 %v668, %v697
    %v702 = vmul.f32 %v675, %v697
    %v703 = vmul.f32 %v682, %v697
    %v704 = vmul.f32 %v689, %v697
    %v705 = vmul.f32 %v696, %v697
    %v706 = vsub.f32 %v632, %v698
    %v707 = vsub.f32 %v633, %v699
    %v708 = vsub.f32 %v634, %v700
    %v709 = vsub.f32 %v635, %v701
    %v710 = vsub.f32 %v636, %v702
    %v711 = vsub.f32 %v637, %v703
    %v712 = vsub.f32 %v638, %v704
    %v713 = vsub.f32 %v639, %v705
    %v714 = vmul.f32 %v706, %v706
    %v715 = vmul.f32 %v707, %v707
    %v716 = vmul.f32 %v708, %v708
    %v717 = vmul.f32 %v709, %v709
    %v718 = vmul.f32 %v710, %v710
    %v719 = vmul.f32 %v711, %v711
    %v720 = vmul.f32 %v712, %v712
    %v721 = vmul.f32 %v713, %v713
    %v722 = vsel %vm640, %v714, 0.0
    %v723 = vrot.slane %v722, 4
    %v724 = vadd.f32 %v722, %v723
    %v725 = vrot.slane %v724, 2
    %v726 = vadd.f32 %v724, %v725
    %v727 = vrot.slane %v726, 1
    %v728 = vadd.f32 %v726, %v727
    %v729 = vsel %vm640, %v715, 0.0
    %v730 = vrot.slane %v729, 4
    %v731 = vadd.f32 %v729, %v730
    %v732 = vrot.slane %v731, 2
    %v733 = vadd.f32 %v731, %v732
    %v734 = vrot.slane %v733, 1
    %v735 = vadd.f32 %v733, %v734
    %v736 = vsel %vm640, %v716, 0.0
    %v737 = vrot.slane %v736, 4
    %v738 = vadd.f32 %v736, %v737
    %v739 = vrot.slane %v738, 2
    %v740 = vadd.f32 %v738, %v739
    %v741 = vrot.slane %v740, 1
    %v742 = vadd.f32 %v740, %v741
    %v743 = vsel %vm640, %v717, 0.0
    %v744 = vrot.slane %v743, 4
    %v745 = vadd.f32 %v743, %v744
    %v746 = vrot.slane %v745, 2
    %v747 = vadd.f32 %v745, %v746
    %v748 = vrot.slane %v747, 1
    %v749 = vadd.f32 %v747, %v748
    %v750 = vsel %vm640, %v718, 0.0
    %v751 = vrot.slane %v750, 4
    %v752 = vadd.f32 %v750, %v751
    %v753 = vrot.slane %v752, 2
    %v754 = vadd.f32 %v752, %v753
    %v755 = vrot.slane %v754, 1
    %v756 = vadd.f32 %v754, %v755
    %v757 = vsel %vm640, %v719, 0.0
    %v758 = vrot.slane %v757, 4
    %v759 = vadd.f32 %v757, %v758
    %v760 = vrot.slane %v759, 2
    %v761 = vadd.f32 %v759, %v760
    %v762 = vrot.slane %v761, 1
    %v763 = vadd.f32 %v761, %v762
    %v764 = vsel %vm640, %v720, 0.0
    %v765 = vrot.slane %v764, 4
    %v766 = vadd.f32 %v764, %v765
    %v767 = vrot.slane %v766, 2
    %v768 = vadd.f32 %v766, %v767
    %v769 = vrot.slane %v768, 1
    %v770 = vadd.f32 %v768, %v769
    %v771 = vsel %vm640, %v721, 0.0
    %v772 = vrot.slane %v771, 4
    %v773 = vadd.f32 %v771, %v772
    %v774 = vrot.slane %v773, 2
    %v775 = vadd.f32 %v773, %v774
    %v776 = vrot.slane %v775, 1
    %v777 = vadd.f32 %v775, %v776
    %v778 = vmul.f32 %v728, %v697
    %v779 = vmul.f32 %v735, %v697
    %v780 = vmul.f32 %v742, %v697
    %v781 = vmul.f32 %v749, %v697
    %v782 = vmul.f32 %v756, %v697
    %v783 = vmul.f32 %v763, %v697
    %v784 = vmul.f32 %v770, %v697
    %v785 = vmul.f32 %v777, %v697
    %v786 = vadd.f32 %v778, 1e-05
    %v787 = vadd.f32 %v779, 1e-05
    %v788 = vadd.f32 %v780, 1e-05
    %v789 = vadd.f32 %v781, 1e-05
    %v790 = vadd.f32 %v782, 1e-05
    %v791 = vadd.f32 %v783, 1e-05
    %v792 = vadd.f32 %v784, 1e-05
    %v793 = vadd.f32 %v785, 1e-05
    %v794 = vrsqrt.pop %v786
    %v795 = vrsqrt.pop %v787
    %v796 = vrsqrt.pop %v788
    %v797 = vrsqrt.pop %v789
    %v798 = vrsqrt.pop %v790
    %v799 = vrsqrt.pop %v791
    %v800 = vrsqrt.pop %v792
    %v801 = vrsqrt.pop %v793
    %v802 = vmul.f32 %v706, %v794
    %v803 = vmul.f32 %v707, %v795
    %v804 = vmul.f32 %v708, %v796
    %v805 = vmul.f32 %v709, %v797
    %v806 = vmul.f32 %v710, %v798
    %v807 = vmul.f32 %v711, %v799
    %v808 = vmul.f32 %v712, %v800
    %v809 = vmul.f32 %v713, %v801
    %s810 = scalar_lea.vmem [#allocation4], 1
    %v811 = vld [vmem:[%s810] ss:$4 sm:$0xff]
    %v813 = vlaneseq
    %v814 = vshrl.u32 %v813, 7
    %v815 = vsub.s32 0, %v814
    %v816 = vrot.slane %v811, %v815
    %v817 = vlaneseq
    %v818 = vshrl.u32 %v817, 7
    %v819 = vsub.s32 1, %v818
    %v820 = vrot.slane %v811, %v819
    %v821 = vlaneseq
    %v822 = vshrl.u32 %v821, 7
    %v823 = vsub.s32 2, %v822
    %v824 = vrot.slane %v811, %v823
    %v825 = vlaneseq
    %v826 = vshrl.u32 %v825, 7
    %v827 = vsub.s32 3, %v826
    %v828 = vrot.slane %v811, %v827
    %v829 = vlaneseq
    %v830 = vshrl.u32 %v829, 7
    %v831 = vsub.s32 4, %v830
    %v832 = vrot.slane %v811, %v831
    %v833 = vlaneseq
    %v834 = vshrl.u32 %v833, 7
    %v835 = vsub.s32 5, %v834
    %v836 = vrot.slane %v811, %v835
    %v837 = vlaneseq
    %v838 = vshrl.u32 %v837, 7
    %v839 = vsub.s32 6, %v838
    %v840 = vrot.slane %v811, %v839
    %v841 = vlaneseq
    %v842 = vshrl.u32 %v841, 7
    %v843 = vsub.s32 7, %v842
    %v844 = vrot.slane %v811, %v843
    %v853 = vmul.f32 %v802, %v816
    %v854 = vmul.f32 %v803, %v820
    %v855 = vmul.f32 %v804, %v824
    %v856 = vmul.f32 %v805, %v828
    %v857 = vmul.f32 %v806, %v832
    %v858 = vmul.f32 %v807, %v836
    %v859 = vmul.f32 %v808, %v840
    %v860 = vmul.f32 %v809, %v844
    %s861 = scalar_lea.vmem [#allocation4], 2
    %v862 = vld [vmem:[%s861] ss:$4 sm:$0xff]
    %v864 = vlaneseq
    %v865 = vshrl.u32 %v864, 7
    %v866 = vsub.s32 0, %v865
    %v867 = vrot.slane %v862, %v866
    %v868 = vlaneseq
    %v869 = vshrl.u32 %v868, 7
    %v870 = vsub.s32 1, %v869
    %v871 = vrot.slane %v862, %v870
    %v872 = vlaneseq
    %v873 = vshrl.u32 %v872, 7
    %v874 = vsub.s32 2, %v873
    %v875 = vrot.slane %v862, %v874
    %v876 = vlaneseq
    %v877 = vshrl.u32 %v876, 7
    %v878 = vsub.s32 3, %v877
    %v879 = vrot.slane %v862, %v878
    %v880 = vlaneseq
    %v881 = vshrl.u32 %v880, 7
    %v882 = vsub.s32 4, %v881
    %v883 = vrot.slane %v862, %v882
    %v884 = vlaneseq
    %v885 = vshrl.u32 %v884, 7
    %v886 = vsub.s32 5, %v885
    %v887 = vrot.slane %v862, %v886
    %v888 = vlaneseq
    %v889 = vshrl.u32 %v888, 7
    %v890 = vsub.s32 6, %v889
    %v891 = vrot.slane %v862, %v890
    %v892 = vlaneseq
    %v893 = vshrl.u32 %v892, 7
    %v894 = vsub.s32 7, %v893
    %v895 = vrot.slane %v862, %v894
    %v904 = vadd.f32 %v853, %v867
    %v905 = vadd.f32 %v854, %v871
    %v906 = vadd.f32 %v855, %v875
    %v907 = vadd.f32 %v856, %v879
    %v908 = vadd.f32 %v857, %v883
    %v909 = vadd.f32 %v858, %v887
    %v910 = vadd.f32 %v859, %v891
    %v911 = vadd.f32 %v860, %v895
    %v912 = vpack.c.bf16 %v904, %v904
    %v913 = vpack.c.bf16 %v905, %v905
    %v914 = vpack.c.bf16 %v906, %v906
    %v915 = vpack.c.bf16 %v907, %v907
    %v916 = vpack.c.bf16 %v908, %v908
    %v917 = vpack.c.bf16 %v909, %v909
    %v918 = vpack.c.bf16 %v910, %v910
    %v919 = vpack.c.bf16 %v911, %v911
    %v928 = vcombine.low %v912, %v913
    %v929 = vcombine.low %v914, %v915
    %v931 = vunpack.c.l.s4 1983009808
    %v932 = vunpack.c.0.s8 %v931
    %v933 = vlaneseq
    %v934 = vshrl.u32 %v933, 7
    %v935 = vsub.s32 %v932, %v934
    %v936 = vrot.slane %v928, %v935
    %v938 = vunpack.c.l.s4 1983009808
    %v939 = vunpack.c.0.s8 %v938
    %v940 = vlaneseq
    %v941 = vshrl.u32 %v940, 7
    %v942 = vsub.s32 %v939, %v941
    %v943 = vrot.slane %v929, %v942
    %v944 = vcombine.low %v936, %v943
    %v945 = vcombine.low %v916, %v917
    %v946 = vcombine.low %v918, %v919
    %v948 = vunpack.c.l.s4 1983009808
    %v949 = vunpack.c.0.s8 %v948
    %v950 = vlaneseq
    %v951 = vshrl.u32 %v950, 7
    %v952 = vsub.s32 %v949, %v951
    %v953 = vrot.slane %v945, %v952
    %v955 = vunpack.c.l.s4 1983009808
    %v956 = vunpack.c.0.s8 %v955
    %v957 = vlaneseq
    %v958 = vshrl.u32 %v957, 7
    %v959 = vsub.s32 %v956, %v958
    %v960 = vrot.slane %v946, %v959
    %v961 = vcombine.low %v953, %v960
    %964 = vst [vmem:[%s3] sm:$0xff] %v944
    %965 = vst [vmem:[%s3 + $0x8] sm:$0xff] %v961
    // Predicated region
    $region22: #{generator_forward.5} parent=1 // pred_check
      _
    $region23: #{generator_forward.5} parent=1 // pred_check_branch
      %967 = sbr.rel (0) target = $region25
    $region24: #{generator_forward.5} parent=1 // pred_region
      _
    $region25: #{generator_forward.5} parent=1 // pred_fallthru
      _
    // Predicated region
    $region26: #{generator_forward.5} parent=1 // pred_check
      _
    $region27: #{generator_forward.5} parent=1 // pred_check_branch
      %969 = sbr.rel (0) target = $region29
    $region28: #{generator_forward.5} parent=1 // pred_region
      _
    $region29: #{generator_forward.5} parent=1 // pred_fallthru
      _
    %970 = vsyncpa [#allocation3], 1
    %971 = vsyncpa [#allocation5], 1

// kernel: generator_forward.7
$region0: #{generator_forward.7}
  #allocation0 [shape = 'u32[]', space=smem, size = 0x4, offset = 0x4, fixed_abs, tag = 'smem constant byte address 0x4 - core index']
  #allocation1 [shape = 'u32[144,128]{1,0:T(1,128)}', space=vmem, size = 0x12000, scoped, tag = 'internal scratch']
  %s0 = inlined_call_operand.vmem [shape: bf16[256,128], index: 0, kind: input, shape index: {}]
  %s1 = inlined_call_operand.vmem [shape: bf16[128,1024], index: 1, kind: input, shape index: {}]
  %s2 = inlined_call_operand.vmem [shape: f32[256,1024], index: 2, kind: output, shape index: {}]
  %s3 = sld [smem:[#allocation0]]
  $region18: #{generator_forward.7} parent=0
    _
  %s5 = ssub.s32 1, %s3
  %s6 = scalar_select 0, %s5, %s3
  // Predicated region
  $region2: #{generator_forward.7} parent=0 // pred_check
    _
  $region3: #{generator_forward.7} parent=0 // pred_check_branch
    %8 = sbr.rel (0) target = $region5
  $region4: #{generator_forward.7} parent=0 // pred_region
    _
  $region5: #{generator_forward.7} parent=0 // pred_fallthru
    _
  // Predicated region
  $region6: #{generator_forward.7} parent=0 // pred_check
    _
  $region7: #{generator_forward.7} parent=0 // pred_check_branch
    %10 = sbr.rel (0) target = $region9
  $region8: #{generator_forward.7} parent=0 // pred_region
    _
  $region9: #{generator_forward.7} parent=0 // pred_fallthru
    _
  %v12 = vld [vmem:[%s0] sm:$0xf]
  %v13 = vld [vmem:[%s0 + $0x4] sm:$0xf]
  %v14 = vld [vmem:[%s0 + $0x8] sm:$0xf]
  %v15 = vld [vmem:[%s0 + $0xc] sm:$0xf]
  %v16 = vld [vmem:[%s0 + $0x10] sm:$0xf]
  %v17 = vld [vmem:[%s0 + $0x14] sm:$0xf]
  %v18 = vld [vmem:[%s0 + $0x18] sm:$0xf]
  %v19 = vld [vmem:[%s0 + $0x1c] sm:$0xf]
  %v20 = vld [vmem:[%s0 + $0x20] sm:$0xf]
  %v21 = vld [vmem:[%s0 + $0x24] sm:$0xf]
  %v22 = vld [vmem:[%s0 + $0x28] sm:$0xf]
  %v23 = vld [vmem:[%s0 + $0x2c] sm:$0xf]
  %v24 = vld [vmem:[%s0 + $0x30] sm:$0xf]
  %v25 = vld [vmem:[%s0 + $0x34] sm:$0xf]
  %v26 = vld [vmem:[%s0 + $0x38] sm:$0xf]
  %v27 = vld [vmem:[%s0 + $0x3c] sm:$0xf]
  %v28 = vld [vmem:[%s0 + $0x40] sm:$0xf]
  %v29 = vld [vmem:[%s0 + $0x44] sm:$0xf]
  %v30 = vld [vmem:[%s0 + $0x48] sm:$0xf]
  %v31 = vld [vmem:[%s0 + $0x4c] sm:$0xf]
  %v32 = vld [vmem:[%s0 + $0x50] sm:$0xf]
  %v33 = vld [vmem:[%s0 + $0x54] sm:$0xf]
  %v34 = vld [vmem:[%s0 + $0x58] sm:$0xf]
  %v35 = vld [vmem:[%s0 + $0x5c] sm:$0xf]
  %v36 = vld [vmem:[%s0 + $0x60] sm:$0xf]
  %v37 = vld [vmem:[%s0 + $0x64] sm:$0xf]
  %v38 = vld [vmem:[%s0 + $0x68] sm:$0xf]
  %v39 = vld [vmem:[%s0 + $0x6c] sm:$0xf]
  %v40 = vld [vmem:[%s0 + $0x70] sm:$0xf]
  %v41 = vld [vmem:[%s0 + $0x74] sm:$0xf]
  %v42 = vld [vmem:[%s0 + $0x78] sm:$0xf]
  %v43 = vld [vmem:[%s0 + $0x7c] sm:$0xf]
  %v44 = vld [vmem:[%s1] sm:$0xff]
  %v45 = vld [vmem:[%s1 + $0x8] sm:$0xff]
  %v46 = vld [vmem:[%s1 + $0x10] sm:$0xff]
  %v47 = vld [vmem:[%s1 + $0x18] sm:$0xff]
  %v48 = vld [vmem:[%s1 + $0x20] sm:$0xff]
  %v49 = vld [vmem:[%s1 + $0x28] sm:$0xff]
  %v50 = vld [vmem:[%s1 + $0x30] sm:$0xff]
  %v51 = vld [vmem:[%s1 + $0x38] sm:$0xff]
  %v52 = vld [vmem:[%s1 + $0x40] sm:$0xff]
  %v53 = vld [vmem:[%s1 + $0x48] sm:$0xff]
  %v54 = vld [vmem:[%s1 + $0x50] sm:$0xff]
  %v55 = vld [vmem:[%s1 + $0x58] sm:$0xff]
  %v56 = vld [vmem:[%s1 + $0x60] sm:$0xff]
  %v57 = vld [vmem:[%s1 + $0x68] sm:$0xff]
  %v58 = vld [vmem:[%s1 + $0x70] sm:$0xff]
  %v59 = vld [vmem:[%s1 + $0x78] sm:$0xff]
  %v60 = vld [vmem:[%s1 + $0x80] sm:$0xff]
  %v61 = vld [vmem:[%s1 + $0x88] sm:$0xff]
  %v62 = vld [vmem:[%s1 + $0x90] sm:$0xff]
  %v63 = vld [vmem:[%s1 + $0x98] sm:$0xff]
  %v64 = vld [vmem:[%s1 + $0xa0] sm:$0xff]
  %v65 = vld [vmem:[%s1 + $0xa8] sm:$0xff]
  %v66 = vld [vmem:[%s1 + $0xb0] sm:$0xff]
  %v67 = vld [vmem:[%s1 + $0xb8] sm:$0xff]
  %v68 = vld [vmem:[%s1 + $0xc0] sm:$0xff]
  %v69 = vld [vmem:[%s1 + $0xc8] sm:$0xff]
  %v70 = vld [vmem:[%s1 + $0xd0] sm:$0xff]
  %v71 = vld [vmem:[%s1 + $0xd8] sm:$0xff]
  %v72 = vld [vmem:[%s1 + $0xe0] sm:$0xff]
  %v73 = vld [vmem:[%s1 + $0xe8] sm:$0xff]
  %v74 = vld [vmem:[%s1 + $0xf0] sm:$0xff]
  %v75 = vld [vmem:[%s1 + $0xf8] sm:$0xff]
  %v76 = vld [vmem:[%s1 + $0x100] sm:$0xff]
  %v77 = vld [vmem:[%s1 + $0x108] sm:$0xff]
  %v78 = vld [vmem:[%s1 + $0x110] sm:$0xff]
  %v79 = vld [vmem:[%s1 + $0x118] sm:$0xff]
  %v80 = vld [vmem:[%s1 + $0x120] sm:$0xff]
  %v81 = vld [vmem:[%s1 + $0x128] sm:$0xff]
  %v82 = vld [vmem:[%s1 + $0x130] sm:$0xff]
  %v83 = vld [vmem:[%s1 + $0x138] sm:$0xff]
  %v84 = vld [vmem:[%s1 + $0x140] sm:$0xff]
  %v85 = vld [vmem:[%s1 + $0x148] sm:$0xff]
  %v86 = vld [vmem:[%s1 + $0x150] sm:$0xff]
  %v87 = vld [vmem:[%s1 + $0x158] sm:$0xff]
  %v88 = vld [vmem:[%s1 + $0x160] sm:$0xff]
  %v89 = vld [vmem:[%s1 + $0x168] sm:$0xff]
  %v90 = vld [vmem:[%s1 + $0x170] sm:$0xff]
  %v91 = vld [vmem:[%s1 + $0x178] sm:$0xff]
  %v92 = vld [vmem:[%s1 + $0x180] sm:$0xff]
  %v93 = vld [vmem:[%s1 + $0x188] sm:$0xff]
  %v94 = vld [vmem:[%s1 + $0x190] sm:$0xff]
  %v95 = vld [vmem:[%s1 + $0x198] sm:$0xff]
  %v96 = vld [vmem:[%s1 + $0x1a0] sm:$0xff]
  %v97 = vld [vmem:[%s1 + $0x1a8] sm:$0xff]
  %v98 = vld [vmem:[%s1 + $0x1b0] sm:$0xff]
  %v99 = vld [vmem:[%s1 + $0x1b8] sm:$0xff]
  %v100 = vld [vmem:[%s1 + $0x1c0] sm:$0xff]
  %v101 = vld [vmem:[%s1 + $0x1c8] sm:$0xff]
  %v102 = vld [vmem:[%s1 + $0x1d0] sm:$0xff]
  %v103 = vld [vmem:[%s1 + $0x1d8] sm:$0xff]
  %v104 = vld [vmem:[%s1 + $0x1e0] sm:$0xff]
  %v105 = vld [vmem:[%s1 + $0x1e8] sm:$0xff]
  %v106 = vld [vmem:[%s1 + $0x1f0] sm:$0xff]
  %v107 = vld [vmem:[%s1 + $0x1f8] sm:$0xff]
  %v140 = vunpack.c.l.b16 %v12
  %v141 = vunpack.c.l.b16 %v13
  %v142 = vunpack.c.l.b16 %v14
  %v143 = vunpack.c.l.b16 %v15
  %v144 = vunpack.c.l.b16 %v16
  %v145 = vunpack.c.l.b16 %v17
  %v146 = vunpack.c.l.b16 %v18
  %v147 = vunpack.c.l.b16 %v19
  %v148 = vunpack.c.l.b16 %v20
  %v149 = vunpack.c.l.b16 %v21
  %v150 = vunpack.c.l.b16 %v22
  %v151 = vunpack.c.l.b16 %v23
  %v152 = vunpack.c.l.b16 %v24
  %v153 = vunpack.c.l.b16 %v25
  %v154 = vunpack.c.l.b16 %v26
  %v155 = vunpack.c.l.b16 %v27
  %v156 = vunpack.c.l.b16 %v28
  %v157 = vunpack.c.l.b16 %v29
  %v158 = vunpack.c.l.b16 %v30
  %v159 = vunpack.c.l.b16 %v31
  %v160 = vunpack.c.l.b16 %v32
  %v161 = vunpack.c.l.b16 %v33
  %v162 = vunpack.c.l.b16 %v34
  %v163 = vunpack.c.l.b16 %v35
  %v164 = vunpack.c.l.b16 %v36
  %v165 = vunpack.c.l.b16 %v37
  %v166 = vunpack.c.l.b16 %v38
  %v167 = vunpack.c.l.b16 %v39
  %v168 = vunpack.c.l.b16 %v40
  %v169 = vunpack.c.l.b16 %v41
  %v170 = vunpack.c.l.b16 %v42
  %v171 = vunpack.c.l.b16 %v43
  %v172 = vpack.c.b16 %v141, %v140
  %v173 = vpack.c.b16 %v143, %v142
  %v174 = vpack.c.b16 %v145, %v144
  %v175 = vpack.c.b16 %v147, %v146
  %v176 = vpack.c.b16 %v149, %v148
  %v177 = vpack.c.b16 %v151, %v150
  %v178 = vpack.c.b16 %v153, %v152
  %v179 = vpack.c.b16 %v155, %v154
  %v180 = vpack.c.b16 %v157, %v156
  %v181 = vpack.c.b16 %v159, %v158
  %v182 = vpack.c.b16 %v161, %v160
  %v183 = vpack.c.b16 %v163, %v162
  %v184 = vpack.c.b16 %v165, %v164
  %v185 = vpack.c.b16 %v167, %v166
  %v186 = vpack.c.b16 %v169, %v168
  %v187 = vpack.c.b16 %v171, %v170
  %v268 = vunpack.c.l.b16 %v44
  %v269 = vunpack.c.h.b16 %v44
  %v270 = vunpack.c.l.b16 %v45
  %v271 = vunpack.c.h.b16 %v45
  %v272 = vunpack.c.l.b16 %v46
  %v273 = vunpack.c.h.b16 %v46
  %v274 = vunpack.c.l.b16 %v47
  %v275 = vunpack.c.h.b16 %v47
  %v276 = vunpack.c.l.b16 %v48
  %v277 = vunpack.c.h.b16 %v48
  %v278 = vunpack.c.l.b16 %v49
  %v279 = vunpack.c.h.b16 %v49
  %v280 = vunpack.c.l.b16 %v50
  %v281 = vunpack.c.h.b16 %v50
  %v282 = vunpack.c.l.b16 %v51
  %v283 = vunpack.c.h.b16 %v51
  %v284 = vunpack.c.l.b16 %v52
  %v285 = vunpack.c.h.b16 %v52
  %v286 = vunpack.c.l.b16 %v53
  %v287 = vunpack.c.h.b16 %v53
  %v288 = vunpack.c.l.b16 %v54
  %v289 = vunpack.c.h.b16 %v54
  %v290 = vunpack.c.l.b16 %v55
  %v291 = vunpack.c.h.b16 %v55
  %v292 = vunpack.c.l.b16 %v56
  %v293 = vunpack.c.h.b16 %v56
  %v294 = vunpack.c.l.b16 %v57
  %v295 = vunpack.c.h.b16 %v57
  %v296 = vunpack.c.l.b16 %v58
  %v297 = vunpack.c.h.b16 %v58
  %v298 = vunpack.c.l.b16 %v59
  %v299 = vunpack.c.h.b16 %v59
  %v300 = vunpack.c.l.b16 %v60
  %v301 = vunpack.c.h.b16 %v60
  %v302 = vunpack.c.l.b16 %v61
  %v303 = vunpack.c.h.b16 %v61
  %v304 = vunpack.c.l.b16 %v62
  %v305 = vunpack.c.h.b16 %v62
  %v306 = vunpack.c.l.b16 %v63
  %v307 = vunpack.c.h.b16 %v63
  %v308 = vunpack.c.l.b16 %v64
  %v309 = vunpack.c.h.b16 %v64
  %v310 = vunpack.c.l.b16 %v65
  %v311 = vunpack.c.h.b16 %v65
  %v312 = vunpack.c.l.b16 %v66
  %v313 = vunpack.c.h.b16 %v66
  %v314 = vunpack.c.l.b16 %v67
  %v315 = vunpack.c.h.b16 %v67
  %v316 = vunpack.c.l.b16 %v68
  %v317 = vunpack.c.h.b16 %v68
  %v318 = vunpack.c.l.b16 %v69
  %v319 = vunpack.c.h.b16 %v69
  %v320 = vunpack.c.l.b16 %v70
  %v321 = vunpack.c.h.b16 %v70
  %v322 = vunpack.c.l.b16 %v71
  %v323 = vunpack.c.h.b16 %v71
  %v324 = vunpack.c.l.b16 %v72
  %v325 = vunpack.c.h.b16 %v72
  %v326 = vunpack.c.l.b16 %v73
  %v327 = vunpack.c.h.b16 %v73
  %v328 = vunpack.c.l.b16 %v74
  %v329 = vunpack.c.h.b16 %v74
  %v330 = vunpack.c.l.b16 %v75
  %v331 = vunpack.c.h.b16 %v75
  %v332 = vunpack.c.l.b16 %v76
  %v333 = vunpack.c.h.b16 %v76
  %v334 = vunpack.c.l.b16 %v77
  %v335 = vunpack.c.h.b16 %v77
  %v336 = vunpack.c.l.b16 %v78
  %v337 = vunpack.c.h.b16 %v78
  %v338 = vunpack.c.l.b16 %v79
  %v339 = vunpack.c.h.b16 %v79
  %v340 = vunpack.c.l.b16 %v80
  %v341 = vunpack.c.h.b16 %v80
  %v342 = vunpack.c.l.b16 %v81
  %v343 = vunpack.c.h.b16 %v81
  %v344 = vunpack.c.l.b16 %v82
  %v345 = vunpack.c.h.b16 %v82
  %v346 = vunpack.c.l.b16 %v83
  %v347 = vunpack.c.h.b16 %v83
  %v348 = vunpack.c.l.b16 %v84
  %v349 = vunpack.c.h.b16 %v84
  %v350 = vunpack.c.l.b16 %v85
  %v351 = vunpack.c.h.b16 %v85
  %v352 = vunpack.c.l.b16 %v86
  %v353 = vunpack.c.h.b16 %v86
  %v354 = vunpack.c.l.b16 %v87
  %v355 = vunpack.c.h.b16 %v87
  %v356 = vunpack.c.l.b16 %v88
  %v357 = vunpack.c.h.b16 %v88
  %v358 = vunpack.c.l.b16 %v89
  %v359 = vunpack.c.h.b16 %v89
  %v360 = vunpack.c.l.b16 %v90
  %v361 = vunpack.c.h.b16 %v90
  %v362 = vunpack.c.l.b16 %v91
  %v363 = vunpack.c.h.b16 %v91
  %v364 = vunpack.c.l.b16 %v92
  %v365 = vunpack.c.h.b16 %v92
  %v366 = vunpack.c.l.b16 %v93
  %v367 = vunpack.c.h.b16 %v93
  %v368 = vunpack.c.l.b16 %v94
  %v369 = vunpack.c.h.b16 %v94
  %v370 = vunpack.c.l.b16 %v95
  %v371 = vunpack.c.h.b16 %v95
  %v372 = vunpack.c.l.b16 %v96
  %v373 = vunpack.c.h.b16 %v96
  %v374 = vunpack.c.l.b16 %v97
  %v375 = vunpack.c.h.b16 %v97
  %v376 = vunpack.c.l.b16 %v98
  %v377 = vunpack.c.h.b16 %v98
  %v378 = vunpack.c.l.b16 %v99
  %v379 = vunpack.c.h.b16 %v99
  %v380 = vunpack.c.l.b16 %v100
  %v381 = vunpack.c.h.b16 %v100
  %v382 = vunpack.c.l.b16 %v101
  %v383 = vunpack.c.h.b16 %v101
  %v384 = vunpack.c.l.b16 %v102
  %v385 = vunpack.c.h.b16 %v102
  %v386 = vunpack.c.l.b16 %v103
  %v387 = vunpack.c.h.b16 %v103
  %v388 = vunpack.c.l.b16 %v104
  %v389 = vunpack.c.h.b16 %v104
  %v390 = vunpack.c.l.b16 %v105
  %v391 = vunpack.c.h.b16 %v105
  %v392 = vunpack.c.l.b16 %v106
  %v393 = vunpack.c.h.b16 %v106
  %v394 = vunpack.c.l.b16 %v107
  %v395 = vunpack.c.h.b16 %v107
  %v396 = vpack.c.b16 %v276, %v268
  %v397 = vpack.c.b16 %v277, %v269
  %v398 = vpack.c.b16 %v278, %v270
  %v399 = vpack.c.b16 %v279, %v271
  %v400 = vpack.c.b16 %v280, %v272
  %v401 = vpack.c.b16 %v281, %v273
  %v402 = vpack.c.b16 %v282, %v274
  %v403 = vpack.c.b16 %v283, %v275
  %v404 = vpack.c.b16 %v292, %v284
  %v405 = vpack.c.b16 %v293, %v285
  %v406 = vpack.c.b16 %v294, %v286
  %v407 = vpack.c.b16 %v295, %v287
  %v408 = vpack.c.b16 %v296, %v288
  %v409 = vpack.c.b16 %v297, %v289
  %v410 = vpack.c.b16 %v298, %v290
  %v411 = vpack.c.b16 %v299, %v291
  %v412 = vpack.c.b16 %v308, %v300
  %v413 = vpack.c.b16 %v309, %v301
  %v414 = vpack.c.b16 %v310, %v302
  %v415 = vpack.c.b16 %v311, %v303
  %v416 = vpack.c.b16 %v312, %v304
  %v417 = vpack.c.b16 %v313, %v305
  %v418 = vpack.c.b16 %v314, %v306
  %v419 = vpack.c.b16 %v315, %v307
  %v420 = vpack.c.b16 %v324, %v316
  %v421 = vpack.c.b16 %v325, %v317
  %v422 = vpack.c.b16 %v326, %v318
  %v423 = vpack.c.b16 %v327, %v319
  %v424 = vpack.c.b16 %v328, %v320
  %v425 = vpack.c.b16 %v329, %v321
  %v426 = vpack.c.b16 %v330, %v322
  %v427 = vpack.c.b16 %v331, %v323
  %v428 = vpack.c.b16 %v340, %v332
  %v429 = vpack.c.b16 %v341, %v333
  %v430 = vpack.c.b16 %v342, %v334
  %v431 = vpack.c.b16 %v343, %v335
  %v432 = vpack.c.b16 %v344, %v336
  %v433 = vpack.c.b16 %v345, %v337
  %v434 = vpack.c.b16 %v346, %v338
  %v435 = vpack.c.b16 %v347, %v339
  %v436 = vpack.c.b16 %v356, %v348
  %v437 = vpack.c.b16 %v357, %v349
  %v438 = vpack.c.b16 %v358, %v350
  %v439 = vpack.c.b16 %v359, %v351
  %v440 = vpack.c.b16 %v360, %v352
  %v441 = vpack.c.b16 %v361, %v353
  %v442 = vpack.c.b16 %v362, %v354
  %v443 = vpack.c.b16 %v363, %v355
  %v444 = vpack.c.b16 %v372, %v364
  %v445 = vpack.c.b16 %v373, %v365
  %v446 = vpack.c.b16 %v374, %v366
  %v447 = vpack.c.b16 %v375, %v367
  %v448 = vpack.c.b16 %v376, %v368
  %v449 = vpack.c.b16 %v377, %v369
  %v450 = vpack.c.b16 %v378, %v370
  %v451 = vpack.c.b16 %v379, %v371
  %v452 = vpack.c.b16 %v388, %v380
  %v453 = vpack.c.b16 %v389, %v381
  %v454 = vpack.c.b16 %v390, %v382
  %v455 = vpack.c.b16 %v391, %v383
  %v456 = vpack.c.b16 %v392, %v384
  %v457 = vpack.c.b16 %v393, %v385
  %v458 = vpack.c.b16 %v394, %v386
  %v459 = vpack.c.b16 %v395, %v387
  %524 = vmatprep.subr.bf16.mxu0 %v397
  %525 = vmatpush1.bf16.msra.mxu0 %v396
  %526 = vmatprep.subr.bf16.mxu0 %v405
  %527 = vmatpush1.bf16.msra.mxu0 %v404
  %528 = vmatprep.subr.bf16.mxu0 %v413
  %529 = vmatpush1.bf16.msra.mxu0 %v412
  %530 = vmatprep.subr.bf16.mxu0 %v421
  %531 = vmatpush1.bf16.msra.mxu0 %v420
  %532 = vmatprep.subr.bf16.mxu0 %v429
  %533 = vmatpush1.bf16.msra.mxu0 %v428
  %534 = vmatprep.subr.bf16.mxu0 %v437
  %535 = vmatpush1.bf16.msra.mxu0 %v436
  %536 = vmatprep.subr.bf16.mxu0 %v445
  %537 = vmatpush1.bf16.msra.mxu0 %v444
  %538 = vmatprep.subr.bf16.mxu0 %v453
  %539 = vmatpush1.bf16.msra.mxu0 %v452
  %540 = vmatprep.subr.bf16.mxu0 0
  %541 = vmatpush1.bf16.msra.mxu0 0
  %542 = vmatprep.subr.bf16.mxu0 0
  %543 = vmatpush1.bf16.msra.mxu0 0
  %544 = vmatprep.subr.bf16.mxu0 0
  %545 = vmatpush1.bf16.msra.mxu0 0
  %546 = vmatprep.subr.bf16.mxu0 0
  %547 = vmatpush1.bf16.msra.mxu0 0
  %548 = vmatprep.subr.bf16.mxu0 0
  %549 = vmatpush1.bf16.msra.mxu0 0
  %550 = vmatprep.subr.bf16.mxu0 0
  %551 = vmatpush1.bf16.msra.mxu0 0
  %552 = vmatprep.subr.bf16.mxu0 0
  %553 = vmatpush1.bf16.msra.mxu0 0
  %554 = vmatprep.subr.bf16.mxu0 0
  %555 = vmatpush1.bf16.msra.mxu0 0
  %556 = vmatprep.mubr.bf16.mxu0 0
  %557 = vmatmul.mubr.bf16.gmra.mrb[0].mxu0 %v172
  %v558 = vpop.f32.mrb[0].mxu0
  %v559 = vadd.f32 0.0, %v558
  %v560 = vpop.f32.mrb[0].mxu0
  %v561 = vadd.f32 0.0, %v560
  %v562 = vpop.f32.mrb[0].mxu0
  %v563 = vadd.f32 0.0, %v562
  %v564 = vpop.f32.mrb[0].mxu0
  %v565 = vadd.f32 0.0, %v564
  %566 = vmatprep.mubr.bf16.mxu0 0
  %567 = vmatmul.mubr.bf16.gmra.mrb[0].mxu0 %v173
  %v568 = vpop.f32.mrb[0].mxu0
  %v569 = vadd.f32 0.0, %v568
  %v570 = vpop.f32.mrb[0].mxu0
  %v571 = vadd.f32 0.0, %v570
  %v572 = vpop.f32.mrb[0].mxu0
  %v573 = vadd.f32 0.0, %v572
  %v574 = vpop.f32.mrb[0].mxu0
  %v575 = vadd.f32 0.0, %v574
  %576 = vmatprep.mubr.bf16.mxu0 0
  %577 = vmatmul.mubr.bf16.gmra.mrb[0].mxu0 %v174
  %v578 = vpop.f32.mrb[0].mxu0
  %v579 = vadd.f32 0.0, %v578
  %v580 = vpop.f32.mrb[0].mxu0
  %v581 = vadd.f32 0.0, %v580
  %v582 = vpop.f32.mrb[0].mxu0
  %v583 = vadd.f32 0.0, %v582
  %v584 = vpop.f32.mrb[0].mxu0
  %v585 = vadd.f32 0.0, %v584
  %586 = vmatprep.mubr.bf16.mxu0 0
  %587 = vmatmul.mubr.bf16.gmra.mrb[0].mxu0 %v175
  %v588 = vpop.f32.mrb[0].mxu0
  %v589 = vadd.f32 0.0, %v588
  %v590 = vpop.f32.mrb[0].mxu0
  %v591 = vadd.f32 0.0, %v590
  %v592 = vpop.f32.mrb[0].mxu0
  %v593 = vadd.f32 0.0, %v592
  %v594 = vpop.f32.mrb[0].mxu0
  %v595 = vadd.f32 0.0, %v594
  %596 = vmatprep.mubr.bf16.mxu0 0
  %597 = vmatmul.mubr.bf16.gmra.mrb[0].mxu0 %v176
  %v598 = vpop.f32.mrb[0].mxu0
  %v599 = vadd.f32 0.0, %v598
  %v600 = vpop.f32.mrb[0].mxu0
  %v601 = vadd.f32 0.0, %v600
  %v602 = vpop.f32.mrb[0].mxu0
  %v603 = vadd.f32 0.0, %v602
  %v604 = vpop.f32.mrb[0].mxu0
  %v605 = vadd.f32 0.0, %v604
  %606 = vmatprep.mubr.bf16.mxu0 0
  %607 = vmatmul.mubr.bf16.gmra.mrb[0].mxu0 %v177
  %v608 = vpop.f32.mrb[0].mxu0
  %v609 = vadd.f32 0.0, %v608
  %v610 = vpop.f32.mrb[0].mxu0
  %v611 = vadd.f32 0.0, %v610
  %v612 = vpop.f32.mrb[0].mxu0
  %v613 = vadd.f32 0.0, %v612
  %v614 = vpop.f32.mrb[0].mxu0
  %v615 = vadd.f32 0.0, %v614
  %616 = vmatprep.mubr.bf16.mxu0 0
  %617 = vmatmul.mubr.bf16.gmra.mrb[0].mxu0 %v178
  %v618 = vpop.f32.mrb[0].mxu0
  %v619 = vadd.f32 0.0, %v618
  %v620 = vpop.f32.mrb[0].mxu0
  %v621 = vadd.f32 0.0, %v620
  %v622 = vpop.f32.mrb[0].mxu0
  %v623 = vadd.f32 0.0, %v622
  %v624 = vpop.f32.mrb[0].mxu0
  %v625 = vadd.f32 0.0, %v624
  %626 = vmatprep.mubr.bf16.mxu0 0
  %627 = vmatmul.mubr.bf16.gmra.mrb[0].mxu0 %v179
  %v628 = vpop.f32.mrb[0].mxu0
  %v629 = vadd.f32 0.0, %v628
  %v630 = vpop.f32.mrb[0].mxu0
  %v631 = vadd.f32 0.0, %v630
  %v632 = vpop.f32.mrb[0].mxu0
  %v633 = vadd.f32 0.0, %v632
  %v634 = vpop.f32.mrb[0].mxu0
  %v635 = vadd.f32 0.0, %v634
  %636 = vmatprep.mubr.bf16.mxu0 0
  %637 = vmatmul.mubr.bf16.gmra.mrb[0].mxu0 %v180
  %v638 = vpop.f32.mrb[0].mxu0
  %v639 = vadd.f32 0.0, %v638
  %v640 = vpop.f32.mrb[0].mxu0
  %v641 = vadd.f32 0.0, %v640
  %v642 = vpop.f32.mrb[0].mxu0
  %v643 = vadd.f32 0.0, %v642
  %v644 = vpop.f32.mrb[0].mxu0
  %v645 = vadd.f32 0.0, %v644
  %646 = vmatprep.mubr.bf16.mxu0 0
  %647 = vmatmul.mubr.bf16.gmra.mrb[0].mxu0 %v181
  %v648 = vpop.f32.mrb[0].mxu0
  %v649 = vadd.f32 0.0, %v648
  %v650 = vpop.f32.mrb[0].mxu0
  %v651 = vadd.f32 0.0, %v650
  %v652 = vpop.f32.mrb[0].mxu0
  %v653 = vadd.f32 0.0, %v652
  %v654 = vpop.f32.mrb[0].mxu0
  %v655 = vadd.f32 0.0, %v654
  %656 = vmatprep.mubr.bf16.mxu0 0
  %657 = vmatmul.mubr.bf16.gmra.mrb[0].mxu0 %v182
  %v658 = vpop.f32.mrb[0].mxu0
  %v659 = vadd.f32 0.0, %v658
  %v660 = vpop.f32.mrb[0].mxu0
  %v661 = vadd.f32 0.0, %v660
  %v662 = vpop.f32.mrb[0].mxu0
  %v663 = vadd.f32 0.0, %v662
  %v664 = vpop.f32.mrb[0].mxu0
  %v665 = vadd.f32 0.0, %v664
  %666 = vmatprep.mubr.bf16.mxu0 0
  %667 = vmatmul.mubr.bf16.gmra.mrb[0].mxu0 %v183
  %v668 = vpop.f32.mrb[0].mxu0
  %v669 = vadd.f32 0.0, %v668
  %v670 = vpop.f32.mrb[0].mxu0
  %v671 = vadd.f32 0.0, %v670
  %v672 = vpop.f32.mrb[0].mxu0
  %v673 = vadd.f32 0.0, %v672
  %v674 = vpop.f32.mrb[0].mxu0
  %v675 = vadd.f32 0.0, %v674
  %676 = vmatprep.mubr.bf16.mxu0 0
  %677 = vmatmul.mubr.bf16.gmra.mrb[0].mxu0 %v184
  %v678 = vpop.f32.mrb[0].mxu0
  %v679 = vadd.f32 0.0, %v678
  %v680 = vpop.f32.mrb[0].mxu0
  %v681 = vadd.f32 0.0, %v680
  %v682 = vpop.f32.mrb[0].mxu0
  %v683 = vadd.f32 0.0, %v682
  %v684 = vpop.f32.mrb[0].mxu0
  %v685 = vadd.f32 0.0, %v684
  %686 = vmatprep.mubr.bf16.mxu0 0
  %687 = vmatmul.mubr.bf16.gmra.mrb[0].mxu0 %v185
  %v688 = vpop.f32.mrb[0].mxu0
  %v689 = vadd.f32 0.0, %v688
  %v690 = vpop.f32.mrb[0].mxu0
  %v691 = vadd.f32 0.0, %v690
  %v692 = vpop.f32.mrb[0].mxu0
  %v693 = vadd.f32 0.0, %v692
  %v694 = vpop.f32.mrb[0].mxu0
  %v695 = vadd.f32 0.0, %v694
  %696 = vmatprep.mubr.bf16.mxu0 0
  %697 = vmatmul.mubr.bf16.gmra.mrb[0].mxu0 %v186
  %v698 = vpop.f32.mrb[0].mxu0
  %v699 = vadd.f32 0.0, %v698
  %v700 = vpop.f32.mrb[0].mxu0
  %v701 = vadd.f32 0.0, %v700
  %v702 = vpop.f32.mrb[0].mxu0
  %v703 = vadd.f32 0.0, %v702
  %v704 = vpop.f32.mrb[0].mxu0
  %v705 = vadd.f32 0.0, %v704
  %706 = vmatprep.mubr.bf16.mxu0 0
  %707 = vmatmul.mubr.bf16.gmra.mrb[0].mxu0 %v187
  %v708 = vpop.f32.mrb[0].mxu0
  %v709 = vadd.f32 0.0, %v708
  %v710 = vpop.f32.mrb[0].mxu0
  %v711 = vadd.f32 0.0, %v710
  %v712 = vpop.f32.mrb[0].mxu0
  %v713 = vadd.f32 0.0, %v712
  %v714 = vpop.f32.mrb[0].mxu0
  %v715 = vadd.f32 0.0, %v714
  %716 = vdwg.mxu0
  %717 = vmatprep.subr.bf16.mxu0 %v399
  %718 = vmatpush1.bf16.msra.mxu0 %v398
  %719 = vmatprep.subr.bf16.mxu0 %v407
  %720 = vmatpush1.bf16.msra.mxu0 %v406
  %721 = vmatprep.subr.bf16.mxu0 %v415
  %722 = vmatpush1.bf16.msra.mxu0 %v414
  %723 = vmatprep.subr.bf16.mxu0 %v423
  %724 = vmatpush1.bf16.msra.mxu0 %v422
  %725 = vmatprep.subr.bf16.mxu0 %v431
  %726 = vmatpush1.bf16.msra.mxu0 %v430
  %727 = vmatprep.subr.bf16.mxu0 %v439
  %728 = vmatpush1.bf16.msra.mxu0 %v438
  %729 = vmatprep.subr.bf16.mxu0 %v447
  %730 = vmatpush1.bf16.msra.mxu0 %v446
  %731 = vmatprep.subr.bf16.mxu0 %v455
  %732 = vmatpush1.bf16.msra.mxu0 %v454
  %733 = vmatprep.subr.bf16.mxu0 0
  %734 = vmatpush1.bf16.msra.mxu0 0
  %735 = vmatprep.subr.bf16.mxu0 0
  %736 = vmatpush1.bf16.msra.mxu0 0
  %737 = vmatprep.subr.bf16.mxu0 0
  %738 = vmatpush1.bf16.msra.mxu0 0
  %739 = vmatprep.subr.bf16.mxu0 0
  %740 = vmatpush1.bf16.msra.mxu0 0
  %741 = vmatprep.subr.bf16.mxu0 0
  %742 = vmatpush1.bf16.msra.mxu0 0
  %743 = vmatprep.subr.bf16.mxu0 0
  %744 = vmatpush1.bf16.msra.mxu0 0
  %745 = vmatprep.subr.bf16.mxu0 0
  %746 = vmatpush1.bf16.msra.mxu0 0
  %747 = vmatprep.subr.bf16.mxu0 0
  %748 = vmatpush1.bf16.msra.mxu0 0
  %749 = vmatprep.mubr.bf16.mxu0 0
  %750 = vmatmul.mubr.bf16.gmra.mrb[0].mxu0 %v172
  %v751 = vpop.f32.mrb[0].mxu0
  %v752 = vadd.f32 0.0, %v751
  %v753 = vpop.f32.mrb[0].mxu0
  %v754 = vadd.f32 0.0, %v753
  %v755 = vpop.f32.mrb[0].mxu0
  %v756 = vadd.f32 0.0, %v755
  %v757 = vpop.f32.mrb[0].mxu0
  %v758 = vadd.f32 0.0, %v757
  %759 = vmatprep.mubr.bf16.mxu0 0
  %760 = vmatmul.mubr.bf16.gmra.mrb[0].mxu0 %v173
  %v761 = vpop.f32.mrb[0].mxu0
  %v762 = vadd.f32 0.0, %v761
  %v763 = vpop.f32.mrb[0].mxu0
  %v764 = vadd.f32 0.0, %v763
  %v765 = vpop.f32.mrb[0].mxu0
  %v766 = vadd.f32 0.0, %v765
  %v767 = vpop.f32.mrb[0].mxu0
  %v768 = vadd.f32 0.0, %v767
  %769 = vmatprep.mubr.bf16.mxu0 0
  %770 = vmatmul.mubr.bf16.gmra.mrb[0].mxu0 %v174
  %v771 = vpop.f32.mrb[0].mxu0
  %v772 = vadd.f32 0.0, %v771
  %v773 = vpop.f32.mrb[0].mxu0
  %v774 = vadd.f32 0.0, %v773
  %v775 = vpop.f32.mrb[0].mxu0
  %v776 = vadd.f32 0.0, %v775
  %v777 = vpop.f32.mrb[0].mxu0
  %v778 = vadd.f32 0.0, %v777
  %779 = vmatprep.mubr.bf16.mxu0 0
  %780 = vmatmul.mubr.bf16.gmra.mrb[0].mxu0 %v175
  %v781 = vpop.f32.mrb[0].mxu0
  %v782 = vadd.f32 0.0, %v781
  %v783 = vpop.f32.mrb[0].mxu0
  %v784 = vadd.f32 0.0, %v783
  %v785 = vpop.f32.mrb[0].mxu0
  %v786 = vadd.f32 0.0, %v785
  %v787 = vpop.f32.mrb[0].mxu0
  %v788 = vadd.f32 0.0, %v787
  %789 = vmatprep.mubr.bf16.mxu0 0
  %790 = vmatmul.mubr.bf16.gmra.mrb[0].mxu0 %v176
  %v791 = vpop.f32.mrb[0].mxu0
  %v792 = vadd.f32 0.0, %v791
  %v793 = vpop.f32.mrb[0].mxu0
  %v794 = vadd.f32 0.0, %v793
  %v795 = vpop.f32.mrb[0].mxu0
  %v796 = vadd.f32 0.0, %v795
  %v797 = vpop.f32.mrb[0].mxu0
  %v798 = vadd.f32 0.0, %v797
  %799 = vmatprep.mubr.bf16.mxu0 0
  %800 = vmatmul.mubr.bf16.gmra.mrb[0].mxu0 %v177
  %v801 = vpop.f32.mrb[0].mxu0
  %v802 = vadd.f32 0.0, %v801
  %v803 = vpop.f32.mrb[0].mxu0
  %v804 = vadd.f32 0.0, %v803
  %v805 = vpop.f32.mrb[0].mxu0
  %v806 = vadd.f32 0.0, %v805
  %v807 = vpop.f32.mrb[0].mxu0
  %v808 = vadd.f32 0.0, %v807
  %809 = vmatprep.mubr.bf16.mxu0 0
  %810 = vmatmul.mubr.bf16.gmra.mrb[0].mxu0 %v178
  %v811 = vpop.f32.mrb[0].mxu0
  %v812 = vadd.f32 0.0, %v811
  %v813 = vpop.f32.mrb[0].mxu0
  %v814 = vadd.f32 0.0, %v813
  %v815 = vpop.f32.mrb[0].mxu0
  %v816 = vadd.f32 0.0, %v815
  %v817 = vpop.f32.mrb[0].mxu0
  %v818 = vadd.f32 0.0, %v817
  %819 = vmatprep.mubr.bf16.mxu0 0
  %820 = vmatmul.mubr.bf16.gmra.mrb[0].mxu0 %v179
  %v821 = vpop.f32.mrb[0].mxu0
  %v822 = vadd.f32 0.0, %v821
  %v823 = vpop.f32.mrb[0].mxu0
  %v824 = vadd.f32 0.0, %v823
  %v825 = vpop.f32.mrb[0].mxu0
  %v826 = vadd.f32 0.0, %v825
  %v827 = vpop.f32.mrb[0].mxu0
  %v828 = vadd.f32 0.0, %v827
  %829 = vmatprep.mubr.bf16.mxu0 0
  %830 = vmatmul.mubr.bf16.gmra.mrb[0].mxu0 %v180
  %v831 = vpop.f32.mrb[0].mxu0
  %v832 = vadd.f32 0.0, %v831
  %v833 = vpop.f32.mrb[0].mxu0
  %v834 = vadd.f32 0.0, %v833
  %v835 = vpop.f32.mrb[0].mxu0
  %v836 = vadd.f32 0.0, %v835
  %v837 = vpop.f32.mrb[0].mxu0
  %v838 = vadd.f32 0.0, %v837
  %839 = vmatprep.mubr.bf16.mxu0 0
  %840 = vmatmul.mubr.bf16.gmra.mrb[0].mxu0 %v181
  %v841 = vpop.f32.mrb[0].mxu0
  %v842 = vadd.f32 0.0, %v841
  %v843 = vpop.f32.mrb[0].mxu0
  %v844 = vadd.f32 0.0, %v843
  %v845 = vpop.f32.mrb[0].mxu0
  %v846 = vadd.f32 0.0, %v845
  %v847 = vpop.f32.mrb[0].mxu0
  %v848 = vadd.f32 0.0, %v847
  %849 = vmatprep.mubr.bf16.mxu0 0
  %850 = vmatmul.mubr.bf16.gmra.mrb[0].mxu0 %v182
  %v851 = vpop.f32.mrb[0].mxu0
  %v852 = vadd.f32 0.0, %v851
  %v853 = vpop.f32.mrb[0].mxu0
  %v854 = vadd.f32 0.0, %v853
  %v855 = vpop.f32.mrb[0].mxu0
  %v856 = vadd.f32 0.0, %v855
  %v857 = vpop.f32.mrb[0].mxu0
  %v858 = vadd.f32 0.0, %v857
  %859 = vmatprep.mubr.bf16.mxu0 0
  %860 = vmatmul.mubr.bf16.gmra.mrb[0].mxu0 %v183
  %v861 = vpop.f32.mrb[0].mxu0
  %v862 = vadd.f32 0.0, %v861
  %v863 = vpop.f32.mrb[0].mxu0
  %v864 = vadd.f32 0.0, %v863
  %v865 = vpop.f32.mrb[0].mxu0
  %v866 = vadd.f32 0.0, %v865
  %v867 = vpop.f32.mrb[0].mxu0
  %v868 = vadd.f32 0.0, %v867
  %869 = vmatprep.mubr.bf16.mxu0 0
  %870 = vmatmul.mubr.bf16.gmra.mrb[0].mxu0 %v184
  %v871 = vpop.f32.mrb[0].mxu0
  %v872 = vadd.f32 0.0, %v871
  %v873 = vpop.f32.mrb[0].mxu0
  %v874 = vadd.f32 0.0, %v873
  %v875 = vpop.f32.mrb[0].mxu0
  %v876 = vadd.f32 0.0, %v875
  %v877 = vpop.f32.mrb[0].mxu0
  %v878 = vadd.f32 0.0, %v877
  %879 = vmatprep.mubr.bf16.mxu0 0
  %880 = vmatmul.mubr.bf16.gmra.mrb[0].mxu0 %v185
  %v881 = vpop.f32.mrb[0].mxu0
  %v882 = vadd.f32 0.0, %v881
  %v883 = vpop.f32.mrb[0].mxu0
  %v884 = vadd.f32 0.0, %v883
  %v885 = vpop.f32.mrb[0].mxu0
  %v886 = vadd.f32 0.0, %v885
  %v887 = vpop.f32.mrb[0].mxu0
  %v888 = vadd.f32 0.0, %v887
  %889 = vmatprep.mubr.bf16.mxu0 0
  %890 = vmatmul.mubr.bf16.gmra.mrb[0].mxu0 %v186
  %v891 = vpop.f32.mrb[0].mxu0
  %v892 = vadd.f32 0.0, %v891
  %v893 = vpop.f32.mrb[0].mxu0
  %v894 = vadd.f32 0.0, %v893
  %v895 = vpop.f32.mrb[0].mxu0
  %v896 = vadd.f32 0.0, %v895
  %v897 = vpop.f32.mrb[0].mxu0
  %v898 = vadd.f32 0.0, %v897
  %899 = vmatprep.mubr.bf16.mxu0 0
  %900 = vmatmul.mubr.bf16.gmra.mrb[0].mxu0 %v187
  %v901 = vpop.f32.mrb[0].mxu0
  %v902 = vadd.f32 0.0, %v901
  %v903 = vpop.f32.mrb[0].mxu0
  %v904 = vadd.f32 0.0, %v903
  %v905 = vpop.f32.mrb[0].mxu0
  %v906 = vadd.f32 0.0, %v905
  %v907 = vpop.f32.mrb[0].mxu0
  %v908 = vadd.f32 0.0, %v907
  %909 = vdwg.mxu0
  %910 = vmatprep.subr.bf16.mxu0 %v401
  %911 = vmatpush1.bf16.msra.mxu0 %v400
  %912 = vmatprep.subr.bf16.mxu0 %v409
  %913 = vmatpush1.bf16.msra.mxu0 %v408
  %914 = vmatprep.subr.bf16.mxu0 %v417
  %915 = vmatpush1.bf16.msra.mxu0 %v416
  %916 = vmatprep.subr.bf16.mxu0 %v425
  %917 = vmatpush1.bf16.msra.mxu0 %v424
  %918 = vmatprep.subr.bf16.mxu0 %v433
  %919 = vmatpush1.bf16.msra.mxu0 %v432
  %920 = vmatprep.subr.bf16.mxu0 %v441
  %921 = vmatpush1.bf16.msra.mxu0 %v440
  %922 = vmatprep.subr.bf16.mxu0 %v449
  %923 = vmatpush1.bf16.msra.mxu0 %v448
  %924 = vmatprep.subr.bf16.mxu0 %v457
  %925 = vmatpush1.bf16.msra.mxu0 %v456
  %926 = vmatprep.subr.bf16.mxu0 0
  %927 = vmatpush1.bf16.msra.mxu0 0
  %928 = vmatprep.subr.bf16.mxu0 0
  %929 = vmatpush1.bf16.msra.mxu0 0
  %930 = vmatprep.subr.bf16.mxu0 0
  %931 = vmatpush1.bf16.msra.mxu0 0
  %932 = vmatprep.subr.bf16.mxu0 0
  %933 = vmatpush1.bf16.msra.mxu0 0
  %934 = vmatprep.subr.bf16.mxu0 0
  %935 = vmatpush1.bf16.msra.mxu0 0
  %936 = vmatprep.subr.bf16.mxu0 0
  %937 = vmatpush1.bf16.msra.mxu0 0
  %938 = vmatprep.subr.bf16.mxu0 0
  %939 = vmatpush1.bf16.msra.mxu0 0
  %940 = vmatprep.subr.bf16.mxu0 0
  %941 = vmatpush1.bf16.msra.mxu0 0
  %942 = vmatprep.mubr.bf16.mxu0 0
  %943 = vmatmul.mubr.bf16.gmra.mrb[0].mxu0 %v172
  %v944 = vpop.f32.mrb[0].mxu0
  %v945 = vadd.f32 0.0, %v944
  %v946 = vpop.f32.mrb[0].mxu0
  %v947 = vadd.f32 0.0, %v946
  %v948 = vpop.f32.mrb[0].mxu0
  %v949 = vadd.f32 0.0, %v948
  %v950 = vpop.f32.mrb[0].mxu0
  %v951 = vadd.f32 0.0, %v950
  %952 = vmatprep.mubr.bf16.mxu0 0
  %953 = vmatmul.mubr.bf16.gmra.mrb[0].mxu0 %v173
  %v954 = vpop.f32.mrb[0].mxu0
  %v955 = vadd.f32 0.0, %v954
  %v956 = vpop.f32.mrb[0].mxu0
  %v957 = vadd.f32 0.0, %v956
  %v958 = vpop.f32.mrb[0].mxu0
  %v959 = vadd.f32 0.0, %v958
  %v960 = vpop.f32.mrb[0].mxu0
  %v961 = vadd.f32 0.0, %v960
  %962 = vmatprep.mubr.bf16.mxu0 0
  %963 = vmatmul.mubr.bf16.gmra.mrb[0].mxu0 %v174
  %v964 = vpop.f32.mrb[0].mxu0
  %v965 = vadd.f32 0.0, %v964
  %v966 = vpop.f32.mrb[0].mxu0
  %v967 = vadd.f32 0.0, %v966
  %v968 = vpop.f32.mrb[0].mxu0
  %v969 = vadd.f32 0.0, %v968
  %v970 = vpop.f32.mrb[0].mxu0
  %v971 = vadd.f32 0.0, %v970
  %972 = vmatprep.mubr.bf16.mxu0 0
  %973 = vmatmul.mubr.bf16.gmra.mrb[0].mxu0 %v175
  %v974 = vpop.f32.mrb[0].mxu0
  %v975 = vadd.f32 0.0, %v974
  %v976 = vpop.f32.mrb[0].mxu0
  %v977 = vadd.f32 0.0, %v976
  %v978 = vpop.f32.mrb[0].mxu0
  %v979 = vadd.f32 0.0, %v978
  %v980 = vpop.f32.mrb[0].mxu0
  %v981 = vadd.f32 0.0, %v980
  %982 = vmatprep.mubr.bf16.mxu0 0
  %983 = vmatmul.mubr.bf16.gmra.mrb[0].mxu0 %v176
  %v984 = vpop.f32.mrb[0].mxu0
  %v985 = vadd.f32 0.0, %v984
  %v986 = vpop.f32.mrb[0].mxu0
  %v987 = vadd.f32 0.0, %v986
  %v988 = vpop.f32.mrb[0].mxu0
  %v989 = vadd.f32 0.0, %v988
  %v990 = vpop.f32.mrb[0].mxu0
  %v991 = vadd.f32 0.0, %v990
  %992 = vmatprep.mubr.bf16.mxu0 0
  %993 = vmatmul.mubr.bf16.gmra.mrb[0].mxu0 %v177
  %v994 = vpop.f32.mrb[0].mxu0
  %v995 = vadd.f32 0.0, %v994
  %v996 = vpop.f32.mrb[0].mxu0
  %v997 = vadd.f32 0.0, %v996
  %v998 = vpop.f32.mrb[0].mxu0
  %v999 = vadd.f32 0.0, %v998
  %v1000 = vpop.f32.mrb[0].mxu0
  %v1001 = vadd.f32 0.0, %v1000
  %1002 = vmatprep.mubr.bf16.mxu0 0
  %1003 = vmatmul.mubr.bf16.gmra.mrb[0].mxu0 %v178
  %v1004 = vpop.f32.mrb[0].mxu0
  %v1005 = vadd.f32 0.0, %v1004
  %v1006 = vpop.f32.mrb[0].mxu0
  %v1007 = vadd.f32 0.0, %v1006
  %v1008 = vpop.f32.mrb[0].mxu0
  %v1009 = vadd.f32 0.0, %v1008
  %v1010 = vpop.f32.mrb[0].mxu0
  %v1011 = vadd.f32 0.0, %v1010
  %1012 = vmatprep.mubr.bf16.mxu0 0
  %1013 = vmatmul.mubr.bf16.gmra.mrb[0].mxu0 %v179
  %v1014 = vpop.f32.mrb[0].mxu0
  %v1015 = vadd.f32 0.0, %v1014
  %v1016 = vpop.f32.mrb[0].mxu0
  %v1017 = vadd.f32 0.0, %v1016
  %v1018 = vpop.f32.mrb[0].mxu0
  %v1019 = vadd.f32 0.0, %v1018
  %v1020 = vpop.f32.mrb[0].mxu0
  %v1021 = vadd.f32 0.0, %v1020
  %1022 = vmatprep.mubr.bf16.mxu0 0
  %1023 = vmatmul.mubr.bf16.gmra.mrb[0].mxu0 %v180
  %v1024 = vpop.f32.mrb[0].mxu0
  %v1025 = vadd.f32 0.0, %v1024
  %v1026 = vpop.f32.mrb[0].mxu0
  %v1027 = vadd.f32 0.0, %v1026
  %v1028 = vpop.f32.mrb[0].mxu0
  %v1029 = vadd.f32 0.0, %v1028
  %v1030 = vpop.f32.mrb[0].mxu0
  %v1031 = vadd.f32 0.0, %v1030
  %1032 = vmatprep.mubr.bf16.mxu0 0
  %1033 = vmatmul.mubr.bf16.gmra.mrb[0].mxu0 %v181
  %v1034 = vpop.f32.mrb[0].mxu0
  %v1035 = vadd.f32 0.0, %v1034
  %v1036 = vpop.f32.mrb[0].mxu0
  %v1037 = vadd.f32 0.0, %v1036
  %v1038 = vpop.f32.mrb[0].mxu0
  %v1039 = vadd.f32 0.0, %v1038
  %v1040 = vpop.f32.mrb[0].mxu0
  %v1041 = vadd.f32 0.0, %v1040
  %1042 = vmatprep.mubr.bf16.mxu0 0
  %1043 = vmatmul.mubr.bf16.gmra.mrb[0].mxu0 %v182
  %v1044 = vpop.f32.mrb[0].mxu0
  %v1045 = vadd.f32 0.0, %v1044
  %v1046 = vpop.f32.mrb[0].mxu0
  %v1047 = vadd.f32 0.0, %v1046
  %v1048 = vpop.f32.mrb[0].mxu0
  %v1049 = vadd.f32 0.0, %v1048
  %v1050 = vpop.f32.mrb[0].mxu0
  %v1051 = vadd.f32 0.0, %v1050
  %1052 = vmatprep.mubr.bf16.mxu0 0
  %1053 = vmatmul.mubr.bf16.gmra.mrb[0].mxu0 %v183
  %v1054 = vpop.f32.mrb[0].mxu0
  %v1055 = vadd.f32 0.0, %v1054
  %v1056 = vpop.f32.mrb[0].mxu0
  %v1057 = vadd.f32 0.0, %v1056
  %v1058 = vpop.f32.mrb[0].mxu0
  %v1059 = vadd.f32 0.0, %v1058
  %v1060 = vpop.f32.mrb[0].mxu0
  %v1061 = vadd.f32 0.0, %v1060
  %1062 = vmatprep.mubr.bf16.mxu0 0
  %1063 = vmatmul.mubr.bf16.gmra.mrb[0].mxu0 %v184
  %v1064 = vpop.f32.mrb[0].mxu0
  %v1065 = vadd.f32 0.0, %v1064
  %v1066 = vpop.f32.mrb[0].mxu0
  %v1067 = vadd.f32 0.0, %v1066
  %v1068 = vpop.f32.mrb[0].mxu0
  %v1069 = vadd.f32 0.0, %v1068
  %v1070 = vpop.f32.mrb[0].mxu0
  %v1071 = vadd.f32 0.0, %v1070
  %1072 = vmatprep.mubr.bf16.mxu0 0
  %1073 = vmatmul.mubr.bf16.gmra.mrb[0].mxu0 %v185
  %v1074 = vpop.f32.mrb[0].mxu0
  %v1075 = vadd.f32 0.0, %v1074
  %v1076 = vpop.f32.mrb[0].mxu0
  %v1077 = vadd.f32 0.0, %v1076
  %v1078 = vpop.f32.mrb[0].mxu0
  %v1079 = vadd.f32 0.0, %v1078
  %v1080 = vpop.f32.mrb[0].mxu0
  %v1081 = vadd.f32 0.0, %v1080
  %1082 = vmatprep.mubr.bf16.mxu0 0
  %1083 = vmatmul.mubr.bf16.gmra.mrb[0].mxu0 %v186
  %v1084 = vpop.f32.mrb[0].mxu0
  %v1085 = vadd.f32 0.0, %v1084
  %v1086 = vpop.f32.mrb[0].mxu0
  %v1087 = vadd.f32 0.0, %v1086
  %v1088 = vpop.f32.mrb[0].mxu0
  %v1089 = vadd.f32 0.0, %v1088
  %v1090 = vpop.f32.mrb[0].mxu0
  %v1091 = vadd.f32 0.0, %v1090
  %1092 = vmatprep.mubr.bf16.mxu0 0
  %1093 = vmatmul.mubr.bf16.gmra.mrb[0].mxu0 %v187
  %v1094 = vpop.f32.mrb[0].mxu0
  %v1095 = vadd.f32 0.0, %v1094
  %v1096 = vpop.f32.mrb[0].mxu0
  %v1097 = vadd.f32 0.0, %v1096
  %v1098 = vpop.f32.mrb[0].mxu0
  %v1099 = vadd.f32 0.0, %v1098
  %v1100 = vpop.f32.mrb[0].mxu0
  %v1101 = vadd.f32 0.0, %v1100
  %1102 = vdwg.mxu0
  %1103 = vmatprep.subr.bf16.mxu0 %v403
  %1104 = vmatpush1.bf16.msra.mxu0 %v402
  %1105 = vmatprep.subr.bf16.mxu0 %v411
  %1106 = vmatpush1.bf16.msra.mxu0 %v410
  %1107 = vmatprep.subr.bf16.mxu0 %v419
  %1108 = vmatpush1.bf16.msra.mxu0 %v418
  %1109 = vmatprep.subr.bf16.mxu0 %v427
  %1110 = vmatpush1.bf16.msra.mxu0 %v426
  %1111 = vmatprep.subr.bf16.mxu0 %v435
  %1112 = vmatpush1.bf16.msra.mxu0 %v434
  %1113 = vmatprep.subr.bf16.mxu0 %v443
  %1114 = vmatpush1.bf16.msra.mxu0 %v442
  %1115 = vmatprep.subr.bf16.mxu0 %v451
  %1116 = vmatpush1.bf16.msra.mxu0 %v450
  %1117 = vmatprep.subr.bf16.mxu0 %v459
  %1118 = vmatpush1.bf16.msra.mxu0 %v458
  %1119 = vmatprep.subr.bf16.mxu0 0
  %1120 = vmatpush1.bf16.msra.mxu0 0
  %1121 = vmatprep.subr.bf16.mxu0 0
  %1122 = vmatpush1.bf16.msra.mxu0 0
  %1123 = vmatprep.subr.bf16.mxu0 0
  %1124 = vmatpush1.bf16.msra.mxu0 0
  %1125 = vmatprep.subr.bf16.mxu0 0
  %1126 = vmatpush1.bf16.msra.mxu0 0
  %1127 = vmatprep.subr.bf16.mxu0 0
  %1128 = vmatpush1.bf16.msra.mxu0 0
  %1129 = vmatprep.subr.bf16.mxu0 0
  %1130 = vmatpush1.bf16.msra.mxu0 0
  %1131 = vmatprep.subr.bf16.mxu0 0
  %1132 = vmatpush1.bf16.msra.mxu0 0
  %1133 = vmatprep.subr.bf16.mxu0 0
  %1134 = vmatpush1.bf16.msra.mxu0 0
  %1135 = vmatprep.mubr.bf16.mxu0 0
  %1136 = vmatmul.mubr.bf16.gmra.mrb[0].mxu0 %v172
  %v1137 = vpop.f32.mrb[0].mxu0
  %v1138 = vadd.f32 0.0, %v1137
  %v1139 = vpop.f32.mrb[0].mxu0
  %v1140 = vadd.f32 0.0, %v1139
  %v1141 = vpop.f32.mrb[0].mxu0
  %v1142 = vadd.f32 0.0, %v1141
  %v1143 = vpop.f32.mrb[0].mxu0
  %v1144 = vadd.f32 0.0, %v1143
  %1145 = vmatprep.mubr.bf16.mxu0 0
  %1146 = vmatmul.mubr.bf16.gmra.mrb[0].mxu0 %v173
  %v1147 = vpop.f32.mrb[0].mxu0
  %v1148 = vadd.f32 0.0, %v1147
  %v1149 = vpop.f32.mrb[0].mxu0
  %v1150 = vadd.f32 0.0, %v1149
  %v1151 = vpop.f32.mrb[0].mxu0
  %v1152 = vadd.f32 0.0, %v1151
  %v1153 = vpop.f32.mrb[0].mxu0
  %v1154 = vadd.f32 0.0, %v1153
  %1155 = vmatprep.mubr.bf16.mxu0 0
  %1156 = vmatmul.mubr.bf16.gmra.mrb[0].mxu0 %v174
  %v1157 = vpop.f32.mrb[0].mxu0
  %v1158 = vadd.f32 0.0, %v1157
  %v1159 = vpop.f32.mrb[0].mxu0
  %v1160 = vadd.f32 0.0, %v1159
  %v1161 = vpop.f32.mrb[0].mxu0
  %v1162 = vadd.f32 0.0, %v1161
  %v1163 = vpop.f32.mrb[0].mxu0
  %v1164 = vadd.f32 0.0, %v1163
  %1165 = vmatprep.mubr.bf16.mxu0 0
  %1166 = vmatmul.mubr.bf16.gmra.mrb[0].mxu0 %v175
  %v1167 = vpop.f32.mrb[0].mxu0
  %v1168 = vadd.f32 0.0, %v1167
  %v1169 = vpop.f32.mrb[0].mxu0
  %v1170 = vadd.f32 0.0, %v1169
  %v1171 = vpop.f32.mrb[0].mxu0
  %v1172 = vadd.f32 0.0, %v1171
  %v1173 = vpop.f32.mrb[0].mxu0
  %v1174 = vadd.f32 0.0, %v1173
  %1175 = vmatprep.mubr.bf16.mxu0 0
  %1176 = vmatmul.mubr.bf16.gmra.mrb[0].mxu0 %v176
  %v1177 = vpop.f32.mrb[0].mxu0
  %v1178 = vadd.f32 0.0, %v1177
  %v1179 = vpop.f32.mrb[0].mxu0
  %v1180 = vadd.f32 0.0, %v1179
  %v1181 = vpop.f32.mrb[0].mxu0
  %v1182 = vadd.f32 0.0, %v1181
  %v1183 = vpop.f32.mrb[0].mxu0
  %v1184 = vadd.f32 0.0, %v1183
  %1185 = vmatprep.mubr.bf16.mxu0 0
  %1186 = vmatmul.mubr.bf16.gmra.mrb[0].mxu0 %v177
  %v1187 = vpop.f32.mrb[0].mxu0
  %v1188 = vadd.f32 0.0, %v1187
  %v1189 = vpop.f32.mrb[0].mxu0
  %v1190 = vadd.f32 0.0, %v1189
  %v1191 = vpop.f32.mrb[0].mxu0
  %v1192 = vadd.f32 0.0, %v1191
  %v1193 = vpop.f32.mrb[0].mxu0
  %v1194 = vadd.f32 0.0, %v1193
  %1195 = vmatprep.mubr.bf16.mxu0 0
  %1196 = vmatmul.mubr.bf16.gmra.mrb[0].mxu0 %v178
  %v1197 = vpop.f32.mrb[0].mxu0
  %v1198 = vadd.f32 0.0, %v1197
  %v1199 = vpop.f32.mrb[0].mxu0
  %v1200 = vadd.f32 0.0, %v1199
  %v1201 = vpop.f32.mrb[0].mxu0
  %v1202 = vadd.f32 0.0, %v1201
  %v1203 = vpop.f32.mrb[0].mxu0
  %v1204 = vadd.f32 0.0, %v1203
  %1205 = vmatprep.mubr.bf16.mxu0 0
  %1206 = vmatmul.mubr.bf16.gmra.mrb[0].mxu0 %v179
  %v1207 = vpop.f32.mrb[0].mxu0
  %v1208 = vadd.f32 0.0, %v1207
  %v1209 = vpop.f32.mrb[0].mxu0
  %v1210 = vadd.f32 0.0, %v1209
  %v1211 = vpop.f32.mrb[0].mxu0
  %v1212 = vadd.f32 0.0, %v1211
  %v1213 = vpop.f32.mrb[0].mxu0
  %v1214 = vadd.f32 0.0, %v1213
  %1215 = vmatprep.mubr.bf16.mxu0 0
  %1216 = vmatmul.mubr.bf16.gmra.mrb[0].mxu0 %v180
  %v1217 = vpop.f32.mrb[0].mxu0
  %v1218 = vadd.f32 0.0, %v1217
  %v1219 = vpop.f32.mrb[0].mxu0
  %v1220 = vadd.f32 0.0, %v1219
  %v1221 = vpop.f32.mrb[0].mxu0
  %v1222 = vadd.f32 0.0, %v1221
  %v1223 = vpop.f32.mrb[0].mxu0
  %v1224 = vadd.f32 0.0, %v1223
  %1225 = vmatprep.mubr.bf16.mxu0 0
  %1226 = vmatmul.mubr.bf16.gmra.mrb[0].mxu0 %v181
  %v1227 = vpop.f32.mrb[0].mxu0
  %v1228 = vadd.f32 0.0, %v1227
  %v1229 = vpop.f32.mrb[0].mxu0
  %v1230 = vadd.f32 0.0, %v1229
  %v1231 = vpop.f32.mrb[0].mxu0
  %v1232 = vadd.f32 0.0, %v1231
  %v1233 = vpop.f32.mrb[0].mxu0
  %v1234 = vadd.f32 0.0, %v1233
  %1235 = vmatprep.mubr.bf16.mxu0 0
  %1236 = vmatmul.mubr.bf16.gmra.mrb[0].mxu0 %v182
  %v1237 = vpop.f32.mrb[0].mxu0
  %v1238 = vadd.f32 0.0, %v1237
  %v1239 = vpop.f32.mrb[0].mxu0
  %v1240 = vadd.f32 0.0, %v1239
  %v1241 = vpop.f32.mrb[0].mxu0
  %v1242 = vadd.f32 0.0, %v1241
  %v1243 = vpop.f32.mrb[0].mxu0
  %v1244 = vadd.f32 0.0, %v1243
  %1245 = vmatprep.mubr.bf16.mxu0 0
  %1246 = vmatmul.mubr.bf16.gmra.mrb[0].mxu0 %v183
  %v1247 = vpop.f32.mrb[0].mxu0
  %v1248 = vadd.f32 0.0, %v1247
  %v1249 = vpop.f32.mrb[0].mxu0
  %v1250 = vadd.f32 0.0, %v1249
  %v1251 = vpop.f32.mrb[0].mxu0
  %v1252 = vadd.f32 0.0, %v1251
  %v1253 = vpop.f32.mrb[0].mxu0
  %v1254 = vadd.f32 0.0, %v1253
  %1255 = vmatprep.mubr.bf16.mxu0 0
  %1256 = vmatmul.mubr.bf16.gmra.mrb[0].mxu0 %v184
  %v1257 = vpop.f32.mrb[0].mxu0
  %v1258 = vadd.f32 0.0, %v1257
  %v1259 = vpop.f32.mrb[0].mxu0
  %v1260 = vadd.f32 0.0, %v1259
  %v1261 = vpop.f32.mrb[0].mxu0
  %v1262 = vadd.f32 0.0, %v1261
  %v1263 = vpop.f32.mrb[0].mxu0
  %v1264 = vadd.f32 0.0, %v1263
  %1265 = vmatprep.mubr.bf16.mxu0 0
  %1266 = vmatmul.mubr.bf16.gmra.mrb[0].mxu0 %v185
  %v1267 = vpop.f32.mrb[0].mxu0
  %v1268 = vadd.f32 0.0, %v1267
  %v1269 = vpop.f32.mrb[0].mxu0
  %v1270 = vadd.f32 0.0, %v1269
  %v1271 = vpop.f32.mrb[0].mxu0
  %v1272 = vadd.f32 0.0, %v1271
  %v1273 = vpop.f32.mrb[0].mxu0
  %v1274 = vadd.f32 0.0, %v1273
  %1275 = vmatprep.mubr.bf16.mxu0 0
  %1276 = vmatmul.mubr.bf16.gmra.mrb[0].mxu0 %v186
  %v1277 = vpop.f32.mrb[0].mxu0
  %v1278 = vadd.f32 0.0, %v1277
  %v1279 = vpop.f32.mrb[0].mxu0
  %v1280 = vadd.f32 0.0, %v1279
  %v1281 = vpop.f32.mrb[0].mxu0
  %v1282 = vadd.f32 0.0, %v1281
  %v1283 = vpop.f32.mrb[0].mxu0
  %v1284 = vadd.f32 0.0, %v1283
  %1285 = vmatprep.mubr.bf16.mxu0 0
  %1286 = vmatmul.mubr.bf16.gmra.mrb[0].mxu0 %v187
  %v1287 = vpop.f32.mrb[0].mxu0
  %v1288 = vadd.f32 0.0, %v1287
  %v1289 = vpop.f32.mrb[0].mxu0
  %v1290 = vadd.f32 0.0, %v1289
  %v1291 = vpop.f32.mrb[0].mxu0
  %v1292 = vadd.f32 0.0, %v1291
  %v1293 = vpop.f32.mrb[0].mxu0
  %v1294 = vadd.f32 0.0, %v1293
  %1295 = vdwg.mxu0
  %1296 = vst [vmem:[%s2] sm:$0xff] %v559
  %1297 = vst [vmem:[%s2 + $0x8] sm:$0xff] %v561
  %1298 = vst [vmem:[%s2 + $0x10] sm:$0xff] %v752
  %1299 = vst [vmem:[%s2 + $0x18] sm:$0xff] %v754
  %1300 = vst [vmem:[%s2 + $0x20] sm:$0xff] %v945
  %1301 = vst [vmem:[%s2 + $0x28] sm:$0xff] %v947
  %1302 = vst [vmem:[%s2 + $0x30] sm:$0xff] %v1138
  %1303 = vst [vmem:[%s2 + $0x38] sm:$0xff] %v1140
  %1304 = vst [vmem:[%s2 + $0x40] sm:$0xff] %v563
  %1305 = vst [vmem:[%s2 + $0x48] sm:$0xff] %v565
  %1306 = vst [vmem:[%s2 + $0x50] sm:$0xff] %v756
  %1307 = vst [vmem:[%s2 + $0x58] sm:$0xff] %v758
  %1308 = vst [vmem:[%s2 + $0x60] sm:$0xff] %v949
  %1309 = vst [vmem:[%s2 + $0x68] sm:$0xff] %v951
  %1310 = vst [vmem:[%s2 + $0x70] sm:$0xff] %v1142
  %1311 = vst [vmem:[%s2 + $0x78] sm:$0xff] %v1144
  %1312 = vst [vmem:[%s2 + $0x80] sm:$0xff] %v569
  %1313 = vst [vmem:[%s2 + $0x88] sm:$0xff] %v571
  %1314 = vst [vmem:[%s2 + $0x90] sm:$0xff] %v762
  %1315 = vst [vmem:[%s2 + $0x98] sm:$0xff] %v764
  %1316 = vst [vmem:[%s2 + $0xa0] sm:$0xff] %v955
  %1317 = vst [vmem:[%s2 + $0xa8] sm:$0xff] %v957
  %1318 = vst [vmem:[%s2 + $0xb0] sm:$0xff] %v1148
  %1319 = vst [vmem:[%s2 + $0xb8] sm:$0xff] %v1150
  %1320 = vst [vmem:[%s2 + $0xc0] sm:$0xff] %v573
  %1321 = vst [vmem:[%s2 + $0xc8] sm:$0xff] %v575
  %1322 = vst [vmem:[%s2 + $0xd0] sm:$0xff] %v766
  %1323 = vst [vmem:[%s2 + $0xd8] sm:$0xff] %v768
  %1324 = vst [vmem:[%s2 + $0xe0] sm:$0xff] %v959
  %1325 = vst [vmem:[%s2 + $0xe8] sm:$0xff] %v961
  %1326 = vst [vmem:[%s2 + $0xf0] sm:$0xff] %v1152
  %1327 = vst [vmem:[%s2 + $0xf8] sm:$0xff] %v1154
  %1328 = vst [vmem:[%s2 + $0x100] sm:$0xff] %v579
  %1329 = vst [vmem:[%s2 + $0x108] sm:$0xff] %v581
  %1330 = vst [vmem:[%s2 + $0x110] sm:$0xff] %v772
  %1331 = vst [vmem:[%s2 + $0x118] sm:$0xff] %v774
  %1332 = vst [vmem:[%s2 + $0x120] sm:$0xff] %v965
  %1333 = vst [vmem:[%s2 + $0x128] sm:$0xff] %v967
  %1334 = vst [vmem:[%s2 + $0x130] sm:$0xff] %v1158
  %1335 = vst [vmem:[%s2 + $0x138] sm:$0xff] %v1160
  %1336 = vst [vmem:[%s2 + $0x140] sm:$0xff] %v583
  %1337 = vst [vmem:[%s2 + $0x148] sm:$0xff] %v585
  %1338 = vst [vmem:[%s2 + $0x150] sm:$0xff] %v776
  %1339 = vst [vmem:[%s2 + $0x158] sm:$0xff] %v778
  %1340 = vst [vmem:[%s2 + $0x160] sm:$0xff] %v969
  %1341 = vst [vmem:[%s2 + $0x168] sm:$0xff] %v971
  %1342 = vst [vmem:[%s2 + $0x170] sm:$0xff] %v1162
  %1343 = vst [vmem:[%s2 + $0x178] sm:$0xff] %v1164
  %1344 = vst [vmem:[%s2 + $0x180] sm:$0xff] %v589
  %1345 = vst [vmem:[%s2 + $0x188] sm:$0xff] %v591
  %1346 = vst [vmem:[%s2 + $0x190] sm:$0xff] %v782
  %1347 = vst [vmem:[%s2 + $0x198] sm:$0xff] %v784
  %1348 = vst [vmem:[%s2 + $0x1a0] sm:$0xff] %v975
  %1349 = vst [vmem:[%s2 + $0x1a8] sm:$0xff] %v977
  %1350 = vst [vmem:[%s2 + $0x1b0] sm:$0xff] %v1168
  %1351 = vst [vmem:[%s2 + $0x1b8] sm:$0xff] %v1170
  %1352 = vst [vmem:[%s2 + $0x1c0] sm:$0xff] %v593
  %1353 = vst [vmem:[%s2 + $0x1c8] sm:$0xff] %v595
  %1354 = vst [vmem:[%s2 + $0x1d0] sm:$0xff] %v786
  %1355 = vst [vmem:[%s2 + $0x1d8] sm:$0xff] %v788
  %1356 = vst [vmem:[%s2 + $0x1e0] sm:$0xff] %v979
  %1357 = vst [vmem:[%s2 + $0x1e8] sm:$0xff] %v981
  %1358 = vst [vmem:[%s2 + $0x1f0] sm:$0xff] %v1172
  %1359 = vst [vmem:[%s2 + $0x1f8] sm:$0xff] %v1174
  %1360 = vst [vmem:[%s2 + $0x200] sm:$0xff] %v599
  %1361 = vst [vmem:[%s2 + $0x208] sm:$0xff] %v601
  %1362 = vst [vmem:[%s2 + $0x210] sm:$0xff] %v792
  %1363 = vst [vmem:[%s2 + $0x218] sm:$0xff] %v794
  %1364 = vst [vmem:[%s2 + $0x220] sm:$0xff] %v985
  %1365 = vst [vmem:[%s2 + $0x228] sm:$0xff] %v987
  %1366 = vst [vmem:[%s2 + $0x230] sm:$0xff] %v1178
  %1367 = vst [vmem:[%s2 + $0x238] sm:$0xff] %v1180
  %1368 = vst [vmem:[%s2 + $0x240] sm:$0xff] %v603
  %1369 = vst [vmem:[%s2 + $0x248] sm:$0xff] %v605
  %1370 = vst [vmem:[%s2 + $0x250] sm:$0xff] %v796
  %1371 = vst [vmem:[%s2 + $0x258] sm:$0xff] %v798
  %1372 = vst [vmem:[%s2 + $0x260] sm:$0xff] %v989
  %1373 = vst [vmem:[%s2 + $0x268] sm:$0xff] %v991
  %1374 = vst [vmem:[%s2 + $0x270] sm:$0xff] %v1182
  %1375 = vst [vmem:[%s2 + $0x278] sm:$0xff] %v1184
  %1376 = vst [vmem:[%s2 + $0x280] sm:$0xff] %v609
  %1377 = vst [vmem:[%s2 + $0x288] sm:$0xff] %v611
  %1378 = vst [vmem:[%s2 + $0x290] sm:$0xff] %v802
  %1379 = vst [vmem:[%s2 + $0x298] sm:$0xff] %v804
  %1380 = vst [vmem:[%s2 + $0x2a0] sm:$0xff] %v995
  %1381 = vst [vmem:[%s2 + $0x2a8] sm:$0xff] %v997
  %1382 = vst [vmem:[%s2 + $0x2b0] sm:$0xff] %v1188
  %1383 = vst [vmem:[%s2 + $0x2b8] sm:$0xff] %v1190
  %1384 = vst [vmem:[%s2 + $0x2c0] sm:$0xff] %v613
  %1385 = vst [vmem:[%s2 + $0x2c8] sm:$0xff] %v615
  %1386 = vst [vmem:[%s2 + $0x2d0] sm:$0xff] %v806
  %1387 = vst [vmem:[%s2 + $0x2d8] sm:$0xff] %v808
  %1388 = vst [vmem:[%s2 + $0x2e0] sm:$0xff] %v999
  %1389 = vst [vmem:[%s2 + $0x2e8] sm:$0xff] %v1001
  %1390 = vst [vmem:[%s2 + $0x2f0] sm:$0xff] %v1192
  %1391 = vst [vmem:[%s2 + $0x2f8] sm:$0xff] %v1194
  %1392 = vst [vmem:[%s2 + $0x300] sm:$0xff] %v619
  %1393 = vst [vmem:[%s2 + $0x308] sm:$0xff] %v621
  %1394 = vst [vmem:[%s2 + $0x310] sm:$0xff] %v812
  %1395 = vst [vmem:[%s2 + $0x318] sm:$0xff] %v814
  %1396 = vst [vmem:[%s2 + $0x320] sm:$0xff] %v1005
  %1397 = vst [vmem:[%s2 + $0x328] sm:$0xff] %v1007
  %1398 = vst [vmem:[%s2 + $0x330] sm:$0xff] %v1198
  %1399 = vst [vmem:[%s2 + $0x338] sm:$0xff] %v1200
  %1400 = vst [vmem:[%s2 + $0x340] sm:$0xff] %v623
  %1401 = vst [vmem:[%s2 + $0x348] sm:$0xff] %v625
  %1402 = vst [vmem:[%s2 + $0x350] sm:$0xff] %v816
  %1403 = vst [vmem:[%s2 + $0x358] sm:$0xff] %v818
  %1404 = vst [vmem:[%s2 + $0x360] sm:$0xff] %v1009
  %1405 = vst [vmem:[%s2 + $0x368] sm:$0xff] %v1011
  %1406 = vst [vmem:[%s2 + $0x370] sm:$0xff] %v1202
  %1407 = vst [vmem:[%s2 + $0x378] sm:$0xff] %v1204
  %1408 = vst [vmem:[%s2 + $0x380] sm:$0xff] %v629
  %1409 = vst [vmem:[%s2 + $0x388] sm:$0xff] %v631
  %1410 = vst [vmem:[%s2 + $0x390] sm:$0xff] %v822
  %1411 = vst [vmem:[%s2 + $0x398] sm:$0xff] %v824
  %1412 = vst [vmem:[%s2 + $0x3a0] sm:$0xff] %v1015
  %1413 = vst [vmem:[%s2 + $0x3a8] sm:$0xff] %v1017
  %1414 = vst [vmem:[%s2 + $0x3b0] sm:$0xff] %v1208
  %1415 = vst [vmem:[%s2 + $0x3b8] sm:$0xff] %v1210
  %1416 = vst [vmem:[%s2 + $0x3c0] sm:$0xff] %v633
  %1417 = vst [vmem:[%s2 + $0x3c8] sm:$0xff] %v635
  %1418 = vst [vmem:[%s2 + $0x3d0] sm:$0xff] %v826
  %1419 = vst [vmem:[%s2 + $0x3d8] sm:$0xff] %v828
  %1420 = vst [vmem:[%s2 + $0x3e0] sm:$0xff] %v1019
  %1421 = vst [vmem:[%s2 + $0x3e8] sm:$0xff] %v1021
  %1422 = vst [vmem:[%s2 + $0x3f0] sm:$0xff] %v1212
  %1423 = vst [vmem:[%s2 + $0x3f8] sm:$0xff] %v1214
  %1424 = vst [vmem:[%s2 + $0x400] sm:$0xff] %v639
  %1425 = vst [vmem:[%s2 + $0x408] sm:$0xff] %v641
  %1426 = vst [vmem:[%s2 + $0x410] sm:$0xff] %v832
  %1427 = vst [vmem:[%s2 + $0x418] sm:$0xff] %v834
  %1428 = vst [vmem:[%s2 + $0x420] sm:$0xff] %v1025
  %1429 = vst [vmem:[%s2 + $0x428] sm:$0xff] %v1027
  %1430 = vst [vmem:[%s2 + $0x430] sm:$0xff] %v1218
  %1431 = vst [vmem:[%s2 + $0x438] sm:$0xff] %v1220
  %1432 = vst [vmem:[%s2 + $0x440] sm:$0xff] %v643
  %1433 = vst [vmem:[%s2 + $0x448] sm:$0xff] %v645
  %1434 = vst [vmem:[%s2 + $0x450] sm:$0xff] %v836
  %1435 = vst [vmem:[%s2 + $0x458] sm:$0xff] %v838
  %1436 = vst [vmem:[%s2 + $0x460] sm:$0xff] %v1029
  %1437 = vst [vmem:[%s2 + $0x468] sm:$0xff] %v1031
  %1438 = vst [vmem:[%s2 + $0x470] sm:$0xff] %v1222
  %1439 = vst [vmem:[%s2 + $0x478] sm:$0xff] %v1224
  %1440 = vst [vmem:[%s2 + $0x480] sm:$0xff] %v649
  %1441 = vst [vmem:[%s2 + $0x488] sm:$0xff] %v651
  %1442 = vst [vmem:[%s2 + $0x490] sm:$0xff] %v842
  %1443 = vst [vmem:[%s2 + $0x498] sm:$0xff] %v844
  %1444 = vst [vmem:[%s2 + $0x4a0] sm:$0xff] %v1035
  %1445 = vst [vmem:[%s2 + $0x4a8] sm:$0xff] %v1037
  %1446 = vst [vmem:[%s2 + $0x4b0] sm:$0xff] %v1228
  %1447 = vst [vmem:[%s2 + $0x4b8] sm:$0xff] %v1230
  %1448 = vst [vmem:[%s2 + $0x4c0] sm:$0xff] %v653
  %1449 = vst [vmem:[%s2 + $0x4c8] sm:$0xff] %v655
  %1450 = vst [vmem:[%s2 + $0x4d0] sm:$0xff] %v846
  %1451 = vst [vmem:[%s2 + $0x4d8] sm:$0xff] %v848
  %1452 = vst [vmem:[%s2 + $0x4e0] sm:$0xff] %v1039
  %1453 = vst [vmem:[%s2 + $0x4e8] sm:$0xff] %v1041
  %1454 = vst [vmem:[%s2 + $0x4f0] sm:$0xff] %v1232
  %1455 = vst [vmem:[%s2 + $0x4f8] sm:$0xff] %v1234
  %1456 = vst [vmem:[%s2 + $0x500] sm:$0xff] %v659
  %1457 = vst [vmem:[%s2 + $0x508] sm:$0xff] %v661
  %1458 = vst [vmem:[%s2 + $0x510] sm:$0xff] %v852
  %1459 = vst [vmem:[%s2 + $0x518] sm:$0xff] %v854
  %1460 = vst [vmem:[%s2 + $0x520] sm:$0xff] %v1045
  %1461 = vst [vmem:[%s2 + $0x528] sm:$0xff] %v1047
  %1462 = vst [vmem:[%s2 + $0x530] sm:$0xff] %v1238
  %1463 = vst [vmem:[%s2 + $0x538] sm:$0xff] %v1240
  %1464 = vst [vmem:[%s2 + $0x540] sm:$0xff] %v663
  %1465 = vst [vmem:[%s2 + $0x548] sm:$0xff] %v665
  %1466 = vst [vmem:[%s2 + $0x550] sm:$0xff] %v856
  %1467 = vst [vmem:[%s2 + $0x558] sm:$0xff] %v858
  %1468 = vst [vmem:[%s2 + $0x560] sm:$0xff] %v1049
  %1469 = vst [vmem:[%s2 + $0x568] sm:$0xff] %v1051
  %1470 = vst [vmem:[%s2 + $0x570] sm:$0xff] %v1242
  %1471 = vst [vmem:[%s2 + $0x578] sm:$0xff] %v1244
  %1472 = vst [vmem:[%s2 + $0x580] sm:$0xff] %v669
  %1473 = vst [vmem:[%s2 + $0x588] sm:$0xff] %v671
  %1474 = vst [vmem:[%s2 + $0x590] sm:$0xff] %v862
  %1475 = vst [vmem:[%s2 + $0x598] sm:$0xff] %v864
  %1476 = vst [vmem:[%s2 + $0x5a0] sm:$0xff] %v1055
  %1477 = vst [vmem:[%s2 + $0x5a8] sm:$0xff] %v1057
  %1478 = vst [vmem:[%s2 + $0x5b0] sm:$0xff] %v1248
  %1479 = vst [vmem:[%s2 + $0x5b8] sm:$0xff] %v1250
  %1480 = vst [vmem:[%s2 + $0x5c0] sm:$0xff] %v673
  %1481 = vst [vmem:[%s2 + $0x5c8] sm:$0xff] %v675
  %1482 = vst [vmem:[%s2 + $0x5d0] sm:$0xff] %v866
  %1483 = vst [vmem:[%s2 + $0x5d8] sm:$0xff] %v868
  %1484 = vst [vmem:[%s2 + $0x5e0] sm:$0xff] %v1059
  %1485 = vst [vmem:[%s2 + $0x5e8] sm:$0xff] %v1061
  %1486 = vst [vmem:[%s2 + $0x5f0] sm:$0xff] %v1252
  %1487 = vst [vmem:[%s2 + $0x5f8] sm:$0xff] %v1254
  %1488 = vst [vmem:[%s2 + $0x600] sm:$0xff] %v679
  %1489 = vst [vmem:[%s2 + $0x608] sm:$0xff] %v681
  %1490 = vst [vmem:[%s2 + $0x610] sm:$0xff] %v872
  %1491 = vst [vmem:[%s2 + $0x618] sm:$0xff] %v874
  %1492 = vst [vmem:[%s2 + $0x620] sm:$0xff] %v1065
  %1493 = vst [vmem:[%s2 + $0x628] sm:$0xff] %v1067
  %1494 = vst [vmem:[%s2 + $0x630] sm:$0xff] %v1258
  %1495 = vst [vmem:[%s2 + $0x638] sm:$0xff] %v1260
  %1496 = vst [vmem:[%s2 + $0x640] sm:$0xff] %v683
  %1497 = vst [vmem:[%s2 + $0x648] sm:$0xff] %v685
  %1498 = vst [vmem:[%s2 + $0x650] sm:$0xff] %v876
  %1499 = vst [vmem:[%s2 + $0x658] sm:$0xff] %v878
  %1500 = vst [vmem:[%s2 + $0x660] sm:$0xff] %v1069
  %1501 = vst [vmem:[%s2 + $0x668] sm:$0xff] %v1071
  %1502 = vst [vmem:[%s2 + $0x670] sm:$0xff] %v1262
  %1503 = vst [vmem:[%s2 + $0x678] sm:$0xff] %v1264
  %1504 = vst [vmem:[%s2 + $0x680] sm:$0xff] %v689
  %1505 = vst [vmem:[%s2 + $0x688] sm:$0xff] %v691
  %1506 = vst [vmem:[%s2 + $0x690] sm:$0xff] %v882
  %1507 = vst [vmem:[%s2 + $0x698] sm:$0xff] %v884
  %1508 = vst [vmem:[%s2 + $0x6a0] sm:$0xff] %v1075
  %1509 = vst [vmem:[%s2 + $0x6a8] sm:$0xff] %v1077
  %1510 = vst [vmem:[%s2 + $0x6b0] sm:$0xff] %v1268
  %1511 = vst [vmem:[%s2 + $0x6b8] sm:$0xff] %v1270
  %1512 = vst [vmem:[%s2 + $0x6c0] sm:$0xff] %v693
  %1513 = vst [vmem:[%s2 + $0x6c8] sm:$0xff] %v695
  %1514 = vst [vmem:[%s2 + $0x6d0] sm:$0xff] %v886
  %1515 = vst [vmem:[%s2 + $0x6d8] sm:$0xff] %v888
  %1516 = vst [vmem:[%s2 + $0x6e0] sm:$0xff] %v1079
  %1517 = vst [vmem:[%s2 + $0x6e8] sm:$0xff] %v1081
  %1518 = vst [vmem:[%s2 + $0x6f0] sm:$0xff] %v1272
  %1519 = vst [vmem:[%s2 + $0x6f8] sm:$0xff] %v1274
  %1520 = vst [vmem:[%s2 + $0x700] sm:$0xff] %v699
  %1521 = vst [vmem:[%s2 + $0x708] sm:$0xff] %v701
  %1522 = vst [vmem:[%s2 + $0x710] sm:$0xff] %v892
  %1523 = vst [vmem:[%s2 + $0x718] sm:$0xff] %v894
  %1524 = vst [vmem:[%s2 + $0x720] sm:$0xff] %v1085
  %1525 = vst [vmem:[%s2 + $0x728] sm:$0xff] %v1087
  %1526 = vst [vmem:[%s2 + $0x730] sm:$0xff] %v1278
  %1527 = vst [vmem:[%s2 + $0x738] sm:$0xff] %v1280
  %1528 = vst [vmem:[%s2 + $0x740] sm:$0xff] %v703
  %1529 = vst [vmem:[%s2 + $0x748] sm:$0xff] %v705
  %1530 = vst [vmem:[%s2 + $0x750] sm:$0xff] %v896
  %1531 = vst [vmem:[%s2 + $0x758] sm:$0xff] %v898
  %1532 = vst [vmem:[%s2 + $0x760] sm:$0xff] %v1089
  %1533 = vst [vmem:[%s2 + $0x768] sm:$0xff] %v1091
  %1534 = vst [vmem:[%s2 + $0x770] sm:$0xff] %v1282
  %1535 = vst [vmem:[%s2 + $0x778] sm:$0xff] %v1284
  %1536 = vst [vmem:[%s2 + $0x780] sm:$0xff] %v709
  %1537 = vst [vmem:[%s2 + $0x788] sm:$0xff] %v711
  %1538 = vst [vmem:[%s2 + $0x790] sm:$0xff] %v902
  %1539 = vst [vmem:[%s2 + $0x798] sm:$0xff] %v904
  %1540 = vst [vmem:[%s2 + $0x7a0] sm:$0xff] %v1095
  %1541 = vst [vmem:[%s2 + $0x7a8] sm:$0xff] %v1097
  %1542 = vst [vmem:[%s2 + $0x7b0] sm:$0xff] %v1288
  %1543 = vst [vmem:[%s2 + $0x7b8] sm:$0xff] %v1290
  %1544 = vst [vmem:[%s2 + $0x7c0] sm:$0xff] %v713
  %1545 = vst [vmem:[%s2 + $0x7c8] sm:$0xff] %v715
  %1546 = vst [vmem:[%s2 + $0x7d0] sm:$0xff] %v906
  %1547 = vst [vmem:[%s2 + $0x7d8] sm:$0xff] %v908
  %1548 = vst [vmem:[%s2 + $0x7e0] sm:$0xff] %v1099
  %1549 = vst [vmem:[%s2 + $0x7e8] sm:$0xff] %v1101
  %1550 = vst [vmem:[%s2 + $0x7f0] sm:$0xff] %v1292
  %1551 = vst [vmem:[%s2 + $0x7f8] sm:$0xff] %v1294
  // Predicated region
  $region10: #{generator_forward.7} parent=0 // pred_check
    _
  $region11: #{generator_forward.7} parent=0 // pred_check_branch
    %1553 = sbr.rel (0) target = $region13
  $region12: #{generator_forward.7} parent=0 // pred_region
    _
  $region13: #{generator_forward.7} parent=0 // pred_fallthru
    _
  // Predicated region
  $region14: #{generator_forward.7} parent=0 // pred_check
    _
  $region15: #{generator_forward.7} parent=0 // pred_check_branch
    %1555 = sbr.rel (0) target = $region17
  $region16: #{generator_forward.7} parent=0 // pred_region
    _
  $region17: #{generator_forward.7} parent=0 // pred_fallthru
    _

// kernel: generator_forward.6
$region0: #{generator_forward.6}
  #allocation0 [shape = 'u32[]', space=smem, size = 0x4, offset = 0x4, fixed_abs, tag = 'smem constant byte address 0x4 - core index']
  #allocation1 [shape = 'u32[144,128]{1,0:T(1,128)}', space=vmem, size = 0x12000, scoped, tag = 'internal scratch']
  %s0 = inlined_call_operand.vmem [shape: bf16[4,1024], index: 0, kind: input, shape index: {}]
  %s1 = inlined_call_operand.hbm [shape: s8[1024,8192], index: 1, kind: input, shape index: {}]
  %s2 = inlined_call_operand.hbm [shape: f32[3,8192], index: 2, kind: input, shape index: {}]
  %s3 = inlined_call_operand.vmem [shape: bf16[4,8192], index: 3, kind: output, shape index: {}]
  %s4 = sld [smem:[#allocation0]]
  $region53: #{generator_forward.6} parent=0
    _
  %s6 = ssub.s32 1, %s4
  %s7 = scalar_select 0, %s6, %s4
  $region1: #{generator_forward.6} parent=0
    #allocation2 [shape = 'u8[4194304]{0}', space=vmem, size = 0x400000, scoped, tag = 'input window, operand 1']
    #allocation3 [shape = 's32[2]{0}', space=sflag, size = 0x8, scoped, tag = 'scoped memory for generator_forward.6']
    #allocation4 [shape = 'u8[65536]{0}', space=vmem, size = 0x10000, scoped, tag = 'input window, operand 2']
    #allocation5 [shape = 's32[2]{0}', space=sflag, size = 0x8, scoped, tag = 'scoped memory for generator_forward.6']
    %8 = vsyncpa [#allocation3], 0
    %s9 = scalar_lea.sflag [#allocation3], 1
    %10 = vsyncpa %s9, 0
    %11 = vsyncpa [#allocation5], 0
    %s12 = scalar_lea.sflag [#allocation5], 1
    %13 = vsyncpa %s12, 0
    loop: start=0, step=1, limit=6
    $region2: #{generator_forward.6} parent=1 // loop_pre_header
      _
    $region3: #{generator_forward.6} parent=1 // loop_header
      %s15 = sphi 0, %s19
      %p16 = scmp.ge.s32.totalorder %s15, 6
      %s23 = sphi 0, %s23
      %s25 = sphi 0, %s23
      %s26 = sphi 0, %s25
      %s40 = sphi 0, %s26
      %s46 = sphi 0, %s48
      %s49 = sphi 0, %s46
      %s50 = sphi 0, %s49
      %s66 = sphi 0, %s50
      %s72 = sphi 0, %s74
      %s75 = sphi 0, %s72
      %s76 = sphi 0, %s75
      %s92 = sphi 0, %s76
      %s98 = sphi 0, %s100
      %s101 = sphi 0, %s98
      %s102 = sphi 0, %s101
      %s118 = sphi 0, %s102
    $region4: #{generator_forward.6} parent=1 // loop_header_branch
      %18 = sbr.rel (%p16) target = $region8
    $region5: #{generator_forward.6} parent=1 // loop_body
      %s20 = ssub.s32 %s15, 1
      %s21 = ssub.s32 %s15, 2
      %s22 = sadd.s32 %s15, 1
      %s24 = sadd.s32 %s23, 1
      %p27 = scmp.eq.s32.totalorder %s15, 3
      %p28 = scmp.ne.s32.totalorder %s23, %s25
      %p29 = scmp.eq.s32.totalorder %s15, 0
      %p30 = por %p28, %p29
      %p31 = scmp.ne.s32.totalorder %s23, %s25
      %p32 = scmp.eq.s32.totalorder %s20, 3
      %p33 = por %p31, %p32
      %p34 = scmp.ne.s32.totalorder %s25, %s26
      %p35 = scmp.eq.s32.totalorder %s20, 0
      %p36 = por %p34, %p35
      %p37 = scmp.ne.s32.totalorder %s25, %s26
      %p38 = scmp.eq.s32.totalorder %s21, 3
      %p39 = por %p37, %p38
      %p41 = scmp.ne.s32.totalorder %s26, %s40
      %p42 = scmp.eq.s32.totalorder %s21, 0
      %p43 = por %p41, %p42
      %s44 = ssub.s32 %s15, %s22
      %p45 = scmp.eq.s32.totalorder %s44, 0
      %s47 = sadd.s32 %s46, 1
      %s48 = scalar_select %p45, %s46, %s47
      %p51 = pneg %p45
      %p52 = scmp.eq.s32.totalorder %s15, 3
      %p53 = por %p51, %p52
      %p54 = scmp.ne.s32.totalorder %s46, %s49
      %p55 = scmp.eq.s32.totalorder %s15, 0
      %p56 = por %p54, %p55
      %p57 = scmp.ne.s32.totalorder %s46, %s49
      %p58 = scmp.eq.s32.totalorder %s20, 3
      %p59 = por %p57, %p58
      %p60 = scmp.ne.s32.totalorder %s49, %s50
      %p61 = scmp.eq.s32.totalorder %s20, 0
      %p62 = por %p60, %p61
      %p63 = scmp.ne.s32.totalorder %s49, %s50
      %p64 = scmp.eq.s32.totalorder %s21, 3
      %p65 = por %p63, %p64
      %p67 = scmp.ne.s32.totalorder %s50, %s66
      %p68 = scmp.eq.s32.totalorder %s21, 0
      %p69 = por %p67, %p68
      %s70 = ssub.s32 %s15, %s22
      %p71 = scmp.eq.s32.totalorder %s70, 0
      %s73 = sadd.s32 %s72, 1
      %s74 = scalar_select %p71, %s72, %s73
      %p77 = pneg %p71
      %p78 = scmp.eq.s32.totalorder %s15, 3
      %p79 = por %p77, %p78
      %p80 = scmp.ne.s32.totalorder %s72, %s75
      %p81 = scmp.eq.s32.totalorder %s15, 0
      %p82 = por %p80, %p81
      %p83 = scmp.ne.s32.totalorder %s72, %s75
      %p84 = scmp.eq.s32.totalorder %s20, 3
      %p85 = por %p83, %p84
      %p86 = scmp.ne.s32.totalorder %s75, %s76
      %p87 = scmp.eq.s32.totalorder %s20, 0
      %p88 = por %p86, %p87
      %p89 = scmp.ne.s32.totalorder %s75, %s76
      %p90 = scmp.eq.s32.totalorder %s21, 3
      %p91 = por %p89, %p90
      %p93 = scmp.ne.s32.totalorder %s76, %s92
      %p94 = scmp.eq.s32.totalorder %s21, 0
      %p95 = por %p93, %p94
      %s96 = ssub.s32 %s15, %s22
      %p97 = scmp.eq.s32.totalorder %s96, 0
      %s99 = sadd.s32 %s98, 1
      %s100 = scalar_select %p97, %s98, %s99
      %p103 = pneg %p97
      %p104 = scmp.eq.s32.totalorder %s15, 3
      %p105 = por %p103, %p104
      %p106 = scmp.ne.s32.totalorder %s98, %s101
      %p107 = scmp.eq.s32.totalorder %s15, 0
      %p108 = por %p106, %p107
      %p109 = scmp.ne.s32.totalorder %s98, %s101
      %p110 = scmp.eq.s32.totalorder %s20, 3
      %p111 = por %p109, %p110
      %p112 = scmp.ne.s32.totalorder %s101, %s102
      %p113 = scmp.eq.s32.totalorder %s20, 0
      %p114 = por %p112, %p113
      %p115 = scmp.ne.s32.totalorder %s101, %s102
      %p116 = scmp.eq.s32.totalorder %s21, 3
      %p117 = por %p115, %p116
      %p119 = scmp.ne.s32.totalorder %s102, %s118
      %p120 = scmp.eq.s32.totalorder %s21, 0
      %p121 = por %p119, %p120
      %p122 = scmp.le.s32.totalorder 1, %s15
      %p123 = scmp.lt.s32.totalorder %s15, 5
      %p124 = pnand %p122, %p123
      %p125 = pneg %p124
      // Predicated region
      $region9: #{generator_forward.6} parent=5 // pred_check
        _
      $region10: #{generator_forward.6} parent=5 // pred_check_branch
        %127 = sbr.rel (%p124) target = $region12
      $region11: #{generator_forward.6} parent=5 // pred_region
        %s128 = ssub.s32 %s15, 1
        // Predicated region
        $region13: #{generator_forward.6} parent=11 // pred_check
          %p129 = pneg %p36
        $region14: #{generator_forward.6} parent=11 // pred_check_branch
          %131 = sbr.rel (%p129) target = $region16
        $region15: #{generator_forward.6} parent=11 // pred_region
          _
        $region16: #{generator_forward.6} parent=11 // pred_fallthru
          _
      $region12: #{generator_forward.6} parent=5 // pred_fallthru
        _
      %p132 = scmp.lt.s32.totalorder %s15, 4
      // Predicated region
      $region17: #{generator_forward.6} parent=5 // pred_check
        %p133 = pneg %p132
      $region18: #{generator_forward.6} parent=5 // pred_check_branch
        %135 = sbr.rel (%p133) target = $region20
      $region19: #{generator_forward.6} parent=5 // pred_region
        // Predicated region
        $region21: #{generator_forward.6} parent=19 // pred_check
          %p136 = pneg %p56
        $region22: #{generator_forward.6} parent=19 // pred_check_branch
          %138 = sbr.rel (%p136) target = $region24
        $region23: #{generator_forward.6} parent=19 // pred_region
          %s139 = sand.u32 %s46, 1
          %s140 = scalar_lea.sflag [#allocation3], %s139
          %s141 = sand.u32 %s46, 1
          %s142 = smul.addr %s141, 4096
          %s143 = scalar_lea.vmem [#allocation2], %s142
          %s144 = smul.u32 16, %s15
          %s146 = ssub.s32 65536, 65536
          %147 = vsyncadd %s140, %s146
          %s148 = smul.addr %s144, 128
          %s149 = scalar_lea.hbm %s1, %s148
          %s150 = sshll.u32 %s143, 4
          %s151 = int_to_ptr.vmem [resolvable:$true] %s150
          %156 = dma.hbm_to_vmem [thread:$0]  %s149, 65536, %s151, %s140, 8192, 2048, 128
        $region24: #{generator_forward.6} parent=19 // pred_fallthru
          _
        // Predicated region
        $region25: #{generator_forward.6} parent=19 // pred_check
          %p157 = pneg %p82
        $region26: #{generator_forward.6} parent=19 // pred_check_branch
          %159 = sbr.rel (%p157) target = $region28
        $region27: #{generator_forward.6} parent=19 // pred_region
          %s160 = sand.u32 %s72, 1
          %s161 = scalar_lea.sflag [#allocation5], %s160
          %s162 = sand.u32 %s72, 1
          %s163 = smul.addr %s162, 64
          %s164 = scalar_lea.vmem [#allocation4], %s163
          %s165 = smul.u32 16, %s15
          %s167 = ssub.s32 1024, 1024
          %168 = vsyncadd %s161, %s167
          %s169 = smul.addr %s165, 64
          %s170 = scalar_lea.hbm %s2, %s169
          %s172 = sshll.u32 %s164, 4
          %s173 = int_to_ptr.vmem [resolvable:$true] %s172
          %175 = dma.hbm_to_vmem [thread:$0]  %s170, 1024, %s173, %s161
        $region28: #{generator_forward.6} parent=19 // pred_fallthru
          _
      $region20: #{generator_forward.6} parent=5 // pred_fallthru
        _
      %p176 = scmp.le.s32.totalorder 1, %s15
      %p177 = scmp.lt.s32.totalorder %s15, 5
      %p178 = pnand %p176, %p177
      %p179 = pneg %p178
      // Predicated region
      $region29: #{generator_forward.6} parent=5 // pred_check
        _
      $region30: #{generator_forward.6} parent=5 // pred_check_branch
        %181 = sbr.rel (%p178) target = $region32
      $region31: #{generator_forward.6} parent=5 // pred_region
        %s182 = ssub.s32 %s15, 1
        %s183 = sand.u32 %s49, 1
        %s184 = scalar_lea.sflag [#allocation3], %s183
        %s185 = sand.u32 %s49, 1
        %s186 = smul.addr %s185, 4096
        %s187 = scalar_lea.vmem [#allocation2], %s186
        // Predicated region
        $region33: #{generator_forward.6} parent=31 // pred_check
          %p188 = pneg %p62
        $region34: #{generator_forward.6} parent=31 // pred_check_branch
          %190 = sbr.rel (%p188) target = $region36
        $region35: #{generator_forward.6} parent=31 // pred_region
          %191 = dma.done %s184, 65536
        $region36: #{generator_forward.6} parent=31 // pred_fallthru
          _
        %s192 = sand.u32 %s75, 1
        %s193 = scalar_lea.sflag [#allocation5], %s192
        %s194 = sand.u32 %s75, 1
        %s195 = smul.addr %s194, 64
        %s196 = scalar_lea.vmem [#allocation4], %s195
        // Predicated region
        $region37: #{generator_forward.6} parent=31 // pred_check
          %p197 = pneg %p88
        $region38: #{generator_forward.6} parent=31 // pred_check_branch
          %199 = sbr.rel (%p197) target = $region40
        $region39: #{generator_forward.6} parent=31 // pred_region
          %200 = dma.done %s193, 1024
        $region40: #{generator_forward.6} parent=31 // pred_fallthru
          _
        %p201 = pneg %p36
        %p202 = pneg %p33
        %s203 = sand.u32 %s49, 1
        %s204 = scalar_lea.sflag [#allocation3], %s203
        %s205 = sand.u32 %s49, 1
        %s206 = smul.addr %s205, 4096
        %s207 = scalar_lea.vmem [#allocation2], %s206
        %p208 = pneg %p62
        %p209 = pneg %p59
        %s210 = sand.u32 %s75, 1
        %s211 = scalar_lea.sflag [#allocation5], %s210
        %s212 = sand.u32 %s75, 1
        %s213 = smul.addr %s212, 64
        %s214 = scalar_lea.vmem [#allocation4], %s213
        %p215 = pneg %p88
        %p216 = pneg %p85
        %p217 = pneg %p114
        %p218 = pneg %p111
        %s219 = smul.u32 16, %s20
        %p220 = scmp.lt.s32.totalorder %s219, 63
        %s221 = scalar_select %p220, %s219, 63
        %s222 = smul.addr %s221, 2
        %s223 = scalar_lea.vmem %s3, %s222
        %s224 = smul.u32 16, %s20
        %s225 = smul.u32 16, %s20
        %s226 = smul.u32 16, %s20
        %p227 = scmp.lt.s32.totalorder %s226, 63
        %s228 = scalar_select %p227, %s226, 63
        %s229 = smul.addr %s228, 2
        %s230 = scalar_lea.vmem %s3, %s229
        %s231 = smul.u32 16, %s20
        %v232 = vld [vmem:[%s187] sm:$0xff]
        %v233 = vld [vmem:[%s187 + $0x8] sm:$0xff]
        %v234 = vld [vmem:[%s187 + $0x10] sm:$0xff]
        %v235 = vld [vmem:[%s187 + $0x18] sm:$0xff]
        %v236 = vld [vmem:[%s187 + $0x20] sm:$0xff]
        %v237 = vld [vmem:[%s187 + $0x28] sm:$0xff]
        %v238 = vld [vmem:[%s187 + $0x30] sm:$0xff]
        %v239 = vld [vmem:[%s187 + $0x38] sm:$0xff]
        %v240 = vld [vmem:[%s187 + $0x40] sm:$0xff]
        %v241 = vld [vmem:[%s187 + $0x48] sm:$0xff]
        %v242 = vld [vmem:[%s187 + $0x50] sm:$0xff]
        %v243 = vld [vmem:[%s187 + $0x58] sm:$0xff]
        %v244 = vld [vmem:[%s187 + $0x60] sm:$0xff]
        %v245 = vld [vmem:[%s187 + $0x68] sm:$0xff]
        %v246 = vld [vmem:[%s187 + $0x70] sm:$0xff]
        %v247 = vld [vmem:[%s187 + $0x78] sm:$0xff]
        %v248 = vld [vmem:[%s187 + $0x80] sm:$0xff]
        %v249 = vld [vmem:[%s187 + $0x88] sm:$0xff]
        %v250 = vld [vmem:[%s187 + $0x90] sm:$0xff]
        %v251 = vld [vmem:[%s187 + $0x98] sm:$0xff]
        %v252 = vld [vmem:[%s187 + $0xa0] sm:$0xff]
        %v253 = vld [vmem:[%s187 + $0xa8] sm:$0xff]
        %v254 = vld [vmem:[%s187 + $0xb0] sm:$0xff]
        %v255 = vld [vmem:[%s187 + $0xb8] sm:$0xff]
        %v256 = vld [vmem:[%s187 + $0xc0] sm:$0xff]
        %v257 = vld [vmem:[%s187 + $0xc8] sm:$0xff]
        %v258 = vld [vmem:[%s187 + $0xd0] sm:$0xff]
        %v259 = vld [vmem:[%s187 + $0xd8] sm:$0xff]
        %v260 = vld [vmem:[%s187 + $0xe0] sm:$0xff]
        %v261 = vld [vmem:[%s187 + $0xe8] sm:$0xff]
        %v262 = vld [vmem:[%s187 + $0xf0] sm:$0xff]
        %v263 = vld [vmem:[%s187 + $0xf8] sm:$0xff]
        %v264 = vld [vmem:[%s187 + $0x100] sm:$0xff]
        %v265 = vld [vmem:[%s187 + $0x108] sm:$0xff]
        %v266 = vld [vmem:[%s187 + $0x110] sm:$0xff]
        %v267 = vld [vmem:[%s187 + $0x118] sm:$0xff]
        %v268 = vld [vmem:[%s187 + $0x120] sm:$0xff]
        %v269 = vld [vmem:[%s187 + $0x128] sm:$0xff]
        %v270 = vld [vmem:[%s187 + $0x130] sm:$0xff]
        %v271 = vld [vmem:[%s187 + $0x138] sm:$0xff]
        %v272 = vld [vmem:[%s187 + $0x140] sm:$0xff]
        %v273 = vld [vmem:[%s187 + $0x148] sm:$0xff]
        %v274 = vld [vmem:[%s187 + $0x150] sm:$0xff]
        %v275 = vld [vmem:[%s187 + $0x158] sm:$0xff]
        %v276 = vld [vmem:[%s187 + $0x160] sm:$0xff]
        %v277 = vld [vmem:[%s187 + $0x168] sm:$0xff]
        %v278 = vld [vmem:[%s187 + $0x170] sm:$0xff]
        %v279 = vld [vmem:[%s187 + $0x178] sm:$0xff]
        %v280 = vld [vmem:[%s187 + $0x180] sm:$0xff]
        %v281 = vld [vmem:[%s187 + $0x188] sm:$0xff]
        %v282 = vld [vmem:[%s187 + $0x190] sm:$0xff]
        %v283 = vld [vmem:[%s187 + $0x198] sm:$0xff]
        %v284 = vld [vmem:[%s187 + $0x1a0] sm:$0xff]
        %v285 = vld [vmem:[%s187 + $0x1a8] sm:$0xff]
        %v286 = vld [vmem:[%s187 + $0x1b0] sm:$0xff]
        %v287 = vld [vmem:[%s187 + $0x1b8] sm:$0xff]
        %v288 = vld [vmem:[%s187 + $0x1c0] sm:$0xff]
        %v289 = vld [vmem:[%s187 + $0x1c8] sm:$0xff]
        %v290 = vld [vmem:[%s187 + $0x1d0] sm:$0xff]
        %v291 = vld [vmem:[%s187 + $0x1d8] sm:$0xff]
        %v292 = vld [vmem:[%s187 + $0x1e0] sm:$0xff]
        %v293 = vld [vmem:[%s187 + $0x1e8] sm:$0xff]
        %v294 = vld [vmem:[%s187 + $0x1f0] sm:$0xff]
        %v295 = vld [vmem:[%s187 + $0x1f8] sm:$0xff]
        %v296 = vld [vmem:[%s187 + $0x200] sm:$0xff]
        %v297 = vld [vmem:[%s187 + $0x208] sm:$0xff]
        %v298 = vld [vmem:[%s187 + $0x210] sm:$0xff]
        %v299 = vld [vmem:[%s187 + $0x218] sm:$0xff]
        %v300 = vld [vmem:[%s187 + $0x220] sm:$0xff]
        %v301 = vld [vmem:[%s187 + $0x228] sm:$0xff]
        %v302 = vld [vmem:[%s187 + $0x230] sm:$0xff]
        %v303 = vld [vmem:[%s187 + $0x238] sm:$0xff]
        %v304 = vld [vmem:[%s187 + $0x240] sm:$0xff]
        %v305 = vld [vmem:[%s187 + $0x248] sm:$0xff]
        %v306 = vld [vmem:[%s187 + $0x250] sm:$0xff]
        %v307 = vld [vmem:[%s187 + $0x258] sm:$0xff]
        %v308 = vld [vmem:[%s187 + $0x260] sm:$0xff]
        %v309 = vld [vmem:[%s187 + $0x268] sm:$0xff]
        %v310 = vld [vmem:[%s187 + $0x270] sm:$0xff]
        %v311 = vld [vmem:[%s187 + $0x278] sm:$0xff]
        %v312 = vld [vmem:[%s187 + $0x280] sm:$0xff]
        %v313 = vld [vmem:[%s187 + $0x288] sm:$0xff]
        %v314 = vld [vmem:[%s187 + $0x290] sm:$0xff]
        %v315 = vld [vmem:[%s187 + $0x298] sm:$0xff]
        %v316 = vld [vmem:[%s187 + $0x2a0] sm:$0xff]
        %v317 = vld [vmem:[%s187 + $0x2a8] sm:$0xff]
        %v318 = vld [vmem:[%s187 + $0x2b0] sm:$0xff]
        %v319 = vld [vmem:[%s187 + $0x2b8] sm:$0xff]
        %v320 = vld [vmem:[%s187 + $0x2c0] sm:$0xff]
        %v321 = vld [vmem:[%s187 + $0x2c8] sm:$0xff]
        %v322 = vld [vmem:[%s187 + $0x2d0] sm:$0xff]
        %v323 = vld [vmem:[%s187 + $0x2d8] sm:$0xff]
        %v324 = vld [vmem:[%s187 + $0x2e0] sm:$0xff]
        %v325 = vld [vmem:[%s187 + $0x2e8] sm:$0xff]
        %v326 = vld [vmem:[%s187 + $0x2f0] sm:$0xff]
        %v327 = vld [vmem:[%s187 + $0x2f8] sm:$0xff]
        %v328 = vld [vmem:[%s187 + $0x300] sm:$0xff]
        %v329 = vld [vmem:[%s187 + $0x308] sm:$0xff]
        %v330 = vld [vmem:[%s187 + $0x310] sm:$0xff]
        %v331 = vld [vmem:[%s187 + $0x318] sm:$0xff]
        %v332 = vld [vmem:[%s187 + $0x320] sm:$0xff]
        %v333 = vld [vmem:[%s187 + $0x328] sm:$0xff]
        %v334 = vld [vmem:[%s187 + $0x330] sm:$0xff]
        %v335 = vld [vmem:[%s187 + $0x338] sm:$0xff]
        %v336 = vld [vmem:[%s187 + $0x340] sm:$0xff]
        %v337 = vld [vmem:[%s187 + $0x348] sm:$0xff]
        %v338 = vld [vmem:[%s187 + $0x350] sm:$0xff]
        %v339 = vld [vmem:[%s187 + $0x358] sm:$0xff]
        %v340 = vld [vmem:[%s187 + $0x360] sm:$0xff]
        %v341 = vld [vmem:[%s187 + $0x368] sm:$0xff]
        %v342 = vld [vmem:[%s187 + $0x370] sm:$0xff]
        %v343 = vld [vmem:[%s187 + $0x378] sm:$0xff]
        %v344 = vld [vmem:[%s187 + $0x380] sm:$0xff]
        %v345 = vld [vmem:[%s187 + $0x388] sm:$0xff]
        %v346 = vld [vmem:[%s187 + $0x390] sm:$0xff]
        %v347 = vld [vmem:[%s187 + $0x398] sm:$0xff]
        %v348 = vld [vmem:[%s187 + $0x3a0] sm:$0xff]
        %v349 = vld [vmem:[%s187 + $0x3a8] sm:$0xff]
        %v350 = vld [vmem:[%s187 + $0x3b0] sm:$0xff]
        %v351 = vld [vmem:[%s187 + $0x3b8] sm:$0xff]
        %v352 = vld [vmem:[%s187 + $0x3c0] sm:$0xff]
        %v353 = vld [vmem:[%s187 + $0x3c8] sm:$0xff]
        %v354 = vld [vmem:[%s187 + $0x3d0] sm:$0xff]
        %v355 = vld [vmem:[%s187 + $0x3d8] sm:$0xff]
        %v356 = vld [vmem:[%s187 + $0x3e0] sm:$0xff]
        %v357 = vld [vmem:[%s187 + $0x3e8] sm:$0xff]
        %v358 = vld [vmem:[%s187 + $0x3f0] sm:$0xff]
        %v359 = vld [vmem:[%s187 + $0x3f8] sm:$0xff]
        %v360 = vld [vmem:[%s187 + $0x400] sm:$0xff]
        %v361 = vld [vmem:[%s187 + $0x408] sm:$0xff]
        %v362 = vld [vmem:[%s187 + $0x410] sm:$0xff]
        %v363 = vld [vmem:[%s187 + $0x418] sm:$0xff]
        %v364 = vld [vmem:[%s187 + $0x420] sm:$0xff]
        %v365 = vld [vmem:[%s187 + $0x428] sm:$0xff]
        %v366 = vld [vmem:[%s187 + $0x430] sm:$0xff]
        %v367 = vld [vmem:[%s187 + $0x438] sm:$0xff]
        %v368 = vld [vmem:[%s187 + $0x440] sm:$0xff]
        %v369 = vld [vmem:[%s187 + $0x448] sm:$0xff]
        %v370 = vld [vmem:[%s187 + $0x450] sm:$0xff]
        %v371 = vld [vmem:[%s187 + $0x458] sm:$0xff]
        %v372 = vld [vmem:[%s187 + $0x460] sm:$0xff]
        %v373 = vld [vmem:[%s187 + $0x468] sm:$0xff]
        %v374 = vld [vmem:[%s187 + $0x470] sm:$0xff]
        %v375 = vld [vmem:[%s187 + $0x478] sm:$0xff]
        %v376 = vld [vmem:[%s187 + $0x480] sm:$0xff]
        %v377 = vld [vmem:[%s187 + $0x488] sm:$0xff]
        %v378 = vld [vmem:[%s187 + $0x490] sm:$0xff]
        %v379 = vld [vmem:[%s187 + $0x498] sm:$0xff]
        %v380 = vld [vmem:[%s187 + $0x4a0] sm:$0xff]
        %v381 = vld [vmem:[%s187 + $0x4a8] sm:$0xff]
        %v382 = vld [vmem:[%s187 + $0x4b0] sm:$0xff]
        %v383 = vld [vmem:[%s187 + $0x4b8] sm:$0xff]
        %v384 = vld [vmem:[%s187 + $0x4c0] sm:$0xff]
        %v385 = vld [vmem:[%s187 + $0x4c8] sm:$0xff]
        %v386 = vld [vmem:[%s187 + $0x4d0] sm:$0xff]
        %v387 = vld [vmem:[%s187 + $0x4d8] sm:$0xff]
        %v388 = vld [vmem:[%s187 + $0x4e0] sm:$0xff]
        %v389 = vld [vmem:[%s187 + $0x4e8] sm:$0xff]
        %v390 = vld [vmem:[%s187 + $0x4f0] sm:$0xff]
        %v391 = vld [vmem:[%s187 + $0x4f8] sm:$0xff]
        %v392 = vld [vmem:[%s187 + $0x500] sm:$0xff]
        %v393 = vld [vmem:[%s187 + $0x508] sm:$0xff]
        %v394 = vld [vmem:[%s187 + $0x510] sm:$0xff]
        %v395 = vld [vmem:[%s187 + $0x518] sm:$0xff]
        %v396 = vld [vmem:[%s187 + $0x520] sm:$0xff]
        %v397 = vld [vmem:[%s187 + $0x528] sm:$0xff]
        %v398 = vld [vmem:[%s187 + $0x530] sm:$0xff]
        %v399 = vld [vmem:[%s187 + $0x538] sm:$0xff]
        %v400 = vld [vmem:[%s187 + $0x540] sm:$0xff]
        %v401 = vld [vmem:[%s187 + $0x548] sm:$0xff]
        %v402 = vld [vmem:[%s187 + $0x550] sm:$0xff]
        %v403 = vld [vmem:[%s187 + $0x558] sm:$0xff]
        %v404 = vld [vmem:[%s187 + $0x560] sm:$0xff]
        %v405 = vld [vmem:[%s187 + $0x568] sm:$0xff]
        %v406 = vld [vmem:[%s187 + $0x570] sm:$0xff]
        %v407 = vld [vmem:[%s187 + $0x578] sm:$0xff]
        %v408 = vld [vmem:[%s187 + $0x580] sm:$0xff]
        %v409 = vld [vmem:[%s187 + $0x588] sm:$0xff]
        %v410 = vld [vmem:[%s187 + $0x590] sm:$0xff]
        %v411 = vld [vmem:[%s187 + $0x598] sm:$0xff]
        %v412 = vld [vmem:[%s187 + $0x5a0] sm:$0xff]
        %v413 = vld [vmem:[%s187 + $0x5a8] sm:$0xff]
        %v414 = vld [vmem:[%s187 + $0x5b0] sm:$0xff]
        %v415 = vld [vmem:[%s187 + $0x5b8] sm:$0xff]
        %v416 = vld [vmem:[%s187 + $0x5c0] sm:$0xff]
        %v417 = vld [vmem:[%s187 + $0x5c8] sm:$0xff]
        %v418 = vld [vmem:[%s187 + $0x5d0] sm:$0xff]
        %v419 = vld [vmem:[%s187 + $0x5d8] sm:$0xff]
        %v420 = vld [vmem:[%s187 + $0x5e0] sm:$0xff]
        %v421 = vld [vmem:[%s187 + $0x5e8] sm:$0xff]
        %v422 = vld [vmem:[%s187 + $0x5f0] sm:$0xff]
        %v423 = vld [vmem:[%s187 + $0x5f8] sm:$0xff]
        %v424 = vld [vmem:[%s187 + $0x600] sm:$0xff]
        %v425 = vld [vmem:[%s187 + $0x608] sm:$0xff]
        %v426 = vld [vmem:[%s187 + $0x610] sm:$0xff]
        %v427 = vld [vmem:[%s187 + $0x618] sm:$0xff]
        %v428 = vld [vmem:[%s187 + $0x620] sm:$0xff]
        %v429 = vld [vmem:[%s187 + $0x628] sm:$0xff]
        %v430 = vld [vmem:[%s187 + $0x630] sm:$0xff]
        %v431 = vld [vmem:[%s187 + $0x638] sm:$0xff]
        %v432 = vld [vmem:[%s187 + $0x640] sm:$0xff]
        %v433 = vld [vmem:[%s187 + $0x648] sm:$0xff]
        %v434 = vld [vmem:[%s187 + $0x650] sm:$0xff]
        %v435 = vld [vmem:[%s187 + $0x658] sm:$0xff]
        %v436 = vld [vmem:[%s187 + $0x660] sm:$0xff]
        %v437 = vld [vmem:[%s187 + $0x668] sm:$0xff]
        %v438 = vld [vmem:[%s187 + $0x670] sm:$0xff]
        %v439 = vld [vmem:[%s187 + $0x678] sm:$0xff]
        %v440 = vld [vmem:[%s187 + $0x680] sm:$0xff]
        %v441 = vld [vmem:[%s187 + $0x688] sm:$0xff]
        %v442 = vld [vmem:[%s187 + $0x690] sm:$0xff]
        %v443 = vld [vmem:[%s187 + $0x698] sm:$0xff]
        %v444 = vld [vmem:[%s187 + $0x6a0] sm:$0xff]
        %v445 = vld [vmem:[%s187 + $0x6a8] sm:$0xff]
        %v446 = vld [vmem:[%s187 + $0x6b0] sm:$0xff]
        %v447 = vld [vmem:[%s187 + $0x6b8] sm:$0xff]
        %v448 = vld [vmem:[%s187 + $0x6c0] sm:$0xff]
        %v449 = vld [vmem:[%s187 + $0x6c8] sm:$0xff]
        %v450 = vld [vmem:[%s187 + $0x6d0] sm:$0xff]
        %v451 = vld [vmem:[%s187 + $0x6d8] sm:$0xff]
        %v452 = vld [vmem:[%s187 + $0x6e0] sm:$0xff]
        %v453 = vld [vmem:[%s187 + $0x6e8] sm:$0xff]
        %v454 = vld [vmem:[%s187 + $0x6f0] sm:$0xff]
        %v455 = vld [vmem:[%s187 + $0x6f8] sm:$0xff]
        %v456 = vld [vmem:[%s187 + $0x700] sm:$0xff]
        %v457 = vld [vmem:[%s187 + $0x708] sm:$0xff]
        %v458 = vld [vmem:[%s187 + $0x710] sm:$0xff]
        %v459 = vld [vmem:[%s187 + $0x718] sm:$0xff]
        %v460 = vld [vmem:[%s187 + $0x720] sm:$0xff]
        %v461 = vld [vmem:[%s187 + $0x728] sm:$0xff]
        %v462 = vld [vmem:[%s187 + $0x730] sm:$0xff]
        %v463 = vld [vmem:[%s187 + $0x738] sm:$0xff]
        %v464 = vld [vmem:[%s187 + $0x740] sm:$0xff]
        %v465 = vld [vmem:[%s187 + $0x748] sm:$0xff]
        %v466 = vld [vmem:[%s187 + $0x750] sm:$0xff]
        %v467 = vld [vmem:[%s187 + $0x758] sm:$0xff]
        %v468 = vld [vmem:[%s187 + $0x760] sm:$0xff]
        %v469 = vld [vmem:[%s187 + $0x768] sm:$0xff]
        %v470 = vld [vmem:[%s187 + $0x770] sm:$0xff]
        %v471 = vld [vmem:[%s187 + $0x778] sm:$0xff]
        %v472 = vld [vmem:[%s187 + $0x780] sm:$0xff]
        %v473 = vld [vmem:[%s187 + $0x788] sm:$0xff]
        %v474 = vld [vmem:[%s187 + $0x790] sm:$0xff]
        %v475 = vld [vmem:[%s187 + $0x798] sm:$0xff]
        %v476 = vld [vmem:[%s187 + $0x7a0] sm:$0xff]
        %v477 = vld [vmem:[%s187 + $0x7a8] sm:$0xff]
        %v478 = vld [vmem:[%s187 + $0x7b0] sm:$0xff]
        %v479 = vld [vmem:[%s187 + $0x7b8] sm:$0xff]
        %v480 = vld [vmem:[%s187 + $0x7c0] sm:$0xff]
        %v481 = vld [vmem:[%s187 + $0x7c8] sm:$0xff]
        %v482 = vld [vmem:[%s187 + $0x7d0] sm:$0xff]
        %v483 = vld [vmem:[%s187 + $0x7d8] sm:$0xff]
        %v484 = vld [vmem:[%s187 + $0x7e0] sm:$0xff]
        %v485 = vld [vmem:[%s187 + $0x7e8] sm:$0xff]
        %v486 = vld [vmem:[%s187 + $0x7f0] sm:$0xff]
        %v487 = vld [vmem:[%s187 + $0x7f8] sm:$0xff]
        %v488 = vld [vmem:[%s187 + $0x800] sm:$0xff]
        %v489 = vld [vmem:[%s187 + $0x808] sm:$0xff]
        %v490 = vld [vmem:[%s187 + $0x810] sm:$0xff]
        %v491 = vld [vmem:[%s187 + $0x818] sm:$0xff]
        %v492 = vld [vmem:[%s187 + $0x820] sm:$0xff]
        %v493 = vld [vmem:[%s187 + $0x828] sm:$0xff]
        %v494 = vld [vmem:[%s187 + $0x830] sm:$0xff]
        %v495 = vld [vmem:[%s187 + $0x838] sm:$0xff]
        %v496 = vld [vmem:[%s187 + $0x840] sm:$0xff]
        %v497 = vld [vmem:[%s187 + $0x848] sm:$0xff]
        %v498 = vld [vmem:[%s187 + $0x850] sm:$0xff]
        %v499 = vld [vmem:[%s187 + $0x858] sm:$0xff]
        %v500 = vld [vmem:[%s187 + $0x860] sm:$0xff]
        %v501 = vld [vmem:[%s187 + $0x868] sm:$0xff]
        %v502 = vld [vmem:[%s187 + $0x870] sm:$0xff]
        %v503 = vld [vmem:[%s187 + $0x878] sm:$0xff]
        %v504 = vld [vmem:[%s187 + $0x880] sm:$0xff]
        %v505 = vld [vmem:[%s187 + $0x888] sm:$0xff]
        %v506 = vld [vmem:[%s187 + $0x890] sm:$0xff]
        %v507 = vld [vmem:[%s187 + $0x898] sm:$0xff]
        %v508 = vld [vmem:[%s187 + $0x8a0] sm:$0xff]
        %v509 = vld [vmem:[%s187 + $0x8a8] sm:$0xff]
        %v510 = vld [vmem:[%s187 + $0x8b0] sm:$0xff]
        %v511 = vld [vmem:[%s187 + $0x8b8] sm:$0xff]
        %v512 = vld [vmem:[%s187 + $0x8c0] sm:$0xff]
        %v513 = vld [vmem:[%s187 + $0x8c8] sm:$0xff]
        %v514 = vld [vmem:[%s187 + $0x8d0] sm:$0xff]
        %v515 = vld [vmem:[%s187 + $0x8d8] sm:$0xff]
        %v516 = vld [vmem:[%s187 + $0x8e0] sm:$0xff]
        %v517 = vld [vmem:[%s187 + $0x8e8] sm:$0xff]
        %v518 = vld [vmem:[%s187 + $0x8f0] sm:$0xff]
        %v519 = vld [vmem:[%s187 + $0x8f8] sm:$0xff]
        %v520 = vld [vmem:[%s187 + $0x900] sm:$0xff]
        %v521 = vld [vmem:[%s187 + $0x908] sm:$0xff]
        %v522 = vld [vmem:[%s187 + $0x910] sm:$0xff]
        %v523 = vld [vmem:[%s187 + $0x918] sm:$0xff]
        %v524 = vld [vmem:[%s187 + $0x920] sm:$0xff]
        %v525 = vld [vmem:[%s187 + $0x928] sm:$0xff]
        %v526 = vld [vmem:[%s187 + $0x930] sm:$0xff]
        %v527 = vld [vmem:[%s187 + $0x938] sm:$0xff]
        %v528 = vld [vmem:[%s187 + $0x940] sm:$0xff]
        %v529 = vld [vmem:[%s187 + $0x948] sm:$0xff]
        %v530 = vld [vmem:[%s187 + $0x950] sm:$0xff]
        %v531 = vld [vmem:[%s187 + $0x958] sm:$0xff]
        %v532 = vld [vmem:[%s187 + $0x960] sm:$0xff]
        %v533 = vld [vmem:[%s187 + $0x968] sm:$0xff]
        %v534 = vld [vmem:[%s187 + $0x970] sm:$0xff]
        %v535 = vld [vmem:[%s187 + $0x978] sm:$0xff]
        %v536 = vld [vmem:[%s187 + $0x980] sm:$0xff]
        %v537 = vld [vmem:[%s187 + $0x988] sm:$0xff]
        %v538 = vld [vmem:[%s187 + $0x990] sm:$0xff]
        %v539 = vld [vmem:[%s187 + $0x998] sm:$0xff]
        %v540 = vld [vmem:[%s187 + $0x9a0] sm:$0xff]
        %v541 = vld [vmem:[%s187 + $0x9a8] sm:$0xff]
        %v542 = vld [vmem:[%s187 + $0x9b0] sm:$0xff]
        %v543 = vld [vmem:[%s187 + $0x9b8] sm:$0xff]
        %v544 = vld [vmem:[%s187 + $0x9c0] sm:$0xff]
        %v545 = vld [vmem:[%s187 + $0x9c8] sm:$0xff]
        %v546 = vld [vmem:[%s187 + $0x9d0] sm:$0xff]
        %v547 = vld [vmem:[%s187 + $0x9d8] sm:$0xff]
        %v548 = vld [vmem:[%s187 + $0x9e0] sm:$0xff]
        %v549 = vld [vmem:[%s187 + $0x9e8] sm:$0xff]
        %v550 = vld [vmem:[%s187 + $0x9f0] sm:$0xff]
        %v551 = vld [vmem:[%s187 + $0x9f8] sm:$0xff]
        %v552 = vld [vmem:[%s187 + $0xa00] sm:$0xff]
        %v553 = vld [vmem:[%s187 + $0xa08] sm:$0xff]
        %v554 = vld [vmem:[%s187 + $0xa10] sm:$0xff]
        %v555 = vld [vmem:[%s187 + $0xa18] sm:$0xff]
        %v556 = vld [vmem:[%s187 + $0xa20] sm:$0xff]
        %v557 = vld [vmem:[%s187 + $0xa28] sm:$0xff]
        %v558 = vld [vmem:[%s187 + $0xa30] sm:$0xff]
        %v559 = vld [vmem:[%s187 + $0xa38] sm:$0xff]
        %v560 = vld [vmem:[%s187 + $0xa40] sm:$0xff]
        %v561 = vld [vmem:[%s187 + $0xa48] sm:$0xff]
        %v562 = vld [vmem:[%s187 + $0xa50] sm:$0xff]
        %v563 = vld [vmem:[%s187 + $0xa58] sm:$0xff]
        %v564 = vld [vmem:[%s187 + $0xa60] sm:$0xff]
        %v565 = vld [vmem:[%s187 + $0xa68] sm:$0xff]
        %v566 = vld [vmem:[%s187 + $0xa70] sm:$0xff]
        %v567 = vld [vmem:[%s187 + $0xa78] sm:$0xff]
        %v568 = vld [vmem:[%s187 + $0xa80] sm:$0xff]
        %v569 = vld [vmem:[%s187 + $0xa88] sm:$0xff]
        %v570 = vld [vmem:[%s187 + $0xa90] sm:$0xff]
        %v571 = vld [vmem:[%s187 + $0xa98] sm:$0xff]
        %v572 = vld [vmem:[%s187 + $0xaa0] sm:$0xff]
        %v573 = vld [vmem:[%s187 + $0xaa8] sm:$0xff]
        %v574 = vld [vmem:[%s187 + $0xab0] sm:$0xff]
        %v575 = vld [vmem:[%s187 + $0xab8] sm:$0xff]
        %v576 = vld [vmem:[%s187 + $0xac0] sm:$0xff]
        %v577 = vld [vmem:[%s187 + $0xac8] sm:$0xff]
        %v578 = vld [vmem:[%s187 + $0xad0] sm:$0xff]
        %v579 = vld [vmem:[%s187 + $0xad8] sm:$0xff]
        %v580 = vld [vmem:[%s187 + $0xae0] sm:$0xff]
        %v581 = vld [vmem:[%s187 + $0xae8] sm:$0xff]
        %v582 = vld [vmem:[%s187 + $0xaf0] sm:$0xff]
        %v583 = vld [vmem:[%s187 + $0xaf8] sm:$0xff]
        %v584 = vld [vmem:[%s187 + $0xb00] sm:$0xff]
        %v585 = vld [vmem:[%s187 + $0xb08] sm:$0xff]
        %v586 = vld [vmem:[%s187 + $0xb10] sm:$0xff]
        %v587 = vld [vmem:[%s187 + $0xb18] sm:$0xff]
        %v588 = vld [vmem:[%s187 + $0xb20] sm:$0xff]
        %v589 = vld [vmem:[%s187 + $0xb28] sm:$0xff]
        %v590 = vld [vmem:[%s187 + $0xb30] sm:$0xff]
        %v591 = vld [vmem:[%s187 + $0xb38] sm:$0xff]
        %v592 = vld [vmem:[%s187 + $0xb40] sm:$0xff]
        %v593 = vld [vmem:[%s187 + $0xb48] sm:$0xff]
        %v594 = vld [vmem:[%s187 + $0xb50] sm:$0xff]
        %v595 = vld [vmem:[%s187 + $0xb58] sm:$0xff]
        %v596 = vld [vmem:[%s187 + $0xb60] sm:$0xff]
        %v597 = vld [vmem:[%s187 + $0xb68] sm:$0xff]
        %v598 = vld [vmem:[%s187 + $0xb70] sm:$0xff]
        %v599 = vld [vmem:[%s187 + $0xb78] sm:$0xff]
        %v600 = vld [vmem:[%s187 + $0xb80] sm:$0xff]
        %v601 = vld [vmem:[%s187 + $0xb88] sm:$0xff]
        %v602 = vld [vmem:[%s187 + $0xb90] sm:$0xff]
        %v603 = vld [vmem:[%s187 + $0xb98] sm:$0xff]
        %v604 = vld [vmem:[%s187 + $0xba0] sm:$0xff]
        %v605 = vld [vmem:[%s187 + $0xba8] sm:$0xff]
        %v606 = vld [vmem:[%s187 + $0xbb0] sm:$0xff]
        %v607 = vld [vmem:[%s187 + $0xbb8] sm:$0xff]
        %v608 = vld [vmem:[%s187 + $0xbc0] sm:$0xff]
        %v609 = vld [vmem:[%s187 + $0xbc8] sm:$0xff]
        %v610 = vld [vmem:[%s187 + $0xbd0] sm:$0xff]
        %v611 = vld [vmem:[%s187 + $0xbd8] sm:$0xff]
        %v612 = vld [vmem:[%s187 + $0xbe0] sm:$0xff]
        %v613 = vld [vmem:[%s187 + $0xbe8] sm:$0xff]
        %v614 = vld [vmem:[%s187 + $0xbf0] sm:$0xff]
        %v615 = vld [vmem:[%s187 + $0xbf8] sm:$0xff]
        %v616 = vld [vmem:[%s187 + $0xc00] sm:$0xff]
        %v617 = vld [vmem:[%s187 + $0xc08] sm:$0xff]
        %v618 = vld [vmem:[%s187 + $0xc10] sm:$0xff]
        %v619 = vld [vmem:[%s187 + $0xc18] sm:$0xff]
        %v620 = vld [vmem:[%s187 + $0xc20] sm:$0xff]
        %v621 = vld [vmem:[%s187 + $0xc28] sm:$0xff]
        %v622 = vld [vmem:[%s187 + $0xc30] sm:$0xff]
        %v623 = vld [vmem:[%s187 + $0xc38] sm:$0xff]
        %v624 = vld [vmem:[%s187 + $0xc40] sm:$0xff]
        %v625 = vld [vmem:[%s187 + $0xc48] sm:$0xff]
        %v626 = vld [vmem:[%s187 + $0xc50] sm:$0xff]
        %v627 = vld [vmem:[%s187 + $0xc58] sm:$0xff]
        %v628 = vld [vmem:[%s187 + $0xc60] sm:$0xff]
        %v629 = vld [vmem:[%s187 + $0xc68] sm:$0xff]
        %v630 = vld [vmem:[%s187 + $0xc70] sm:$0xff]
        %v631 = vld [vmem:[%s187 + $0xc78] sm:$0xff]
        %v632 = vld [vmem:[%s187 + $0xc80] sm:$0xff]
        %v633 = vld [vmem:[%s187 + $0xc88] sm:$0xff]
        %v634 = vld [vmem:[%s187 + $0xc90] sm:$0xff]
        %v635 = vld [vmem:[%s187 + $0xc98] sm:$0xff]
        %v636 = vld [vmem:[%s187 + $0xca0] sm:$0xff]
        %v637 = vld [vmem:[%s187 + $0xca8] sm:$0xff]
        %v638 = vld [vmem:[%s187 + $0xcb0] sm:$0xff]
        %v639 = vld [vmem:[%s187 + $0xcb8] sm:$0xff]
        %v640 = vld [vmem:[%s187 + $0xcc0] sm:$0xff]
        %v641 = vld [vmem:[%s187 + $0xcc8] sm:$0xff]
        %v642 = vld [vmem:[%s187 + $0xcd0] sm:$0xff]
        %v643 = vld [vmem:[%s187 + $0xcd8] sm:$0xff]
        %v644 = vld [vmem:[%s187 + $0xce0] sm:$0xff]
        %v645 = vld [vmem:[%s187 + $0xce8] sm:$0xff]
        %v646 = vld [vmem:[%s187 + $0xcf0] sm:$0xff]
        %v647 = vld [vmem:[%s187 + $0xcf8] sm:$0xff]
        %v648 = vld [vmem:[%s187 + $0xd00] sm:$0xff]
        %v649 = vld [vmem:[%s187 + $0xd08] sm:$0xff]
        %v650 = vld [vmem:[%s187 + $0xd10] sm:$0xff]
        %v651 = vld [vmem:[%s187 + $0xd18] sm:$0xff]
        %v652 = vld [vmem:[%s187 + $0xd20] sm:$0xff]
        %v653 = vld [vmem:[%s187 + $0xd28] sm:$0xff]
        %v654 = vld [vmem:[%s187 + $0xd30] sm:$0xff]
        %v655 = vld [vmem:[%s187 + $0xd38] sm:$0xff]
        %v656 = vld [vmem:[%s187 + $0xd40] sm:$0xff]
        %v657 = vld [vmem:[%s187 + $0xd48] sm:$0xff]
        %v658 = vld [vmem:[%s187 + $0xd50] sm:$0xff]
        %v659 = vld [vmem:[%s187 + $0xd58] sm:$0xff]
        %v660 = vld [vmem:[%s187 + $0xd60] sm:$0xff]
        %v661 = vld [vmem:[%s187 + $0xd68] sm:$0xff]
        %v662 = vld [vmem:[%s187 + $0xd70] sm:$0xff]
        %v663 = vld [vmem:[%s187 + $0xd78] sm:$0xff]
        %v664 = vld [vmem:[%s187 + $0xd80] sm:$0xff]
        %v665 = vld [vmem:[%s187 + $0xd88] sm:$0xff]
        %v666 = vld [vmem:[%s187 + $0xd90] sm:$0xff]
        %v667 = vld [vmem:[%s187 + $0xd98] sm:$0xff]
        %v668 = vld [vmem:[%s187 + $0xda0] sm:$0xff]
        %v669 = vld [vmem:[%s187 + $0xda8] sm:$0xff]
        %v670 = vld [vmem:[%s187 + $0xdb0] sm:$0xff]
        %v671 = vld [vmem:[%s187 + $0xdb8] sm:$0xff]
        %v672 = vld [vmem:[%s187 + $0xdc0] sm:$0xff]
        %v673 = vld [vmem:[%s187 + $0xdc8] sm:$0xff]
        %v674 = vld [vmem:[%s187 + $0xdd0] sm:$0xff]
        %v675 = vld [vmem:[%s187 + $0xdd8] sm:$0xff]
        %v676 = vld [vmem:[%s187 + $0xde0] sm:$0xff]
        %v677 = vld [vmem:[%s187 + $0xde8] sm:$0xff]
        %v678 = vld [vmem:[%s187 + $0xdf0] sm:$0xff]
        %v679 = vld [vmem:[%s187 + $0xdf8] sm:$0xff]
        %v680 = vld [vmem:[%s187 + $0xe00] sm:$0xff]
        %v681 = vld [vmem:[%s187 + $0xe08] sm:$0xff]
        %v682 = vld [vmem:[%s187 + $0xe10] sm:$0xff]
        %v683 = vld [vmem:[%s187 + $0xe18] sm:$0xff]
        %v684 = vld [vmem:[%s187 + $0xe20] sm:$0xff]
        %v685 = vld [vmem:[%s187 + $0xe28] sm:$0xff]
        %v686 = vld [vmem:[%s187 + $0xe30] sm:$0xff]
        %v687 = vld [vmem:[%s187 + $0xe38] sm:$0xff]
        %v688 = vld [vmem:[%s187 + $0xe40] sm:$0xff]
        %v689 = vld [vmem:[%s187 + $0xe48] sm:$0xff]
        %v690 = vld [vmem:[%s187 + $0xe50] sm:$0xff]
        %v691 = vld [vmem:[%s187 + $0xe58] sm:$0xff]
        %v692 = vld [vmem:[%s187 + $0xe60] sm:$0xff]
        %v693 = vld [vmem:[%s187 + $0xe68] sm:$0xff]
        %v694 = vld [vmem:[%s187 + $0xe70] sm:$0xff]
        %v695 = vld [vmem:[%s187 + $0xe78] sm:$0xff]
        %v696 = vld [vmem:[%s187 + $0xe80] sm:$0xff]
        %v697 = vld [vmem:[%s187 + $0xe88] sm:$0xff]
        %v698 = vld [vmem:[%s187 + $0xe90] sm:$0xff]
        %v699 = vld [vmem:[%s187 + $0xe98] sm:$0xff]
        %v700 = vld [vmem:[%s187 + $0xea0] sm:$0xff]
        %v701 = vld [vmem:[%s187 + $0xea8] sm:$0xff]
        %v702 = vld [vmem:[%s187 + $0xeb0] sm:$0xff]
        %v703 = vld [vmem:[%s187 + $0xeb8] sm:$0xff]
        %v704 = vld [vmem:[%s187 + $0xec0] sm:$0xff]
        %v705 = vld [vmem:[%s187 + $0xec8] sm:$0xff]
        %v706 = vld [vmem:[%s187 + $0xed0] sm:$0xff]
        %v707 = vld [vmem:[%s187 + $0xed8] sm:$0xff]
        %v708 = vld [vmem:[%s187 + $0xee0] sm:$0xff]
        %v709 = vld [vmem:[%s187 + $0xee8] sm:$0xff]
        %v710 = vld [vmem:[%s187 + $0xef0] sm:$0xff]
        %v711 = vld [vmem:[%s187 + $0xef8] sm:$0xff]
        %v712 = vld [vmem:[%s187 + $0xf00] sm:$0xff]
        %v713 = vld [vmem:[%s187 + $0xf08] sm:$0xff]
        %v714 = vld [vmem:[%s187 + $0xf10] sm:$0xff]
        %v715 = vld [vmem:[%s187 + $0xf18] sm:$0xff]
        %v716 = vld [vmem:[%s187 + $0xf20] sm:$0xff]
        %v717 = vld [vmem:[%s187 + $0xf28] sm:$0xff]
        %v718 = vld [vmem:[%s187 + $0xf30] sm:$0xff]
        %v719 = vld [vmem:[%s187 + $0xf38] sm:$0xff]
        %v720 = vld [vmem:[%s187 + $0xf40] sm:$0xff]
        %v721 = vld [vmem:[%s187 + $0xf48] sm:$0xff]
        %v722 = vld [vmem:[%s187 + $0xf50] sm:$0xff]
        %v723 = vld [vmem:[%s187 + $0xf58] sm:$0xff]
        %v724 = vld [vmem:[%s187 + $0xf60] sm:$0xff]
        %v725 = vld [vmem:[%s187 + $0xf68] sm:$0xff]
        %v726 = vld [vmem:[%s187 + $0xf70] sm:$0xff]
        %v727 = vld [vmem:[%s187 + $0xf78] sm:$0xff]
        %v728 = vld [vmem:[%s187 + $0xf80] sm:$0xff]
        %v729 = vld [vmem:[%s187 + $0xf88] sm:$0xff]
        %v730 = vld [vmem:[%s187 + $0xf90] sm:$0xff]
        %v731 = vld [vmem:[%s187 + $0xf98] sm:$0xff]
        %v732 = vld [vmem:[%s187 + $0xfa0] sm:$0xff]
        %v733 = vld [vmem:[%s187 + $0xfa8] sm:$0xff]
        %v734 = vld [vmem:[%s187 + $0xfb0] sm:$0xff]
        %v735 = vld [vmem:[%s187 + $0xfb8] sm:$0xff]
        %v736 = vld [vmem:[%s187 + $0xfc0] sm:$0xff]
        %v737 = vld [vmem:[%s187 + $0xfc8] sm:$0xff]
        %v738 = vld [vmem:[%s187 + $0xfd0] sm:$0xff]
        %v739 = vld [vmem:[%s187 + $0xfd8] sm:$0xff]
        %v740 = vld [vmem:[%s187 + $0xfe0] sm:$0xff]
        %v741 = vld [vmem:[%s187 + $0xfe8] sm:$0xff]
        %v742 = vld [vmem:[%s187 + $0xff0] sm:$0xff]
        %v743 = vld [vmem:[%s187 + $0xff8] sm:$0xff]
        %v744 = vunpack.c.l.s8.bf16 %v232
        %v745 = vunpack.c.l.s8.bf16 %v233
        %v746 = vunpack.c.l.s8.bf16 %v234
        %v747 = vunpack.c.l.s8.bf16 %v235
        %v748 = vunpack.c.l.s8.bf16 %v236
        %v749 = vunpack.c.l.s8.bf16 %v237
        %v750 = vunpack.c.l.s8.bf16 %v238
        %v751 = vunpack.c.l.s8.bf16 %v239
        %v752 = vunpack.c.l.s8.bf16 %v240
        %v753 = vunpack.c.l.s8.bf16 %v241
        %v754 = vunpack.c.l.s8.bf16 %v242
        %v755 = vunpack.c.l.s8.bf16 %v243
        %v756 = vunpack.c.l.s8.bf16 %v244
        %v757 = vunpack.c.l.s8.bf16 %v245
        %v758 = vunpack.c.l.s8.bf16 %v246
        %v759 = vunpack.c.l.s8.bf16 %v247
        %v760 = vunpack.c.h.s8.bf16 %v232
        %v761 = vunpack.c.h.s8.bf16 %v233
        %v762 = vunpack.c.h.s8.bf16 %v234
        %v763 = vunpack.c.h.s8.bf16 %v235
        %v764 = vunpack.c.h.s8.bf16 %v236
        %v765 = vunpack.c.h.s8.bf16 %v237
        %v766 = vunpack.c.h.s8.bf16 %v238
        %v767 = vunpack.c.h.s8.bf16 %v239
        %v768 = vunpack.c.h.s8.bf16 %v240
        %v769 = vunpack.c.h.s8.bf16 %v241
        %v770 = vunpack.c.h.s8.bf16 %v242
        %v771 = vunpack.c.h.s8.bf16 %v243
        %v772 = vunpack.c.h.s8.bf16 %v244
        %v773 = vunpack.c.h.s8.bf16 %v245
        %v774 = vunpack.c.h.s8.bf16 %v246
        %v775 = vunpack.c.h.s8.bf16 %v247
        %v776 = vunpack.c.l.s8.bf16 %v248
        %v777 = vunpack.c.l.s8.bf16 %v249
        %v778 = vunpack.c.l.s8.bf16 %v250
        %v779 = vunpack.c.l.s8.bf16 %v251
        %v780 = vunpack.c.l.s8.bf16 %v252
        %v781 = vunpack.c.l.s8.bf16 %v253
        %v782 = vunpack.c.l.s8.bf16 %v254
        %v783 = vunpack.c.l.s8.bf16 %v255
        %v784 = vunpack.c.l.s8.bf16 %v256
        %v785 = vunpack.c.l.s8.bf16 %v257
        %v786 = vunpack.c.l.s8.bf16 %v258
        %v787 = vunpack.c.l.s8.bf16 %v259
        %v788 = vunpack.c.l.s8.bf16 %v260
        %v789 = vunpack.c.l.s8.bf16 %v261
        %v790 = vunpack.c.l.s8.bf16 %v262
        %v791 = vunpack.c.l.s8.bf16 %v263
        %v792 = vunpack.c.h.s8.bf16 %v248
        %v793 = vunpack.c.h.s8.bf16 %v249
        %v794 = vunpack.c.h.s8.bf16 %v250
        %v795 = vunpack.c.h.s8.bf16 %v251
        %v796 = vunpack.c.h.s8.bf16 %v252
        %v797 = vunpack.c.h.s8.bf16 %v253
        %v798 = vunpack.c.h.s8.bf16 %v254
        %v799 = vunpack.c.h.s8.bf16 %v255
        %v800 = vunpack.c.h.s8.bf16 %v256
        %v801 = vunpack.c.h.s8.bf16 %v257
        %v802 = vunpack.c.h.s8.bf16 %v258
        %v803 = vunpack.c.h.s8.bf16 %v259
        %v804 = vunpack.c.h.s8.bf16 %v260
        %v805 = vunpack.c.h.s8.bf16 %v261
        %v806 = vunpack.c.h.s8.bf16 %v262
        %v807 = vunpack.c.h.s8.bf16 %v263
        %v808 = vunpack.c.l.s8.bf16 %v264
        %v809 = vunpack.c.l.s8.bf16 %v265
        %v810 = vunpack.c.l.s8.bf16 %v266
        %v811 = vunpack.c.l.s8.bf16 %v267
        %v812 = vunpack.c.l.s8.bf16 %v268
        %v813 = vunpack.c.l.s8.bf16 %v269
        %v814 = vunpack.c.l.s8.bf16 %v270
        %v815 = vunpack.c.l.s8.bf16 %v271
        %v816 = vunpack.c.l.s8.bf16 %v272
        %v817 = vunpack.c.l.s8.bf16 %v273
        %v818 = vunpack.c.l.s8.bf16 %v274
        %v819 = vunpack.c.l.s8.bf16 %v275
        %v820 = vunpack.c.l.s8.bf16 %v276
        %v821 = vunpack.c.l.s8.bf16 %v277
        %v822 = vunpack.c.l.s8.bf16 %v278
        %v823 = vunpack.c.l.s8.bf16 %v279
        %v824 = vunpack.c.h.s8.bf16 %v264
        %v825 = vunpack.c.h.s8.bf16 %v265
        %v826 = vunpack.c.h.s8.bf16 %v266
        %v827 = vunpack.c.h.s8.bf16 %v267
        %v828 = vunpack.c.h.s8.bf16 %v268
        %v829 = vunpack.c.h.s8.bf16 %v269
        %v830 = vunpack.c.h.s8.bf16 %v270
        %v831 = vunpack.c.h.s8.bf16 %v271
        %v832 = vunpack.c.h.s8.bf16 %v272
        %v833 = vunpack.c.h.s8.bf16 %v273
        %v834 = vunpack.c.h.s8.bf16 %v274
        %v835 = vunpack.c.h.s8.bf16 %v275
        %v836 = vunpack.c.h.s8.bf16 %v276
        %v837 = vunpack.c.h.s8.bf16 %v277
        %v838 = vunpack.c.h.s8.bf16 %v278
        %v839 = vunpack.c.h.s8.bf16 %v279
        %v840 = vunpack.c.l.s8.bf16 %v280
        %v841 = vunpack.c.l.s8.bf16 %v281
        %v842 = vunpack.c.l.s8.bf16 %v282
        %v843 = vunpack.c.l.s8.bf16 %v283
        %v844 = vunpack.c.l.s8.bf16 %v284
        %v845 = vunpack.c.l.s8.bf16 %v285
        %v846 = vunpack.c.l.s8.bf16 %v286
        %v847 = vunpack.c.l.s8.bf16 %v287
        %v848 = vunpack.c.l.s8.bf16 %v288
        %v849 = vunpack.c.l.s8.bf16 %v289
        %v850 = vunpack.c.l.s8.bf16 %v290
        %v851 = vunpack.c.l.s8.bf16 %v291
        %v852 = vunpack.c.l.s8.bf16 %v292
        %v853 = vunpack.c.l.s8.bf16 %v293
        %v854 = vunpack.c.l.s8.bf16 %v294
        %v855 = vunpack.c.l.s8.bf16 %v295
        %v856 = vunpack.c.h.s8.bf16 %v280
        %v857 = vunpack.c.h.s8.bf16 %v281
        %v858 = vunpack.c.h.s8.bf16 %v282
        %v859 = vunpack.c.h.s8.bf16 %v283
        %v860 = vunpack.c.h.s8.bf16 %v284
        %v861 = vunpack.c.h.s8.bf16 %v285
        %v862 = vunpack.c.h.s8.bf16 %v286
        %v863 = vunpack.c.h.s8.bf16 %v287
        %v864 = vunpack.c.h.s8.bf16 %v288
        %v865 = vunpack.c.h.s8.bf16 %v289
        %v866 = vunpack.c.h.s8.bf16 %v290
        %v867 = vunpack.c.h.s8.bf16 %v291
        %v868 = vunpack.c.h.s8.bf16 %v292
        %v869 = vunpack.c.h.s8.bf16 %v293
        %v870 = vunpack.c.h.s8.bf16 %v294
        %v871 = vunpack.c.h.s8.bf16 %v295
        %v872 = vunpack.c.l.s8.bf16 %v296
        %v873 = vunpack.c.l.s8.bf16 %v297
        %v874 = vunpack.c.l.s8.bf16 %v298
        %v875 = vunpack.c.l.s8.bf16 %v299
        %v876 = vunpack.c.l.s8.bf16 %v300
        %v877 = vunpack.c.l.s8.bf16 %v301
        %v878 = vunpack.c.l.s8.bf16 %v302
        %v879 = vunpack.c.l.s8.bf16 %v303
        %v880 = vunpack.c.l.s8.bf16 %v304
        %v881 = vunpack.c.l.s8.bf16 %v305
        %v882 = vunpack.c.l.s8.bf16 %v306
        %v883 = vunpack.c.l.s8.bf16 %v307
        %v884 = vunpack.c.l.s8.bf16 %v308
        %v885 = vunpack.c.l.s8.bf16 %v309
        %v886 = vunpack.c.l.s8.bf16 %v310
        %v887 = vunpack.c.l.s8.bf16 %v311
        %v888 = vunpack.c.h.s8.bf16 %v296
        %v889 = vunpack.c.h.s8.bf16 %v297
        %v890 = vunpack.c.h.s8.bf16 %v298
        %v891 = vunpack.c.h.s8.bf16 %v299
        %v892 = vunpack.c.h.s8.bf16 %v300
        %v893 = vunpack.c.h.s8.bf16 %v301
        %v894 = vunpack.c.h.s8.bf16 %v302
        %v895 = vunpack.c.h.s8.bf16 %v303
        %v896 = vunpack.c.h.s8.bf16 %v304
        %v897 = vunpack.c.h.s8.bf16 %v305
        %v898 = vunpack.c.h.s8.bf16 %v306
        %v899 = vunpack.c.h.s8.bf16 %v307
        %v900 = vunpack.c.h.s8.bf16 %v308
        %v901 = vunpack.c.h.s8.bf16 %v309
        %v902 = vunpack.c.h.s8.bf16 %v310
        %v903 = vunpack.c.h.s8.bf16 %v311
        %v904 = vunpack.c.l.s8.bf16 %v312
        %v905 = vunpack.c.l.s8.bf16 %v313
        %v906 = vunpack.c.l.s8.bf16 %v314
        %v907 = vunpack.c.l.s8.bf16 %v315
        %v908 = vunpack.c.l.s8.bf16 %v316
        %v909 = vunpack.c.l.s8.bf16 %v317
        %v910 = vunpack.c.l.s8.bf16 %v318
        %v911 = vunpack.c.l.s8.bf16 %v319
        %v912 = vunpack.c.l.s8.bf16 %v320
        %v913 = vunpack.c.l.s8.bf16 %v321
        %v914 = vunpack.c.l.s8.bf16 %v322
        %v915 = vunpack.c.l.s8.bf16 %v323
        %v916 = vunpack.c.l.s8.bf16 %v324
        %v917 = vunpack.c.l.s8.bf16 %v325
        %v918 = vunpack.c.l.s8.bf16 %v326
        %v919 = vunpack.c.l.s8.bf16 %v327
        %v920 = vunpack.c.h.s8.bf16 %v312
        %v921 = vunpack.c.h.s8.bf16 %v313
        %v922 = vunpack.c.h.s8.bf16 %v314
        %v923 = vunpack.c.h.s8.bf16 %v315
        %v924 = vunpack.c.h.s8.bf16 %v316
        %v925 = vunpack.c.h.s8.bf16 %v317
        %v926 = vunpack.c.h.s8.bf16 %v318
        %v927 = vunpack.c.h.s8.bf16 %v319
        %v928 = vunpack.c.h.s8.bf16 %v320
        %v929 = vunpack.c.h.s8.bf16 %v321
        %v930 = vunpack.c.h.s8.bf16 %v322
        %v931 = vunpack.c.h.s8.bf16 %v323
        %v932 = vunpack.c.h.s8.bf16 %v324
        %v933 = vunpack.c.h.s8.bf16 %v325
        %v934 = vunpack.c.h.s8.bf16 %v326
        %v935 = vunpack.c.h.s8.bf16 %v327
        %v936 = vunpack.c.l.s8.bf16 %v328
        %v937 = vunpack.c.l.s8.bf16 %v329
        %v938 = vunpack.c.l.s8.bf16 %v330
        %v939 = vunpack.c.l.s8.bf16 %v331
        %v940 = vunpack.c.l.s8.bf16 %v332
        %v941 = vunpack.c.l.s8.bf16 %v333
        %v942 = vunpack.c.l.s8.bf16 %v334
        %v943 = vunpack.c.l.s8.bf16 %v335
        %v944 = vunpack.c.l.s8.bf16 %v336
        %v945 = vunpack.c.l.s8.bf16 %v337
        %v946 = vunpack.c.l.s8.bf16 %v338
        %v947 = vunpack.c.l.s8.bf16 %v339
        %v948 = vunpack.c.l.s8.bf16 %v340
        %v949 = vunpack.c.l.s8.bf16 %v341
        %v950 = vunpack.c.l.s8.bf16 %v342
        %v951 = vunpack.c.l.s8.bf16 %v343
        %v952 = vunpack.c.h.s8.bf16 %v328
        %v953 = vunpack.c.h.s8.bf16 %v329
        %v954 = vunpack.c.h.s8.bf16 %v330
        %v955 = vunpack.c.h.s8.bf16 %v331
        %v956 = vunpack.c.h.s8.bf16 %v332
        %v957 = vunpack.c.h.s8.bf16 %v333
        %v958 = vunpack.c.h.s8.bf16 %v334
        %v959 = vunpack.c.h.s8.bf16 %v335
        %v960 = vunpack.c.h.s8.bf16 %v336
        %v961 = vunpack.c.h.s8.bf16 %v337
        %v962 = vunpack.c.h.s8.bf16 %v338
        %v963 = vunpack.c.h.s8.bf16 %v339
        %v964 = vunpack.c.h.s8.bf16 %v340
        %v965 = vunpack.c.h.s8.bf16 %v341
        %v966 = vunpack.c.h.s8.bf16 %v342
        %v967 = vunpack.c.h.s8.bf16 %v343
        %v968 = vunpack.c.l.s8.bf16 %v344
        %v969 = vunpack.c.l.s8.bf16 %v345
        %v970 = vunpack.c.l.s8.bf16 %v346
        %v971 = vunpack.c.l.s8.bf16 %v347
        %v972 = vunpack.c.l.s8.bf16 %v348
        %v973 = vunpack.c.l.s8.bf16 %v349
        %v974 = vunpack.c.l.s8.bf16 %v350
        %v975 = vunpack.c.l.s8.bf16 %v351
        %v976 = vunpack.c.l.s8.bf16 %v352
        %v977 = vunpack.c.l.s8.bf16 %v353
        %v978 = vunpack.c.l.s8.bf16 %v354
        %v979 = vunpack.c.l.s8.bf16 %v355
        %v980 = vunpack.c.l.s8.bf16 %v356
        %v981 = vunpack.c.l.s8.bf16 %v357
        %v982 = vunpack.c.l.s8.bf16 %v358
        %v983 = vunpack.c.l.s8.bf16 %v359
        %v984 = vunpack.c.h.s8.bf16 %v344
        %v985 = vunpack.c.h.s8.bf16 %v345
        %v986 = vunpack.c.h.s8.bf16 %v346
        %v987 = vunpack.c.h.s8.bf16 %v347
        %v988 = vunpack.c.h.s8.bf16 %v348
        %v989 = vunpack.c.h.s8.bf16 %v349
        %v990 = vunpack.c.h.s8.bf16 %v350
        %v991 = vunpack.c.h.s8.bf16 %v351
        %v992 = vunpack.c.h.s8.bf16 %v352
        %v993 = vunpack.c.h.s8.bf16 %v353
        %v994 = vunpack.c.h.s8.bf16 %v354
        %v995 = vunpack.c.h.s8.bf16 %v355
        %v996 = vunpack.c.h.s8.bf16 %v356
        %v997 = vunpack.c.h.s8.bf16 %v357
        %v998 = vunpack.c.h.s8.bf16 %v358
        %v999 = vunpack.c.h.s8.bf16 %v359
        %v1000 = vunpack.c.l.s8.bf16 %v360
        %v1001 = vunpack.c.l.s8.bf16 %v361
        %v1002 = vunpack.c.l.s8.bf16 %v362
        %v1003 = vunpack.c.l.s8.bf16 %v363
        %v1004 = vunpack.c.l.s8.bf16 %v364
        %v1005 = vunpack.c.l.s8.bf16 %v365
        %v1006 = vunpack.c.l.s8.bf16 %v366
        %v1007 = vunpack.c.l.s8.bf16 %v367
        %v1008 = vunpack.c.l.s8.bf16 %v368
        %v1009 = vunpack.c.l.s8.bf16 %v369
        %v1010 = vunpack.c.l.s8.bf16 %v370
        %v1011 = vunpack.c.l.s8.bf16 %v371
        %v1012 = vunpack.c.l.s8.bf16 %v372
        %v1013 = vunpack.c.l.s8.bf16 %v373
        %v1014 = vunpack.c.l.s8.bf16 %v374
        %v1015 = vunpack.c.l.s8.bf16 %v375
        %v1016 = vunpack.c.h.s8.bf16 %v360
        %v1017 = vunpack.c.h.s8.bf16 %v361
        %v1018 = vunpack.c.h.s8.bf16 %v362
        %v1019 = vunpack.c.h.s8.bf16 %v363
        %v1020 = vunpack.c.h.s8.bf16 %v364
        %v1021 = vunpack.c.h.s8.bf16 %v365
        %v1022 = vunpack.c.h.s8.bf16 %v366
        %v1023 = vunpack.c.h.s8.bf16 %v367
        %v1024 = vunpack.c.h.s8.bf16 %v368
        %v1025 = vunpack.c.h.s8.bf16 %v369
        %v1026 = vunpack.c.h.s8.bf16 %v370
        %v1027 = vunpack.c.h.s8.bf16 %v371
        %v1028 = vunpack.c.h.s8.bf16 %v372
        %v1029 = vunpack.c.h.s8.bf16 %v373
        %v1030 = vunpack.c.h.s8.bf16 %v374
        %v1031 = vunpack.c.h.s8.bf16 %v375
        %v1032 = vunpack.c.l.s8.bf16 %v376
        %v1033 = vunpack.c.l.s8.bf16 %v377
        %v1034 = vunpack.c.l.s8.bf16 %v378
        %v1035 = vunpack.c.l.s8.bf16 %v379
        %v1036 = vunpack.c.l.s8.bf16 %v380
        %v1037 = vunpack.c.l.s8.bf16 %v381
        %v1038 = vunpack.c.l.s8.bf16 %v382
        %v1039 = vunpack.c.l.s8.bf16 %v383
        %v1040 = vunpack.c.l.s8.bf16 %v384
        %v1041 = vunpack.c.l.s8.bf16 %v385
        %v1042 = vunpack.c.l.s8.bf16 %v386
        %v1043 = vunpack.c.l.s8.bf16 %v387
        %v1044 = vunpack.c.l.s8.bf16 %v388
        %v1045 = vunpack.c.l.s8.bf16 %v389
        %v1046 = vunpack.c.l.s8.bf16 %v390
        %v1047 = vunpack.c.l.s8.bf16 %v391
        %v1048 = vunpack.c.h.s8.bf16 %v376
        %v1049 = vunpack.c.h.s8.bf16 %v377
        %v1050 = vunpack.c.h.s8.bf16 %v378
        %v1051 = vunpack.c.h.s8.bf16 %v379
        %v1052 = vunpack.c.h.s8.bf16 %v380
        %v1053 = vunpack.c.h.s8.bf16 %v381
        %v1054 = vunpack.c.h.s8.bf16 %v382
        %v1055 = vunpack.c.h.s8.bf16 %v383
        %v1056 = vunpack.c.h.s8.bf16 %v384
        %v1057 = vunpack.c.h.s8.bf16 %v385
        %v1058 = vunpack.c.h.s8.bf16 %v386
        %v1059 = vunpack.c.h.s8.bf16 %v387
        %v1060 = vunpack.c.h.s8.bf16 %v388
        %v1061 = vunpack.c.h.s8.bf16 %v389
        %v1062 = vunpack.c.h.s8.bf16 %v390
        %v1063 = vunpack.c.h.s8.bf16 %v391
        %v1064 = vunpack.c.l.s8.bf16 %v392
        %v1065 = vunpack.c.l.s8.bf16 %v393
        %v1066 = vunpack.c.l.s8.bf16 %v394
        %v1067 = vunpack.c.l.s8.bf16 %v395
        %v1068 = vunpack.c.l.s8.bf16 %v396
        %v1069 = vunpack.c.l.s8.bf16 %v397
        %v1070 = vunpack.c.l.s8.bf16 %v398
        %v1071 = vunpack.c.l.s8.bf16 %v399
        %v1072 = vunpack.c.l.s8.bf16 %v400
        %v1073 = vunpack.c.l.s8.bf16 %v401
        %v1074 = vunpack.c.l.s8.bf16 %v402
        %v1075 = vunpack.c.l.s8.bf16 %v403
        %v1076 = vunpack.c.l.s8.bf16 %v404
        %v1077 = vunpack.c.l.s8.bf16 %v405
        %v1078 = vunpack.c.l.s8.bf16 %v406
        %v1079 = vunpack.c.l.s8.bf16 %v407
        %v1080 = vunpack.c.h.s8.bf16 %v392
        %v1081 = vunpack.c.h.s8.bf16 %v393
        %v1082 = vunpack.c.h.s8.bf16 %v394
        %v1083 = vunpack.c.h.s8.bf16 %v395
        %v1084 = vunpack.c.h.s8.bf16 %v396
        %v1085 = vunpack.c.h.s8.bf16 %v397
        %v1086 = vunpack.c.h.s8.bf16 %v398
        %v1087 = vunpack.c.h.s8.bf16 %v399
        %v1088 = vunpack.c.h.s8.bf16 %v400
        %v1089 = vunpack.c.h.s8.bf16 %v401
        %v1090 = vunpack.c.h.s8.bf16 %v402
        %v1091 = vunpack.c.h.s8.bf16 %v403
        %v1092 = vunpack.c.h.s8.bf16 %v404
        %v1093 = vunpack.c.h.s8.bf16 %v405
        %v1094 = vunpack.c.h.s8.bf16 %v406
        %v1095 = vunpack.c.h.s8.bf16 %v407
        %v1096 = vunpack.c.l.s8.bf16 %v408
        %v1097 = vunpack.c.l.s8.bf16 %v409
        %v1098 = vunpack.c.l.s8.bf16 %v410
        %v1099 = vunpack.c.l.s8.bf16 %v411
        %v1100 = vunpack.c.l.s8.bf16 %v412
        %v1101 = vunpack.c.l.s8.bf16 %v413
        %v1102 = vunpack.c.l.s8.bf16 %v414
        %v1103 = vunpack.c.l.s8.bf16 %v415
        %v1104 = vunpack.c.l.s8.bf16 %v416
        %v1105 = vunpack.c.l.s8.bf16 %v417
        %v1106 = vunpack.c.l.s8.bf16 %v418
        %v1107 = vunpack.c.l.s8.bf16 %v419
        %v1108 = vunpack.c.l.s8.bf16 %v420
        %v1109 = vunpack.c.l.s8.bf16 %v421
        %v1110 = vunpack.c.l.s8.bf16 %v422
        %v1111 = vunpack.c.l.s8.bf16 %v423
        %v1112 = vunpack.c.h.s8.bf16 %v408
        %v1113 = vunpack.c.h.s8.bf16 %v409
        %v1114 = vunpack.c.h.s8.bf16 %v410
        %v1115 = vunpack.c.h.s8.bf16 %v411
        %v1116 = vunpack.c.h.s8.bf16 %v412
        %v1117 = vunpack.c.h.s8.bf16 %v413
        %v1118 = vunpack.c.h.s8.bf16 %v414
        %v1119 = vunpack.c.h.s8.bf16 %v415
        %v1120 = vunpack.c.h.s8.bf16 %v416
        %v1121 = vunpack.c.h.s8.bf16 %v417
        %v1122 = vunpack.c.h.s8.bf16 %v418
        %v1123 = vunpack.c.h.s8.bf16 %v419
        %v1124 = vunpack.c.h.s8.bf16 %v420
        %v1125 = vunpack.c.h.s8.bf16 %v421
        %v1126 = vunpack.c.h.s8.bf16 %v422
        %v1127 = vunpack.c.h.s8.bf16 %v423
        %v1128 = vunpack.c.l.s8.bf16 %v424
        %v1129 = vunpack.c.l.s8.bf16 %v425
        %v1130 = vunpack.c.l.s8.bf16 %v426
        %v1131 = vunpack.c.l.s8.bf16 %v427
        %v1132 = vunpack.c.l.s8.bf16 %v428
        %v1133 = vunpack.c.l.s8.bf16 %v429
        %v1134 = vunpack.c.l.s8.bf16 %v430
        %v1135 = vunpack.c.l.s8.bf16 %v431
        %v1136 = vunpack.c.l.s8.bf16 %v432
        %v1137 = vunpack.c.l.s8.bf16 %v433
        %v1138 = vunpack.c.l.s8.bf16 %v434
        %v1139 = vunpack.c.l.s8.bf16 %v435
        %v1140 = vunpack.c.l.s8.bf16 %v436
        %v1141 = vunpack.c.l.s8.bf16 %v437
        %v1142 = vunpack.c.l.s8.bf16 %v438
        %v1143 = vunpack.c.l.s8.bf16 %v439
        %v1144 = vunpack.c.h.s8.bf16 %v424
        %v1145 = vunpack.c.h.s8.bf16 %v425
        %v1146 = vunpack.c.h.s8.bf16 %v426
        %v1147 = vunpack.c.h.s8.bf16 %v427
        %v1148 = vunpack.c.h.s8.bf16 %v428
        %v1149 = vunpack.c.h.s8.bf16 %v429
        %v1150 = vunpack.c.h.s8.bf16 %v430
        %v1151 = vunpack.c.h.s8.bf16 %v431
        %v1152 = vunpack.c.h.s8.bf16 %v432
        %v1153 = vunpack.c.h.s8.bf16 %v433
        %v1154 = vunpack.c.h.s8.bf16 %v434
        %v1155 = vunpack.c.h.s8.bf16 %v435
        %v1156 = vunpack.c.h.s8.bf16 %v436
        %v1157 = vunpack.c.h.s8.bf16 %v437
        %v1158 = vunpack.c.h.s8.bf16 %v438
        %v1159 = vunpack.c.h.s8.bf16 %v439
        %v1160 = vunpack.c.l.s8.bf16 %v440
        %v1161 = vunpack.c.l.s8.bf16 %v441
        %v1162 = vunpack.c.l.s8.bf16 %v442
        %v1163 = vunpack.c.l.s8.bf16 %v443
        %v1164 = vunpack.c.l.s8.bf16 %v444
        %v1165 = vunpack.c.l.s8.bf16 %v445
        %v1166 = vunpack.c.l.s8.bf16 %v446
        %v1167 = vunpack.c.l.s8.bf16 %v447
        %v1168 = vunpack.c.l.s8.bf16 %v448
        %v1169 = vunpack.c.l.s8.bf16 %v449
        %v1170 = vunpack.c.l.s8.bf16 %v450
        %v1171 = vunpack.c.l.s8.bf16 %v451
        %v1172 = vunpack.c.l.s8.bf16 %v452
        %v1173 = vunpack.c.l.s8.bf16 %v453
        %v1174 = vunpack.c.l.s8.bf16 %v454
        %v1175 = vunpack.c.l.s8.bf16 %v455
        %v1176 = vunpack.c.h.s8.bf16 %v440
        %v1177 = vunpack.c.h.s8.bf16 %v441
        %v1178 = vunpack.c.h.s8.bf16 %v442
        %v1179 = vunpack.c.h.s8.bf16 %v443
        %v1180 = vunpack.c.h.s8.bf16 %v444
        %v1181 = vunpack.c.h.s8.bf16 %v445
        %v1182 = vunpack.c.h.s8.bf16 %v446
        %v1183 = vunpack.c.h.s8.bf16 %v447
        %v1184 = vunpack.c.h.s8.bf16 %v448
        %v1185 = vunpack.c.h.s8.bf16 %v449
        %v1186 = vunpack.c.h.s8.bf16 %v450
        %v1187 = vunpack.c.h.s8.bf16 %v451
        %v1188 = vunpack.c.h.s8.bf16 %v452
        %v1189 = vunpack.c.h.s8.bf16 %v453
        %v1190 = vunpack.c.h.s8.bf16 %v454
        %v1191 = vunpack.c.h.s8.bf16 %v455
        %v1192 = vunpack.c.l.s8.bf16 %v456
        %v1193 = vunpack.c.l.s8.bf16 %v457
        %v1194 = vunpack.c.l.s8.bf16 %v458
        %v1195 = vunpack.c.l.s8.bf16 %v459
        %v1196 = vunpack.c.l.s8.bf16 %v460
        %v1197 = vunpack.c.l.s8.bf16 %v461
        %v1198 = vunpack.c.l.s8.bf16 %v462
        %v1199 = vunpack.c.l.s8.bf16 %v463
        %v1200 = vunpack.c.l.s8.bf16 %v464
        %v1201 = vunpack.c.l.s8.bf16 %v465
        %v1202 = vunpack.c.l.s8.bf16 %v466
        %v1203 = vunpack.c.l.s8.bf16 %v467
        %v1204 = vunpack.c.l.s8.bf16 %v468
        %v1205 = vunpack.c.l.s8.bf16 %v469
        %v1206 = vunpack.c.l.s8.bf16 %v470
        %v1207 = vunpack.c.l.s8.bf16 %v471
        %v1208 = vunpack.c.h.s8.bf16 %v456
        %v1209 = vunpack.c.h.s8.bf16 %v457
        %v1210 = vunpack.c.h.s8.bf16 %v458
        %v1211 = vunpack.c.h.s8.bf16 %v459
        %v1212 = vunpack.c.h.s8.bf16 %v460
        %v1213 = vunpack.c.h.s8.bf16 %v461
        %v1214 = vunpack.c.h.s8.bf16 %v462
        %v1215 = vunpack.c.h.s8.bf16 %v463
        %v1216 = vunpack.c.h.s8.bf16 %v464
        %v1217 = vunpack.c.h.s8.bf16 %v465
        %v1218 = vunpack.c.h.s8.bf16 %v466
        %v1219 = vunpack.c.h.s8.bf16 %v467
        %v1220 = vunpack.c.h.s8.bf16 %v468
        %v1221 = vunpack.c.h.s8.bf16 %v469
        %v1222 = vunpack.c.h.s8.bf16 %v470
        %v1223 = vunpack.c.h.s8.bf16 %v471
        %v1224 = vunpack.c.l.s8.bf16 %v472
        %v1225 = vunpack.c.l.s8.bf16 %v473
        %v1226 = vunpack.c.l.s8.bf16 %v474
        %v1227 = vunpack.c.l.s8.bf16 %v475
        %v1228 = vunpack.c.l.s8.bf16 %v476
        %v1229 = vunpack.c.l.s8.bf16 %v477
        %v1230 = vunpack.c.l.s8.bf16 %v478
        %v1231 = vunpack.c.l.s8.bf16 %v479
        %v1232 = vunpack.c.l.s8.bf16 %v480
        %v1233 = vunpack.c.l.s8.bf16 %v481
        %v1234 = vunpack.c.l.s8.bf16 %v482
        %v1235 = vunpack.c.l.s8.bf16 %v483
        %v1236 = vunpack.c.l.s8.bf16 %v484
        %v1237 = vunpack.c.l.s8.bf16 %v485
        %v1238 = vunpack.c.l.s8.bf16 %v486
        %v1239 = vunpack.c.l.s8.bf16 %v487
        %v1240 = vunpack.c.h.s8.bf16 %v472
        %v1241 = vunpack.c.h.s8.bf16 %v473
        %v1242 = vunpack.c.h.s8.bf16 %v474
        %v1243 = vunpack.c.h.s8.bf16 %v475
        %v1244 = vunpack.c.h.s8.bf16 %v476
        %v1245 = vunpack.c.h.s8.bf16 %v477
        %v1246 = vunpack.c.h.s8.bf16 %v478
        %v1247 = vunpack.c.h.s8.bf16 %v479
        %v1248 = vunpack.c.h.s8.bf16 %v480
        %v1249 = vunpack.c.h.s8.bf16 %v481
        %v1250 = vunpack.c.h.s8.bf16 %v482
        %v1251 = vunpack.c.h.s8.bf16 %v483
        %v1252 = vunpack.c.h.s8.bf16 %v484
        %v1253 = vunpack.c.h.s8.bf16 %v485
        %v1254 = vunpack.c.h.s8.bf16 %v486
        %v1255 = vunpack.c.h.s8.bf16 %v487
        %v1256 = vunpack.c.l.s8.bf16 %v488
        %v1257 = vunpack.c.l.s8.bf16 %v489
        %v1258 = vunpack.c.l.s8.bf16 %v490
        %v1259 = vunpack.c.l.s8.bf16 %v491
        %v1260 = vunpack.c.l.s8.bf16 %v492
        %v1261 = vunpack.c.l.s8.bf16 %v493
        %v1262 = vunpack.c.l.s8.bf16 %v494
        %v1263 = vunpack.c.l.s8.bf16 %v495
        %v1264 = vunpack.c.l.s8.bf16 %v496
        %v1265 = vunpack.c.l.s8.bf16 %v497
        %v1266 = vunpack.c.l.s8.bf16 %v498
        %v1267 = vunpack.c.l.s8.bf16 %v499
        %v1268 = vunpack.c.l.s8.bf16 %v500
        %v1269 = vunpack.c.l.s8.bf16 %v501
        %v1270 = vunpack.c.l.s8.bf16 %v502
        %v1271 = vunpack.c.l.s8.bf16 %v503
        %v1272 = vunpack.c.h.s8.bf16 %v488
        %v1273 = vunpack.c.h.s8.bf16 %v489
        %v1274 = vunpack.c.h.s8.bf16 %v490
        %v1275 = vunpack.c.h.s8.bf16 %v491
        %v1276 = vunpack.c.h.s8.bf16 %v492
        %v1277 = vunpack.c.h.s8.bf16 %v493
        %v1278 = vunpack.c.h.s8.bf16 %v494
        %v1279 = vunpack.c.h.s8.bf16 %v495
        %v1280 = vunpack.c.h.s8.bf16 %v496
        %v1281 = vunpack.c.h.s8.bf16 %v497
        %v1282 = vunpack.c.h.s8.bf16 %v498
        %v1283 = vunpack.c.h.s8.bf16 %v499
        %v1284 = vunpack.c.h.s8.bf16 %v500
        %v1285 = vunpack.c.h.s8.bf16 %v501
        %v1286 = vunpack.c.h.s8.bf16 %v502
        %v1287 = vunpack.c.h.s8.bf16 %v503
        %v1288 = vunpack.c.l.s8.bf16 %v504
        %v1289 = vunpack.c.l.s8.bf16 %v505
        %v1290 = vunpack.c.l.s8.bf16 %v506
        %v1291 = vunpack.c.l.s8.bf16 %v507
        %v1292 = vunpack.c.l.s8.bf16 %v508
        %v1293 = vunpack.c.l.s8.bf16 %v509
        %v1294 = vunpack.c.l.s8.bf16 %v510
        %v1295 = vunpack.c.l.s8.bf16 %v511
        %v1296 = vunpack.c.l.s8.bf16 %v512
        %v1297 = vunpack.c.l.s8.bf16 %v513
        %v1298 = vunpack.c.l.s8.bf16 %v514
        %v1299 = vunpack.c.l.s8.bf16 %v515
        %v1300 = vunpack.c.l.s8.bf16 %v516
        %v1301 = vunpack.c.l.s8.bf16 %v517
        %v1302 = vunpack.c.l.s8.bf16 %v518
        %v1303 = vunpack.c.l.s8.bf16 %v519
        %v1304 = vunpack.c.h.s8.bf16 %v504
        %v1305 = vunpack.c.h.s8.bf16 %v505
        %v1306 = vunpack.c.h.s8.bf16 %v506
        %v1307 = vunpack.c.h.s8.bf16 %v507
        %v1308 = vunpack.c.h.s8.bf16 %v508
        %v1309 = vunpack.c.h.s8.bf16 %v509
        %v1310 = vunpack.c.h.s8.bf16 %v510
        %v1311 = vunpack.c.h.s8.bf16 %v511
        %v1312 = vunpack.c.h.s8.bf16 %v512
        %v1313 = vunpack.c.h.s8.bf16 %v513
        %v1314 = vunpack.c.h.s8.bf16 %v514
        %v1315 = vunpack.c.h.s8.bf16 %v515
        %v1316 = vunpack.c.h.s8.bf16 %v516
        %v1317 = vunpack.c.h.s8.bf16 %v517
        %v1318 = vunpack.c.h.s8.bf16 %v518
        %v1319 = vunpack.c.h.s8.bf16 %v519
        %v1320 = vunpack.c.l.s8.bf16 %v520
        %v1321 = vunpack.c.l.s8.bf16 %v521
        %v1322 = vunpack.c.l.s8.bf16 %v522
        %v1323 = vunpack.c.l.s8.bf16 %v523
        %v1324 = vunpack.c.l.s8.bf16 %v524
        %v1325 = vunpack.c.l.s8.bf16 %v525
        %v1326 = vunpack.c.l.s8.bf16 %v526
        %v1327 = vunpack.c.l.s8.bf16 %v527
        %v1328 = vunpack.c.l.s8.bf16 %v528
        %v1329 = vunpack.c.l.s8.bf16 %v529
        %v1330 = vunpack.c.l.s8.bf16 %v530
        %v1331 = vunpack.c.l.s8.bf16 %v531
        %v1332 = vunpack.c.l.s8.bf16 %v532
        %v1333 = vunpack.c.l.s8.bf16 %v533
        %v1334 = vunpack.c.l.s8.bf16 %v534
        %v1335 = vunpack.c.l.s8.bf16 %v535
        %v1336 = vunpack.c.h.s8.bf16 %v520
        %v1337 = vunpack.c.h.s8.bf16 %v521
        %v1338 = vunpack.c.h.s8.bf16 %v522
        %v1339 = vunpack.c.h.s8.bf16 %v523
        %v1340 = vunpack.c.h.s8.bf16 %v524
        %v1341 = vunpack.c.h.s8.bf16 %v525
        %v1342 = vunpack.c.h.s8.bf16 %v526
        %v1343 = vunpack.c.h.s8.bf16 %v527
        %v1344 = vunpack.c.h.s8.bf16 %v528
        %v1345 = vunpack.c.h.s8.bf16 %v529
        %v1346 = vunpack.c.h.s8.bf16 %v530
        %v1347 = vunpack.c.h.s8.bf16 %v531
        %v1348 = vunpack.c.h.s8.bf16 %v532
        %v1349 = vunpack.c.h.s8.bf16 %v533
        %v1350 = vunpack.c.h.s8.bf16 %v534
        %v1351 = vunpack.c.h.s8.bf16 %v535
        %v1352 = vunpack.c.l.s8.bf16 %v536
        %v1353 = vunpack.c.l.s8.bf16 %v537
        %v1354 = vunpack.c.l.s8.bf16 %v538
        %v1355 = vunpack.c.l.s8.bf16 %v539
        %v1356 = vunpack.c.l.s8.bf16 %v540
        %v1357 = vunpack.c.l.s8.bf16 %v541
        %v1358 = vunpack.c.l.s8.bf16 %v542
        %v1359 = vunpack.c.l.s8.bf16 %v543
        %v1360 = vunpack.c.l.s8.bf16 %v544
        %v1361 = vunpack.c.l.s8.bf16 %v545
        %v1362 = vunpack.c.l.s8.bf16 %v546
        %v1363 = vunpack.c.l.s8.bf16 %v547
        %v1364 = vunpack.c.l.s8.bf16 %v548
        %v1365 = vunpack.c.l.s8.bf16 %v549
        %v1366 = vunpack.c.l.s8.bf16 %v550
        %v1367 = vunpack.c.l.s8.bf16 %v551
        %v1368 = vunpack.c.h.s8.bf16 %v536
        %v1369 = vunpack.c.h.s8.bf16 %v537
        %v1370 = vunpack.c.h.s8.bf16 %v538
        %v1371 = vunpack.c.h.s8.bf16 %v539
        %v1372 = vunpack.c.h.s8.bf16 %v540
        %v1373 = vunpack.c.h.s8.bf16 %v541
        %v1374 = vunpack.c.h.s8.bf16 %v542
        %v1375 = vunpack.c.h.s8.bf16 %v543
        %v1376 = vunpack.c.h.s8.bf16 %v544
        %v1377 = vunpack.c.h.s8.bf16 %v545
        %v1378 = vunpack.c.h.s8.bf16 %v546
        %v1379 = vunpack.c.h.s8.bf16 %v547
        %v1380 = vunpack.c.h.s8.bf16 %v548
        %v1381 = vunpack.c.h.s8.bf16 %v549
        %v1382 = vunpack.c.h.s8.bf16 %v550
        %v1383 = vunpack.c.h.s8.bf16 %v551
        %v1384 = vunpack.c.l.s8.bf16 %v552
        %v1385 = vunpack.c.l.s8.bf16 %v553
        %v1386 = vunpack.c.l.s8.bf16 %v554
        %v1387 = vunpack.c.l.s8.bf16 %v555
        %v1388 = vunpack.c.l.s8.bf16 %v556
        %v1389 = vunpack.c.l.s8.bf16 %v557
        %v1390 = vunpack.c.l.s8.bf16 %v558
        %v1391 = vunpack.c.l.s8.bf16 %v559
        %v1392 = vunpack.c.l.s8.bf16 %v560
        %v1393 = vunpack.c.l.s8.bf16 %v561
        %v1394 = vunpack.c.l.s8.bf16 %v562
        %v1395 = vunpack.c.l.s8.bf16 %v563
        %v1396 = vunpack.c.l.s8.bf16 %v564
        %v1397 = vunpack.c.l.s8.bf16 %v565
        %v1398 = vunpack.c.l.s8.bf16 %v566
        %v1399 = vunpack.c.l.s8.bf16 %v567
        %v1400 = vunpack.c.h.s8.bf16 %v552
        %v1401 = vunpack.c.h.s8.bf16 %v553
        %v1402 = vunpack.c.h.s8.bf16 %v554
        %v1403 = vunpack.c.h.s8.bf16 %v555
        %v1404 = vunpack.c.h.s8.bf16 %v556
        %v1405 = vunpack.c.h.s8.bf16 %v557
        %v1406 = vunpack.c.h.s8.bf16 %v558
        %v1407 = vunpack.c.h.s8.bf16 %v559
        %v1408 = vunpack.c.h.s8.bf16 %v560
        %v1409 = vunpack.c.h.s8.bf16 %v561
        %v1410 = vunpack.c.h.s8.bf16 %v562
        %v1411 = vunpack.c.h.s8.bf16 %v563
        %v1412 = vunpack.c.h.s8.bf16 %v564
        %v1413 = vunpack.c.h.s8.bf16 %v565
        %v1414 = vunpack.c.h.s8.bf16 %v566
        %v1415 = vunpack.c.h.s8.bf16 %v567
        %v1416 = vunpack.c.l.s8.bf16 %v568
        %v1417 = vunpack.c.l.s8.bf16 %v569
        %v1418 = vunpack.c.l.s8.bf16 %v570
        %v1419 = vunpack.c.l.s8.bf16 %v571
        %v1420 = vunpack.c.l.s8.bf16 %v572
        %v1421 = vunpack.c.l.s8.bf16 %v573
        %v1422 = vunpack.c.l.s8.bf16 %v574
        %v1423 = vunpack.c.l.s8.bf16 %v575
        %v1424 = vunpack.c.l.s8.bf16 %v576
        %v1425 = vunpack.c.l.s8.bf16 %v577
        %v1426 = vunpack.c.l.s8.bf16 %v578
        %v1427 = vunpack.c.l.s8.bf16 %v579
        %v1428 = vunpack.c.l.s8.bf16 %v580
        %v1429 = vunpack.c.l.s8.bf16 %v581
        %v1430 = vunpack.c.l.s8.bf16 %v582
        %v1431 = vunpack.c.l.s8.bf16 %v583
        %v1432 = vunpack.c.h.s8.bf16 %v568
        %v1433 = vunpack.c.h.s8.bf16 %v569
        %v1434 = vunpack.c.h.s8.bf16 %v570
        %v1435 = vunpack.c.h.s8.bf16 %v571
        %v1436 = vunpack.c.h.s8.bf16 %v572
        %v1437 = vunpack.c.h.s8.bf16 %v573
        %v1438 = vunpack.c.h.s8.bf16 %v574
        %v1439 = vunpack.c.h.s8.bf16 %v575
        %v1440 = vunpack.c.h.s8.bf16 %v576
        %v1441 = vunpack.c.h.s8.bf16 %v577
        %v1442 = vunpack.c.h.s8.bf16 %v578
        %v1443 = vunpack.c.h.s8.bf16 %v579
        %v1444 = vunpack.c.h.s8.bf16 %v580
        %v1445 = vunpack.c.h.s8.bf16 %v581
        %v1446 = vunpack.c.h.s8.bf16 %v582
        %v1447 = vunpack.c.h.s8.bf16 %v583
        %v1448 = vunpack.c.l.s8.bf16 %v584
        %v1449 = vunpack.c.l.s8.bf16 %v585
        %v1450 = vunpack.c.l.s8.bf16 %v586
        %v1451 = vunpack.c.l.s8.bf16 %v587
        %v1452 = vunpack.c.l.s8.bf16 %v588
        %v1453 = vunpack.c.l.s8.bf16 %v589
        %v1454 = vunpack.c.l.s8.bf16 %v590
        %v1455 = vunpack.c.l.s8.bf16 %v591
        %v1456 = vunpack.c.l.s8.bf16 %v592
        %v1457 = vunpack.c.l.s8.bf16 %v593
        %v1458 = vunpack.c.l.s8.bf16 %v594
        %v1459 = vunpack.c.l.s8.bf16 %v595
        %v1460 = vunpack.c.l.s8.bf16 %v596
        %v1461 = vunpack.c.l.s8.bf16 %v597
        %v1462 = vunpack.c.l.s8.bf16 %v598
        %v1463 = vunpack.c.l.s8.bf16 %v599
        %v1464 = vunpack.c.h.s8.bf16 %v584
        %v1465 = vunpack.c.h.s8.bf16 %v585
        %v1466 = vunpack.c.h.s8.bf16 %v586
        %v1467 = vunpack.c.h.s8.bf16 %v587
        %v1468 = vunpack.c.h.s8.bf16 %v588
        %v1469 = vunpack.c.h.s8.bf16 %v589
        %v1470 = vunpack.c.h.s8.bf16 %v590
        %v1471 = vunpack.c.h.s8.bf16 %v591
        %v1472 = vunpack.c.h.s8.bf16 %v592
        %v1473 = vunpack.c.h.s8.bf16 %v593
        %v1474 = vunpack.c.h.s8.bf16 %v594
        %v1475 = vunpack.c.h.s8.bf16 %v595
        %v1476 = vunpack.c.h.s8.bf16 %v596
        %v1477 = vunpack.c.h.s8.bf16 %v597
        %v1478 = vunpack.c.h.s8.bf16 %v598
        %v1479 = vunpack.c.h.s8.bf16 %v599
        %v1480 = vunpack.c.l.s8.bf16 %v600
        %v1481 = vunpack.c.l.s8.bf16 %v601
        %v1482 = vunpack.c.l.s8.bf16 %v602
        %v1483 = vunpack.c.l.s8.bf16 %v603
        %v1484 = vunpack.c.l.s8.bf16 %v604
        %v1485 = vunpack.c.l.s8.bf16 %v605
        %v1486 = vunpack.c.l.s8.bf16 %v606
        %v1487 = vunpack.c.l.s8.bf16 %v607
        %v1488 = vunpack.c.l.s8.bf16 %v608
        %v1489 = vunpack.c.l.s8.bf16 %v609
        %v1490 = vunpack.c.l.s8.bf16 %v610
        %v1491 = vunpack.c.l.s8.bf16 %v611
        %v1492 = vunpack.c.l.s8.bf16 %v612
        %v1493 = vunpack.c.l.s8.bf16 %v613
        %v1494 = vunpack.c.l.s8.bf16 %v614
        %v1495 = vunpack.c.l.s8.bf16 %v615
        %v1496 = vunpack.c.h.s8.bf16 %v600
        %v1497 = vunpack.c.h.s8.bf16 %v601
        %v1498 = vunpack.c.h.s8.bf16 %v602
        %v1499 = vunpack.c.h.s8.bf16 %v603
        %v1500 = vunpack.c.h.s8.bf16 %v604
        %v1501 = vunpack.c.h.s8.bf16 %v605
        %v1502 = vunpack.c.h.s8.bf16 %v606
        %v1503 = vunpack.c.h.s8.bf16 %v607
        %v1504 = vunpack.c.h.s8.bf16 %v608
        %v1505 = vunpack.c.h.s8.bf16 %v609
        %v1506 = vunpack.c.h.s8.bf16 %v610
        %v1507 = vunpack.c.h.s8.bf16 %v611
        %v1508 = vunpack.c.h.s8.bf16 %v612
        %v1509 = vunpack.c.h.s8.bf16 %v613
        %v1510 = vunpack.c.h.s8.bf16 %v614
        %v1511 = vunpack.c.h.s8.bf16 %v615
        %v1512 = vunpack.c.l.s8.bf16 %v616
        %v1513 = vunpack.c.l.s8.bf16 %v617
        %v1514 = vunpack.c.l.s8.bf16 %v618
        %v1515 = vunpack.c.l.s8.bf16 %v619
        %v1516 = vunpack.c.l.s8.bf16 %v620
        %v1517 = vunpack.c.l.s8.bf16 %v621
        %v1518 = vunpack.c.l.s8.bf16 %v622
        %v1519 = vunpack.c.l.s8.bf16 %v623
        %v1520 = vunpack.c.l.s8.bf16 %v624
        %v1521 = vunpack.c.l.s8.bf16 %v625
        %v1522 = vunpack.c.l.s8.bf16 %v626
        %v1523 = vunpack.c.l.s8.bf16 %v627
        %v1524 = vunpack.c.l.s8.bf16 %v628
        %v1525 = vunpack.c.l.s8.bf16 %v629
        %v1526 = vunpack.c.l.s8.bf16 %v630
        %v1527 = vunpack.c.l.s8.bf16 %v631
        %v1528 = vunpack.c.h.s8.bf16 %v616
        %v1529 = vunpack.c.h.s8.bf16 %v617
        %v1530 = vunpack.c.h.s8.bf16 %v618
        %v1531 = vunpack.c.h.s8.bf16 %v619
        %v1532 = vunpack.c.h.s8.bf16 %v620
        %v1533 = vunpack.c.h.s8.bf16 %v621
        %v1534 = vunpack.c.h.s8.bf16 %v622
        %v1535 = vunpack.c.h.s8.bf16 %v623
        %v1536 = vunpack.c.h.s8.bf16 %v624
        %v1537 = vunpack.c.h.s8.bf16 %v625
        %v1538 = vunpack.c.h.s8.bf16 %v626
        %v1539 = vunpack.c.h.s8.bf16 %v627
        %v1540 = vunpack.c.h.s8.bf16 %v628
        %v1541 = vunpack.c.h.s8.bf16 %v629
        %v1542 = vunpack.c.h.s8.bf16 %v630
        %v1543 = vunpack.c.h.s8.bf16 %v631
        %v1544 = vunpack.c.l.s8.bf16 %v632
        %v1545 = vunpack.c.l.s8.bf16 %v633
        %v1546 = vunpack.c.l.s8.bf16 %v634
        %v1547 = vunpack.c.l.s8.bf16 %v635
        %v1548 = vunpack.c.l.s8.bf16 %v636
        %v1549 = vunpack.c.l.s8.bf16 %v637
        %v1550 = vunpack.c.l.s8.bf16 %v638
        %v1551 = vunpack.c.l.s8.bf16 %v639
        %v1552 = vunpack.c.l.s8.bf16 %v640
        %v1553 = vunpack.c.l.s8.bf16 %v641
        %v1554 = vunpack.c.l.s8.bf16 %v642
        %v1555 = vunpack.c.l.s8.bf16 %v643
        %v1556 = vunpack.c.l.s8.bf16 %v644
        %v1557 = vunpack.c.l.s8.bf16 %v645
        %v1558 = vunpack.c.l.s8.bf16 %v646
        %v1559 = vunpack.c.l.s8.bf16 %v647
        %v1560 = vunpack.c.h.s8.bf16 %v632
        %v1561 = vunpack.c.h.s8.bf16 %v633
        %v1562 = vunpack.c.h.s8.bf16 %v634
        %v1563 = vunpack.c.h.s8.bf16 %v635
        %v1564 = vunpack.c.h.s8.bf16 %v636
        %v1565 = vunpack.c.h.s8.bf16 %v637
        %v1566 = vunpack.c.h.s8.bf16 %v638
        %v1567 = vunpack.c.h.s8.bf16 %v639
        %v1568 = vunpack.c.h.s8.bf16 %v640
        %v1569 = vunpack.c.h.s8.bf16 %v641
        %v1570 = vunpack.c.h.s8.bf16 %v642
        %v1571 = vunpack.c.h.s8.bf16 %v643
        %v1572 = vunpack.c.h.s8.bf16 %v644
        %v1573 = vunpack.c.h.s8.bf16 %v645
        %v1574 = vunpack.c.h.s8.bf16 %v646
        %v1575 = vunpack.c.h.s8.bf16 %v647
        %v1576 = vunpack.c.l.s8.bf16 %v648
        %v1577 = vunpack.c.l.s8.bf16 %v649
        %v1578 = vunpack.c.l.s8.bf16 %v650
        %v1579 = vunpack.c.l.s8.bf16 %v651
        %v1580 = vunpack.c.l.s8.bf16 %v652
        %v1581 = vunpack.c.l.s8.bf16 %v653
        %v1582 = vunpack.c.l.s8.bf16 %v654
        %v1583 = vunpack.c.l.s8.bf16 %v655
        %v1584 = vunpack.c.l.s8.bf16 %v656
        %v1585 = vunpack.c.l.s8.bf16 %v657
        %v1586 = vunpack.c.l.s8.bf16 %v658
        %v1587 = vunpack.c.l.s8.bf16 %v659
        %v1588 = vunpack.c.l.s8.bf16 %v660
        %v1589 = vunpack.c.l.s8.bf16 %v661
        %v1590 = vunpack.c.l.s8.bf16 %v662
        %v1591 = vunpack.c.l.s8.bf16 %v663
        %v1592 = vunpack.c.h.s8.bf16 %v648
        %v1593 = vunpack.c.h.s8.bf16 %v649
        %v1594 = vunpack.c.h.s8.bf16 %v650
        %v1595 = vunpack.c.h.s8.bf16 %v651
        %v1596 = vunpack.c.h.s8.bf16 %v652
        %v1597 = vunpack.c.h.s8.bf16 %v653
        %v1598 = vunpack.c.h.s8.bf16 %v654
        %v1599 = vunpack.c.h.s8.bf16 %v655
        %v1600 = vunpack.c.h.s8.bf16 %v656
        %v1601 = vunpack.c.h.s8.bf16 %v657
        %v1602 = vunpack.c.h.s8.bf16 %v658
        %v1603 = vunpack.c.h.s8.bf16 %v659
        %v1604 = vunpack.c.h.s8.bf16 %v660
        %v1605 = vunpack.c.h.s8.bf16 %v661
        %v1606 = vunpack.c.h.s8.bf16 %v662
        %v1607 = vunpack.c.h.s8.bf16 %v663
        %v1608 = vunpack.c.l.s8.bf16 %v664
        %v1609 = vunpack.c.l.s8.bf16 %v665
        %v1610 = vunpack.c.l.s8.bf16 %v666
        %v1611 = vunpack.c.l.s8.bf16 %v667
        %v1612 = vunpack.c.l.s8.bf16 %v668
        %v1613 = vunpack.c.l.s8.bf16 %v669
        %v1614 = vunpack.c.l.s8.bf16 %v670
        %v1615 = vunpack.c.l.s8.bf16 %v671
        %v1616 = vunpack.c.l.s8.bf16 %v672
        %v1617 = vunpack.c.l.s8.bf16 %v673
        %v1618 = vunpack.c.l.s8.bf16 %v674
        %v1619 = vunpack.c.l.s8.bf16 %v675
        %v1620 = vunpack.c.l.s8.bf16 %v676
        %v1621 = vunpack.c.l.s8.bf16 %v677
        %v1622 = vunpack.c.l.s8.bf16 %v678
        %v1623 = vunpack.c.l.s8.bf16 %v679
        %v1624 = vunpack.c.h.s8.bf16 %v664
        %v1625 = vunpack.c.h.s8.bf16 %v665
        %v1626 = vunpack.c.h.s8.bf16 %v666
        %v1627 = vunpack.c.h.s8.bf16 %v667
        %v1628 = vunpack.c.h.s8.bf16 %v668
        %v1629 = vunpack.c.h.s8.bf16 %v669
        %v1630 = vunpack.c.h.s8.bf16 %v670
        %v1631 = vunpack.c.h.s8.bf16 %v671
        %v1632 = vunpack.c.h.s8.bf16 %v672
        %v1633 = vunpack.c.h.s8.bf16 %v673
        %v1634 = vunpack.c.h.s8.bf16 %v674
        %v1635 = vunpack.c.h.s8.bf16 %v675
        %v1636 = vunpack.c.h.s8.bf16 %v676
        %v1637 = vunpack.c.h.s8.bf16 %v677
        %v1638 = vunpack.c.h.s8.bf16 %v678
        %v1639 = vunpack.c.h.s8.bf16 %v679
        %v1640 = vunpack.c.l.s8.bf16 %v680
        %v1641 = vunpack.c.l.s8.bf16 %v681
        %v1642 = vunpack.c.l.s8.bf16 %v682
        %v1643 = vunpack.c.l.s8.bf16 %v683
        %v1644 = vunpack.c.l.s8.bf16 %v684
        %v1645 = vunpack.c.l.s8.bf16 %v685
        %v1646 = vunpack.c.l.s8.bf16 %v686
        %v1647 = vunpack.c.l.s8.bf16 %v687
        %v1648 = vunpack.c.l.s8.bf16 %v688
        %v1649 = vunpack.c.l.s8.bf16 %v689
        %v1650 = vunpack.c.l.s8.bf16 %v690
        %v1651 = vunpack.c.l.s8.bf16 %v691
        %v1652 = vunpack.c.l.s8.bf16 %v692
        %v1653 = vunpack.c.l.s8.bf16 %v693
        %v1654 = vunpack.c.l.s8.bf16 %v694
        %v1655 = vunpack.c.l.s8.bf16 %v695
        %v1656 = vunpack.c.h.s8.bf16 %v680
        %v1657 = vunpack.c.h.s8.bf16 %v681
        %v1658 = vunpack.c.h.s8.bf16 %v682
        %v1659 = vunpack.c.h.s8.bf16 %v683
        %v1660 = vunpack.c.h.s8.bf16 %v684
        %v1661 = vunpack.c.h.s8.bf16 %v685
        %v1662 = vunpack.c.h.s8.bf16 %v686
        %v1663 = vunpack.c.h.s8.bf16 %v687
        %v1664 = vunpack.c.h.s8.bf16 %v688
        %v1665 = vunpack.c.h.s8.bf16 %v689
        %v1666 = vunpack.c.h.s8.bf16 %v690
        %v1667 = vunpack.c.h.s8.bf16 %v691
        %v1668 = vunpack.c.h.s8.bf16 %v692
        %v1669 = vunpack.c.h.s8.bf16 %v693
        %v1670 = vunpack.c.h.s8.bf16 %v694
        %v1671 = vunpack.c.h.s8.bf16 %v695
        %v1672 = vunpack.c.l.s8.bf16 %v696
        %v1673 = vunpack.c.l.s8.bf16 %v697
        %v1674 = vunpack.c.l.s8.bf16 %v698
        %v1675 = vunpack.c.l.s8.bf16 %v699
        %v1676 = vunpack.c.l.s8.bf16 %v700
        %v1677 = vunpack.c.l.s8.bf16 %v701
        %v1678 = vunpack.c.l.s8.bf16 %v702
        %v1679 = vunpack.c.l.s8.bf16 %v703
        %v1680 = vunpack.c.l.s8.bf16 %v704
        %v1681 = vunpack.c.l.s8.bf16 %v705
        %v1682 = vunpack.c.l.s8.bf16 %v706
        %v1683 = vunpack.c.l.s8.bf16 %v707
        %v1684 = vunpack.c.l.s8.bf16 %v708
        %v1685 = vunpack.c.l.s8.bf16 %v709
        %v1686 = vunpack.c.l.s8.bf16 %v710
        %v1687 = vunpack.c.l.s8.bf16 %v711
        %v1688 = vunpack.c.h.s8.bf16 %v696
        %v1689 = vunpack.c.h.s8.bf16 %v697
        %v1690 = vunpack.c.h.s8.bf16 %v698
        %v1691 = vunpack.c.h.s8.bf16 %v699
        %v1692 = vunpack.c.h.s8.bf16 %v700
        %v1693 = vunpack.c.h.s8.bf16 %v701
        %v1694 = vunpack.c.h.s8.bf16 %v702
        %v1695 = vunpack.c.h.s8.bf16 %v703
        %v1696 = vunpack.c.h.s8.bf16 %v704
        %v1697 = vunpack.c.h.s8.bf16 %v705
        %v1698 = vunpack.c.h.s8.bf16 %v706
        %v1699 = vunpack.c.h.s8.bf16 %v707
        %v1700 = vunpack.c.h.s8.bf16 %v708
        %v1701 = vunpack.c.h.s8.bf16 %v709
        %v1702 = vunpack.c.h.s8.bf16 %v710
        %v1703 = vunpack.c.h.s8.bf16 %v711
        %v1704 = vunpack.c.l.s8.bf16 %v712
        %v1705 = vunpack.c.l.s8.bf16 %v713
        %v1706 = vunpack.c.l.s8.bf16 %v714
        %v1707 = vunpack.c.l.s8.bf16 %v715
        %v1708 = vunpack.c.l.s8.bf16 %v716
        %v1709 = vunpack.c.l.s8.bf16 %v717
        %v1710 = vunpack.c.l.s8.bf16 %v718
        %v1711 = vunpack.c.l.s8.bf16 %v719
        %v1712 = vunpack.c.l.s8.bf16 %v720
        %v1713 = vunpack.c.l.s8.bf16 %v721
        %v1714 = vunpack.c.l.s8.bf16 %v722
        %v1715 = vunpack.c.l.s8.bf16 %v723
        %v1716 = vunpack.c.l.s8.bf16 %v724
        %v1717 = vunpack.c.l.s8.bf16 %v725
        %v1718 = vunpack.c.l.s8.bf16 %v726
        %v1719 = vunpack.c.l.s8.bf16 %v727
        %v1720 = vunpack.c.h.s8.bf16 %v712
        %v1721 = vunpack.c.h.s8.bf16 %v713
        %v1722 = vunpack.c.h.s8.bf16 %v714
        %v1723 = vunpack.c.h.s8.bf16 %v715
        %v1724 = vunpack.c.h.s8.bf16 %v716
        %v1725 = vunpack.c.h.s8.bf16 %v717
        %v1726 = vunpack.c.h.s8.bf16 %v718
        %v1727 = vunpack.c.h.s8.bf16 %v719
        %v1728 = vunpack.c.h.s8.bf16 %v720
        %v1729 = vunpack.c.h.s8.bf16 %v721
        %v1730 = vunpack.c.h.s8.bf16 %v722
        %v1731 = vunpack.c.h.s8.bf16 %v723
        %v1732 = vunpack.c.h.s8.bf16 %v724
        %v1733 = vunpack.c.h.s8.bf16 %v725
        %v1734 = vunpack.c.h.s8.bf16 %v726
        %v1735 = vunpack.c.h.s8.bf16 %v727
        %v1736 = vunpack.c.l.s8.bf16 %v728
        %v1737 = vunpack.c.l.s8.bf16 %v729
        %v1738 = vunpack.c.l.s8.bf16 %v730
        %v1739 = vunpack.c.l.s8.bf16 %v731
        %v1740 = vunpack.c.l.s8.bf16 %v732
        %v1741 = vunpack.c.l.s8.bf16 %v733
        %v1742 = vunpack.c.l.s8.bf16 %v734
        %v1743 = vunpack.c.l.s8.bf16 %v735
        %v1744 = vunpack.c.l.s8.bf16 %v736
        %v1745 = vunpack.c.l.s8.bf16 %v737
        %v1746 = vunpack.c.l.s8.bf16 %v738
        %v1747 = vunpack.c.l.s8.bf16 %v739
        %v1748 = vunpack.c.l.s8.bf16 %v740
        %v1749 = vunpack.c.l.s8.bf16 %v741
        %v1750 = vunpack.c.l.s8.bf16 %v742
        %v1751 = vunpack.c.l.s8.bf16 %v743
        %v1752 = vunpack.c.h.s8.bf16 %v728
        %v1753 = vunpack.c.h.s8.bf16 %v729
        %v1754 = vunpack.c.h.s8.bf16 %v730
        %v1755 = vunpack.c.h.s8.bf16 %v731
        %v1756 = vunpack.c.h.s8.bf16 %v732
        %v1757 = vunpack.c.h.s8.bf16 %v733
        %v1758 = vunpack.c.h.s8.bf16 %v734
        %v1759 = vunpack.c.h.s8.bf16 %v735
        %v1760 = vunpack.c.h.s8.bf16 %v736
        %v1761 = vunpack.c.h.s8.bf16 %v737
        %v1762 = vunpack.c.h.s8.bf16 %v738
        %v1763 = vunpack.c.h.s8.bf16 %v739
        %v1764 = vunpack.c.h.s8.bf16 %v740
        %v1765 = vunpack.c.h.s8.bf16 %v741
        %v1766 = vunpack.c.h.s8.bf16 %v742
        %v1767 = vunpack.c.h.s8.bf16 %v743
        %v1768 = vld [vmem:[%s0] sm:$0xff]
        %v1769 = vld [vmem:[%s0 + $0x8] sm:$0xff]
        %v1772 = vcombine.high %v1768, %v1768
        %v1774 = vunpack.c.l.s4 1983009808
        %v1775 = vunpack.c.0.s8 %v1774
        %v1776 = vlaneseq
        %v1777 = vshrl.u32 %v1776, 7
        %v1778 = vsub.s32 %v1775, %v1777
        %v1779 = vrot.slane %v1768, %v1778
        %v1781 = vunpack.c.l.s4 1983009808
        %v1782 = vunpack.c.0.s8 %v1781
        %v1783 = vlaneseq
        %v1784 = vshrl.u32 %v1783, 7
        %v1785 = vsub.s32 %v1782, %v1784
        %v1786 = vrot.slane %v1772, %v1785
        %v1787 = vcombine.high %v1779, %v1779
        %v1788 = vcombine.high %v1786, %v1786
        %v1789 = vcombine.high %v1769, %v1769
        %v1791 = vunpack.c.l.s4 1983009808
        %v1792 = vunpack.c.0.s8 %v1791
        %v1793 = vlaneseq
        %v1794 = vshrl.u32 %v1793, 7
        %v1795 = vsub.s32 %v1792, %v1794
        %v1796 = vrot.slane %v1769, %v1795
        %v1798 = vunpack.c.l.s4 1983009808
        %v1799 = vunpack.c.0.s8 %v1798
        %v1800 = vlaneseq
        %v1801 = vshrl.u32 %v1800, 7
        %v1802 = vsub.s32 %v1799, %v1801
        %v1803 = vrot.slane %v1789, %v1802
        %v1804 = vcombine.high %v1796, %v1796
        %v1805 = vcombine.high %v1803, %v1803
        %1814 = vmatprep.subr.bf16.mxu0 %v745
        %1815 = vmatpush1.bf16.msra.mxu0 %v744
        %1816 = vmatprep.subr.bf16.mxu0 %v761
        %1817 = vmatpush1.bf16.msra.mxu0 %v760
        %1818 = vmatprep.subr.bf16.mxu0 %v777
        %1819 = vmatpush1.bf16.msra.mxu0 %v776
        %1820 = vmatprep.subr.bf16.mxu0 %v793
        %1821 = vmatpush1.bf16.msra.mxu0 %v792
        %1822 = vmatprep.subr.bf16.mxu0 %v809
        %1823 = vmatpush1.bf16.msra.mxu0 %v808
        %1824 = vmatprep.subr.bf16.mxu0 %v825
        %1825 = vmatpush1.bf16.msra.mxu0 %v824
        %1826 = vmatprep.subr.bf16.mxu0 %v841
        %1827 = vmatpush1.bf16.msra.mxu0 %v840
        %1828 = vmatprep.subr.bf16.mxu0 %v857
        %1829 = vmatpush1.bf16.msra.mxu0 %v856
        %1830 = vmatprep.subr.bf16.mxu0 %v873
        %1831 = vmatpush1.bf16.msra.mxu0 %v872
        %1832 = vmatprep.subr.bf16.mxu0 %v889
        %1833 = vmatpush1.bf16.msra.mxu0 %v888
        %1834 = vmatprep.subr.bf16.mxu0 %v905
        %1835 = vmatpush1.bf16.msra.mxu0 %v904
        %1836 = vmatprep.subr.bf16.mxu0 %v921
        %1837 = vmatpush1.bf16.msra.mxu0 %v920
        %1838 = vmatprep.subr.bf16.mxu0 %v937
        %1839 = vmatpush1.bf16.msra.mxu0 %v936
        %1840 = vmatprep.subr.bf16.mxu0 %v953
        %1841 = vmatpush1.bf16.msra.mxu0 %v952
        %1842 = vmatprep.subr.bf16.mxu0 %v969
        %1843 = vmatpush1.bf16.msra.mxu0 %v968
        %1844 = vmatprep.subr.bf16.mxu0 %v985
        %1845 = vmatpush1.bf16.msra.mxu0 %v984
        %1846 = vmatprep.mubr.bf16.mxu0 %v1787
        %1847 = vmatmul.mubr.bf16.gmra.mrb[0].mxu0 %v1779
        %v1848 = vpop.f32.mrb[0].mxu0
        %v1849 = vadd.f32 0.0, %v1848
        %v1850 = vpop.f32.mrb[0].mxu0
        %v1851 = vadd.f32 0.0, %v1850
        %v1852 = vpop.f32.mrb[0].mxu0
        %v1853 = vpop.f32.mrb[0].mxu0
        %1854 = vdwg.mxu0
        %1855 = vmatprep.subr.bf16.mxu0 %v1001
        %1856 = vmatpush1.bf16.msra.mxu0 %v1000
        %1857 = vmatprep.subr.bf16.mxu0 %v1017
        %1858 = vmatpush1.bf16.msra.mxu0 %v1016
        %1859 = vmatprep.subr.bf16.mxu0 %v1033
        %1860 = vmatpush1.bf16.msra.mxu0 %v1032
        %1861 = vmatprep.subr.bf16.mxu0 %v1049
        %1862 = vmatpush1.bf16.msra.mxu0 %v1048
        %1863 = vmatprep.subr.bf16.mxu0 %v1065
        %1864 = vmatpush1.bf16.msra.mxu0 %v1064
        %1865 = vmatprep.subr.bf16.mxu0 %v1081
        %1866 = vmatpush1.bf16.msra.mxu0 %v1080
        %1867 = vmatprep.subr.bf16.mxu0 %v1097
        %1868 = vmatpush1.bf16.msra.mxu0 %v1096
        %1869 = vmatprep.subr.bf16.mxu0 %v1113
        %1870 = vmatpush1.bf16.msra.mxu0 %v1112
        %1871 = vmatprep.subr.bf16.mxu0 %v1129
        %1872 = vmatpush1.bf16.msra.mxu0 %v1128
        %1873 = vmatprep.subr.bf16.mxu0 %v1145
        %1874 = vmatpush1.bf16.msra.mxu0 %v1144
        %1875 = vmatprep.subr.bf16.mxu0 %v1161
        %1876 = vmatpush1.bf16.msra.mxu0 %v1160
        %1877 = vmatprep.subr.bf16.mxu0 %v1177
        %1878 = vmatpush1.bf16.msra.mxu0 %v1176
        %1879 = vmatprep.subr.bf16.mxu0 %v1193
        %1880 = vmatpush1.bf16.msra.mxu0 %v1192
        %1881 = vmatprep.subr.bf16.mxu0 %v1209
        %1882 = vmatpush1.bf16.msra.mxu0 %v1208
        %1883 = vmatprep.subr.bf16.mxu0 %v1225
        %1884 = vmatpush1.bf16.msra.mxu0 %v1224
        %1885 = vmatprep.subr.bf16.mxu0 %v1241
        %1886 = vmatpush1.bf16.msra.mxu0 %v1240
        %1887 = vmatprep.mubr.bf16.mxu0 %v1788
        %1888 = vmatmul.mubr.bf16.gmra.mrb[0].mxu0 %v1786
        %v1889 = vpop.f32.mrb[0].mxu0
        %v1890 = vadd.f32 %v1849, %v1889
        %v1891 = vpop.f32.mrb[0].mxu0
        %v1892 = vadd.f32 %v1851, %v1891
        %v1893 = vpop.f32.mrb[0].mxu0
        %v1894 = vpop.f32.mrb[0].mxu0
        %1895 = vdwg.mxu0
        %1896 = vmatprep.subr.bf16.mxu0 %v1257
        %1897 = vmatpush1.bf16.msra.mxu0 %v1256
        %1898 = vmatprep.subr.bf16.mxu0 %v1273
        %1899 = vmatpush1.bf16.msra.mxu0 %v1272
        %1900 = vmatprep.subr.bf16.mxu0 %v1289
        %1901 = vmatpush1.bf16.msra.mxu0 %v1288
        %1902 = vmatprep.subr.bf16.mxu0 %v1305
        %1903 = vmatpush1.bf16.msra.mxu0 %v1304
        %1904 = vmatprep.subr.bf16.mxu0 %v1321
        %1905 = vmatpush1.bf16.msra.mxu0 %v1320
        %1906 = vmatprep.subr.bf16.mxu0 %v1337
        %1907 = vmatpush1.bf16.msra.mxu0 %v1336
        %1908 = vmatprep.subr.bf16.mxu0 %v1353
        %1909 = vmatpush1.bf16.msra.mxu0 %v1352
        %1910 = vmatprep.subr.bf16.mxu0 %v1369
        %1911 = vmatpush1.bf16.msra.mxu0 %v1368
        %1912 = vmatprep.subr.bf16.mxu0 %v1385
        %1913 = vmatpush1.bf16.msra.mxu0 %v1384
        %1914 = vmatprep.subr.bf16.mxu0 %v1401
        %1915 = vmatpush1.bf16.msra.mxu0 %v1400
        %1916 = vmatprep.subr.bf16.mxu0 %v1417
        %1917 = vmatpush1.bf16.msra.mxu0 %v1416
        %1918 = vmatprep.subr.bf16.mxu0 %v1433
        %1919 = vmatpush1.bf16.msra.mxu0 %v1432
        %1920 = vmatprep.subr.bf16.mxu0 %v1449
        %1921 = vmatpush1.bf16.msra.mxu0 %v1448
        %1922 = vmatprep.subr.bf16.mxu0 %v1465
        %1923 = vmatpush1.bf16.msra.mxu0 %v1464
        %1924 = vmatprep.subr.bf16.mxu0 %v1481
        %1925 = vmatpush1.bf16.msra.mxu0 %v1480
        %1926 = vmatprep.subr.bf16.mxu0 %v1497
        %1927 = vmatpush1.bf16.msra.mxu0 %v1496
        %1928 = vmatprep.mubr.bf16.mxu0 %v1804
        %1929 = vmatmul.mubr.bf16.gmra.mrb[0].mxu0 %v1796
        %v1930 = vpop.f32.mrb[0].mxu0
        %v1931 = vadd.f32 %v1890, %v1930
        %v1932 = vpop.f32.mrb[0].mxu0
        %v1933 = vadd.f32 %v1892, %v1932
        %v1934 = vpop.f32.mrb[0].mxu0
        %v1935 = vpop.f32.mrb[0].mxu0
        %1936 = vdwg.mxu0
        %1937 = vmatprep.subr.bf16.mxu0 %v1513
        %1938 = vmatpush1.bf16.msra.mxu0 %v1512
        %1939 = vmatprep.subr.bf16.mxu0 %v1529
        %1940 = vmatpush1.bf16.msra.mxu0 %v1528
        %1941 = vmatprep.subr.bf16.mxu0 %v1545
        %1942 = vmatpush1.bf16.msra.mxu0 %v1544
        %1943 = vmatprep.subr.bf16.mxu0 %v1561
        %1944 = vmatpush1.bf16.msra.mxu0 %v1560
        %1945 = vmatprep.subr.bf16.mxu0 %v1577
        %1946 = vmatpush1.bf16.msra.mxu0 %v1576
        %1947 = vmatprep.subr.bf16.mxu0 %v1593
        %1948 = vmatpush1.bf16.msra.mxu0 %v1592
        %1949 = vmatprep.subr.bf16.mxu0 %v1609
        %1950 = vmatpush1.bf16.msra.mxu0 %v1608
        %1951 = vmatprep.subr.bf16.mxu0 %v1625
        %1952 = vmatpush1.bf16.msra.mxu0 %v1624
        %1953 = vmatprep.subr.bf16.mxu0 %v1641
        %1954 = vmatpush1.bf16.msra.mxu0 %v1640
        %1955 = vmatprep.subr.bf16.mxu0 %v1657
        %1956 = vmatpush1.bf16.msra.mxu0 %v1656
        %1957 = vmatprep.subr.bf16.mxu0 %v1673
        %1958 = vmatpush1.bf16.msra.mxu0 %v1672
        %1959 = vmatprep.subr.bf16.mxu0 %v1689
        %1960 = vmatpush1.bf16.msra.mxu0 %v1688
        %1961 = vmatprep.subr.bf16.mxu0 %v1705
        %1962 = vmatpush1.bf16.msra.mxu0 %v1704
        %1963 = vmatprep.subr.bf16.mxu0 %v1721
        %1964 = vmatpush1.bf16.msra.mxu0 %v1720
        %1965 = vmatprep.subr.bf16.mxu0 %v1737
        %1966 = vmatpush1.bf16.msra.mxu0 %v1736
        %1967 = vmatprep.subr.bf16.mxu0 %v1753
        %1968 = vmatpush1.bf16.msra.mxu0 %v1752
        %1969 = vmatprep.mubr.bf16.mxu0 %v1805
        %1970 = vmatmul.mubr.bf16.gmra.mrb[0].mxu0 %v1803
        %v1971 = vpop.f32.mrb[0].mxu0
        %v1972 = vadd.f32 %v1931, %v1971
        %v1973 = vpop.f32.mrb[0].mxu0
        %v1974 = vadd.f32 %v1933, %v1973
        %v1975 = vpop.f32.mrb[0].mxu0
        %v1976 = vpop.f32.mrb[0].mxu0
        %1977 = vdwg.mxu0
        %1978 = vmatprep.subr.bf16.mxu0 %v747
        %1979 = vmatpush1.bf16.msra.mxu0 %v746
        %1980 = vmatprep.subr.bf16.mxu0 %v763
        %1981 = vmatpush1.bf16.msra.mxu0 %v762
        %1982 = vmatprep.subr.bf16.mxu0 %v779
        %1983 = vmatpush1.bf16.msra.mxu0 %v778
        %1984 = vmatprep.subr.bf16.mxu0 %v795
        %1985 = vmatpush1.bf16.msra.mxu0 %v794
        %1986 = vmatprep.subr.bf16.mxu0 %v811
        %1987 = vmatpush1.bf16.msra.mxu0 %v810
        %1988 = vmatprep.subr.bf16.mxu0 %v827
        %1989 = vmatpush1.bf16.msra.mxu0 %v826
        %1990 = vmatprep.subr.bf16.mxu0 %v843
        %1991 = vmatpush1.bf16.msra.mxu0 %v842
        %1992 = vmatprep.subr.bf16.mxu0 %v859
        %1993 = vmatpush1.bf16.msra.mxu0 %v858
        %1994 = vmatprep.subr.bf16.mxu0 %v875
        %1995 = vmatpush1.bf16.msra.mxu0 %v874
        %1996 = vmatprep.subr.bf16.mxu0 %v891
        %1997 = vmatpush1.bf16.msra.mxu0 %v890
        %1998 = vmatprep.subr.bf16.mxu0 %v907
        %1999 = vmatpush1.bf16.msra.mxu0 %v906
        %2000 = vmatprep.subr.bf16.mxu0 %v923
        %2001 = vmatpush1.bf16.msra.mxu0 %v922
        %2002 = vmatprep.subr.bf16.mxu0 %v939
        %2003 = vmatpush1.bf16.msra.mxu0 %v938
        %2004 = vmatprep.subr.bf16.mxu0 %v955
        %2005 = vmatpush1.bf16.msra.mxu0 %v954
        %2006 = vmatprep.subr.bf16.mxu0 %v971
        %2007 = vmatpush1.bf16.msra.mxu0 %v970
        %2008 = vmatprep.subr.bf16.mxu0 %v987
        %2009 = vmatpush1.bf16.msra.mxu0 %v986
        %2010 = vmatprep.mubr.bf16.mxu0 %v1787
        %2011 = vmatmul.mubr.bf16.gmra.mrb[0].mxu0 %v1779
        %v2012 = vpop.f32.mrb[0].mxu0
        %v2013 = vadd.f32 0.0, %v2012
        %v2014 = vpop.f32.mrb[0].mxu0
        %v2015 = vadd.f32 0.0, %v2014
        %v2016 = vpop.f32.mrb[0].mxu0
        %v2017 = vpop.f32.mrb[0].mxu0
        %2018 = vdwg.mxu0
        %2019 = vmatprep.subr.bf16.mxu0 %v1003
        %2020 = vmatpush1.bf16.msra.mxu0 %v1002
        %2021 = vmatprep.subr.bf16.mxu0 %v1019
        %2022 = vmatpush1.bf16.msra.mxu0 %v1018
        %2023 = vmatprep.subr.bf16.mxu0 %v1035
        %2024 = vmatpush1.bf16.msra.mxu0 %v1034
        %2025 = vmatprep.subr.bf16.mxu0 %v1051
        %2026 = vmatpush1.bf16.msra.mxu0 %v1050
        %2027 = vmatprep.subr.bf16.mxu0 %v1067
        %2028 = vmatpush1.bf16.msra.mxu0 %v1066
        %2029 = vmatprep.subr.bf16.mxu0 %v1083
        %2030 = vmatpush1.bf16.msra.mxu0 %v1082
        %2031 = vmatprep.subr.bf16.mxu0 %v1099
        %2032 = vmatpush1.bf16.msra.mxu0 %v1098
        %2033 = vmatprep.subr.bf16.mxu0 %v1115
        %2034 = vmatpush1.bf16.msra.mxu0 %v1114
        %2035 = vmatprep.subr.bf16.mxu0 %v1131
        %2036 = vmatpush1.bf16.msra.mxu0 %v1130
        %2037 = vmatprep.subr.bf16.mxu0 %v1147
        %2038 = vmatpush1.bf16.msra.mxu0 %v1146
        %2039 = vmatprep.subr.bf16.mxu0 %v1163
        %2040 = vmatpush1.bf16.msra.mxu0 %v1162
        %2041 = vmatprep.subr.bf16.mxu0 %v1179
        %2042 = vmatpush1.bf16.msra.mxu0 %v1178
        %2043 = vmatprep.subr.bf16.mxu0 %v1195
        %2044 = vmatpush1.bf16.msra.mxu0 %v1194
        %2045 = vmatprep.subr.bf16.mxu0 %v1211
        %2046 = vmatpush1.bf16.msra.mxu0 %v1210
        %2047 = vmatprep.subr.bf16.mxu0 %v1227
        %2048 = vmatpush1.bf16.msra.mxu0 %v1226
        %2049 = vmatprep.subr.bf16.mxu0 %v1243
        %2050 = vmatpush1.bf16.msra.mxu0 %v1242
        %2051 = vmatprep.mubr.bf16.mxu0 %v1788
        %2052 = vmatmul.mubr.bf16.gmra.mrb[0].mxu0 %v1786
        %v2053 = vpop.f32.mrb[0].mxu0
        %v2054 = vadd.f32 %v2013, %v2053
        %v2055 = vpop.f32.mrb[0].mxu0
        %v2056 = vadd.f32 %v2015, %v2055
        %v2057 = vpop.f32.mrb[0].mxu0
        %v2058 = vpop.f32.mrb[0].mxu0
        %2059 = vdwg.mxu0
        %2060 = vmatprep.subr.bf16.mxu0 %v1259
        %2061 = vmatpush1.bf16.msra.mxu0 %v1258
        %2062 = vmatprep.subr.bf16.mxu0 %v1275
        %2063 = vmatpush1.bf16.msra.mxu0 %v1274
        %2064 = vmatprep.subr.bf16.mxu0 %v1291
        %2065 = vmatpush1.bf16.msra.mxu0 %v1290
        %2066 = vmatprep.subr.bf16.mxu0 %v1307
        %2067 = vmatpush1.bf16.msra.mxu0 %v1306
        %2068 = vmatprep.subr.bf16.mxu0 %v1323
        %2069 = vmatpush1.bf16.msra.mxu0 %v1322
        %2070 = vmatprep.subr.bf16.mxu0 %v1339
        %2071 = vmatpush1.bf16.msra.mxu0 %v1338
        %2072 = vmatprep.subr.bf16.mxu0 %v1355
        %2073 = vmatpush1.bf16.msra.mxu0 %v1354
        %2074 = vmatprep.subr.bf16.mxu0 %v1371
        %2075 = vmatpush1.bf16.msra.mxu0 %v1370
        %2076 = vmatprep.subr.bf16.mxu0 %v1387
        %2077 = vmatpush1.bf16.msra.mxu0 %v1386
        %2078 = vmatprep.subr.bf16.mxu0 %v1403
        %2079 = vmatpush1.bf16.msra.mxu0 %v1402
        %2080 = vmatprep.subr.bf16.mxu0 %v1419
        %2081 = vmatpush1.bf16.msra.mxu0 %v1418
        %2082 = vmatprep.subr.bf16.mxu0 %v1435
        %2083 = vmatpush1.bf16.msra.mxu0 %v1434
        %2084 = vmatprep.subr.bf16.mxu0 %v1451
        %2085 = vmatpush1.bf16.msra.mxu0 %v1450
        %2086 = vmatprep.subr.bf16.mxu0 %v1467
        %2087 = vmatpush1.bf16.msra.mxu0 %v1466
        %2088 = vmatprep.subr.bf16.mxu0 %v1483
        %2089 = vmatpush1.bf16.msra.mxu0 %v1482
        %2090 = vmatprep.subr.bf16.mxu0 %v1499
        %2091 = vmatpush1.bf16.msra.mxu0 %v1498
        %2092 = vmatprep.mubr.bf16.mxu0 %v1804
        %2093 = vmatmul.mubr.bf16.gmra.mrb[0].mxu0 %v1796
        %v2094 = vpop.f32.mrb[0].mxu0
        %v2095 = vadd.f32 %v2054, %v2094
        %v2096 = vpop.f32.mrb[0].mxu0
        %v2097 = vadd.f32 %v2056, %v2096
        %v2098 = vpop.f32.mrb[0].mxu0
        %v2099 = vpop.f32.mrb[0].mxu0
        %2100 = vdwg.mxu0
        %2101 = vmatprep.subr.bf16.mxu0 %v1515
        %2102 = vmatpush1.bf16.msra.mxu0 %v1514
        %2103 = vmatprep.subr.bf16.mxu0 %v1531
        %2104 = vmatpush1.bf16.msra.mxu0 %v1530
        %2105 = vmatprep.subr.bf16.mxu0 %v1547
        %2106 = vmatpush1.bf16.msra.mxu0 %v1546
        %2107 = vmatprep.subr.bf16.mxu0 %v1563
        %2108 = vmatpush1.bf16.msra.mxu0 %v1562
        %2109 = vmatprep.subr.bf16.mxu0 %v1579
        %2110 = vmatpush1.bf16.msra.mxu0 %v1578
        %2111 = vmatprep.subr.bf16.mxu0 %v1595
        %2112 = vmatpush1.bf16.msra.mxu0 %v1594
        %2113 = vmatprep.subr.bf16.mxu0 %v1611
        %2114 = vmatpush1.bf16.msra.mxu0 %v1610
        %2115 = vmatprep.subr.bf16.mxu0 %v1627
        %2116 = vmatpush1.bf16.msra.mxu0 %v1626
        %2117 = vmatprep.subr.bf16.mxu0 %v1643
        %2118 = vmatpush1.bf16.msra.mxu0 %v1642
        %2119 = vmatprep.subr.bf16.mxu0 %v1659
        %2120 = vmatpush1.bf16.msra.mxu0 %v1658
        %2121 = vmatprep.subr.bf16.mxu0 %v1675
        %2122 = vmatpush1.bf16.msra.mxu0 %v1674
        %2123 = vmatprep.subr.bf16.mxu0 %v1691
        %2124 = vmatpush1.bf16.msra.mxu0 %v1690
        %2125 = vmatprep.subr.bf16.mxu0 %v1707
        %2126 = vmatpush1.bf16.msra.mxu0 %v1706
        %2127 = vmatprep.subr.bf16.mxu0 %v1723
        %2128 = vmatpush1.bf16.msra.mxu0 %v1722
        %2129 = vmatprep.subr.bf16.mxu0 %v1739
        %2130 = vmatpush1.bf16.msra.mxu0 %v1738
        %2131 = vmatprep.subr.bf16.mxu0 %v1755
        %2132 = vmatpush1.bf16.msra.mxu0 %v1754
        %2133 = vmatprep.mubr.bf16.mxu0 %v1805
        %2134 = vmatmul.mubr.bf16.gmra.mrb[0].mxu0 %v1803
        %v2135 = vpop.f32.mrb[0].mxu0
        %v2136 = vadd.f32 %v2095, %v2135
        %v2137 = vpop.f32.mrb[0].mxu0
        %v2138 = vadd.f32 %v2097, %v2137
        %v2139 = vpop.f32.mrb[0].mxu0
        %v2140 = vpop.f32.mrb[0].mxu0
        %2141 = vdwg.mxu0
        %2142 = vmatprep.subr.bf16.mxu0 %v749
        %2143 = vmatpush1.bf16.msra.mxu0 %v748
        %2144 = vmatprep.subr.bf16.mxu0 %v765
        %2145 = vmatpush1.bf16.msra.mxu0 %v764
        %2146 = vmatprep.subr.bf16.mxu0 %v781
        %2147 = vmatpush1.bf16.msra.mxu0 %v780
        %2148 = vmatprep.subr.bf16.mxu0 %v797
        %2149 = vmatpush1.bf16.msra.mxu0 %v796
        %2150 = vmatprep.subr.bf16.mxu0 %v813
        %2151 = vmatpush1.bf16.msra.mxu0 %v812
        %2152 = vmatprep.subr.bf16.mxu0 %v829
        %2153 = vmatpush1.bf16.msra.mxu0 %v828
        %2154 = vmatprep.subr.bf16.mxu0 %v845
        %2155 = vmatpush1.bf16.msra.mxu0 %v844
        %2156 = vmatprep.subr.bf16.mxu0 %v861
        %2157 = vmatpush1.bf16.msra.mxu0 %v860
        %2158 = vmatprep.subr.bf16.mxu0 %v877
        %2159 = vmatpush1.bf16.msra.mxu0 %v876
        %2160 = vmatprep.subr.bf16.mxu0 %v893
        %2161 = vmatpush1.bf16.msra.mxu0 %v892
        %2162 = vmatprep.subr.bf16.mxu0 %v909
        %2163 = vmatpush1.bf16.msra.mxu0 %v908
        %2164 = vmatprep.subr.bf16.mxu0 %v925
        %2165 = vmatpush1.bf16.msra.mxu0 %v924
        %2166 = vmatprep.subr.bf16.mxu0 %v941
        %2167 = vmatpush1.bf16.msra.mxu0 %v940
        %2168 = vmatprep.subr.bf16.mxu0 %v957
        %2169 = vmatpush1.bf16.msra.mxu0 %v956
        %2170 = vmatprep.subr.bf16.mxu0 %v973
        %2171 = vmatpush1.bf16.msra.mxu0 %v972
        %2172 = vmatprep.subr.bf16.mxu0 %v989
        %2173 = vmatpush1.bf16.msra.mxu0 %v988
        %2174 = vmatprep.mubr.bf16.mxu0 %v1787
        %2175 = vmatmul.mubr.bf16.gmra.mrb[0].mxu0 %v1779
        %v2176 = vpop.f32.mrb[0].mxu0
        %v2177 = vadd.f32 0.0, %v2176
        %v2178 = vpop.f32.mrb[0].mxu0
        %v2179 = vadd.f32 0.0, %v2178
        %v2180 = vpop.f32.mrb[0].mxu0
        %v2181 = vpop.f32.mrb[0].mxu0
        %2182 = vdwg.mxu0
        %2183 = vmatprep.subr.bf16.mxu0 %v1005
        %2184 = vmatpush1.bf16.msra.mxu0 %v1004
        %2185 = vmatprep.subr.bf16.mxu0 %v1021
        %2186 = vmatpush1.bf16.msra.mxu0 %v1020
        %2187 = vmatprep.subr.bf16.mxu0 %v1037
        %2188 = vmatpush1.bf16.msra.mxu0 %v1036
        %2189 = vmatprep.subr.bf16.mxu0 %v1053
        %2190 = vmatpush1.bf16.msra.mxu0 %v1052
        %2191 = vmatprep.subr.bf16.mxu0 %v1069
        %2192 = vmatpush1.bf16.msra.mxu0 %v1068
        %2193 = vmatprep.subr.bf16.mxu0 %v1085
        %2194 = vmatpush1.bf16.msra.mxu0 %v1084
        %2195 = vmatprep.subr.bf16.mxu0 %v1101
        %2196 = vmatpush1.bf16.msra.mxu0 %v1100
        %2197 = vmatprep.subr.bf16.mxu0 %v1117
        %2198 = vmatpush1.bf16.msra.mxu0 %v1116
        %2199 = vmatprep.subr.bf16.mxu0 %v1133
        %2200 = vmatpush1.bf16.msra.mxu0 %v1132
        %2201 = vmatprep.subr.bf16.mxu0 %v1149
        %2202 = vmatpush1.bf16.msra.mxu0 %v1148
        %2203 = vmatprep.subr.bf16.mxu0 %v1165
        %2204 = vmatpush1.bf16.msra.mxu0 %v1164
        %2205 = vmatprep.subr.bf16.mxu0 %v1181
        %2206 = vmatpush1.bf16.msra.mxu0 %v1180
        %2207 = vmatprep.subr.bf16.mxu0 %v1197
        %2208 = vmatpush1.bf16.msra.mxu0 %v1196
        %2209 = vmatprep.subr.bf16.mxu0 %v1213
        %2210 = vmatpush1.bf16.msra.mxu0 %v1212
        %2211 = vmatprep.subr.bf16.mxu0 %v1229
        %2212 = vmatpush1.bf16.msra.mxu0 %v1228
        %2213 = vmatprep.subr.bf16.mxu0 %v1245
        %2214 = vmatpush1.bf16.msra.mxu0 %v1244
        %2215 = vmatprep.mubr.bf16.mxu0 %v1788
        %2216 = vmatmul.mubr.bf16.gmra.mrb[0].mxu0 %v1786
        %v2217 = vpop.f32.mrb[0].mxu0
        %v2218 = vadd.f32 %v2177, %v2217
        %v2219 = vpop.f32.mrb[0].mxu0
        %v2220 = vadd.f32 %v2179, %v2219
        %v2221 = vpop.f32.mrb[0].mxu0
        %v2222 = vpop.f32.mrb[0].mxu0
        %2223 = vdwg.mxu0
        %2224 = vmatprep.subr.bf16.mxu0 %v1261
        %2225 = vmatpush1.bf16.msra.mxu0 %v1260
        %2226 = vmatprep.subr.bf16.mxu0 %v1277
        %2227 = vmatpush1.bf16.msra.mxu0 %v1276
        %2228 = vmatprep.subr.bf16.mxu0 %v1293
        %2229 = vmatpush1.bf16.msra.mxu0 %v1292
        %2230 = vmatprep.subr.bf16.mxu0 %v1309
        %2231 = vmatpush1.bf16.msra.mxu0 %v1308
        %2232 = vmatprep.subr.bf16.mxu0 %v1325
        %2233 = vmatpush1.bf16.msra.mxu0 %v1324
        %2234 = vmatprep.subr.bf16.mxu0 %v1341
        %2235 = vmatpush1.bf16.msra.mxu0 %v1340
        %2236 = vmatprep.subr.bf16.mxu0 %v1357
        %2237 = vmatpush1.bf16.msra.mxu0 %v1356
        %2238 = vmatprep.subr.bf16.mxu0 %v1373
        %2239 = vmatpush1.bf16.msra.mxu0 %v1372
        %2240 = vmatprep.subr.bf16.mxu0 %v1389
        %2241 = vmatpush1.bf16.msra.mxu0 %v1388
        %2242 = vmatprep.subr.bf16.mxu0 %v1405
        %2243 = vmatpush1.bf16.msra.mxu0 %v1404
        %2244 = vmatprep.subr.bf16.mxu0 %v1421
        %2245 = vmatpush1.bf16.msra.mxu0 %v1420
        %2246 = vmatprep.subr.bf16.mxu0 %v1437
        %2247 = vmatpush1.bf16.msra.mxu0 %v1436
        %2248 = vmatprep.subr.bf16.mxu0 %v1453
        %2249 = vmatpush1.bf16.msra.mxu0 %v1452
        %2250 = vmatprep.subr.bf16.mxu0 %v1469
        %2251 = vmatpush1.bf16.msra.mxu0 %v1468
        %2252 = vmatprep.subr.bf16.mxu0 %v1485
        %2253 = vmatpush1.bf16.msra.mxu0 %v1484
        %2254 = vmatprep.subr.bf16.mxu0 %v1501
        %2255 = vmatpush1.bf16.msra.mxu0 %v1500
        %2256 = vmatprep.mubr.bf16.mxu0 %v1804
        %2257 = vmatmul.mubr.bf16.gmra.mrb[0].mxu0 %v1796
        %v2258 = vpop.f32.mrb[0].mxu0
        %v2259 = vadd.f32 %v2218, %v2258
        %v2260 = vpop.f32.mrb[0].mxu0
        %v2261 = vadd.f32 %v2220, %v2260
        %v2262 = vpop.f32.mrb[0].mxu0
        %v2263 = vpop.f32.mrb[0].mxu0
        %2264 = vdwg.mxu0
        %2265 = vmatprep.subr.bf16.mxu0 %v1517
        %2266 = vmatpush1.bf16.msra.mxu0 %v1516
        %2267 = vmatprep.subr.bf16.mxu0 %v1533
        %2268 = vmatpush1.bf16.msra.mxu0 %v1532
        %2269 = vmatprep.subr.bf16.mxu0 %v1549
        %2270 = vmatpush1.bf16.msra.mxu0 %v1548
        %2271 = vmatprep.subr.bf16.mxu0 %v1565
        %2272 = vmatpush1.bf16.msra.mxu0 %v1564
        %2273 = vmatprep.subr.bf16.mxu0 %v1581
        %2274 = vmatpush1.bf16.msra.mxu0 %v1580
        %2275 = vmatprep.subr.bf16.mxu0 %v1597
        %2276 = vmatpush1.bf16.msra.mxu0 %v1596
        %2277 = vmatprep.subr.bf16.mxu0 %v1613
        %2278 = vmatpush1.bf16.msra.mxu0 %v1612
        %2279 = vmatprep.subr.bf16.mxu0 %v1629
        %2280 = vmatpush1.bf16.msra.mxu0 %v1628
        %2281 = vmatprep.subr.bf16.mxu0 %v1645
        %2282 = vmatpush1.bf16.msra.mxu0 %v1644
        %2283 = vmatprep.subr.bf16.mxu0 %v1661
        %2284 = vmatpush1.bf16.msra.mxu0 %v1660
        %2285 = vmatprep.subr.bf16.mxu0 %v1677
        %2286 = vmatpush1.bf16.msra.mxu0 %v1676
        %2287 = vmatprep.subr.bf16.mxu0 %v1693
        %2288 = vmatpush1.bf16.msra.mxu0 %v1692
        %2289 = vmatprep.subr.bf16.mxu0 %v1709
        %2290 = vmatpush1.bf16.msra.mxu0 %v1708
        %2291 = vmatprep.subr.bf16.mxu0 %v1725
        %2292 = vmatpush1.bf16.msra.mxu0 %v1724
        %2293 = vmatprep.subr.bf16.mxu0 %v1741
        %2294 = vmatpush1.bf16.msra.mxu0 %v1740
        %2295 = vmatprep.subr.bf16.mxu0 %v1757
        %2296 = vmatpush1.bf16.msra.mxu0 %v1756
        %2297 = vmatprep.mubr.bf16.mxu0 %v1805
        %2298 = vmatmul.mubr.bf16.gmra.mrb[0].mxu0 %v1803
        %v2299 = vpop.f32.mrb[0].mxu0
        %v2300 = vadd.f32 %v2259, %v2299
        %v2301 = vpop.f32.mrb[0].mxu0
        %v2302 = vadd.f32 %v2261, %v2301
        %v2303 = vpop.f32.mrb[0].mxu0
        %v2304 = vpop.f32.mrb[0].mxu0
        %2305 = vdwg.mxu0
        %2306 = vmatprep.subr.bf16.mxu0 %v751
        %2307 = vmatpush1.bf16.msra.mxu0 %v750
        %2308 = vmatprep.subr.bf16.mxu0 %v767
        %2309 = vmatpush1.bf16.msra.mxu0 %v766
        %2310 = vmatprep.subr.bf16.mxu0 %v783
        %2311 = vmatpush1.bf16.msra.mxu0 %v782
        %2312 = vmatprep.subr.bf16.mxu0 %v799
        %2313 = vmatpush1.bf16.msra.mxu0 %v798
        %2314 = vmatprep.subr.bf16.mxu0 %v815
        %2315 = vmatpush1.bf16.msra.mxu0 %v814
        %2316 = vmatprep.subr.bf16.mxu0 %v831
        %2317 = vmatpush1.bf16.msra.mxu0 %v830
        %2318 = vmatprep.subr.bf16.mxu0 %v847
        %2319 = vmatpush1.bf16.msra.mxu0 %v846
        %2320 = vmatprep.subr.bf16.mxu0 %v863
        %2321 = vmatpush1.bf16.msra.mxu0 %v862
        %2322 = vmatprep.subr.bf16.mxu0 %v879
        %2323 = vmatpush1.bf16.msra.mxu0 %v878
        %2324 = vmatprep.subr.bf16.mxu0 %v895
        %2325 = vmatpush1.bf16.msra.mxu0 %v894
        %2326 = vmatprep.subr.bf16.mxu0 %v911
        %2327 = vmatpush1.bf16.msra.mxu0 %v910
        %2328 = vmatprep.subr.bf16.mxu0 %v927
        %2329 = vmatpush1.bf16.msra.mxu0 %v926
        %2330 = vmatprep.subr.bf16.mxu0 %v943
        %2331 = vmatpush1.bf16.msra.mxu0 %v942
        %2332 = vmatprep.subr.bf16.mxu0 %v959
        %2333 = vmatpush1.bf16.msra.mxu0 %v958
        %2334 = vmatprep.subr.bf16.mxu0 %v975
        %2335 = vmatpush1.bf16.msra.mxu0 %v974
        %2336 = vmatprep.subr.bf16.mxu0 %v991
        %2337 = vmatpush1.bf16.msra.mxu0 %v990
        %2338 = vmatprep.mubr.bf16.mxu0 %v1787
        %2339 = vmatmul.mubr.bf16.gmra.mrb[0].mxu0 %v1779
        %v2340 = vpop.f32.mrb[0].mxu0
        %v2341 = vadd.f32 0.0, %v2340
        %v2342 = vpop.f32.mrb[0].mxu0
        %v2343 = vadd.f32 0.0, %v2342
        %v2344 = vpop.f32.mrb[0].mxu0
        %v2345 = vpop.f32.mrb[0].mxu0
        %2346 = vdwg.mxu0
        %2347 = vmatprep.subr.bf16.mxu0 %v1007
        %2348 = vmatpush1.bf16.msra.mxu0 %v1006
        %2349 = vmatprep.subr.bf16.mxu0 %v1023
        %2350 = vmatpush1.bf16.msra.mxu0 %v1022
        %2351 = vmatprep.subr.bf16.mxu0 %v1039
        %2352 = vmatpush1.bf16.msra.mxu0 %v1038
        %2353 = vmatprep.subr.bf16.mxu0 %v1055
        %2354 = vmatpush1.bf16.msra.mxu0 %v1054
        %2355 = vmatprep.subr.bf16.mxu0 %v1071
        %2356 = vmatpush1.bf16.msra.mxu0 %v1070
        %2357 = vmatprep.subr.bf16.mxu0 %v1087
        %2358 = vmatpush1.bf16.msra.mxu0 %v1086
        %2359 = vmatprep.subr.bf16.mxu0 %v1103
        %2360 = vmatpush1.bf16.msra.mxu0 %v1102
        %2361 = vmatprep.subr.bf16.mxu0 %v1119
        %2362 = vmatpush1.bf16.msra.mxu0 %v1118
        %2363 = vmatprep.subr.bf16.mxu0 %v1135
        %2364 = vmatpush1.bf16.msra.mxu0 %v1134
        %2365 = vmatprep.subr.bf16.mxu0 %v1151
        %2366 = vmatpush1.bf16.msra.mxu0 %v1150
        %2367 = vmatprep.subr.bf16.mxu0 %v1167
        %2368 = vmatpush1.bf16.msra.mxu0 %v1166
        %2369 = vmatprep.subr.bf16.mxu0 %v1183
        %2370 = vmatpush1.bf16.msra.mxu0 %v1182
        %2371 = vmatprep.subr.bf16.mxu0 %v1199
        %2372 = vmatpush1.bf16.msra.mxu0 %v1198
        %2373 = vmatprep.subr.bf16.mxu0 %v1215
        %2374 = vmatpush1.bf16.msra.mxu0 %v1214
        %2375 = vmatprep.subr.bf16.mxu0 %v1231
        %2376 = vmatpush1.bf16.msra.mxu0 %v1230
        %2377 = vmatprep.subr.bf16.mxu0 %v1247
        %2378 = vmatpush1.bf16.msra.mxu0 %v1246
        %2379 = vmatprep.mubr.bf16.mxu0 %v1788
        %2380 = vmatmul.mubr.bf16.gmra.mrb[0].mxu0 %v1786
        %v2381 = vpop.f32.mrb[0].mxu0
        %v2382 = vadd.f32 %v2341, %v2381
        %v2383 = vpop.f32.mrb[0].mxu0
        %v2384 = vadd.f32 %v2343, %v2383
        %v2385 = vpop.f32.mrb[0].mxu0
        %v2386 = vpop.f32.mrb[0].mxu0
        %2387 = vdwg.mxu0
        %2388 = vmatprep.subr.bf16.mxu0 %v1263
        %2389 = vmatpush1.bf16.msra.mxu0 %v1262
        %2390 = vmatprep.subr.bf16.mxu0 %v1279
        %2391 = vmatpush1.bf16.msra.mxu0 %v1278
        %2392 = vmatprep.subr.bf16.mxu0 %v1295
        %2393 = vmatpush1.bf16.msra.mxu0 %v1294
        %2394 = vmatprep.subr.bf16.mxu0 %v1311
        %2395 = vmatpush1.bf16.msra.mxu0 %v1310
        %2396 = vmatprep.subr.bf16.mxu0 %v1327
        %2397 = vmatpush1.bf16.msra.mxu0 %v1326
        %2398 = vmatprep.subr.bf16.mxu0 %v1343
        %2399 = vmatpush1.bf16.msra.mxu0 %v1342
        %2400 = vmatprep.subr.bf16.mxu0 %v1359
        %2401 = vmatpush1.bf16.msra.mxu0 %v1358
        %2402 = vmatprep.subr.bf16.mxu0 %v1375
        %2403 = vmatpush1.bf16.msra.mxu0 %v1374
        %2404 = vmatprep.subr.bf16.mxu0 %v1391
        %2405 = vmatpush1.bf16.msra.mxu0 %v1390
        %2406 = vmatprep.subr.bf16.mxu0 %v1407
        %2407 = vmatpush1.bf16.msra.mxu0 %v1406
        %2408 = vmatprep.subr.bf16.mxu0 %v1423
        %2409 = vmatpush1.bf16.msra.mxu0 %v1422
        %2410 = vmatprep.subr.bf16.mxu0 %v1439
        %2411 = vmatpush1.bf16.msra.mxu0 %v1438
        %2412 = vmatprep.subr.bf16.mxu0 %v1455
        %2413 = vmatpush1.bf16.msra.mxu0 %v1454
        %2414 = vmatprep.subr.bf16.mxu0 %v1471
        %2415 = vmatpush1.bf16.msra.mxu0 %v1470
        %2416 = vmatprep.subr.bf16.mxu0 %v1487
        %2417 = vmatpush1.bf16.msra.mxu0 %v1486
        %2418 = vmatprep.subr.bf16.mxu0 %v1503
        %2419 = vmatpush1.bf16.msra.mxu0 %v1502
        %2420 = vmatprep.mubr.bf16.mxu0 %v1804
        %2421 = vmatmul.mubr.bf16.gmra.mrb[0].mxu0 %v1796
        %v2422 = vpop.f32.mrb[0].mxu0
        %v2423 = vadd.f32 %v2382, %v2422
        %v2424 = vpop.f32.mrb[0].mxu0
        %v2425 = vadd.f32 %v2384, %v2424
        %v2426 = vpop.f32.mrb[0].mxu0
        %v2427 = vpop.f32.mrb[0].mxu0
        %2428 = vdwg.mxu0
        %2429 = vmatprep.subr.bf16.mxu0 %v1519
        %2430 = vmatpush1.bf16.msra.mxu0 %v1518
        %2431 = vmatprep.subr.bf16.mxu0 %v1535
        %2432 = vmatpush1.bf16.msra.mxu0 %v1534
        %2433 = vmatprep.subr.bf16.mxu0 %v1551
        %2434 = vmatpush1.bf16.msra.mxu0 %v1550
        %2435 = vmatprep.subr.bf16.mxu0 %v1567
        %2436 = vmatpush1.bf16.msra.mxu0 %v1566
        %2437 = vmatprep.subr.bf16.mxu0 %v1583
        %2438 = vmatpush1.bf16.msra.mxu0 %v1582
        %2439 = vmatprep.subr.bf16.mxu0 %v1599
        %2440 = vmatpush1.bf16.msra.mxu0 %v1598
        %2441 = vmatprep.subr.bf16.mxu0 %v1615
        %2442 = vmatpush1.bf16.msra.mxu0 %v1614
        %2443 = vmatprep.subr.bf16.mxu0 %v1631
        %2444 = vmatpush1.bf16.msra.mxu0 %v1630
        %2445 = vmatprep.subr.bf16.mxu0 %v1647
        %2446 = vmatpush1.bf16.msra.mxu0 %v1646
        %2447 = vmatprep.subr.bf16.mxu0 %v1663
        %2448 = vmatpush1.bf16.msra.mxu0 %v1662
        %2449 = vmatprep.subr.bf16.mxu0 %v1679
        %2450 = vmatpush1.bf16.msra.mxu0 %v1678
        %2451 = vmatprep.subr.bf16.mxu0 %v1695
        %2452 = vmatpush1.bf16.msra.mxu0 %v1694
        %2453 = vmatprep.subr.bf16.mxu0 %v1711
        %2454 = vmatpush1.bf16.msra.mxu0 %v1710
        %2455 = vmatprep.subr.bf16.mxu0 %v1727
        %2456 = vmatpush1.bf16.msra.mxu0 %v1726
        %2457 = vmatprep.subr.bf16.mxu0 %v1743
        %2458 = vmatpush1.bf16.msra.mxu0 %v1742
        %2459 = vmatprep.subr.bf16.mxu0 %v1759
        %2460 = vmatpush1.bf16.msra.mxu0 %v1758
        %2461 = vmatprep.mubr.bf16.mxu0 %v1805
        %2462 = vmatmul.mubr.bf16.gmra.mrb[0].mxu0 %v1803
        %v2463 = vpop.f32.mrb[0].mxu0
        %v2464 = vadd.f32 %v2423, %v2463
        %v2465 = vpop.f32.mrb[0].mxu0
        %v2466 = vadd.f32 %v2425, %v2465
        %v2467 = vpop.f32.mrb[0].mxu0
        %v2468 = vpop.f32.mrb[0].mxu0
        %2469 = vdwg.mxu0
        %2470 = vmatprep.subr.bf16.mxu0 %v753
        %2471 = vmatpush1.bf16.msra.mxu0 %v752
        %2472 = vmatprep.subr.bf16.mxu0 %v769
        %2473 = vmatpush1.bf16.msra.mxu0 %v768
        %2474 = vmatprep.subr.bf16.mxu0 %v785
        %2475 = vmatpush1.bf16.msra.mxu0 %v784
        %2476 = vmatprep.subr.bf16.mxu0 %v801
        %2477 = vmatpush1.bf16.msra.mxu0 %v800
        %2478 = vmatprep.subr.bf16.mxu0 %v817
        %2479 = vmatpush1.bf16.msra.mxu0 %v816
        %2480 = vmatprep.subr.bf16.mxu0 %v833
        %2481 = vmatpush1.bf16.msra.mxu0 %v832
        %2482 = vmatprep.subr.bf16.mxu0 %v849
        %2483 = vmatpush1.bf16.msra.mxu0 %v848
        %2484 = vmatprep.subr.bf16.mxu0 %v865
        %2485 = vmatpush1.bf16.msra.mxu0 %v864
        %2486 = vmatprep.subr.bf16.mxu0 %v881
        %2487 = vmatpush1.bf16.msra.mxu0 %v880
        %2488 = vmatprep.subr.bf16.mxu0 %v897
        %2489 = vmatpush1.bf16.msra.mxu0 %v896
        %2490 = vmatprep.subr.bf16.mxu0 %v913
        %2491 = vmatpush1.bf16.msra.mxu0 %v912
        %2492 = vmatprep.subr.bf16.mxu0 %v929
        %2493 = vmatpush1.bf16.msra.mxu0 %v928
        %2494 = vmatprep.subr.bf16.mxu0 %v945
        %2495 = vmatpush1.bf16.msra.mxu0 %v944
        %2496 = vmatprep.subr.bf16.mxu0 %v961
        %2497 = vmatpush1.bf16.msra.mxu0 %v960
        %2498 = vmatprep.subr.bf16.mxu0 %v977
        %2499 = vmatpush1.bf16.msra.mxu0 %v976
        %2500 = vmatprep.subr.bf16.mxu0 %v993
        %2501 = vmatpush1.bf16.msra.mxu0 %v992
        %2502 = vmatprep.mubr.bf16.mxu0 %v1787
        %2503 = vmatmul.mubr.bf16.gmra.mrb[0].mxu0 %v1779
        %v2504 = vpop.f32.mrb[0].mxu0
        %v2505 = vadd.f32 0.0, %v2504
        %v2506 = vpop.f32.mrb[0].mxu0
        %v2507 = vadd.f32 0.0, %v2506
        %v2508 = vpop.f32.mrb[0].mxu0
        %v2509 = vpop.f32.mrb[0].mxu0
        %2510 = vdwg.mxu0
        %2511 = vmatprep.subr.bf16.mxu0 %v1009
        %2512 = vmatpush1.bf16.msra.mxu0 %v1008
        %2513 = vmatprep.subr.bf16.mxu0 %v1025
        %2514 = vmatpush1.bf16.msra.mxu0 %v1024
        %2515 = vmatprep.subr.bf16.mxu0 %v1041
        %2516 = vmatpush1.bf16.msra.mxu0 %v1040
        %2517 = vmatprep.subr.bf16.mxu0 %v1057
        %2518 = vmatpush1.bf16.msra.mxu0 %v1056
        %2519 = vmatprep.subr.bf16.mxu0 %v1073
        %2520 = vmatpush1.bf16.msra.mxu0 %v1072
        %2521 = vmatprep.subr.bf16.mxu0 %v1089
        %2522 = vmatpush1.bf16.msra.mxu0 %v1088
        %2523 = vmatprep.subr.bf16.mxu0 %v1105
        %2524 = vmatpush1.bf16.msra.mxu0 %v1104
        %2525 = vmatprep.subr.bf16.mxu0 %v1121
        %2526 = vmatpush1.bf16.msra.mxu0 %v1120
        %2527 = vmatprep.subr.bf16.mxu0 %v1137
        %2528 = vmatpush1.bf16.msra.mxu0 %v1136
        %2529 = vmatprep.subr.bf16.mxu0 %v1153
        %2530 = vmatpush1.bf16.msra.mxu0 %v1152
        %2531 = vmatprep.subr.bf16.mxu0 %v1169
        %2532 = vmatpush1.bf16.msra.mxu0 %v1168
        %2533 = vmatprep.subr.bf16.mxu0 %v1185
        %2534 = vmatpush1.bf16.msra.mxu0 %v1184
        %2535 = vmatprep.subr.bf16.mxu0 %v1201
        %2536 = vmatpush1.bf16.msra.mxu0 %v1200
        %2537 = vmatprep.subr.bf16.mxu0 %v1217
        %2538 = vmatpush1.bf16.msra.mxu0 %v1216
        %2539 = vmatprep.subr.bf16.mxu0 %v1233
        %2540 = vmatpush1.bf16.msra.mxu0 %v1232
        %2541 = vmatprep.subr.bf16.mxu0 %v1249
        %2542 = vmatpush1.bf16.msra.mxu0 %v1248
        %2543 = vmatprep.mubr.bf16.mxu0 %v1788
        %2544 = vmatmul.mubr.bf16.gmra.mrb[0].mxu0 %v1786
        %v2545 = vpop.f32.mrb[0].mxu0
        %v2546 = vadd.f32 %v2505, %v2545
        %v2547 = vpop.f32.mrb[0].mxu0
        %v2548 = vadd.f32 %v2507, %v2547
        %v2549 = vpop.f32.mrb[0].mxu0
        %v2550 = vpop.f32.mrb[0].mxu0
        %2551 = vdwg.mxu0
        %2552 = vmatprep.subr.bf16.mxu0 %v1265
        %2553 = vmatpush1.bf16.msra.mxu0 %v1264
        %2554 = vmatprep.subr.bf16.mxu0 %v1281
        %2555 = vmatpush1.bf16.msra.mxu0 %v1280
        %2556 = vmatprep.subr.bf16.mxu0 %v1297
        %2557 = vmatpush1.bf16.msra.mxu0 %v1296
        %2558 = vmatprep.subr.bf16.mxu0 %v1313
        %2559 = vmatpush1.bf16.msra.mxu0 %v1312
        %2560 = vmatprep.subr.bf16.mxu0 %v1329
        %2561 = vmatpush1.bf16.msra.mxu0 %v1328
        %2562 = vmatprep.subr.bf16.mxu0 %v1345
        %2563 = vmatpush1.bf16.msra.mxu0 %v1344
        %2564 = vmatprep.subr.bf16.mxu0 %v1361
        %2565 = vmatpush1.bf16.msra.mxu0 %v1360
        %2566 = vmatprep.subr.bf16.mxu0 %v1377
        %2567 = vmatpush1.bf16.msra.mxu0 %v1376
        %2568 = vmatprep.subr.bf16.mxu0 %v1393
        %2569 = vmatpush1.bf16.msra.mxu0 %v1392
        %2570 = vmatprep.subr.bf16.mxu0 %v1409
        %2571 = vmatpush1.bf16.msra.mxu0 %v1408
        %2572 = vmatprep.subr.bf16.mxu0 %v1425
        %2573 = vmatpush1.bf16.msra.mxu0 %v1424
        %2574 = vmatprep.subr.bf16.mxu0 %v1441
        %2575 = vmatpush1.bf16.msra.mxu0 %v1440
        %2576 = vmatprep.subr.bf16.mxu0 %v1457
        %2577 = vmatpush1.bf16.msra.mxu0 %v1456
        %2578 = vmatprep.subr.bf16.mxu0 %v1473
        %2579 = vmatpush1.bf16.msra.mxu0 %v1472
        %2580 = vmatprep.subr.bf16.mxu0 %v1489
        %2581 = vmatpush1.bf16.msra.mxu0 %v1488
        %2582 = vmatprep.subr.bf16.mxu0 %v1505
        %2583 = vmatpush1.bf16.msra.mxu0 %v1504
        %2584 = vmatprep.mubr.bf16.mxu0 %v1804
        %2585 = vmatmul.mubr.bf16.gmra.mrb[0].mxu0 %v1796
        %v2586 = vpop.f32.mrb[0].mxu0
        %v2587 = vadd.f32 %v2546, %v2586
        %v2588 = vpop.f32.mrb[0].mxu0
        %v2589 = vadd.f32 %v2548, %v2588
        %v2590 = vpop.f32.mrb[0].mxu0
        %v2591 = vpop.f32.mrb[0].mxu0
        %2592 = vdwg.mxu0
        %2593 = vmatprep.subr.bf16.mxu0 %v1521
        %2594 = vmatpush1.bf16.msra.mxu0 %v1520
        %2595 = vmatprep.subr.bf16.mxu0 %v1537
        %2596 = vmatpush1.bf16.msra.mxu0 %v1536
        %2597 = vmatprep.subr.bf16.mxu0 %v1553
        %2598 = vmatpush1.bf16.msra.mxu0 %v1552
        %2599 = vmatprep.subr.bf16.mxu0 %v1569
        %2600 = vmatpush1.bf16.msra.mxu0 %v1568
        %2601 = vmatprep.subr.bf16.mxu0 %v1585
        %2602 = vmatpush1.bf16.msra.mxu0 %v1584
        %2603 = vmatprep.subr.bf16.mxu0 %v1601
        %2604 = vmatpush1.bf16.msra.mxu0 %v1600
        %2605 = vmatprep.subr.bf16.mxu0 %v1617
        %2606 = vmatpush1.bf16.msra.mxu0 %v1616
        %2607 = vmatprep.subr.bf16.mxu0 %v1633
        %2608 = vmatpush1.bf16.msra.mxu0 %v1632
        %2609 = vmatprep.subr.bf16.mxu0 %v1649
        %2610 = vmatpush1.bf16.msra.mxu0 %v1648
        %2611 = vmatprep.subr.bf16.mxu0 %v1665
        %2612 = vmatpush1.bf16.msra.mxu0 %v1664
        %2613 = vmatprep.subr.bf16.mxu0 %v1681
        %2614 = vmatpush1.bf16.msra.mxu0 %v1680
        %2615 = vmatprep.subr.bf16.mxu0 %v1697
        %2616 = vmatpush1.bf16.msra.mxu0 %v1696
        %2617 = vmatprep.subr.bf16.mxu0 %v1713
        %2618 = vmatpush1.bf16.msra.mxu0 %v1712
        %2619 = vmatprep.subr.bf16.mxu0 %v1729
        %2620 = vmatpush1.bf16.msra.mxu0 %v1728
        %2621 = vmatprep.subr.bf16.mxu0 %v1745
        %2622 = vmatpush1.bf16.msra.mxu0 %v1744
        %2623 = vmatprep.subr.bf16.mxu0 %v1761
        %2624 = vmatpush1.bf16.msra.mxu0 %v1760
        %2625 = vmatprep.mubr.bf16.mxu0 %v1805
        %2626 = vmatmul.mubr.bf16.gmra.mrb[0].mxu0 %v1803
        %v2627 = vpop.f32.mrb[0].mxu0
        %v2628 = vadd.f32 %v2587, %v2627
        %v2629 = vpop.f32.mrb[0].mxu0
        %v2630 = vadd.f32 %v2589, %v2629
        %v2631 = vpop.f32.mrb[0].mxu0
        %v2632 = vpop.f32.mrb[0].mxu0
        %2633 = vdwg.mxu0
        %2634 = vmatprep.subr.bf16.mxu0 %v755
        %2635 = vmatpush1.bf16.msra.mxu0 %v754
        %2636 = vmatprep.subr.bf16.mxu0 %v771
        %2637 = vmatpush1.bf16.msra.mxu0 %v770
        %2638 = vmatprep.subr.bf16.mxu0 %v787
        %2639 = vmatpush1.bf16.msra.mxu0 %v786
        %2640 = vmatprep.subr.bf16.mxu0 %v803
        %2641 = vmatpush1.bf16.msra.mxu0 %v802
        %2642 = vmatprep.subr.bf16.mxu0 %v819
        %2643 = vmatpush1.bf16.msra.mxu0 %v818
        %2644 = vmatprep.subr.bf16.mxu0 %v835
        %2645 = vmatpush1.bf16.msra.mxu0 %v834
        %2646 = vmatprep.subr.bf16.mxu0 %v851
        %2647 = vmatpush1.bf16.msra.mxu0 %v850
        %2648 = vmatprep.subr.bf16.mxu0 %v867
        %2649 = vmatpush1.bf16.msra.mxu0 %v866
        %2650 = vmatprep.subr.bf16.mxu0 %v883
        %2651 = vmatpush1.bf16.msra.mxu0 %v882
        %2652 = vmatprep.subr.bf16.mxu0 %v899
        %2653 = vmatpush1.bf16.msra.mxu0 %v898
        %2654 = vmatprep.subr.bf16.mxu0 %v915
        %2655 = vmatpush1.bf16.msra.mxu0 %v914
        %2656 = vmatprep.subr.bf16.mxu0 %v931
        %2657 = vmatpush1.bf16.msra.mxu0 %v930
        %2658 = vmatprep.subr.bf16.mxu0 %v947
        %2659 = vmatpush1.bf16.msra.mxu0 %v946
        %2660 = vmatprep.subr.bf16.mxu0 %v963
        %2661 = vmatpush1.bf16.msra.mxu0 %v962
        %2662 = vmatprep.subr.bf16.mxu0 %v979
        %2663 = vmatpush1.bf16.msra.mxu0 %v978
        %2664 = vmatprep.subr.bf16.mxu0 %v995
        %2665 = vmatpush1.bf16.msra.mxu0 %v994
        %2666 = vmatprep.mubr.bf16.mxu0 %v1787
        %2667 = vmatmul.mubr.bf16.gmra.mrb[0].mxu0 %v1779
        %v2668 = vpop.f32.mrb[0].mxu0
        %v2669 = vadd.f32 0.0, %v2668
        %v2670 = vpop.f32.mrb[0].mxu0
        %v2671 = vadd.f32 0.0, %v2670
        %v2672 = vpop.f32.mrb[0].mxu0
        %v2673 = vpop.f32.mrb[0].mxu0
        %2674 = vdwg.mxu0
        %2675 = vmatprep.subr.bf16.mxu0 %v1011
        %2676 = vmatpush1.bf16.msra.mxu0 %v1010
        %2677 = vmatprep.subr.bf16.mxu0 %v1027
        %2678 = vmatpush1.bf16.msra.mxu0 %v1026
        %2679 = vmatprep.subr.bf16.mxu0 %v1043
        %2680 = vmatpush1.bf16.msra.mxu0 %v1042
        %2681 = vmatprep.subr.bf16.mxu0 %v1059
        %2682 = vmatpush1.bf16.msra.mxu0 %v1058
        %2683 = vmatprep.subr.bf16.mxu0 %v1075
        %2684 = vmatpush1.bf16.msra.mxu0 %v1074
        %2685 = vmatprep.subr.bf16.mxu0 %v1091
        %2686 = vmatpush1.bf16.msra.mxu0 %v1090
        %2687 = vmatprep.subr.bf16.mxu0 %v1107
        %2688 = vmatpush1.bf16.msra.mxu0 %v1106
        %2689 = vmatprep.subr.bf16.mxu0 %v1123
        %2690 = vmatpush1.bf16.msra.mxu0 %v1122
        %2691 = vmatprep.subr.bf16.mxu0 %v1139
        %2692 = vmatpush1.bf16.msra.mxu0 %v1138
        %2693 = vmatprep.subr.bf16.mxu0 %v1155
        %2694 = vmatpush1.bf16.msra.mxu0 %v1154
        %2695 = vmatprep.subr.bf16.mxu0 %v1171
        %2696 = vmatpush1.bf16.msra.mxu0 %v1170
        %2697 = vmatprep.subr.bf16.mxu0 %v1187
        %2698 = vmatpush1.bf16.msra.mxu0 %v1186
        %2699 = vmatprep.subr.bf16.mxu0 %v1203
        %2700 = vmatpush1.bf16.msra.mxu0 %v1202
        %2701 = vmatprep.subr.bf16.mxu0 %v1219
        %2702 = vmatpush1.bf16.msra.mxu0 %v1218
        %2703 = vmatprep.subr.bf16.mxu0 %v1235
        %2704 = vmatpush1.bf16.msra.mxu0 %v1234
        %2705 = vmatprep.subr.bf16.mxu0 %v1251
        %2706 = vmatpush1.bf16.msra.mxu0 %v1250
        %2707 = vmatprep.mubr.bf16.mxu0 %v1788
        %2708 = vmatmul.mubr.bf16.gmra.mrb[0].mxu0 %v1786
        %v2709 = vpop.f32.mrb[0].mxu0
        %v2710 = vadd.f32 %v2669, %v2709
        %v2711 = vpop.f32.mrb[0].mxu0
        %v2712 = vadd.f32 %v2671, %v2711
        %v2713 = vpop.f32.mrb[0].mxu0
        %v2714 = vpop.f32.mrb[0].mxu0
        %2715 = vdwg.mxu0
        %2716 = vmatprep.subr.bf16.mxu0 %v1267
        %2717 = vmatpush1.bf16.msra.mxu0 %v1266
        %2718 = vmatprep.subr.bf16.mxu0 %v1283
        %2719 = vmatpush1.bf16.msra.mxu0 %v1282
        %2720 = vmatprep.subr.bf16.mxu0 %v1299
        %2721 = vmatpush1.bf16.msra.mxu0 %v1298
        %2722 = vmatprep.subr.bf16.mxu0 %v1315
        %2723 = vmatpush1.bf16.msra.mxu0 %v1314
        %2724 = vmatprep.subr.bf16.mxu0 %v1331
        %2725 = vmatpush1.bf16.msra.mxu0 %v1330
        %2726 = vmatprep.subr.bf16.mxu0 %v1347
        %2727 = vmatpush1.bf16.msra.mxu0 %v1346
        %2728 = vmatprep.subr.bf16.mxu0 %v1363
        %2729 = vmatpush1.bf16.msra.mxu0 %v1362
        %2730 = vmatprep.subr.bf16.mxu0 %v1379
        %2731 = vmatpush1.bf16.msra.mxu0 %v1378
        %2732 = vmatprep.subr.bf16.mxu0 %v1395
        %2733 = vmatpush1.bf16.msra.mxu0 %v1394
        %2734 = vmatprep.subr.bf16.mxu0 %v1411
        %2735 = vmatpush1.bf16.msra.mxu0 %v1410
        %2736 = vmatprep.subr.bf16.mxu0 %v1427
        %2737 = vmatpush1.bf16.msra.mxu0 %v1426
        %2738 = vmatprep.subr.bf16.mxu0 %v1443
        %2739 = vmatpush1.bf16.msra.mxu0 %v1442
        %2740 = vmatprep.subr.bf16.mxu0 %v1459
        %2741 = vmatpush1.bf16.msra.mxu0 %v1458
        %2742 = vmatprep.subr.bf16.mxu0 %v1475
        %2743 = vmatpush1.bf16.msra.mxu0 %v1474
        %2744 = vmatprep.subr.bf16.mxu0 %v1491
        %2745 = vmatpush1.bf16.msra.mxu0 %v1490
        %2746 = vmatprep.subr.bf16.mxu0 %v1507
        %2747 = vmatpush1.bf16.msra.mxu0 %v1506
        %2748 = vmatprep.mubr.bf16.mxu0 %v1804
        %2749 = vmatmul.mubr.bf16.gmra.mrb[0].mxu0 %v1796
        %v2750 = vpop.f32.mrb[0].mxu0
        %v2751 = vadd.f32 %v2710, %v2750
        %v2752 = vpop.f32.mrb[0].mxu0
        %v2753 = vadd.f32 %v2712, %v2752
        %v2754 = vpop.f32.mrb[0].mxu0
        %v2755 = vpop.f32.mrb[0].mxu0
        %2756 = vdwg.mxu0
        %2757 = vmatprep.subr.bf16.mxu0 %v1523
        %2758 = vmatpush1.bf16.msra.mxu0 %v1522
        %2759 = vmatprep.subr.bf16.mxu0 %v1539
        %2760 = vmatpush1.bf16.msra.mxu0 %v1538
        %2761 = vmatprep.subr.bf16.mxu0 %v1555
        %2762 = vmatpush1.bf16.msra.mxu0 %v1554
        %2763 = vmatprep.subr.bf16.mxu0 %v1571
        %2764 = vmatpush1.bf16.msra.mxu0 %v1570
        %2765 = vmatprep.subr.bf16.mxu0 %v1587
        %2766 = vmatpush1.bf16.msra.mxu0 %v1586
        %2767 = vmatprep.subr.bf16.mxu0 %v1603
        %2768 = vmatpush1.bf16.msra.mxu0 %v1602
        %2769 = vmatprep.subr.bf16.mxu0 %v1619
        %2770 = vmatpush1.bf16.msra.mxu0 %v1618
        %2771 = vmatprep.subr.bf16.mxu0 %v1635
        %2772 = vmatpush1.bf16.msra.mxu0 %v1634
        %2773 = vmatprep.subr.bf16.mxu0 %v1651
        %2774 = vmatpush1.bf16.msra.mxu0 %v1650
        %2775 = vmatprep.subr.bf16.mxu0 %v1667
        %2776 = vmatpush1.bf16.msra.mxu0 %v1666
        %2777 = vmatprep.subr.bf16.mxu0 %v1683
        %2778 = vmatpush1.bf16.msra.mxu0 %v1682
        %2779 = vmatprep.subr.bf16.mxu0 %v1699
        %2780 = vmatpush1.bf16.msra.mxu0 %v1698
        %2781 = vmatprep.subr.bf16.mxu0 %v1715
        %2782 = vmatpush1.bf16.msra.mxu0 %v1714
        %2783 = vmatprep.subr.bf16.mxu0 %v1731
        %2784 = vmatpush1.bf16.msra.mxu0 %v1730
        %2785 = vmatprep.subr.bf16.mxu0 %v1747
        %2786 = vmatpush1.bf16.msra.mxu0 %v1746
        %2787 = vmatprep.subr.bf16.mxu0 %v1763
        %2788 = vmatpush1.bf16.msra.mxu0 %v1762
        %2789 = vmatprep.mubr.bf16.mxu0 %v1805
        %2790 = vmatmul.mubr.bf16.gmra.mrb[0].mxu0 %v1803
        %v2791 = vpop.f32.mrb[0].mxu0
        %v2792 = vadd.f32 %v2751, %v2791
        %v2793 = vpop.f32.mrb[0].mxu0
        %v2794 = vadd.f32 %v2753, %v2793
        %v2795 = vpop.f32.mrb[0].mxu0
        %v2796 = vpop.f32.mrb[0].mxu0
        %2797 = vdwg.mxu0
        %2798 = vmatprep.subr.bf16.mxu0 %v757
        %2799 = vmatpush1.bf16.msra.mxu0 %v756
        %2800 = vmatprep.subr.bf16.mxu0 %v773
        %2801 = vmatpush1.bf16.msra.mxu0 %v772
        %2802 = vmatprep.subr.bf16.mxu0 %v789
        %2803 = vmatpush1.bf16.msra.mxu0 %v788
        %2804 = vmatprep.subr.bf16.mxu0 %v805
        %2805 = vmatpush1.bf16.msra.mxu0 %v804
        %2806 = vmatprep.subr.bf16.mxu0 %v821
        %2807 = vmatpush1.bf16.msra.mxu0 %v820
        %2808 = vmatprep.subr.bf16.mxu0 %v837
        %2809 = vmatpush1.bf16.msra.mxu0 %v836
        %2810 = vmatprep.subr.bf16.mxu0 %v853
        %2811 = vmatpush1.bf16.msra.mxu0 %v852
        %2812 = vmatprep.subr.bf16.mxu0 %v869
        %2813 = vmatpush1.bf16.msra.mxu0 %v868
        %2814 = vmatprep.subr.bf16.mxu0 %v885
        %2815 = vmatpush1.bf16.msra.mxu0 %v884
        %2816 = vmatprep.subr.bf16.mxu0 %v901
        %2817 = vmatpush1.bf16.msra.mxu0 %v900
        %2818 = vmatprep.subr.bf16.mxu0 %v917
        %2819 = vmatpush1.bf16.msra.mxu0 %v916
        %2820 = vmatprep.subr.bf16.mxu0 %v933
        %2821 = vmatpush1.bf16.msra.mxu0 %v932
        %2822 = vmatprep.subr.bf16.mxu0 %v949
        %2823 = vmatpush1.bf16.msra.mxu0 %v948
        %2824 = vmatprep.subr.bf16.mxu0 %v965
        %2825 = vmatpush1.bf16.msra.mxu0 %v964
        %2826 = vmatprep.subr.bf16.mxu0 %v981
        %2827 = vmatpush1.bf16.msra.mxu0 %v980
        %2828 = vmatprep.subr.bf16.mxu0 %v997
        %2829 = vmatpush1.bf16.msra.mxu0 %v996
        %2830 = vmatprep.mubr.bf16.mxu0 %v1787
        %2831 = vmatmul.mubr.bf16.gmra.mrb[0].mxu0 %v1779
        %v2832 = vpop.f32.mrb[0].mxu0
        %v2833 = vadd.f32 0.0, %v2832
        %v2834 = vpop.f32.mrb[0].mxu0
        %v2835 = vadd.f32 0.0, %v2834
        %v2836 = vpop.f32.mrb[0].mxu0
        %v2837 = vpop.f32.mrb[0].mxu0
        %2838 = vdwg.mxu0
        %2839 = vmatprep.subr.bf16.mxu0 %v1013
        %2840 = vmatpush1.bf16.msra.mxu0 %v1012
        %2841 = vmatprep.subr.bf16.mxu0 %v1029
        %2842 = vmatpush1.bf16.msra.mxu0 %v1028
        %2843 = vmatprep.subr.bf16.mxu0 %v1045
        %2844 = vmatpush1.bf16.msra.mxu0 %v1044
        %2845 = vmatprep.subr.bf16.mxu0 %v1061
        %2846 = vmatpush1.bf16.msra.mxu0 %v1060
        %2847 = vmatprep.subr.bf16.mxu0 %v1077
        %2848 = vmatpush1.bf16.msra.mxu0 %v1076
        %2849 = vmatprep.subr.bf16.mxu0 %v1093
        %2850 = vmatpush1.bf16.msra.mxu0 %v1092
        %2851 = vmatprep.subr.bf16.mxu0 %v1109
        %2852 = vmatpush1.bf16.msra.mxu0 %v1108
        %2853 = vmatprep.subr.bf16.mxu0 %v1125
        %2854 = vmatpush1.bf16.msra.mxu0 %v1124
        %2855 = vmatprep.subr.bf16.mxu0 %v1141
        %2856 = vmatpush1.bf16.msra.mxu0 %v1140
        %2857 = vmatprep.subr.bf16.mxu0 %v1157
        %2858 = vmatpush1.bf16.msra.mxu0 %v1156
        %2859 = vmatprep.subr.bf16.mxu0 %v1173
        %2860 = vmatpush1.bf16.msra.mxu0 %v1172
        %2861 = vmatprep.subr.bf16.mxu0 %v1189
        %2862 = vmatpush1.bf16.msra.mxu0 %v1188
        %2863 = vmatprep.subr.bf16.mxu0 %v1205
        %2864 = vmatpush1.bf16.msra.mxu0 %v1204
        %2865 = vmatprep.subr.bf16.mxu0 %v1221
        %2866 = vmatpush1.bf16.msra.mxu0 %v1220
        %2867 = vmatprep.subr.bf16.mxu0 %v1237
        %2868 = vmatpush1.bf16.msra.mxu0 %v1236
        %2869 = vmatprep.subr.bf16.mxu0 %v1253
        %2870 = vmatpush1.bf16.msra.mxu0 %v1252
        %2871 = vmatprep.mubr.bf16.mxu0 %v1788
        %2872 = vmatmul.mubr.bf16.gmra.mrb[0].mxu0 %v1786
        %v2873 = vpop.f32.mrb[0].mxu0
        %v2874 = vadd.f32 %v2833, %v2873
        %v2875 = vpop.f32.mrb[0].mxu0
        %v2876 = vadd.f32 %v2835, %v2875
        %v2877 = vpop.f32.mrb[0].mxu0
        %v2878 = vpop.f32.mrb[0].mxu0
        %2879 = vdwg.mxu0
        %2880 = vmatprep.subr.bf16.mxu0 %v1269
        %2881 = vmatpush1.bf16.msra.mxu0 %v1268
        %2882 = vmatprep.subr.bf16.mxu0 %v1285
        %2883 = vmatpush1.bf16.msra.mxu0 %v1284
        %2884 = vmatprep.subr.bf16.mxu0 %v1301
        %2885 = vmatpush1.bf16.msra.mxu0 %v1300
        %2886 = vmatprep.subr.bf16.mxu0 %v1317
        %2887 = vmatpush1.bf16.msra.mxu0 %v1316
        %2888 = vmatprep.subr.bf16.mxu0 %v1333
        %2889 = vmatpush1.bf16.msra.mxu0 %v1332
        %2890 = vmatprep.subr.bf16.mxu0 %v1349
        %2891 = vmatpush1.bf16.msra.mxu0 %v1348
        %2892 = vmatprep.subr.bf16.mxu0 %v1365
        %2893 = vmatpush1.bf16.msra.mxu0 %v1364
        %2894 = vmatprep.subr.bf16.mxu0 %v1381
        %2895 = vmatpush1.bf16.msra.mxu0 %v1380
        %2896 = vmatprep.subr.bf16.mxu0 %v1397
        %2897 = vmatpush1.bf16.msra.mxu0 %v1396
        %2898 = vmatprep.subr.bf16.mxu0 %v1413
        %2899 = vmatpush1.bf16.msra.mxu0 %v1412
        %2900 = vmatprep.subr.bf16.mxu0 %v1429
        %2901 = vmatpush1.bf16.msra.mxu0 %v1428
        %2902 = vmatprep.subr.bf16.mxu0 %v1445
        %2903 = vmatpush1.bf16.msra.mxu0 %v1444
        %2904 = vmatprep.subr.bf16.mxu0 %v1461
        %2905 = vmatpush1.bf16.msra.mxu0 %v1460
        %2906 = vmatprep.subr.bf16.mxu0 %v1477
        %2907 = vmatpush1.bf16.msra.mxu0 %v1476
        %2908 = vmatprep.subr.bf16.mxu0 %v1493
        %2909 = vmatpush1.bf16.msra.mxu0 %v1492
        %2910 = vmatprep.subr.bf16.mxu0 %v1509
        %2911 = vmatpush1.bf16.msra.mxu0 %v1508
        %2912 = vmatprep.mubr.bf16.mxu0 %v1804
        %2913 = vmatmul.mubr.bf16.gmra.mrb[0].mxu0 %v1796
        %v2914 = vpop.f32.mrb[0].mxu0
        %v2915 = vadd.f32 %v2874, %v2914
        %v2916 = vpop.f32.mrb[0].mxu0
        %v2917 = vadd.f32 %v2876, %v2916
        %v2918 = vpop.f32.mrb[0].mxu0
        %v2919 = vpop.f32.mrb[0].mxu0
        %2920 = vdwg.mxu0
        %2921 = vmatprep.subr.bf16.mxu0 %v1525
        %2922 = vmatpush1.bf16.msra.mxu0 %v1524
        %2923 = vmatprep.subr.bf16.mxu0 %v1541
        %2924 = vmatpush1.bf16.msra.mxu0 %v1540
        %2925 = vmatprep.subr.bf16.mxu0 %v1557
        %2926 = vmatpush1.bf16.msra.mxu0 %v1556
        %2927 = vmatprep.subr.bf16.mxu0 %v1573
        %2928 = vmatpush1.bf16.msra.mxu0 %v1572
        %2929 = vmatprep.subr.bf16.mxu0 %v1589
        %2930 = vmatpush1.bf16.msra.mxu0 %v1588
        %2931 = vmatprep.subr.bf16.mxu0 %v1605
        %2932 = vmatpush1.bf16.msra.mxu0 %v1604
        %2933 = vmatprep.subr.bf16.mxu0 %v1621
        %2934 = vmatpush1.bf16.msra.mxu0 %v1620
        %2935 = vmatprep.subr.bf16.mxu0 %v1637
        %2936 = vmatpush1.bf16.msra.mxu0 %v1636
        %2937 = vmatprep.subr.bf16.mxu0 %v1653
        %2938 = vmatpush1.bf16.msra.mxu0 %v1652
        %2939 = vmatprep.subr.bf16.mxu0 %v1669
        %2940 = vmatpush1.bf16.msra.mxu0 %v1668
        %2941 = vmatprep.subr.bf16.mxu0 %v1685
        %2942 = vmatpush1.bf16.msra.mxu0 %v1684
        %2943 = vmatprep.subr.bf16.mxu0 %v1701
        %2944 = vmatpush1.bf16.msra.mxu0 %v1700
        %2945 = vmatprep.subr.bf16.mxu0 %v1717
        %2946 = vmatpush1.bf16.msra.mxu0 %v1716
        %2947 = vmatprep.subr.bf16.mxu0 %v1733
        %2948 = vmatpush1.bf16.msra.mxu0 %v1732
        %2949 = vmatprep.subr.bf16.mxu0 %v1749
        %2950 = vmatpush1.bf16.msra.mxu0 %v1748
        %2951 = vmatprep.subr.bf16.mxu0 %v1765
        %2952 = vmatpush1.bf16.msra.mxu0 %v1764
        %2953 = vmatprep.mubr.bf16.mxu0 %v1805
        %2954 = vmatmul.mubr.bf16.gmra.mrb[0].mxu0 %v1803
        %v2955 = vpop.f32.mrb[0].mxu0
        %v2956 = vadd.f32 %v2915, %v2955
        %v2957 = vpop.f32.mrb[0].mxu0
        %v2958 = vadd.f32 %v2917, %v2957
        %v2959 = vpop.f32.mrb[0].mxu0
        %v2960 = vpop.f32.mrb[0].mxu0
        %2961 = vdwg.mxu0
        %2962 = vmatprep.subr.bf16.mxu0 %v759
        %2963 = vmatpush1.bf16.msra.mxu0 %v758
        %2964 = vmatprep.subr.bf16.mxu0 %v775
        %2965 = vmatpush1.bf16.msra.mxu0 %v774
        %2966 = vmatprep.subr.bf16.mxu0 %v791
        %2967 = vmatpush1.bf16.msra.mxu0 %v790
        %2968 = vmatprep.subr.bf16.mxu0 %v807
        %2969 = vmatpush1.bf16.msra.mxu0 %v806
        %2970 = vmatprep.subr.bf16.mxu0 %v823
        %2971 = vmatpush1.bf16.msra.mxu0 %v822
        %2972 = vmatprep.subr.bf16.mxu0 %v839
        %2973 = vmatpush1.bf16.msra.mxu0 %v838
        %2974 = vmatprep.subr.bf16.mxu0 %v855
        %2975 = vmatpush1.bf16.msra.mxu0 %v854
        %2976 = vmatprep.subr.bf16.mxu0 %v871
        %2977 = vmatpush1.bf16.msra.mxu0 %v870
        %2978 = vmatprep.subr.bf16.mxu0 %v887
        %2979 = vmatpush1.bf16.msra.mxu0 %v886
        %2980 = vmatprep.subr.bf16.mxu0 %v903
        %2981 = vmatpush1.bf16.msra.mxu0 %v902
        %2982 = vmatprep.subr.bf16.mxu0 %v919
        %2983 = vmatpush1.bf16.msra.mxu0 %v918
        %2984 = vmatprep.subr.bf16.mxu0 %v935
        %2985 = vmatpush1.bf16.msra.mxu0 %v934
        %2986 = vmatprep.subr.bf16.mxu0 %v951
        %2987 = vmatpush1.bf16.msra.mxu0 %v950
        %2988 = vmatprep.subr.bf16.mxu0 %v967
        %2989 = vmatpush1.bf16.msra.mxu0 %v966
        %2990 = vmatprep.subr.bf16.mxu0 %v983
        %2991 = vmatpush1.bf16.msra.mxu0 %v982
        %2992 = vmatprep.subr.bf16.mxu0 %v999
        %2993 = vmatpush1.bf16.msra.mxu0 %v998
        %2994 = vmatprep.mubr.bf16.mxu0 %v1787
        %2995 = vmatmul.mubr.bf16.gmra.mrb[0].mxu0 %v1779
        %v2996 = vpop.f32.mrb[0].mxu0
        %v2997 = vadd.f32 0.0, %v2996
        %v2998 = vpop.f32.mrb[0].mxu0
        %v2999 = vadd.f32 0.0, %v2998
        %v3000 = vpop.f32.mrb[0].mxu0
        %v3001 = vpop.f32.mrb[0].mxu0
        %3002 = vdwg.mxu0
        %3003 = vmatprep.subr.bf16.mxu0 %v1015
        %3004 = vmatpush1.bf16.msra.mxu0 %v1014
        %3005 = vmatprep.subr.bf16.mxu0 %v1031
        %3006 = vmatpush1.bf16.msra.mxu0 %v1030
        %3007 = vmatprep.subr.bf16.mxu0 %v1047
        %3008 = vmatpush1.bf16.msra.mxu0 %v1046
        %3009 = vmatprep.subr.bf16.mxu0 %v1063
        %3010 = vmatpush1.bf16.msra.mxu0 %v1062
        %3011 = vmatprep.subr.bf16.mxu0 %v1079
        %3012 = vmatpush1.bf16.msra.mxu0 %v1078
        %3013 = vmatprep.subr.bf16.mxu0 %v1095
        %3014 = vmatpush1.bf16.msra.mxu0 %v1094
        %3015 = vmatprep.subr.bf16.mxu0 %v1111
        %3016 = vmatpush1.bf16.msra.mxu0 %v1110
        %3017 = vmatprep.subr.bf16.mxu0 %v1127
        %3018 = vmatpush1.bf16.msra.mxu0 %v1126
        %3019 = vmatprep.subr.bf16.mxu0 %v1143
        %3020 = vmatpush1.bf16.msra.mxu0 %v1142
        %3021 = vmatprep.subr.bf16.mxu0 %v1159
        %3022 = vmatpush1.bf16.msra.mxu0 %v1158
        %3023 = vmatprep.subr.bf16.mxu0 %v1175
        %3024 = vmatpush1.bf16.msra.mxu0 %v1174
        %3025 = vmatprep.subr.bf16.mxu0 %v1191
        %3026 = vmatpush1.bf16.msra.mxu0 %v1190
        %3027 = vmatprep.subr.bf16.mxu0 %v1207
        %3028 = vmatpush1.bf16.msra.mxu0 %v1206
        %3029 = vmatprep.subr.bf16.mxu0 %v1223
        %3030 = vmatpush1.bf16.msra.mxu0 %v1222
        %3031 = vmatprep.subr.bf16.mxu0 %v1239
        %3032 = vmatpush1.bf16.msra.mxu0 %v1238
        %3033 = vmatprep.subr.bf16.mxu0 %v1255
        %3034 = vmatpush1.bf16.msra.mxu0 %v1254
        %3035 = vmatprep.mubr.bf16.mxu0 %v1788
        %3036 = vmatmul.mubr.bf16.gmra.mrb[0].mxu0 %v1786
        %v3037 = vpop.f32.mrb[0].mxu0
        %v3038 = vadd.f32 %v2997, %v3037
        %v3039 = vpop.f32.mrb[0].mxu0
        %v3040 = vadd.f32 %v2999, %v3039
        %v3041 = vpop.f32.mrb[0].mxu0
        %v3042 = vpop.f32.mrb[0].mxu0
        %3043 = vdwg.mxu0
        %3044 = vmatprep.subr.bf16.mxu0 %v1271
        %3045 = vmatpush1.bf16.msra.mxu0 %v1270
        %3046 = vmatprep.subr.bf16.mxu0 %v1287
        %3047 = vmatpush1.bf16.msra.mxu0 %v1286
        %3048 = vmatprep.subr.bf16.mxu0 %v1303
        %3049 = vmatpush1.bf16.msra.mxu0 %v1302
        %3050 = vmatprep.subr.bf16.mxu0 %v1319
        %3051 = vmatpush1.bf16.msra.mxu0 %v1318
        %3052 = vmatprep.subr.bf16.mxu0 %v1335
        %3053 = vmatpush1.bf16.msra.mxu0 %v1334
        %3054 = vmatprep.subr.bf16.mxu0 %v1351
        %3055 = vmatpush1.bf16.msra.mxu0 %v1350
        %3056 = vmatprep.subr.bf16.mxu0 %v1367
        %3057 = vmatpush1.bf16.msra.mxu0 %v1366
        %3058 = vmatprep.subr.bf16.mxu0 %v1383
        %3059 = vmatpush1.bf16.msra.mxu0 %v1382
        %3060 = vmatprep.subr.bf16.mxu0 %v1399
        %3061 = vmatpush1.bf16.msra.mxu0 %v1398
        %3062 = vmatprep.subr.bf16.mxu0 %v1415
        %3063 = vmatpush1.bf16.msra.mxu0 %v1414
        %3064 = vmatprep.subr.bf16.mxu0 %v1431
        %3065 = vmatpush1.bf16.msra.mxu0 %v1430
        %3066 = vmatprep.subr.bf16.mxu0 %v1447
        %3067 = vmatpush1.bf16.msra.mxu0 %v1446
        %3068 = vmatprep.subr.bf16.mxu0 %v1463
        %3069 = vmatpush1.bf16.msra.mxu0 %v1462
        %3070 = vmatprep.subr.bf16.mxu0 %v1479
        %3071 = vmatpush1.bf16.msra.mxu0 %v1478
        %3072 = vmatprep.subr.bf16.mxu0 %v1495
        %3073 = vmatpush1.bf16.msra.mxu0 %v1494
        %3074 = vmatprep.subr.bf16.mxu0 %v1511
        %3075 = vmatpush1.bf16.msra.mxu0 %v1510
        %3076 = vmatprep.mubr.bf16.mxu0 %v1804
        %3077 = vmatmul.mubr.bf16.gmra.mrb[0].mxu0 %v1796
        %v3078 = vpop.f32.mrb[0].mxu0
        %v3079 = vadd.f32 %v3038, %v3078
        %v3080 = vpop.f32.mrb[0].mxu0
        %v3081 = vadd.f32 %v3040, %v3080
        %v3082 = vpop.f32.mrb[0].mxu0
        %v3083 = vpop.f32.mrb[0].mxu0
        %3084 = vdwg.mxu0
        %3085 = vmatprep.subr.bf16.mxu0 %v1527
        %3086 = vmatpush1.bf16.msra.mxu0 %v1526
        %3087 = vmatprep.subr.bf16.mxu0 %v1543
        %3088 = vmatpush1.bf16.msra.mxu0 %v1542
        %3089 = vmatprep.subr.bf16.mxu0 %v1559
        %3090 = vmatpush1.bf16.msra.mxu0 %v1558
        %3091 = vmatprep.subr.bf16.mxu0 %v1575
        %3092 = vmatpush1.bf16.msra.mxu0 %v1574
        %3093 = vmatprep.subr.bf16.mxu0 %v1591
        %3094 = vmatpush1.bf16.msra.mxu0 %v1590
        %3095 = vmatprep.subr.bf16.mxu0 %v1607
        %3096 = vmatpush1.bf16.msra.mxu0 %v1606
        %3097 = vmatprep.subr.bf16.mxu0 %v1623
        %3098 = vmatpush1.bf16.msra.mxu0 %v1622
        %3099 = vmatprep.subr.bf16.mxu0 %v1639
        %3100 = vmatpush1.bf16.msra.mxu0 %v1638
        %3101 = vmatprep.subr.bf16.mxu0 %v1655
        %3102 = vmatpush1.bf16.msra.mxu0 %v1654
        %3103 = vmatprep.subr.bf16.mxu0 %v1671
        %3104 = vmatpush1.bf16.msra.mxu0 %v1670
        %3105 = vmatprep.subr.bf16.mxu0 %v1687
        %3106 = vmatpush1.bf16.msra.mxu0 %v1686
        %3107 = vmatprep.subr.bf16.mxu0 %v1703
        %3108 = vmatpush1.bf16.msra.mxu0 %v1702
        %3109 = vmatprep.subr.bf16.mxu0 %v1719
        %3110 = vmatpush1.bf16.msra.mxu0 %v1718
        %3111 = vmatprep.subr.bf16.mxu0 %v1735
        %3112 = vmatpush1.bf16.msra.mxu0 %v1734
        %3113 = vmatprep.subr.bf16.mxu0 %v1751
        %3114 = vmatpush1.bf16.msra.mxu0 %v1750
        %3115 = vmatprep.subr.bf16.mxu0 %v1767
        %3116 = vmatpush1.bf16.msra.mxu0 %v1766
        %3117 = vmatprep.mubr.bf16.mxu0 %v1805
        %3118 = vmatmul.mubr.bf16.gmra.mrb[0].mxu0 %v1803
        %v3119 = vpop.f32.mrb[0].mxu0
        %v3120 = vadd.f32 %v3079, %v3119
        %v3121 = vpop.f32.mrb[0].mxu0
        %v3122 = vadd.f32 %v3081, %v3121
        %v3123 = vpop.f32.mrb[0].mxu0
        %v3124 = vpop.f32.mrb[0].mxu0
        %3125 = vdwg.mxu0
        %v3126 = vld [vmem:[%s196] ss:$4 sm:$0xff]
        %s3127 = scalar_lea.vmem %s196, 32 [#allocation4]
        %v3128 = vld [vmem:[%s3127] ss:$4 sm:$0xff]
        %v3131 = vlaneseq
        %v3132 = vshrl.u32 %v3131, 7
        %v3133 = vsub.s32 0, %v3132
        %v3134 = vrot.slane %v3126, %v3133
        %v3135 = vlaneseq
        %v3136 = vshrl.u32 %v3135, 7
        %v3137 = vsub.s32 1, %v3136
        %v3138 = vrot.slane %v3126, %v3137
        %v3139 = vlaneseq
        %v3140 = vshrl.u32 %v3139, 7
        %v3141 = vsub.s32 2, %v3140
        %v3142 = vrot.slane %v3126, %v3141
        %v3143 = vlaneseq
        %v3144 = vshrl.u32 %v3143, 7
        %v3145 = vsub.s32 3, %v3144
        %v3146 = vrot.slane %v3126, %v3145
        %v3147 = vlaneseq
        %v3148 = vshrl.u32 %v3147, 7
        %v3149 = vsub.s32 4, %v3148
        %v3150 = vrot.slane %v3126, %v3149
        %v3151 = vlaneseq
        %v3152 = vshrl.u32 %v3151, 7
        %v3153 = vsub.s32 5, %v3152
        %v3154 = vrot.slane %v3126, %v3153
        %v3155 = vlaneseq
        %v3156 = vshrl.u32 %v3155, 7
        %v3157 = vsub.s32 6, %v3156
        %v3158 = vrot.slane %v3126, %v3157
        %v3159 = vlaneseq
        %v3160 = vshrl.u32 %v3159, 7
        %v3161 = vsub.s32 7, %v3160
        %v3162 = vrot.slane %v3126, %v3161
        %v3163 = vlaneseq
        %v3164 = vshrl.u32 %v3163, 7
        %v3165 = vsub.s32 0, %v3164
        %v3166 = vrot.slane %v3128, %v3165
        %v3167 = vlaneseq
        %v3168 = vshrl.u32 %v3167, 7
        %v3169 = vsub.s32 1, %v3168
        %v3170 = vrot.slane %v3128, %v3169
        %v3171 = vlaneseq
        %v3172 = vshrl.u32 %v3171, 7
        %v3173 = vsub.s32 2, %v3172
        %v3174 = vrot.slane %v3128, %v3173
        %v3175 = vlaneseq
        %v3176 = vshrl.u32 %v3175, 7
        %v3177 = vsub.s32 3, %v3176
        %v3178 = vrot.slane %v3128, %v3177
        %v3179 = vlaneseq
        %v3180 = vshrl.u32 %v3179, 7
        %v3181 = vsub.s32 4, %v3180
        %v3182 = vrot.slane %v3128, %v3181
        %v3183 = vlaneseq
        %v3184 = vshrl.u32 %v3183, 7
        %v3185 = vsub.s32 5, %v3184
        %v3186 = vrot.slane %v3128, %v3185
        %v3187 = vlaneseq
        %v3188 = vshrl.u32 %v3187, 7
        %v3189 = vsub.s32 6, %v3188
        %v3190 = vrot.slane %v3128, %v3189
        %v3191 = vlaneseq
        %v3192 = vshrl.u32 %v3191, 7
        %v3193 = vsub.s32 7, %v3192
        %v3194 = vrot.slane %v3128, %v3193
        %v3211 = vmul.f32 %v1972, %v3134
        %v3212 = vmul.f32 %v1974, %v3138
        %v3213 = vmul.f32 %v2136, %v3142
        %v3214 = vmul.f32 %v2138, %v3146
        %v3215 = vmul.f32 %v2300, %v3150
        %v3216 = vmul.f32 %v2302, %v3154
        %v3217 = vmul.f32 %v2464, %v3158
        %v3218 = vmul.f32 %v2466, %v3162
        %v3219 = vmul.f32 %v2628, %v3166
        %v3220 = vmul.f32 %v2630, %v3170
        %v3221 = vmul.f32 %v2792, %v3174
        %v3222 = vmul.f32 %v2794, %v3178
        %v3223 = vmul.f32 %v2956, %v3182
        %v3224 = vmul.f32 %v2958, %v3186
        %v3225 = vmul.f32 %v3120, %v3190
        %v3226 = vmul.f32 %v3122, %v3194
        %vm3227 = vcmask 1043456
        %v3228 = vsel %vm3227, %v3211, 0.0
        %v3229 = vrot.slane %v3228, 4
        %v3230 = vadd.f32 %v3228, %v3229
        %v3231 = vrot.slane %v3230, 2
        %v3232 = vadd.f32 %v3230, %v3231
        %v3233 = vrot.slane %v3232, 1
        %v3234 = vadd.f32 %v3232, %v3233
        %v3235 = vsel %vm3227, %v3212, 0.0
        %v3236 = vrot.slane %v3235, 4
        %v3237 = vadd.f32 %v3235, %v3236
        %v3238 = vrot.slane %v3237, 2
        %v3239 = vadd.f32 %v3237, %v3238
        %v3240 = vrot.slane %v3239, 1
        %v3241 = vadd.f32 %v3239, %v3240
        %v3242 = vsel %vm3227, %v3213, 0.0
        %v3243 = vrot.slane %v3242, 4
        %v3244 = vadd.f32 %v3242, %v3243
        %v3245 = vrot.slane %v3244, 2
        %v3246 = vadd.f32 %v3244, %v3245
        %v3247 = vrot.slane %v3246, 1
        %v3248 = vadd.f32 %v3246, %v3247
        %v3249 = vsel %vm3227, %v3214, 0.0
        %v3250 = vrot.slane %v3249, 4
        %v3251 = vadd.f32 %v3249, %v3250
        %v3252 = vrot.slane %v3251, 2
        %v3253 = vadd.f32 %v3251, %v3252
        %v3254 = vrot.slane %v3253, 1
        %v3255 = vadd.f32 %v3253, %v3254
        %v3256 = vsel %vm3227, %v3215, 0.0
        %v3257 = vrot.slane %v3256, 4
        %v3258 = vadd.f32 %v3256, %v3257
        %v3259 = vrot.slane %v3258, 2
        %v3260 = vadd.f32 %v3258, %v3259
        %v3261 = vrot.slane %v3260, 1
        %v3262 = vadd.f32 %v3260, %v3261
        %v3263 = vsel %vm3227, %v3216, 0.0
        %v3264 = vrot.slane %v3263, 4
        %v3265 = vadd.f32 %v3263, %v3264
        %v3266 = vrot.slane %v3265, 2
        %v3267 = vadd.f32 %v3265, %v3266
        %v3268 = vrot.slane %v3267, 1
        %v3269 = vadd.f32 %v3267, %v3268
        %v3270 = vsel %vm3227, %v3217, 0.0
        %v3271 = vrot.slane %v3270, 4
        %v3272 = vadd.f32 %v3270, %v3271
        %v3273 = vrot.slane %v3272, 2
        %v3274 = vadd.f32 %v3272, %v3273
        %v3275 = vrot.slane %v3274, 1
        %v3276 = vadd.f32 %v3274, %v3275
        %v3277 = vsel %vm3227, %v3218, 0.0
        %v3278 = vrot.slane %v3277, 4
        %v3279 = vadd.f32 %v3277, %v3278
        %v3280 = vrot.slane %v3279, 2
        %v3281 = vadd.f32 %v3279, %v3280
        %v3282 = vrot.slane %v3281, 1
        %v3283 = vadd.f32 %v3281, %v3282
        %v3284 = vsel %vm3227, %v3219, 0.0
        %v3285 = vrot.slane %v3284, 4
        %v3286 = vadd.f32 %v3284, %v3285
        %v3287 = vrot.slane %v3286, 2
        %v3288 = vadd.f32 %v3286, %v3287
        %v3289 = vrot.slane %v3288, 1
        %v3290 = vadd.f32 %v3288, %v3289
        %v3291 = vsel %vm3227, %v3220, 0.0
        %v3292 = vrot.slane %v3291, 4
        %v3293 = vadd.f32 %v3291, %v3292
        %v3294 = vrot.slane %v3293, 2
        %v3295 = vadd.f32 %v3293, %v3294
        %v3296 = vrot.slane %v3295, 1
        %v3297 = vadd.f32 %v3295, %v3296
        %v3298 = vsel %vm3227, %v3221, 0.0
        %v3299 = vrot.slane %v3298, 4
        %v3300 = vadd.f32 %v3298, %v3299
        %v3301 = vrot.slane %v3300, 2
        %v3302 = vadd.f32 %v3300, %v3301
        %v3303 = vrot.slane %v3302, 1
        %v3304 = vadd.f32 %v3302, %v3303
        %v3305 = vsel %vm3227, %v3222, 0.0
        %v3306 = vrot.slane %v3305, 4
        %v3307 = vadd.f32 %v3305, %v3306
        %v3308 = vrot.slane %v3307, 2
        %v3309 = vadd.f32 %v3307, %v3308
        %v3310 = vrot.slane %v3309, 1
        %v3311 = vadd.f32 %v3309, %v3310
        %v3312 = vsel %vm3227, %v3223, 0.0
        %v3313 = vrot.slane %v3312, 4
        %v3314 = vadd.f32 %v3312, %v3313
        %v3315 = vrot.slane %v3314, 2
        %v3316 = vadd.f32 %v3314, %v3315
        %v3317 = vrot.slane %v3316, 1
        %v3318 = vadd.f32 %v3316, %v3317
        %v3319 = vsel %vm3227, %v3224, 0.0
        %v3320 = vrot.slane %v3319, 4
        %v3321 = vadd.f32 %v3319, %v3320
        %v3322 = vrot.slane %v3321, 2
        %v3323 = vadd.f32 %v3321, %v3322
        %v3324 = vrot.slane %v3323, 1
        %v3325 = vadd.f32 %v3323, %v3324
        %v3326 = vsel %vm3227, %v3225, 0.0
        %v3327 = vrot.slane %v3326, 4
        %v3328 = vadd.f32 %v3326, %v3327
        %v3329 = vrot.slane %v3328, 2
        %v3330 = vadd.f32 %v3328, %v3329
        %v3331 = vrot.slane %v3330, 1
        %v3332 = vadd.f32 %v3330, %v3331
        %v3333 = vsel %vm3227, %v3226, 0.0
        %v3334 = vrot.slane %v3333, 4
        %v3335 = vadd.f32 %v3333, %v3334
        %v3336 = vrot.slane %v3335, 2
        %v3337 = vadd.f32 %v3335, %v3336
        %v3338 = vrot.slane %v3337, 1
        %v3339 = vadd.f32 %v3337, %v3338
        %v3340 = vrcp.pop 4.0
        %v3341 = vmul.f32 %v3234, %v3340
        %v3342 = vmul.f32 %v3241, %v3340
        %v3343 = vmul.f32 %v3248, %v3340
        %v3344 = vmul.f32 %v3255, %v3340
        %v3345 = vmul.f32 %v3262, %v3340
        %v3346 = vmul.f32 %v3269, %v3340
        %v3347 = vmul.f32 %v3276, %v3340
        %v3348 = vmul.f32 %v3283, %v3340
        %v3349 = vmul.f32 %v3290, %v3340
        %v3350 = vmul.f32 %v3297, %v3340
        %v3351 = vmul.f32 %v3304, %v3340
        %v3352 = vmul.f32 %v3311, %v3340
        %v3353 = vmul.f32 %v3318, %v3340
        %v3354 = vmul.f32 %v3325, %v3340
        %v3355 = vmul.f32 %v3332, %v3340
        %v3356 = vmul.f32 %v3339, %v3340
        %v3357 = vsub.f32 %v3211, %v3341
        %v3358 = vsub.f32 %v3212, %v3342
        %v3359 = vsub.f32 %v3213, %v3343
        %v3360 = vsub.f32 %v3214, %v3344
        %v3361 = vsub.f32 %v3215, %v3345
        %v3362 = vsub.f32 %v3216, %v3346
        %v3363 = vsub.f32 %v3217, %v3347
        %v3364 = vsub.f32 %v3218, %v3348
        %v3365 = vsub.f32 %v3219, %v3349
        %v3366 = vsub.f32 %v3220, %v3350
        %v3367 = vsub.f32 %v3221, %v3351
        %v3368 = vsub.f32 %v3222, %v3352
        %v3369 = vsub.f32 %v3223, %v3353
        %v3370 = vsub.f32 %v3224, %v3354
        %v3371 = vsub.f32 %v3225, %v3355
        %v3372 = vsub.f32 %v3226, %v3356
        %v3373 = vmul.f32 %v3357, %v3357
        %v3374 = vmul.f32 %v3358, %v3358
        %v3375 = vmul.f32 %v3359, %v3359
        %v3376 = vmul.f32 %v3360, %v3360
        %v3377 = vmul.f32 %v3361, %v3361
        %v3378 = vmul.f32 %v3362, %v3362
        %v3379 = vmul.f32 %v3363, %v3363
        %v3380 = vmul.f32 %v3364, %v3364
        %v3381 = vmul.f32 %v3365, %v3365
        %v3382 = vmul.f32 %v3366, %v3366
        %v3383 = vmul.f32 %v3367, %v3367
        %v3384 = vmul.f32 %v3368, %v3368
        %v3385 = vmul.f32 %v3369, %v3369
        %v3386 = vmul.f32 %v3370, %v3370
        %v3387 = vmul.f32 %v3371, %v3371
        %v3388 = vmul.f32 %v3372, %v3372
        %v3389 = vsel %vm3227, %v3373, 0.0
        %v3390 = vrot.slane %v3389, 4
        %v3391 = vadd.f32 %v3389, %v3390
        %v3392 = vrot.slane %v3391, 2
        %v3393 = vadd.f32 %v3391, %v3392
        %v3394 = vrot.slane %v3393, 1
        %v3395 = vadd.f32 %v3393, %v3394
        %v3396 = vsel %vm3227, %v3374, 0.0
        %v3397 = vrot.slane %v3396, 4
        %v3398 = vadd.f32 %v3396, %v3397
        %v3399 = vrot.slane %v3398, 2
        %v3400 = vadd.f32 %v3398, %v3399
        %v3401 = vrot.slane %v3400, 1
        %v3402 = vadd.f32 %v3400, %v3401
        %v3403 = vsel %vm3227, %v3375, 0.0
        %v3404 = vrot.slane %v3403, 4
        %v3405 = vadd.f32 %v3403, %v3404
        %v3406 = vrot.slane %v3405, 2
        %v3407 = vadd.f32 %v3405, %v3406
        %v3408 = vrot.slane %v3407, 1
        %v3409 = vadd.f32 %v3407, %v3408
        %v3410 = vsel %vm3227, %v3376, 0.0
        %v3411 = vrot.slane %v3410, 4
        %v3412 = vadd.f32 %v3410, %v3411
        %v3413 = vrot.slane %v3412, 2
        %v3414 = vadd.f32 %v3412, %v3413
        %v3415 = vrot.slane %v3414, 1
        %v3416 = vadd.f32 %v3414, %v3415
        %v3417 = vsel %vm3227, %v3377, 0.0
        %v3418 = vrot.slane %v3417, 4
        %v3419 = vadd.f32 %v3417, %v3418
        %v3420 = vrot.slane %v3419, 2
        %v3421 = vadd.f32 %v3419, %v3420
        %v3422 = vrot.slane %v3421, 1
        %v3423 = vadd.f32 %v3421, %v3422
        %v3424 = vsel %vm3227, %v3378, 0.0
        %v3425 = vrot.slane %v3424, 4
        %v3426 = vadd.f32 %v3424, %v3425
        %v3427 = vrot.slane %v3426, 2
        %v3428 = vadd.f32 %v3426, %v3427
        %v3429 = vrot.slane %v3428, 1
        %v3430 = vadd.f32 %v3428, %v3429
        %v3431 = vsel %vm3227, %v3379, 0.0
        %v3432 = vrot.slane %v3431, 4
        %v3433 = vadd.f32 %v3431, %v3432
        %v3434 = vrot.slane %v3433, 2
        %v3435 = vadd.f32 %v3433, %v3434
        %v3436 = vrot.slane %v3435, 1
        %v3437 = vadd.f32 %v3435, %v3436
        %v3438 = vsel %vm3227, %v3380, 0.0
        %v3439 = vrot.slane %v3438, 4
        %v3440 = vadd.f32 %v3438, %v3439
        %v3441 = vrot.slane %v3440, 2
        %v3442 = vadd.f32 %v3440, %v3441
        %v3443 = vrot.slane %v3442, 1
        %v3444 = vadd.f32 %v3442, %v3443
        %v3445 = vsel %vm3227, %v3381, 0.0
        %v3446 = vrot.slane %v3445, 4
        %v3447 = vadd.f32 %v3445, %v3446
        %v3448 = vrot.slane %v3447, 2
        %v3449 = vadd.f32 %v3447, %v3448
        %v3450 = vrot.slane %v3449, 1
        %v3451 = vadd.f32 %v3449, %v3450
        %v3452 = vsel %vm3227, %v3382, 0.0
        %v3453 = vrot.slane %v3452, 4
        %v3454 = vadd.f32 %v3452, %v3453
        %v3455 = vrot.slane %v3454, 2
        %v3456 = vadd.f32 %v3454, %v3455
        %v3457 = vrot.slane %v3456, 1
        %v3458 = vadd.f32 %v3456, %v3457
        %v3459 = vsel %vm3227, %v3383, 0.0
        %v3460 = vrot.slane %v3459, 4
        %v3461 = vadd.f32 %v3459, %v3460
        %v3462 = vrot.slane %v3461, 2
        %v3463 = vadd.f32 %v3461, %v3462
        %v3464 = vrot.slane %v3463, 1
        %v3465 = vadd.f32 %v3463, %v3464
        %v3466 = vsel %vm3227, %v3384, 0.0
        %v3467 = vrot.slane %v3466, 4
        %v3468 = vadd.f32 %v3466, %v3467
        %v3469 = vrot.slane %v3468, 2
        %v3470 = vadd.f32 %v3468, %v3469
        %v3471 = vrot.slane %v3470, 1
        %v3472 = vadd.f32 %v3470, %v3471
        %v3473 = vsel %vm3227, %v3385, 0.0
        %v3474 = vrot.slane %v3473, 4
        %v3475 = vadd.f32 %v3473, %v3474
        %v3476 = vrot.slane %v3475, 2
        %v3477 = vadd.f32 %v3475, %v3476
        %v3478 = vrot.slane %v3477, 1
        %v3479 = vadd.f32 %v3477, %v3478
        %v3480 = vsel %vm3227, %v3386, 0.0
        %v3481 = vrot.slane %v3480, 4
        %v3482 = vadd.f32 %v3480, %v3481
        %v3483 = vrot.slane %v3482, 2
        %v3484 = vadd.f32 %v3482, %v3483
        %v3485 = vrot.slane %v3484, 1
        %v3486 = vadd.f32 %v3484, %v3485
        %v3487 = vsel %vm3227, %v3387, 0.0
        %v3488 = vrot.slane %v3487, 4
        %v3489 = vadd.f32 %v3487, %v3488
        %v3490 = vrot.slane %v3489, 2
        %v3491 = vadd.f32 %v3489, %v3490
        %v3492 = vrot.slane %v3491, 1
        %v3493 = vadd.f32 %v3491, %v3492
        %v3494 = vsel %vm3227, %v3388, 0.0
        %v3495 = vrot.slane %v3494, 4
        %v3496 = vadd.f32 %v3494, %v3495
        %v3497 = vrot.slane %v3496, 2
        %v3498 = vadd.f32 %v3496, %v3497
        %v3499 = vrot.slane %v3498, 1
        %v3500 = vadd.f32 %v3498, %v3499
        %v3501 = vmul.f32 %v3395, %v3340
        %v3502 = vmul.f32 %v3402, %v3340
        %v3503 = vmul.f32 %v3409, %v3340
        %v3504 = vmul.f32 %v3416, %v3340
        %v3505 = vmul.f32 %v3423, %v3340
        %v3506 = vmul.f32 %v3430, %v3340
        %v3507 = vmul.f32 %v3437, %v3340
        %v3508 = vmul.f32 %v3444, %v3340
        %v3509 = vmul.f32 %v3451, %v3340
        %v3510 = vmul.f32 %v3458, %v3340
        %v3511 = vmul.f32 %v3465, %v3340
        %v3512 = vmul.f32 %v3472, %v3340
        %v3513 = vmul.f32 %v3479, %v3340
        %v3514 = vmul.f32 %v3486, %v3340
        %v3515 = vmul.f32 %v3493, %v3340
        %v3516 = vmul.f32 %v3500, %v3340
        %v3517 = vadd.f32 %v3501, 1e-05
        %v3518 = vadd.f32 %v3502, 1e-05
        %v3519 = vadd.f32 %v3503, 1e-05
        %v3520 = vadd.f32 %v3504, 1e-05
        %v3521 = vadd.f32 %v3505, 1e-05
        %v3522 = vadd.f32 %v3506, 1e-05
        %v3523 = vadd.f32 %v3507, 1e-05
        %v3524 = vadd.f32 %v3508, 1e-05
        %v3525 = vadd.f32 %v3509, 1e-05
        %v3526 = vadd.f32 %v3510, 1e-05
        %v3527 = vadd.f32 %v3511, 1e-05
        %v3528 = vadd.f32 %v3512, 1e-05
        %v3529 = vadd.f32 %v3513, 1e-05
        %v3530 = vadd.f32 %v3514, 1e-05
        %v3531 = vadd.f32 %v3515, 1e-05
        %v3532 = vadd.f32 %v3516, 1e-05
        %v3533 = vrsqrt.pop %v3517
        %v3534 = vrsqrt.pop %v3518
        %v3535 = vrsqrt.pop %v3519
        %v3536 = vrsqrt.pop %v3520
        %v3537 = vrsqrt.pop %v3521
        %v3538 = vrsqrt.pop %v3522
        %v3539 = vrsqrt.pop %v3523
        %v3540 = vrsqrt.pop %v3524
        %v3541 = vrsqrt.pop %v3525
        %v3542 = vrsqrt.pop %v3526
        %v3543 = vrsqrt.pop %v3527
        %v3544 = vrsqrt.pop %v3528
        %v3545 = vrsqrt.pop %v3529
        %v3546 = vrsqrt.pop %v3530
        %v3547 = vrsqrt.pop %v3531
        %v3548 = vrsqrt.pop %v3532
        %v3549 = vmul.f32 %v3357, %v3533
        %v3550 = vmul.f32 %v3358, %v3534
        %v3551 = vmul.f32 %v3359, %v3535
        %v3552 = vmul.f32 %v3360, %v3536
        %v3553 = vmul.f32 %v3361, %v3537
        %v3554 = vmul.f32 %v3362, %v3538
        %v3555 = vmul.f32 %v3363, %v3539
        %v3556 = vmul.f32 %v3364, %v3540
        %v3557 = vmul.f32 %v3365, %v3541
        %v3558 = vmul.f32 %v3366, %v3542
        %v3559 = vmul.f32 %v3367, %v3543
        %v3560 = vmul.f32 %v3368, %v3544
        %v3561 = vmul.f32 %v3369, %v3545
        %v3562 = vmul.f32 %v3370, %v3546
        %v3563 = vmul.f32 %v3371, %v3547
        %v3564 = vmul.f32 %v3372, %v3548
        %s3565 = scalar_lea.vmem %s196, 1 [#allocation4]
        %v3566 = vld [vmem:[%s3565] ss:$4 sm:$0xff]
        %s3567 = scalar_lea.vmem %s196, 33 [#allocation4]
        %v3568 = vld [vmem:[%s3567] ss:$4 sm:$0xff]
        %v3571 = vlaneseq
        %v3572 = vshrl.u32 %v3571, 7
        %v3573 = vsub.s32 0, %v3572
        %v3574 = vrot.slane %v3566, %v3573
        %v3575 = vlaneseq
        %v3576 = vshrl.u32 %v3575, 7
        %v3577 = vsub.s32 1, %v3576
        %v3578 = vrot.slane %v3566, %v3577
        %v3579 = vlaneseq
        %v3580 = vshrl.u32 %v3579, 7
        %v3581 = vsub.s32 2, %v3580
        %v3582 = vrot.slane %v3566, %v3581
        %v3583 = vlaneseq
        %v3584 = vshrl.u32 %v3583, 7
        %v3585 = vsub.s32 3, %v3584
        %v3586 = vrot.slane %v3566, %v3585
        %v3587 = vlaneseq
        %v3588 = vshrl.u32 %v3587, 7
        %v3589 = vsub.s32 4, %v3588
        %v3590 = vrot.slane %v3566, %v3589
        %v3591 = vlaneseq
        %v3592 = vshrl.u32 %v3591, 7
        %v3593 = vsub.s32 5, %v3592
        %v3594 = vrot.slane %v3566, %v3593
        %v3595 = vlaneseq
        %v3596 = vshrl.u32 %v3595, 7
        %v3597 = vsub.s32 6, %v3596
        %v3598 = vrot.slane %v3566, %v3597
        %v3599 = vlaneseq
        %v3600 = vshrl.u32 %v3599, 7
        %v3601 = vsub.s32 7, %v3600
        %v3602 = vrot.slane %v3566, %v3601
        %v3603 = vlaneseq
        %v3604 = vshrl.u32 %v3603, 7
        %v3605 = vsub.s32 0, %v3604
        %v3606 = vrot.slane %v3568, %v3605
        %v3607 = vlaneseq
        %v3608 = vshrl.u32 %v3607, 7
        %v3609 = vsub.s32 1, %v3608
        %v3610 = vrot.slane %v3568, %v3609
        %v3611 = vlaneseq
        %v3612 = vshrl.u32 %v3611, 7
        %v3613 = vsub.s32 2, %v3612
        %v3614 = vrot.slane %v3568, %v3613
        %v3615 = vlaneseq
        %v3616 = vshrl.u32 %v3615, 7
        %v3617 = vsub.s32 3, %v3616
        %v3618 = vrot.slane %v3568, %v3617
        %v3619 = vlaneseq
        %v3620 = vshrl.u32 %v3619, 7
        %v3621 = vsub.s32 4, %v3620
        %v3622 = vrot.slane %v3568, %v3621
        %v3623 = vlaneseq
        %v3624 = vshrl.u32 %v3623, 7
        %v3625 = vsub.s32 5, %v3624
        %v3626 = vrot.slane %v3568, %v3625
        %v3627 = vlaneseq
        %v3628 = vshrl.u32 %v3627, 7
        %v3629 = vsub.s32 6, %v3628
        %v3630 = vrot.slane %v3568, %v3629
        %v3631 = vlaneseq
        %v3632 = vshrl.u32 %v3631, 7
        %v3633 = vsub.s32 7, %v3632
        %v3634 = vrot.slane %v3568, %v3633
        %v3651 = vmul.f32 %v3549, %v3574
        %v3652 = vmul.f32 %v3550, %v3578
        %v3653 = vmul.f32 %v3551, %v3582
        %v3654 = vmul.f32 %v3552, %v3586
        %v3655 = vmul.f32 %v3553, %v3590
        %v3656 = vmul.f32 %v3554, %v3594
        %v3657 = vmul.f32 %v3555, %v3598
        %v3658 = vmul.f32 %v3556, %v3602
        %v3659 = vmul.f32 %v3557, %v3606
        %v3660 = vmul.f32 %v3558, %v3610
        %v3661 = vmul.f32 %v3559, %v3614
        %v3662 = vmul.f32 %v3560, %v3618
        %v3663 = vmul.f32 %v3561, %v3622
        %v3664 = vmul.f32 %v3562, %v3626
        %v3665 = vmul.f32 %v3563, %v3630
        %v3666 = vmul.f32 %v3564, %v3634
        %s3667 = scalar_lea.vmem %s196, 2 [#allocation4]
        %v3668 = vld [vmem:[%s3667] ss:$4 sm:$0xff]
        %s3669 = scalar_lea.vmem %s196, 34 [#allocation4]
        %v3670 = vld [vmem:[%s3669] ss:$4 sm:$0xff]
        %v3673 = vlaneseq
        %v3674 = vshrl.u32 %v3673, 7
        %v3675 = vsub.s32 0, %v3674
        %v3676 = vrot.slane %v3668, %v3675
        %v3677 = vlaneseq
        %v3678 = vshrl.u32 %v3677, 7
        %v3679 = vsub.s32 1, %v3678
        %v3680 = vrot.slane %v3668, %v3679
        %v3681 = vlaneseq
        %v3682 = vshrl.u32 %v3681, 7
        %v3683 = vsub.s32 2, %v3682
        %v3684 = vrot.slane %v3668, %v3683
        %v3685 = vlaneseq
        %v3686 = vshrl.u32 %v3685, 7
        %v3687 = vsub.s32 3, %v3686
        %v3688 = vrot.slane %v3668, %v3687
        %v3689 = vlaneseq
        %v3690 = vshrl.u32 %v3689, 7
        %v3691 = vsub.s32 4, %v3690
        %v3692 = vrot.slane %v3668, %v3691
        %v3693 = vlaneseq
        %v3694 = vshrl.u32 %v3693, 7
        %v3695 = vsub.s32 5, %v3694
        %v3696 = vrot.slane %v3668, %v3695
        %v3697 = vlaneseq
        %v3698 = vshrl.u32 %v3697, 7
        %v3699 = vsub.s32 6, %v3698
        %v3700 = vrot.slane %v3668, %v3699
        %v3701 = vlaneseq
        %v3702 = vshrl.u32 %v3701, 7
        %v3703 = vsub.s32 7, %v3702
        %v3704 = vrot.slane %v3668, %v3703
        %v3705 = vlaneseq
        %v3706 = vshrl.u32 %v3705, 7
        %v3707 = vsub.s32 0, %v3706
        %v3708 = vrot.slane %v3670, %v3707
        %v3709 = vlaneseq
        %v3710 = vshrl.u32 %v3709, 7
        %v3711 = vsub.s32 1, %v3710
        %v3712 = vrot.slane %v3670, %v3711
        %v3713 = vlaneseq
        %v3714 = vshrl.u32 %v3713, 7
        %v3715 = vsub.s32 2, %v3714
        %v3716 = vrot.slane %v3670, %v3715
        %v3717 = vlaneseq
        %v3718 = vshrl.u32 %v3717, 7
        %v3719 = vsub.s32 3, %v3718
        %v3720 = vrot.slane %v3670, %v3719
        %v3721 = vlaneseq
        %v3722 = vshrl.u32 %v3721, 7
        %v3723 = vsub.s32 4, %v3722
        %v3724 = vrot.slane %v3670, %v3723
        %v3725 = vlaneseq
        %v3726 = vshrl.u32 %v3725, 7
        %v3727 = vsub.s32 5, %v3726
        %v3728 = vrot.slane %v3670, %v3727
        %v3729 = vlaneseq
        %v3730 = vshrl.u32 %v3729, 7
        %v3731 = vsub.s32 6, %v3730
        %v3732 = vrot.slane %v3670, %v3731
        %v3733 = vlaneseq
        %v3734 = vshrl.u32 %v3733, 7
        %v3735 = vsub.s32 7, %v3734
        %v3736 = vrot.slane %v3670, %v3735
        %v3753 = vadd.f32 %v3651, %v3676
        %v3754 = vadd.f32 %v3652, %v3680
        %v3755 = vadd.f32 %v3653, %v3684
        %v3756 = vadd.f32 %v3654, %v3688
        %v3757 = vadd.f32 %v3655, %v3692
        %v3758 = vadd.f32 %v3656, %v3696
        %v3759 = vadd.f32 %v3657, %v3700
        %v3760 = vadd.f32 %v3658, %v3704
        %v3761 = vadd.f32 %v3659, %v3708
        %v3762 = vadd.f32 %v3660, %v3712
        %v3763 = vadd.f32 %v3661, %v3716
        %v3764 = vadd.f32 %v3662, %v3720
        %v3765 = vadd.f32 %v3663, %v3724
        %v3766 = vadd.f32 %v3664, %v3728
        %v3767 = vadd.f32 %v3665, %v3732
        %v3768 = vadd.f32 %v3666, %v3736
        %v3769 = vpack.c.bf16 %v3753, %v3753
        %v3770 = vpack.c.bf16 %v3754, %v3754
        %v3771 = vpack.c.bf16 %v3755, %v3755
        %v3772 = vpack.c.bf16 %v3756, %v3756
        %v3773 = vpack.c.bf16 %v3757, %v3757
        %v3774 = vpack.c.bf16 %v3758, %v3758
        %v3775 = vpack.c.bf16 %v3759, %v3759
        %v3776 = vpack.c.bf16 %v3760, %v3760
        %v3777 = vpack.c.bf16 %v3761, %v3761
        %v3778 = vpack.c.bf16 %v3762, %v3762
        %v3779 = vpack.c.bf16 %v3763, %v3763
        %v3780 = vpack.c.bf16 %v3764, %v3764
        %v3781 = vpack.c.bf16 %v3765, %v3765
        %v3782 = vpack.c.bf16 %v3766, %v3766
        %v3783 = vpack.c.bf16 %v3767, %v3767
        %v3784 = vpack.c.bf16 %v3768, %v3768
        %v3801 = vcombine.low %v3769, %v3770
        %v3802 = vcombine.low %v3771, %v3772
        %v3804 = vunpack.c.l.s4 1983009808
        %v3805 = vunpack.c.0.s8 %v3804
        %v3806 = vlaneseq
        %v3807 = vshrl.u32 %v3806, 7
        %v3808 = vsub.s32 %v3805, %v3807
        %v3809 = vrot.slane %v3801, %v3808
        %v3811 = vunpack.c.l.s4 1983009808
        %v3812 = vunpack.c.0.s8 %v3811
        %v3813 = vlaneseq
        %v3814 = vshrl.u32 %v3813, 7
        %v3815 = vsub.s32 %v3812, %v3814
        %v3816 = vrot.slane %v3802, %v3815
        %v3817 = vcombine.low %v3809, %v3816
        %v3818 = vcombine.low %v3773, %v3774
        %v3819 = vcombine.low %v3775, %v3776
        %v3821 = vunpack.c.l.s4 1983009808
        %v3822 = vunpack.c.0.s8 %v3821
        %v3823 = vlaneseq
        %v3824 = vshrl.u32 %v3823, 7
        %v3825 = vsub.s32 %v3822, %v3824
        %v3826 = vrot.slane %v3818, %v3825
        %v3828 = vunpack.c.l.s4 1983009808
        %v3829 = vunpack.c.0.s8 %v3828
        %v3830 = vlaneseq
        %v3831 = vshrl.u32 %v3830, 7
        %v3832 = vsub.s32 %v3829, %v3831
        %v3833 = vrot.slane %v3819, %v3832
        %v3834 = vcombine.low %v3826, %v3833
        %v3835 = vcombine.low %v3777, %v3778
        %v3836 = vcombine.low %v3779, %v3780
        %v3838 = vunpack.c.l.s4 1983009808
        %v3839 = vunpack.c.0.s8 %v3838
        %v3840 = vlaneseq
        %v3841 = vshrl.u32 %v3840, 7
        %v3842 = vsub.s32 %v3839, %v3841
        %v3843 = vrot.slane %v3835, %v3842
        %v3845 = vunpack.c.l.s4 1983009808
        %v3846 = vunpack.c.0.s8 %v3845
        %v3847 = vlaneseq
        %v3848 = vshrl.u32 %v3847, 7
        %v3849 = vsub.s32 %v3846, %v3848
        %v3850 = vrot.slane %v3836, %v3849
        %v3851 = vcombine.low %v3843, %v3850
        %v3852 = vcombine.low %v3781, %v3782
        %v3853 = vcombine.low %v3783, %v3784
        %v3855 = vunpack.c.l.s4 1983009808
        %v3856 = vunpack.c.0.s8 %v3855
        %v3857 = vlaneseq
        %v3858 = vshrl.u32 %v3857, 7
        %v3859 = vsub.s32 %v3856, %v3858
        %v3860 = vrot.slane %v3852, %v3859
        %v3862 = vunpack.c.l.s4 1983009808
        %v3863 = vunpack.c.0.s8 %v3862
        %v3864 = vlaneseq
        %v3865 = vshrl.u32 %v3864, 7
        %v3866 = vsub.s32 %v3863, %v3865
        %v3867 = vrot.slane %v3853, %v3866
        %v3868 = vcombine.low %v3860, %v3867
        %3873 = vst [vmem:[%s230] sm:$0xff] %v3817
        %3874 = vst [vmem:[%s230 + $0x8] sm:$0xff] %v3834
        %3875 = vst [vmem:[%s230 + $0x10] sm:$0xff] %v3851
        %3876 = vst [vmem:[%s230 + $0x18] sm:$0xff] %v3868
        %s3877 = smul.u32 16, %s20
        %p3878 = scmp.lt.s32.totalorder %s3877, 63
        %s3879 = scalar_select %p3878, %s3877, 63
        %s3880 = smul.addr %s3879, 2
        %s3881 = scalar_lea.vmem %s3, %s3880
        // Predicated region
        $region41: #{generator_forward.6} parent=31 // pred_check
          %p3882 = pneg %p111
        $region42: #{generator_forward.6} parent=31 // pred_check_branch
          %3884 = sbr.rel (%p3882) target = $region44
        $region43: #{generator_forward.6} parent=31 // pred_region
          %s3885 = smul.u32 16, %s20
        $region44: #{generator_forward.6} parent=31 // pred_fallthru
          _
      $region32: #{generator_forward.6} parent=5 // pred_fallthru
        _
      %p3886 = scmp.le.s32.totalorder 2, %s15
      // Predicated region
      $region45: #{generator_forward.6} parent=5 // pred_check
        %p3887 = pneg %p3886
      $region46: #{generator_forward.6} parent=5 // pred_check_branch
        %3889 = sbr.rel (%p3887) target = $region48
      $region47: #{generator_forward.6} parent=5 // pred_region
        %s3890 = ssub.s32 %s15, 2
        // Predicated region
        $region49: #{generator_forward.6} parent=47 // pred_check
          %p3891 = pneg %p117
        $region50: #{generator_forward.6} parent=47 // pred_check_branch
          %3893 = sbr.rel (%p3891) target = $region52
        $region51: #{generator_forward.6} parent=47 // pred_region
          %s3894 = smul.u32 16, %s21
          %p3895 = scmp.lt.s32.totalorder %s3894, 63
          %s3896 = scalar_select %p3895, %s3894, 63
          %s3897 = smul.addr %s3896, 2
          %s3898 = scalar_lea.vmem %s3, %s3897
        $region52: #{generator_forward.6} parent=47 // pred_fallthru
          _
      $region48: #{generator_forward.6} parent=5 // pred_fallthru
        _
    $region6: #{generator_forward.6} parent=1 // loop_footer
      %s19 = sadd.s32 1, %s15
    $region7: #{generator_forward.6} parent=1 // loop_footer_branch
      %14 = sbr.rel target = $region3
    $region8: #{generator_forward.6} parent=1 // loop_exit
      _
    %3899 = vsyncpa [#allocation3], 1
    %s3900 = scalar_lea.sflag [#allocation3], 1
    %3901 = vsyncpa %s3900, 1
    %3902 = vsyncpa [#allocation5], 1
    %s3903 = scalar_lea.sflag [#allocation5], 1
    %3904 = vsyncpa %s3903, 1

// kernel: generator_forward.8
$region0: #{generator_forward.8}
  #allocation0 [shape = 'u32[]', space=smem, size = 0x4, offset = 0x4, fixed_abs, tag = 'smem constant byte address 0x4 - core index']
  #allocation1 [shape = 'u32[144,128]{1,0:T(1,128)}', space=vmem, size = 0x12000, scoped, tag = 'internal scratch']
  %s0 = inlined_call_operand.vmem [shape: bf16[1024,64], index: 0, kind: input, shape index: {}]
  %s1 = inlined_call_operand.vmem [shape: bf16[64,512], index: 1, kind: input, shape index: {}]
  %s2 = inlined_call_operand.vmem [shape: f32[1024,512], index: 2, kind: output, shape index: {}]
  %s3 = sld [smem:[#allocation0]]
  $region18: #{generator_forward.8} parent=0
    _
  %s5 = ssub.s32 1, %s3
  %s6 = scalar_select 0, %s5, %s3
  // Predicated region
  $region2: #{generator_forward.8} parent=0 // pred_check
    _
  $region3: #{generator_forward.8} parent=0 // pred_check_branch
    %8 = sbr.rel (0) target = $region5
  $region4: #{generator_forward.8} parent=0 // pred_region
    _
  $region5: #{generator_forward.8} parent=0 // pred_fallthru
    _
  // Predicated region
  $region6: #{generator_forward.8} parent=0 // pred_check
    _
  $region7: #{generator_forward.8} parent=0 // pred_check_branch
    %10 = sbr.rel (0) target = $region9
  $region8: #{generator_forward.8} parent=0 // pred_region
    _
  $region9: #{generator_forward.8} parent=0 // pred_fallthru
    _
  %v12 = vld [vmem:[%s0] sm:$0xf]
  %v13 = vld [vmem:[%s0 + $0x4] sm:$0xf]
  %v14 = vld [vmem:[%s0 + $0x8] sm:$0xf]
  %v15 = vld [vmem:[%s0 + $0xc] sm:$0xf]
  %v16 = vld [vmem:[%s0 + $0x10] sm:$0xf]
  %v17 = vld [vmem:[%s0 + $0x14] sm:$0xf]
  %v18 = vld [vmem:[%s0 + $0x18] sm:$0xf]
  %v19 = vld [vmem:[%s0 + $0x1c] sm:$0xf]
  %v20 = vld [vmem:[%s0 + $0x20] sm:$0xf]
  %v21 = vld [vmem:[%s0 + $0x24] sm:$0xf]
  %v22 = vld [vmem:[%s0 + $0x28] sm:$0xf]
  %v23 = vld [vmem:[%s0 + $0x2c] sm:$0xf]
  %v24 = vld [vmem:[%s0 + $0x30] sm:$0xf]
  %v25 = vld [vmem:[%s0 + $0x34] sm:$0xf]
  %v26 = vld [vmem:[%s0 + $0x38] sm:$0xf]
  %v27 = vld [vmem:[%s0 + $0x3c] sm:$0xf]
  %v28 = vld [vmem:[%s0 + $0x40] sm:$0xf]
  %v29 = vld [vmem:[%s0 + $0x44] sm:$0xf]
  %v30 = vld [vmem:[%s0 + $0x48] sm:$0xf]
  %v31 = vld [vmem:[%s0 + $0x4c] sm:$0xf]
  %v32 = vld [vmem:[%s0 + $0x50] sm:$0xf]
  %v33 = vld [vmem:[%s0 + $0x54] sm:$0xf]
  %v34 = vld [vmem:[%s0 + $0x58] sm:$0xf]
  %v35 = vld [vmem:[%s0 + $0x5c] sm:$0xf]
  %v36 = vld [vmem:[%s0 + $0x60] sm:$0xf]
  %v37 = vld [vmem:[%s0 + $0x64] sm:$0xf]
  %v38 = vld [vmem:[%s0 + $0x68] sm:$0xf]
  %v39 = vld [vmem:[%s0 + $0x6c] sm:$0xf]
  %v40 = vld [vmem:[%s0 + $0x70] sm:$0xf]
  %v41 = vld [vmem:[%s0 + $0x74] sm:$0xf]
  %v42 = vld [vmem:[%s0 + $0x78] sm:$0xf]
  %v43 = vld [vmem:[%s0 + $0x7c] sm:$0xf]
  %v44 = vld [vmem:[%s0 + $0x80] sm:$0xf]
  %v45 = vld [vmem:[%s0 + $0x84] sm:$0xf]
  %v46 = vld [vmem:[%s0 + $0x88] sm:$0xf]
  %v47 = vld [vmem:[%s0 + $0x8c] sm:$0xf]
  %v48 = vld [vmem:[%s0 + $0x90] sm:$0xf]
  %v49 = vld [vmem:[%s0 + $0x94] sm:$0xf]
  %v50 = vld [vmem:[%s0 + $0x98] sm:$0xf]
  %v51 = vld [vmem:[%s0 + $0x9c] sm:$0xf]
  %v52 = vld [vmem:[%s0 + $0xa0] sm:$0xf]
  %v53 = vld [vmem:[%s0 + $0xa4] sm:$0xf]
  %v54 = vld [vmem:[%s0 + $0xa8] sm:$0xf]
  %v55 = vld [vmem:[%s0 + $0xac] sm:$0xf]
  %v56 = vld [vmem:[%s0 + $0xb0] sm:$0xf]
  %v57 = vld [vmem:[%s0 + $0xb4] sm:$0xf]
  %v58 = vld [vmem:[%s0 + $0xb8] sm:$0xf]
  %v59 = vld [vmem:[%s0 + $0xbc] sm:$0xf]
  %v60 = vld [vmem:[%s0 + $0xc0] sm:$0xf]
  %v61 = vld [vmem:[%s0 + $0xc4] sm:$0xf]
  %v62 = vld [vmem:[%s0 + $0xc8] sm:$0xf]
  %v63 = vld [vmem:[%s0 + $0xcc] sm:$0xf]
  %v64 = vld [vmem:[%s0 + $0xd0] sm:$0xf]
  %v65 = vld [vmem:[%s0 + $0xd4] sm:$0xf]
  %v66 = vld [vmem:[%s0 + $0xd8] sm:$0xf]
  %v67 = vld [vmem:[%s0 + $0xdc] sm:$0xf]
  %v68 = vld [vmem:[%s0 + $0xe0] sm:$0xf]
  %v69 = vld [vmem:[%s0 + $0xe4] sm:$0xf]
  %v70 = vld [vmem:[%s0 + $0xe8] sm:$0xf]
  %v71 = vld [vmem:[%s0 + $0xec] sm:$0xf]
  %v72 = vld [vmem:[%s0 + $0xf0] sm:$0xf]
  %v73 = vld [vmem:[%s0 + $0xf4] sm:$0xf]
  %v74 = vld [vmem:[%s0 + $0xf8] sm:$0xf]
  %v75 = vld [vmem:[%s0 + $0xfc] sm:$0xf]
  %v76 = vld [vmem:[%s0 + $0x100] sm:$0xf]
  %v77 = vld [vmem:[%s0 + $0x104] sm:$0xf]
  %v78 = vld [vmem:[%s0 + $0x108] sm:$0xf]
  %v79 = vld [vmem:[%s0 + $0x10c] sm:$0xf]
  %v80 = vld [vmem:[%s0 + $0x110] sm:$0xf]
  %v81 = vld [vmem:[%s0 + $0x114] sm:$0xf]
  %v82 = vld [vmem:[%s0 + $0x118] sm:$0xf]
  %v83 = vld [vmem:[%s0 + $0x11c] sm:$0xf]
  %v84 = vld [vmem:[%s0 + $0x120] sm:$0xf]
  %v85 = vld [vmem:[%s0 + $0x124] sm:$0xf]
  %v86 = vld [vmem:[%s0 + $0x128] sm:$0xf]
  %v87 = vld [vmem:[%s0 + $0x12c] sm:$0xf]
  %v88 = vld [vmem:[%s0 + $0x130] sm:$0xf]
  %v89 = vld [vmem:[%s0 + $0x134] sm:$0xf]
  %v90 = vld [vmem:[%s0 + $0x138] sm:$0xf]
  %v91 = vld [vmem:[%s0 + $0x13c] sm:$0xf]
  %v92 = vld [vmem:[%s0 + $0x140] sm:$0xf]
  %v93 = vld [vmem:[%s0 + $0x144] sm:$0xf]
  %v94 = vld [vmem:[%s0 + $0x148] sm:$0xf]
  %v95 = vld [vmem:[%s0 + $0x14c] sm:$0xf]
  %v96 = vld [vmem:[%s0 + $0x150] sm:$0xf]
  %v97 = vld [vmem:[%s0 + $0x154] sm:$0xf]
  %v98 = vld [vmem:[%s0 + $0x158] sm:$0xf]
  %v99 = vld [vmem:[%s0 + $0x15c] sm:$0xf]
  %v100 = vld [vmem:[%s0 + $0x160] sm:$0xf]
  %v101 = vld [vmem:[%s0 + $0x164] sm:$0xf]
  %v102 = vld [vmem:[%s0 + $0x168] sm:$0xf]
  %v103 = vld [vmem:[%s0 + $0x16c] sm:$0xf]
  %v104 = vld [vmem:[%s0 + $0x170] sm:$0xf]
  %v105 = vld [vmem:[%s0 + $0x174] sm:$0xf]
  %v106 = vld [vmem:[%s0 + $0x178] sm:$0xf]
  %v107 = vld [vmem:[%s0 + $0x17c] sm:$0xf]
  %v108 = vld [vmem:[%s0 + $0x180] sm:$0xf]
  %v109 = vld [vmem:[%s0 + $0x184] sm:$0xf]
  %v110 = vld [vmem:[%s0 + $0x188] sm:$0xf]
  %v111 = vld [vmem:[%s0 + $0x18c] sm:$0xf]
  %v112 = vld [vmem:[%s0 + $0x190] sm:$0xf]
  %v113 = vld [vmem:[%s0 + $0x194] sm:$0xf]
  %v114 = vld [vmem:[%s0 + $0x198] sm:$0xf]
  %v115 = vld [vmem:[%s0 + $0x19c] sm:$0xf]
  %v116 = vld [vmem:[%s0 + $0x1a0] sm:$0xf]
  %v117 = vld [vmem:[%s0 + $0x1a4] sm:$0xf]
  %v118 = vld [vmem:[%s0 + $0x1a8] sm:$0xf]
  %v119 = vld [vmem:[%s0 + $0x1ac] sm:$0xf]
  %v120 = vld [vmem:[%s0 + $0x1b0] sm:$0xf]
  %v121 = vld [vmem:[%s0 + $0x1b4] sm:$0xf]
  %v122 = vld [vmem:[%s0 + $0x1b8] sm:$0xf]
  %v123 = vld [vmem:[%s0 + $0x1bc] sm:$0xf]
  %v124 = vld [vmem:[%s0 + $0x1c0] sm:$0xf]
  %v125 = vld [vmem:[%s0 + $0x1c4] sm:$0xf]
  %v126 = vld [vmem:[%s0 + $0x1c8] sm:$0xf]
  %v127 = vld [vmem:[%s0 + $0x1cc] sm:$0xf]
  %v128 = vld [vmem:[%s0 + $0x1d0] sm:$0xf]
  %v129 = vld [vmem:[%s0 + $0x1d4] sm:$0xf]
  %v130 = vld [vmem:[%s0 + $0x1d8] sm:$0xf]
  %v131 = vld [vmem:[%s0 + $0x1dc] sm:$0xf]
  %v132 = vld [vmem:[%s0 + $0x1e0] sm:$0xf]
  %v133 = vld [vmem:[%s0 + $0x1e4] sm:$0xf]
  %v134 = vld [vmem:[%s0 + $0x1e8] sm:$0xf]
  %v135 = vld [vmem:[%s0 + $0x1ec] sm:$0xf]
  %v136 = vld [vmem:[%s0 + $0x1f0] sm:$0xf]
  %v137 = vld [vmem:[%s0 + $0x1f4] sm:$0xf]
  %v138 = vld [vmem:[%s0 + $0x1f8] sm:$0xf]
  %v139 = vld [vmem:[%s0 + $0x1fc] sm:$0xf]
  %v140 = vld [vmem:[%s1] sm:$0xff]
  %v141 = vld [vmem:[%s1 + $0x8] sm:$0xff]
  %v142 = vld [vmem:[%s1 + $0x10] sm:$0xff]
  %v143 = vld [vmem:[%s1 + $0x18] sm:$0xff]
  %v144 = vld [vmem:[%s1 + $0x20] sm:$0xff]
  %v145 = vld [vmem:[%s1 + $0x28] sm:$0xff]
  %v146 = vld [vmem:[%s1 + $0x30] sm:$0xff]
  %v147 = vld [vmem:[%s1 + $0x38] sm:$0xff]
  %v148 = vld [vmem:[%s1 + $0x40] sm:$0xff]
  %v149 = vld [vmem:[%s1 + $0x48] sm:$0xff]
  %v150 = vld [vmem:[%s1 + $0x50] sm:$0xff]
  %v151 = vld [vmem:[%s1 + $0x58] sm:$0xff]
  %v152 = vld [vmem:[%s1 + $0x60] sm:$0xff]
  %v153 = vld [vmem:[%s1 + $0x68] sm:$0xff]
  %v154 = vld [vmem:[%s1 + $0x70] sm:$0xff]
  %v155 = vld [vmem:[%s1 + $0x78] sm:$0xff]
  %v284 = vunpack.c.l.b16 %v12
  %v285 = vunpack.c.l.b16 %v13
  %v286 = vunpack.c.l.b16 %v14
  %v287 = vunpack.c.l.b16 %v15
  %v288 = vunpack.c.l.b16 %v16
  %v289 = vunpack.c.l.b16 %v17
  %v290 = vunpack.c.l.b16 %v18
  %v291 = vunpack.c.l.b16 %v19
  %v292 = vunpack.c.l.b16 %v20
  %v293 = vunpack.c.l.b16 %v21
  %v294 = vunpack.c.l.b16 %v22
  %v295 = vunpack.c.l.b16 %v23
  %v296 = vunpack.c.l.b16 %v24
  %v297 = vunpack.c.l.b16 %v25
  %v298 = vunpack.c.l.b16 %v26
  %v299 = vunpack.c.l.b16 %v27
  %v300 = vunpack.c.l.b16 %v28
  %v301 = vunpack.c.l.b16 %v29
  %v302 = vunpack.c.l.b16 %v30
  %v303 = vunpack.c.l.b16 %v31
  %v304 = vunpack.c.l.b16 %v32
  %v305 = vunpack.c.l.b16 %v33
  %v306 = vunpack.c.l.b16 %v34
  %v307 = vunpack.c.l.b16 %v35
  %v308 = vunpack.c.l.b16 %v36
  %v309 = vunpack.c.l.b16 %v37
  %v310 = vunpack.c.l.b16 %v38
  %v311 = vunpack.c.l.b16 %v39
  %v312 = vunpack.c.l.b16 %v40
  %v313 = vunpack.c.l.b16 %v41
  %v314 = vunpack.c.l.b16 %v42
  %v315 = vunpack.c.l.b16 %v43
  %v316 = vunpack.c.l.b16 %v44
  %v317 = vunpack.c.l.b16 %v45
  %v318 = vunpack.c.l.b16 %v46
  %v319 = vunpack.c.l.b16 %v47
  %v320 = vunpack.c.l.b16 %v48
  %v321 = vunpack.c.l.b16 %v49
  %v322 = vunpack.c.l.b16 %v50
  %v323 = vunpack.c.l.b16 %v51
  %v324 = vunpack.c.l.b16 %v52
  %v325 = vunpack.c.l.b16 %v53
  %v326 = vunpack.c.l.b16 %v54
  %v327 = vunpack.c.l.b16 %v55
  %v328 = vunpack.c.l.b16 %v56
  %v329 = vunpack.c.l.b16 %v57
  %v330 = vunpack.c.l.b16 %v58
  %v331 = vunpack.c.l.b16 %v59
  %v332 = vunpack.c.l.b16 %v60
  %v333 = vunpack.c.l.b16 %v61
  %v334 = vunpack.c.l.b16 %v62
  %v335 = vunpack.c.l.b16 %v63
  %v336 = vunpack.c.l.b16 %v64
  %v337 = vunpack.c.l.b16 %v65
  %v338 = vunpack.c.l.b16 %v66
  %v339 = vunpack.c.l.b16 %v67
  %v340 = vunpack.c.l.b16 %v68
  %v341 = vunpack.c.l.b16 %v69
  %v342 = vunpack.c.l.b16 %v70
  %v343 = vunpack.c.l.b16 %v71
  %v344 = vunpack.c.l.b16 %v72
  %v345 = vunpack.c.l.b16 %v73
  %v346 = vunpack.c.l.b16 %v74
  %v347 = vunpack.c.l.b16 %v75
  %v348 = vunpack.c.l.b16 %v76
  %v349 = vunpack.c.l.b16 %v77
  %v350 = vunpack.c.l.b16 %v78
  %v351 = vunpack.c.l.b16 %v79
  %v352 = vunpack.c.l.b16 %v80
  %v353 = vunpack.c.l.b16 %v81
  %v354 = vunpack.c.l.b16 %v82
  %v355 = vunpack.c.l.b16 %v83
  %v356 = vunpack.c.l.b16 %v84
  %v357 = vunpack.c.l.b16 %v85
  %v358 = vunpack.c.l.b16 %v86
  %v359 = vunpack.c.l.b16 %v87
  %v360 = vunpack.c.l.b16 %v88
  %v361 = vunpack.c.l.b16 %v89
  %v362 = vunpack.c.l.b16 %v90
  %v363 = vunpack.c.l.b16 %v91
  %v364 = vunpack.c.l.b16 %v92
  %v365 = vunpack.c.l.b16 %v93
  %v366 = vunpack.c.l.b16 %v94
  %v367 = vunpack.c.l.b16 %v95
  %v368 = vunpack.c.l.b16 %v96
  %v369 = vunpack.c.l.b16 %v97
  %v370 = vunpack.c.l.b16 %v98
  %v371 = vunpack.c.l.b16 %v99
  %v372 = vunpack.c.l.b16 %v100
  %v373 = vunpack.c.l.b16 %v101
  %v374 = vunpack.c.l.b16 %v102
  %v375 = vunpack.c.l.b16 %v103
  %v376 = vunpack.c.l.b16 %v104
  %v377 = vunpack.c.l.b16 %v105
  %v378 = vunpack.c.l.b16 %v106
  %v379 = vunpack.c.l.b16 %v107
  %v380 = vunpack.c.l.b16 %v108
  %v381 = vunpack.c.l.b16 %v109
  %v382 = vunpack.c.l.b16 %v110
  %v383 = vunpack.c.l.b16 %v111
  %v384 = vunpack.c.l.b16 %v112
  %v385 = vunpack.c.l.b16 %v113
  %v386 = vunpack.c.l.b16 %v114
  %v387 = vunpack.c.l.b16 %v115
  %v388 = vunpack.c.l.b16 %v116
  %v389 = vunpack.c.l.b16 %v117
  %v390 = vunpack.c.l.b16 %v118
  %v391 = vunpack.c.l.b16 %v119
  %v392 = vunpack.c.l.b16 %v120
  %v393 = vunpack.c.l.b16 %v121
  %v394 = vunpack.c.l.b16 %v122
  %v395 = vunpack.c.l.b16 %v123
  %v396 = vunpack.c.l.b16 %v124
  %v397 = vunpack.c.l.b16 %v125
  %v398 = vunpack.c.l.b16 %v126
  %v399 = vunpack.c.l.b16 %v127
  %v400 = vunpack.c.l.b16 %v128
  %v401 = vunpack.c.l.b16 %v129
  %v402 = vunpack.c.l.b16 %v130
  %v403 = vunpack.c.l.b16 %v131
  %v404 = vunpack.c.l.b16 %v132
  %v405 = vunpack.c.l.b16 %v133
  %v406 = vunpack.c.l.b16 %v134
  %v407 = vunpack.c.l.b16 %v135
  %v408 = vunpack.c.l.b16 %v136
  %v409 = vunpack.c.l.b16 %v137
  %v410 = vunpack.c.l.b16 %v138
  %v411 = vunpack.c.l.b16 %v139
  %v412 = vpack.c.b16 %v285, %v284
  %v413 = vpack.c.b16 %v287, %v286
  %v414 = vpack.c.b16 %v289, %v288
  %v415 = vpack.c.b16 %v291, %v290
  %v416 = vpack.c.b16 %v293, %v292
  %v417 = vpack.c.b16 %v295, %v294
  %v418 = vpack.c.b16 %v297, %v296
  %v419 = vpack.c.b16 %v299, %v298
  %v420 = vpack.c.b16 %v301, %v300
  %v421 = vpack.c.b16 %v303, %v302
  %v422 = vpack.c.b16 %v305, %v304
  %v423 = vpack.c.b16 %v307, %v306
  %v424 = vpack.c.b16 %v309, %v308
  %v425 = vpack.c.b16 %v311, %v310
  %v426 = vpack.c.b16 %v313, %v312
  %v427 = vpack.c.b16 %v315, %v314
  %v428 = vpack.c.b16 %v317, %v316
  %v429 = vpack.c.b16 %v319, %v318
  %v430 = vpack.c.b16 %v321, %v320
  %v431 = vpack.c.b16 %v323, %v322
  %v432 = vpack.c.b16 %v325, %v324
  %v433 = vpack.c.b16 %v327, %v326
  %v434 = vpack.c.b16 %v329, %v328
  %v435 = vpack.c.b16 %v331, %v330
  %v436 = vpack.c.b16 %v333, %v332
  %v437 = vpack.c.b16 %v335, %v334
  %v438 = vpack.c.b16 %v337, %v336
  %v439 = vpack.c.b16 %v339, %v338
  %v440 = vpack.c.b16 %v341, %v340
  %v441 = vpack.c.b16 %v343, %v342
  %v442 = vpack.c.b16 %v345, %v344
  %v443 = vpack.c.b16 %v347, %v346
  %v444 = vpack.c.b16 %v349, %v348
  %v445 = vpack.c.b16 %v351, %v350
  %v446 = vpack.c.b16 %v353, %v352
  %v447 = vpack.c.b16 %v355, %v354
  %v448 = vpack.c.b16 %v357, %v356
  %v449 = vpack.c.b16 %v359, %v358
  %v450 = vpack.c.b16 %v361, %v360
  %v451 = vpack.c.b16 %v363, %v362
  %v452 = vpack.c.b16 %v365, %v364
  %v453 = vpack.c.b16 %v367, %v366
  %v454 = vpack.c.b16 %v369, %v368
  %v455 = vpack.c.b16 %v371, %v370
  %v456 = vpack.c.b16 %v373, %v372
  %v457 = vpack.c.b16 %v375, %v374
  %v458 = vpack.c.b16 %v377, %v376
  %v459 = vpack.c.b16 %v379, %v378
  %v460 = vpack.c.b16 %v381, %v380
  %v461 = vpack.c.b16 %v383, %v382
  %v462 = vpack.c.b16 %v385, %v384
  %v463 = vpack.c.b16 %v387, %v386
  %v464 = vpack.c.b16 %v389, %v388
  %v465 = vpack.c.b16 %v391, %v390
  %v466 = vpack.c.b16 %v393, %v392
  %v467 = vpack.c.b16 %v395, %v394
  %v468 = vpack.c.b16 %v397, %v396
  %v469 = vpack.c.b16 %v399, %v398
  %v470 = vpack.c.b16 %v401, %v400
  %v471 = vpack.c.b16 %v403, %v402
  %v472 = vpack.c.b16 %v405, %v404
  %v473 = vpack.c.b16 %v407, %v406
  %v474 = vpack.c.b16 %v409, %v408
  %v475 = vpack.c.b16 %v411, %v410
  %v492 = vunpack.c.l.b16 %v140
  %v493 = vunpack.c.h.b16 %v140
  %v494 = vunpack.c.l.b16 %v141
  %v495 = vunpack.c.h.b16 %v141
  %v496 = vunpack.c.l.b16 %v142
  %v497 = vunpack.c.h.b16 %v142
  %v498 = vunpack.c.l.b16 %v143
  %v499 = vunpack.c.h.b16 %v143
  %v500 = vunpack.c.l.b16 %v144
  %v501 = vunpack.c.h.b16 %v144
  %v502 = vunpack.c.l.b16 %v145
  %v503 = vunpack.c.h.b16 %v145
  %v504 = vunpack.c.l.b16 %v146
  %v505 = vunpack.c.h.b16 %v146
  %v506 = vunpack.c.l.b16 %v147
  %v507 = vunpack.c.h.b16 %v147
  %v508 = vunpack.c.l.b16 %v148
  %v509 = vunpack.c.h.b16 %v148
  %v510 = vunpack.c.l.b16 %v149
  %v511 = vunpack.c.h.b16 %v149
  %v512 = vunpack.c.l.b16 %v150
  %v513 = vunpack.c.h.b16 %v150
  %v514 = vunpack.c.l.b16 %v151
  %v515 = vunpack.c.h.b16 %v151
  %v516 = vunpack.c.l.b16 %v152
  %v517 = vunpack.c.h.b16 %v152
  %v518 = vunpack.c.l.b16 %v153
  %v519 = vunpack.c.h.b16 %v153
  %v520 = vunpack.c.l.b16 %v154
  %v521 = vunpack.c.h.b16 %v154
  %v522 = vunpack.c.l.b16 %v155
  %v523 = vunpack.c.h.b16 %v155
  %v524 = vpack.c.b16 %v496, %v492
  %v525 = vpack.c.b16 %v497, %v493
  %v526 = vpack.c.b16 %v498, %v494
  %v527 = vpack.c.b16 %v499, %v495
  %v528 = vpack.c.b16 %v504, %v500
  %v529 = vpack.c.b16 %v505, %v501
  %v530 = vpack.c.b16 %v506, %v502
  %v531 = vpack.c.b16 %v507, %v503
  %v532 = vpack.c.b16 %v512, %v508
  %v533 = vpack.c.b16 %v513, %v509
  %v534 = vpack.c.b16 %v514, %v510
  %v535 = vpack.c.b16 %v515, %v511
  %v536 = vpack.c.b16 %v520, %v516
  %v537 = vpack.c.b16 %v521, %v517
  %v538 = vpack.c.b16 %v522, %v518
  %v539 = vpack.c.b16 %v523, %v519
  %vm556 = vcmask 523264
  %v558 = vsel %vm556, %v412, 0
  %v561 = vsel %vm556, %v413, 0
  %v564 = vsel %vm556, %v414, 0
  %v567 = vsel %vm556, %v415, 0
  %v570 = vsel %vm556, %v416, 0
  %v573 = vsel %vm556, %v417, 0
  %v576 = vsel %vm556, %v418, 0
  %v579 = vsel %vm556, %v419, 0
  %v582 = vsel %vm556, %v420, 0
  %v585 = vsel %vm556, %v421, 0
  %v588 = vsel %vm556, %v422, 0
  %v591 = vsel %vm556, %v423, 0
  %v594 = vsel %vm556, %v424, 0
  %v597 = vsel %vm556, %v425, 0
  %v600 = vsel %vm556, %v426, 0
  %v603 = vsel %vm556, %v427, 0
  %v606 = vsel %vm556, %v428, 0
  %v609 = vsel %vm556, %v429, 0
  %v612 = vsel %vm556, %v430, 0
  %v615 = vsel %vm556, %v431, 0
  %v618 = vsel %vm556, %v432, 0
  %v621 = vsel %vm556, %v433, 0
  %v624 = vsel %vm556, %v434, 0
  %v627 = vsel %vm556, %v435, 0
  %v630 = vsel %vm556, %v436, 0
  %v633 = vsel %vm556, %v437, 0
  %v636 = vsel %vm556, %v438, 0
  %v639 = vsel %vm556, %v439, 0
  %v642 = vsel %vm556, %v440, 0
  %v645 = vsel %vm556, %v441, 0
  %v648 = vsel %vm556, %v442, 0
  %v651 = vsel %vm556, %v443, 0
  %v654 = vsel %vm556, %v444, 0
  %v657 = vsel %vm556, %v445, 0
  %v660 = vsel %vm556, %v446, 0
  %v663 = vsel %vm556, %v447, 0
  %v666 = vsel %vm556, %v448, 0
  %v669 = vsel %vm556, %v449, 0
  %v672 = vsel %vm556, %v450, 0
  %v675 = vsel %vm556, %v451, 0
  %v678 = vsel %vm556, %v452, 0
  %v681 = vsel %vm556, %v453, 0
  %v684 = vsel %vm556, %v454, 0
  %v687 = vsel %vm556, %v455, 0
  %v690 = vsel %vm556, %v456, 0
  %v693 = vsel %vm556, %v457, 0
  %v696 = vsel %vm556, %v458, 0
  %v699 = vsel %vm556, %v459, 0
  %v702 = vsel %vm556, %v460, 0
  %v705 = vsel %vm556, %v461, 0
  %v708 = vsel %vm556, %v462, 0
  %v711 = vsel %vm556, %v463, 0
  %v714 = vsel %vm556, %v464, 0
  %v717 = vsel %vm556, %v465, 0
  %v720 = vsel %vm556, %v466, 0
  %v723 = vsel %vm556, %v467, 0
  %v726 = vsel %vm556, %v468, 0
  %v729 = vsel %vm556, %v469, 0
  %v732 = vsel %vm556, %v470, 0
  %v735 = vsel %vm556, %v471, 0
  %v738 = vsel %vm556, %v472, 0
  %v741 = vsel %vm556, %v473, 0
  %v744 = vsel %vm556, %v474, 0
  %v747 = vsel %vm556, %v475, 0
  %749 = vmatprep.subr.bf16.mxu0 %v525
  %750 = vmatpush1.bf16.msra.mxu0 %v524
  %751 = vmatprep.subr.bf16.mxu0 %v529
  %752 = vmatpush1.bf16.msra.mxu0 %v528
  %753 = vmatprep.subr.bf16.mxu0 %v533
  %754 = vmatpush1.bf16.msra.mxu0 %v532
  %755 = vmatprep.subr.bf16.mxu0 %v537
  %756 = vmatpush1.bf16.msra.mxu0 %v536
  %757 = vmatprep.subr.bf16.mxu0 0
  %758 = vmatpush1.bf16.msra.mxu0 0
  %759 = vmatprep.subr.bf16.mxu0 0
  %760 = vmatpush1.bf16.msra.mxu0 0
  %761 = vmatprep.subr.bf16.mxu0 0
  %762 = vmatpush1.bf16.msra.mxu0 0
  %763 = vmatprep.subr.bf16.mxu0 0
  %764 = vmatpush1.bf16.msra.mxu0 0
  %765 = vmatprep.subr.bf16.mxu0 0
  %766 = vmatpush1.bf16.msra.mxu0 0
  %767 = vmatprep.subr.bf16.mxu0 0
  %768 = vmatpush1.bf16.msra.mxu0 0
  %769 = vmatprep.subr.bf16.mxu0 0
  %770 = vmatpush1.bf16.msra.mxu0 0
  %771 = vmatprep.subr.bf16.mxu0 0
  %772 = vmatpush1.bf16.msra.mxu0 0
  %773 = vmatprep.subr.bf16.mxu0 0
  %774 = vmatpush1.bf16.msra.mxu0 0
  %775 = vmatprep.subr.bf16.mxu0 0
  %776 = vmatpush1.bf16.msra.mxu0 0
  %777 = vmatprep.subr.bf16.mxu0 0
  %778 = vmatpush1.bf16.msra.mxu0 0
  %779 = vmatprep.subr.bf16.mxu0 0
  %780 = vmatpush1.bf16.msra.mxu0 0
  %781 = vmatprep.mubr.bf16.mxu0 0
  %782 = vmatmul.mubr.bf16.gmra.mrb[0].mxu0 %v558
  %v783 = vpop.f32.mrb[0].mxu0
  %v784 = vadd.f32 0.0, %v783
  %v785 = vpop.f32.mrb[0].mxu0
  %v786 = vadd.f32 0.0, %v785
  %v787 = vpop.f32.mrb[0].mxu0
  %v788 = vadd.f32 0.0, %v787
  %v789 = vpop.f32.mrb[0].mxu0
  %v790 = vadd.f32 0.0, %v789
  %791 = vmatprep.mubr.bf16.mxu0 0
  %792 = vmatmul.mubr.bf16.gmra.mrb[0].mxu0 %v561
  %v793 = vpop.f32.mrb[0].mxu0
  %v794 = vadd.f32 0.0, %v793
  %v795 = vpop.f32.mrb[0].mxu0
  %v796 = vadd.f32 0.0, %v795
  %v797 = vpop.f32.mrb[0].mxu0
  %v798 = vadd.f32 0.0, %v797
  %v799 = vpop.f32.mrb[0].mxu0
  %v800 = vadd.f32 0.0, %v799
  %801 = vmatprep.mubr.bf16.mxu0 0
  %802 = vmatmul.mubr.bf16.gmra.mrb[0].mxu0 %v564
  %v803 = vpop.f32.mrb[0].mxu0
  %v804 = vadd.f32 0.0, %v803
  %v805 = vpop.f32.mrb[0].mxu0
  %v806 = vadd.f32 0.0, %v805
  %v807 = vpop.f32.mrb[0].mxu0
  %v808 = vadd.f32 0.0, %v807
  %v809 = vpop.f32.mrb[0].mxu0
  %v810 = vadd.f32 0.0, %v809
  %811 = vmatprep.mubr.bf16.mxu0 0
  %812 = vmatmul.mubr.bf16.gmra.mrb[0].mxu0 %v567
  %v813 = vpop.f32.mrb[0].mxu0
  %v814 = vadd.f32 0.0, %v813
  %v815 = vpop.f32.mrb[0].mxu0
  %v816 = vadd.f32 0.0, %v815
  %v817 = vpop.f32.mrb[0].mxu0
  %v818 = vadd.f32 0.0, %v817
  %v819 = vpop.f32.mrb[0].mxu0
  %v820 = vadd.f32 0.0, %v819
  %821 = vmatprep.mubr.bf16.mxu0 0
  %822 = vmatmul.mubr.bf16.gmra.mrb[0].mxu0 %v570
  %v823 = vpop.f32.mrb[0].mxu0
  %v824 = vadd.f32 0.0, %v823
  %v825 = vpop.f32.mrb[0].mxu0
  %v826 = vadd.f32 0.0, %v825
  %v827 = vpop.f32.mrb[0].mxu0
  %v828 = vadd.f32 0.0, %v827
  %v829 = vpop.f32.mrb[0].mxu0
  %v830 = vadd.f32 0.0, %v829
  %831 = vmatprep.mubr.bf16.mxu0 0
  %832 = vmatmul.mubr.bf16.gmra.mrb[0].mxu0 %v573
  %v833 = vpop.f32.mrb[0].mxu0
  %v834 = vadd.f32 0.0, %v833
  %v835 = vpop.f32.mrb[0].mxu0
  %v836 = vadd.f32 0.0, %v835
  %v837 = vpop.f32.mrb[0].mxu0
  %v838 = vadd.f32 0.0, %v837
  %v839 = vpop.f32.mrb[0].mxu0
  %v840 = vadd.f32 0.0, %v839
  %841 = vmatprep.mubr.bf16.mxu0 0
  %842 = vmatmul.mubr.bf16.gmra.mrb[0].mxu0 %v576
  %v843 = vpop.f32.mrb[0].mxu0
  %v844 = vadd.f32 0.0, %v843
  %v845 = vpop.f32.mrb[0].mxu0
  %v846 = vadd.f32 0.0, %v845
  %v847 = vpop.f32.mrb[0].mxu0
  %v848 = vadd.f32 0.0, %v847
  %v849 = vpop.f32.mrb[0].mxu0
  %v850 = vadd.f32 0.0, %v849
  %851 = vmatprep.mubr.bf16.mxu0 0
  %852 = vmatmul.mubr.bf16.gmra.mrb[0].mxu0 %v579
  %v853 = vpop.f32.mrb[0].mxu0
  %v854 = vadd.f32 0.0, %v853
  %v855 = vpop.f32.mrb[0].mxu0
  %v856 = vadd.f32 0.0, %v855
  %v857 = vpop.f32.mrb[0].mxu0
  %v858 = vadd.f32 0.0, %v857
  %v859 = vpop.f32.mrb[0].mxu0
  %v860 = vadd.f32 0.0, %v859
  %861 = vmatprep.mubr.bf16.mxu0 0
  %862 = vmatmul.mubr.bf16.gmra.mrb[0].mxu0 %v582
  %v863 = vpop.f32.mrb[0].mxu0
  %v864 = vadd.f32 0.0, %v863
  %v865 = vpop.f32.mrb[0].mxu0
  %v866 = vadd.f32 0.0, %v865
  %v867 = vpop.f32.mrb[0].mxu0
  %v868 = vadd.f32 0.0, %v867
  %v869 = vpop.f32.mrb[0].mxu0
  %v870 = vadd.f32 0.0, %v869
  %871 = vmatprep.mubr.bf16.mxu0 0
  %872 = vmatmul.mubr.bf16.gmra.mrb[0].mxu0 %v585
  %v873 = vpop.f32.mrb[0].mxu0
  %v874 = vadd.f32 0.0, %v873
  %v875 = vpop.f32.mrb[0].mxu0
  %v876 = vadd.f32 0.0, %v875
  %v877 = vpop.f32.mrb[0].mxu0
  %v878 = vadd.f32 0.0, %v877
  %v879 = vpop.f32.mrb[0].mxu0
  %v880 = vadd.f32 0.0, %v879
  %881 = vmatprep.mubr.bf16.mxu0 0
  %882 = vmatmul.mubr.bf16.gmra.mrb[0].mxu0 %v588
  %v883 = vpop.f32.mrb[0].mxu0
  %v884 = vadd.f32 0.0, %v883
  %v885 = vpop.f32.mrb[0].mxu0
  %v886 = vadd.f32 0.0, %v885
  %v887 = vpop.f32.mrb[0].mxu0
  %v888 = vadd.f32 0.0, %v887
  %v889 = vpop.f32.mrb[0].mxu0
  %v890 = vadd.f32 0.0, %v889
  %891 = vmatprep.mubr.bf16.mxu0 0
  %892 = vmatmul.mubr.bf16.gmra.mrb[0].mxu0 %v591
  %v893 = vpop.f32.mrb[0].mxu0
  %v894 = vadd.f32 0.0, %v893
  %v895 = vpop.f32.mrb[0].mxu0
  %v896 = vadd.f32 0.0, %v895
  %v897 = vpop.f32.mrb[0].mxu0
  %v898 = vadd.f32 0.0, %v897
  %v899 = vpop.f32.mrb[0].mxu0
  %v900 = vadd.f32 0.0, %v899
  %901 = vmatprep.mubr.bf16.mxu0 0
  %902 = vmatmul.mubr.bf16.gmra.mrb[0].mxu0 %v594
  %v903 = vpop.f32.mrb[0].mxu0
  %v904 = vadd.f32 0.0, %v903
  %v905 = vpop.f32.mrb[0].mxu0
  %v906 = vadd.f32 0.0, %v905
  %v907 = vpop.f32.mrb[0].mxu0
  %v908 = vadd.f32 0.0, %v907
  %v909 = vpop.f32.mrb[0].mxu0
  %v910 = vadd.f32 0.0, %v909
  %911 = vmatprep.mubr.bf16.mxu0 0
  %912 = vmatmul.mubr.bf16.gmra.mrb[0].mxu0 %v597
  %v913 = vpop.f32.mrb[0].mxu0
  %v914 = vadd.f32 0.0, %v913
  %v915 = vpop.f32.mrb[0].mxu0
  %v916 = vadd.f32 0.0, %v915
  %v917 = vpop.f32.mrb[0].mxu0
  %v918 = vadd.f32 0.0, %v917
  %v919 = vpop.f32.mrb[0].mxu0
  %v920 = vadd.f32 0.0, %v919
  %921 = vmatprep.mubr.bf16.mxu0 0
  %922 = vmatmul.mubr.bf16.gmra.mrb[0].mxu0 %v600
  %v923 = vpop.f32.mrb[0].mxu0
  %v924 = vadd.f32 0.0, %v923
  %v925 = vpop.f32.mrb[0].mxu0
  %v926 = vadd.f32 0.0, %v925
  %v927 = vpop.f32.mrb[0].mxu0
  %v928 = vadd.f32 0.0, %v927
  %v929 = vpop.f32.mrb[0].mxu0
  %v930 = vadd.f32 0.0, %v929
  %931 = vmatprep.mubr.bf16.mxu0 0
  %932 = vmatmul.mubr.bf16.gmra.mrb[0].mxu0 %v603
  %v933 = vpop.f32.mrb[0].mxu0
  %v934 = vadd.f32 0.0, %v933
  %v935 = vpop.f32.mrb[0].mxu0
  %v936 = vadd.f32 0.0, %v935
  %v937 = vpop.f32.mrb[0].mxu0
  %v938 = vadd.f32 0.0, %v937
  %v939 = vpop.f32.mrb[0].mxu0
  %v940 = vadd.f32 0.0, %v939
  %941 = vmatprep.mubr.bf16.mxu0 0
  %942 = vmatmul.mubr.bf16.gmra.mrb[0].mxu0 %v606
  %v943 = vpop.f32.mrb[0].mxu0
  %v944 = vadd.f32 0.0, %v943
  %v945 = vpop.f32.mrb[0].mxu0
  %v946 = vadd.f32 0.0, %v945
  %v947 = vpop.f32.mrb[0].mxu0
  %v948 = vadd.f32 0.0, %v947
  %v949 = vpop.f32.mrb[0].mxu0
  %v950 = vadd.f32 0.0, %v949
  %951 = vmatprep.mubr.bf16.mxu0 0
  %952 = vmatmul.mubr.bf16.gmra.mrb[0].mxu0 %v609
  %v953 = vpop.f32.mrb[0].mxu0
  %v954 = vadd.f32 0.0, %v953
  %v955 = vpop.f32.mrb[0].mxu0
  %v956 = vadd.f32 0.0, %v955
  %v957 = vpop.f32.mrb[0].mxu0
  %v958 = vadd.f32 0.0, %v957
  %v959 = vpop.f32.mrb[0].mxu0
  %v960 = vadd.f32 0.0, %v959
  %961 = vmatprep.mubr.bf16.mxu0 0
  %962 = vmatmul.mubr.bf16.gmra.mrb[0].mxu0 %v612
  %v963 = vpop.f32.mrb[0].mxu0
  %v964 = vadd.f32 0.0, %v963
  %v965 = vpop.f32.mrb[0].mxu0
  %v966 = vadd.f32 0.0, %v965
  %v967 = vpop.f32.mrb[0].mxu0
  %v968 = vadd.f32 0.0, %v967
  %v969 = vpop.f32.mrb[0].mxu0
  %v970 = vadd.f32 0.0, %v969
  %971 = vmatprep.mubr.bf16.mxu0 0
  %972 = vmatmul.mubr.bf16.gmra.mrb[0].mxu0 %v615
  %v973 = vpop.f32.mrb[0].mxu0
  %v974 = vadd.f32 0.0, %v973
  %v975 = vpop.f32.mrb[0].mxu0
  %v976 = vadd.f32 0.0, %v975
  %v977 = vpop.f32.mrb[0].mxu0
  %v978 = vadd.f32 0.0, %v977
  %v979 = vpop.f32.mrb[0].mxu0
  %v980 = vadd.f32 0.0, %v979
  %981 = vmatprep.mubr.bf16.mxu0 0
  %982 = vmatmul.mubr.bf16.gmra.mrb[0].mxu0 %v618
  %v983 = vpop.f32.mrb[0].mxu0
  %v984 = vadd.f32 0.0, %v983
  %v985 = vpop.f32.mrb[0].mxu0
  %v986 = vadd.f32 0.0, %v985
  %v987 = vpop.f32.mrb[0].mxu0
  %v988 = vadd.f32 0.0, %v987
  %v989 = vpop.f32.mrb[0].mxu0
  %v990 = vadd.f32 0.0, %v989
  %991 = vmatprep.mubr.bf16.mxu0 0
  %992 = vmatmul.mubr.bf16.gmra.mrb[0].mxu0 %v621
  %v993 = vpop.f32.mrb[0].mxu0
  %v994 = vadd.f32 0.0, %v993
  %v995 = vpop.f32.mrb[0].mxu0
  %v996 = vadd.f32 0.0, %v995
  %v997 = vpop.f32.mrb[0].mxu0
  %v998 = vadd.f32 0.0, %v997
  %v999 = vpop.f32.mrb[0].mxu0
  %v1000 = vadd.f32 0.0, %v999
  %1001 = vmatprep.mubr.bf16.mxu0 0
  %1002 = vmatmul.mubr.bf16.gmra.mrb[0].mxu0 %v624
  %v1003 = vpop.f32.mrb[0].mxu0
  %v1004 = vadd.f32 0.0, %v1003
  %v1005 = vpop.f32.mrb[0].mxu0
  %v1006 = vadd.f32 0.0, %v1005
  %v1007 = vpop.f32.mrb[0].mxu0
  %v1008 = vadd.f32 0.0, %v1007
  %v1009 = vpop.f32.mrb[0].mxu0
  %v1010 = vadd.f32 0.0, %v1009
  %1011 = vmatprep.mubr.bf16.mxu0 0
  %1012 = vmatmul.mubr.bf16.gmra.mrb[0].mxu0 %v627
  %v1013 = vpop.f32.mrb[0].mxu0
  %v1014 = vadd.f32 0.0, %v1013
  %v1015 = vpop.f32.mrb[0].mxu0
  %v1016 = vadd.f32 0.0, %v1015
  %v1017 = vpop.f32.mrb[0].mxu0
  %v1018 = vadd.f32 0.0, %v1017
  %v1019 = vpop.f32.mrb[0].mxu0
  %v1020 = vadd.f32 0.0, %v1019
  %1021 = vmatprep.mubr.bf16.mxu0 0
  %1022 = vmatmul.mubr.bf16.gmra.mrb[0].mxu0 %v630
  %v1023 = vpop.f32.mrb[0].mxu0
  %v1024 = vadd.f32 0.0, %v1023
  %v1025 = vpop.f32.mrb[0].mxu0
  %v1026 = vadd.f32 0.0, %v1025
  %v1027 = vpop.f32.mrb[0].mxu0
  %v1028 = vadd.f32 0.0, %v1027
  %v1029 = vpop.f32.mrb[0].mxu0
  %v1030 = vadd.f32 0.0, %v1029
  %1031 = vmatprep.mubr.bf16.mxu0 0
  %1032 = vmatmul.mubr.bf16.gmra.mrb[0].mxu0 %v633
  %v1033 = vpop.f32.mrb[0].mxu0
  %v1034 = vadd.f32 0.0, %v1033
  %v1035 = vpop.f32.mrb[0].mxu0
  %v1036 = vadd.f32 0.0, %v1035
  %v1037 = vpop.f32.mrb[0].mxu0
  %v1038 = vadd.f32 0.0, %v1037
  %v1039 = vpop.f32.mrb[0].mxu0
  %v1040 = vadd.f32 0.0, %v1039
  %1041 = vmatprep.mubr.bf16.mxu0 0
  %1042 = vmatmul.mubr.bf16.gmra.mrb[0].mxu0 %v636
  %v1043 = vpop.f32.mrb[0].mxu0
  %v1044 = vadd.f32 0.0, %v1043
  %v1045 = vpop.f32.mrb[0].mxu0
  %v1046 = vadd.f32 0.0, %v1045
  %v1047 = vpop.f32.mrb[0].mxu0
  %v1048 = vadd.f32 0.0, %v1047
  %v1049 = vpop.f32.mrb[0].mxu0
  %v1050 = vadd.f32 0.0, %v1049
  %1051 = vmatprep.mubr.bf16.mxu0 0
  %1052 = vmatmul.mubr.bf16.gmra.mrb[0].mxu0 %v639
  %v1053 = vpop.f32.mrb[0].mxu0
  %v1054 = vadd.f32 0.0, %v1053
  %v1055 = vpop.f32.mrb[0].mxu0
  %v1056 = vadd.f32 0.0, %v1055
  %v1057 = vpop.f32.mrb[0].mxu0
  %v1058 = vadd.f32 0.0, %v1057
  %v1059 = vpop.f32.mrb[0].mxu0
  %v1060 = vadd.f32 0.0, %v1059
  %1061 = vmatprep.mubr.bf16.mxu0 0
  %1062 = vmatmul.mubr.bf16.gmra.mrb[0].mxu0 %v642
  %v1063 = vpop.f32.mrb[0].mxu0
  %v1064 = vadd.f32 0.0, %v1063
  %v1065 = vpop.f32.mrb[0].mxu0
  %v1066 = vadd.f32 0.0, %v1065
  %v1067 = vpop.f32.mrb[0].mxu0
  %v1068 = vadd.f32 0.0, %v1067
  %v1069 = vpop.f32.mrb[0].mxu0
  %v1070 = vadd.f32 0.0, %v1069
  %1071 = vmatprep.mubr.bf16.mxu0 0
  %1072 = vmatmul.mubr.bf16.gmra.mrb[0].mxu0 %v645
  %v1073 = vpop.f32.mrb[0].mxu0
  %v1074 = vadd.f32 0.0, %v1073
  %v1075 = vpop.f32.mrb[0].mxu0
  %v1076 = vadd.f32 0.0, %v1075
  %v1077 = vpop.f32.mrb[0].mxu0
  %v1078 = vadd.f32 0.0, %v1077
  %v1079 = vpop.f32.mrb[0].mxu0
  %v1080 = vadd.f32 0.0, %v1079
  %1081 = vmatprep.mubr.bf16.mxu0 0
  %1082 = vmatmul.mubr.bf16.gmra.mrb[0].mxu0 %v648
  %v1083 = vpop.f32.mrb[0].mxu0
  %v1084 = vadd.f32 0.0, %v1083
  %v1085 = vpop.f32.mrb[0].mxu0
  %v1086 = vadd.f32 0.0, %v1085
  %v1087 = vpop.f32.mrb[0].mxu0
  %v1088 = vadd.f32 0.0, %v1087
  %v1089 = vpop.f32.mrb[0].mxu0
  %v1090 = vadd.f32 0.0, %v1089
  %1091 = vmatprep.mubr.bf16.mxu0 0
  %1092 = vmatmul.mubr.bf16.gmra.mrb[0].mxu0 %v651
  %v1093 = vpop.f32.mrb[0].mxu0
  %v1094 = vadd.f32 0.0, %v1093
  %v1095 = vpop.f32.mrb[0].mxu0
  %v1096 = vadd.f32 0.0, %v1095
  %v1097 = vpop.f32.mrb[0].mxu0
  %v1098 = vadd.f32 0.0, %v1097
  %v1099 = vpop.f32.mrb[0].mxu0
  %v1100 = vadd.f32 0.0, %v1099
  %1101 = vmatprep.mubr.bf16.mxu0 0
  %1102 = vmatmul.mubr.bf16.gmra.mrb[0].mxu0 %v654
  %v1103 = vpop.f32.mrb[0].mxu0
  %v1104 = vadd.f32 0.0, %v1103
  %v1105 = vpop.f32.mrb[0].mxu0
  %v1106 = vadd.f32 0.0, %v1105
  %v1107 = vpop.f32.mrb[0].mxu0
  %v1108 = vadd.f32 0.0, %v1107
  %v1109 = vpop.f32.mrb[0].mxu0
  %v1110 = vadd.f32 0.0, %v1109
  %1111 = vmatprep.mubr.bf16.mxu0 0
  %1112 = vmatmul.mubr.bf16.gmra.mrb[0].mxu0 %v657
  %v1113 = vpop.f32.mrb[0].mxu0
  %v1114 = vadd.f32 0.0, %v1113
  %v1115 = vpop.f32.mrb[0].mxu0
  %v1116 = vadd.f32 0.0, %v1115
  %v1117 = vpop.f32.mrb[0].mxu0
  %v1118 = vadd.f32 0.0, %v1117
  %v1119 = vpop.f32.mrb[0].mxu0
  %v1120 = vadd.f32 0.0, %v1119
  %1121 = vmatprep.mubr.bf16.mxu0 0
  %1122 = vmatmul.mubr.bf16.gmra.mrb[0].mxu0 %v660
  %v1123 = vpop.f32.mrb[0].mxu0
  %v1124 = vadd.f32 0.0, %v1123
  %v1125 = vpop.f32.mrb[0].mxu0
  %v1126 = vadd.f32 0.0, %v1125
  %v1127 = vpop.f32.mrb[0].mxu0
  %v1128 = vadd.f32 0.0, %v1127
  %v1129 = vpop.f32.mrb[0].mxu0
  %v1130 = vadd.f32 0.0, %v1129
  %1131 = vmatprep.mubr.bf16.mxu0 0
  %1132 = vmatmul.mubr.bf16.gmra.mrb[0].mxu0 %v663
  %v1133 = vpop.f32.mrb[0].mxu0
  %v1134 = vadd.f32 0.0, %v1133
  %v1135 = vpop.f32.mrb[0].mxu0
  %v1136 = vadd.f32 0.0, %v1135
  %v1137 = vpop.f32.mrb[0].mxu0
  %v1138 = vadd.f32 0.0, %v1137
  %v1139 = vpop.f32.mrb[0].mxu0
  %v1140 = vadd.f32 0.0, %v1139
  %1141 = vmatprep.mubr.bf16.mxu0 0
  %1142 = vmatmul.mubr.bf16.gmra.mrb[0].mxu0 %v666
  %v1143 = vpop.f32.mrb[0].mxu0
  %v1144 = vadd.f32 0.0, %v1143
  %v1145 = vpop.f32.mrb[0].mxu0
  %v1146 = vadd.f32 0.0, %v1145
  %v1147 = vpop.f32.mrb[0].mxu0
  %v1148 = vadd.f32 0.0, %v1147
  %v1149 = vpop.f32.mrb[0].mxu0
  %v1150 = vadd.f32 0.0, %v1149
  %1151 = vmatprep.mubr.bf16.mxu0 0
  %1152 = vmatmul.mubr.bf16.gmra.mrb[0].mxu0 %v669
  %v1153 = vpop.f32.mrb[0].mxu0
  %v1154 = vadd.f32 0.0, %v1153
  %v1155 = vpop.f32.mrb[0].mxu0
  %v1156 = vadd.f32 0.0, %v1155
  %v1157 = vpop.f32.mrb[0].mxu0
  %v1158 = vadd.f32 0.0, %v1157
  %v1159 = vpop.f32.mrb[0].mxu0
  %v1160 = vadd.f32 0.0, %v1159
  %1161 = vmatprep.mubr.bf16.mxu0 0
  %1162 = vmatmul.mubr.bf16.gmra.mrb[0].mxu0 %v672
  %v1163 = vpop.f32.mrb[0].mxu0
  %v1164 = vadd.f32 0.0, %v1163
  %v1165 = vpop.f32.mrb[0].mxu0
  %v1166 = vadd.f32 0.0, %v1165
  %v1167 = vpop.f32.mrb[0].mxu0
  %v1168 = vadd.f32 0.0, %v1167
  %v1169 = vpop.f32.mrb[0].mxu0
  %v1170 = vadd.f32 0.0, %v1169
  %1171 = vmatprep.mubr.bf16.mxu0 0
  %1172 = vmatmul.mubr.bf16.gmra.mrb[0].mxu0 %v675
  %v1173 = vpop.f32.mrb[0].mxu0
  %v1174 = vadd.f32 0.0, %v1173
  %v1175 = vpop.f32.mrb[0].mxu0
  %v1176 = vadd.f32 0.0, %v1175
  %v1177 = vpop.f32.mrb[0].mxu0
  %v1178 = vadd.f32 0.0, %v1177
  %v1179 = vpop.f32.mrb[0].mxu0
  %v1180 = vadd.f32 0.0, %v1179
  %1181 = vmatprep.mubr.bf16.mxu0 0
  %1182 = vmatmul.mubr.bf16.gmra.mrb[0].mxu0 %v678
  %v1183 = vpop.f32.mrb[0].mxu0
  %v1184 = vadd.f32 0.0, %v1183
  %v1185 = vpop.f32.mrb[0].mxu0
  %v1186 = vadd.f32 0.0, %v1185
  %v1187 = vpop.f32.mrb[0].mxu0
  %v1188 = vadd.f32 0.0, %v1187
  %v1189 = vpop.f32.mrb[0].mxu0
  %v1190 = vadd.f32 0.0, %v1189
  %1191 = vmatprep.mubr.bf16.mxu0 0
  %1192 = vmatmul.mubr.bf16.gmra.mrb[0].mxu0 %v681
  %v1193 = vpop.f32.mrb[0].mxu0
  %v1194 = vadd.f32 0.0, %v1193
  %v1195 = vpop.f32.mrb[0].mxu0
  %v1196 = vadd.f32 0.0, %v1195
  %v1197 = vpop.f32.mrb[0].mxu0
  %v1198 = vadd.f32 0.0, %v1197
  %v1199 = vpop.f32.mrb[0].mxu0
  %v1200 = vadd.f32 0.0, %v1199
  %1201 = vmatprep.mubr.bf16.mxu0 0
  %1202 = vmatmul.mubr.bf16.gmra.mrb[0].mxu0 %v684
  %v1203 = vpop.f32.mrb[0].mxu0
  %v1204 = vadd.f32 0.0, %v1203
  %v1205 = vpop.f32.mrb[0].mxu0
  %v1206 = vadd.f32 0.0, %v1205
  %v1207 = vpop.f32.mrb[0].mxu0
  %v1208 = vadd.f32 0.0, %v1207
  %v1209 = vpop.f32.mrb[0].mxu0
  %v1210 = vadd.f32 0.0, %v1209
  %1211 = vmatprep.mubr.bf16.mxu0 0
  %1212 = vmatmul.mubr.bf16.gmra.mrb[0].mxu0 %v687
  %v1213 = vpop.f32.mrb[0].mxu0
  %v1214 = vadd.f32 0.0, %v1213
  %v1215 = vpop.f32.mrb[0].mxu0
  %v1216 = vadd.f32 0.0, %v1215
  %v1217 = vpop.f32.mrb[0].mxu0
  %v1218 = vadd.f32 0.0, %v1217
  %v1219 = vpop.f32.mrb[0].mxu0
  %v1220 = vadd.f32 0.0, %v1219
  %1221 = vmatprep.mubr.bf16.mxu0 0
  %1222 = vmatmul.mubr.bf16.gmra.mrb[0].mxu0 %v690
  %v1223 = vpop.f32.mrb[0].mxu0
  %v1224 = vadd.f32 0.0, %v1223
  %v1225 = vpop.f32.mrb[0].mxu0
  %v1226 = vadd.f32 0.0, %v1225
  %v1227 = vpop.f32.mrb[0].mxu0
  %v1228 = vadd.f32 0.0, %v1227
  %v1229 = vpop.f32.mrb[0].mxu0
  %v1230 = vadd.f32 0.0, %v1229
  %1231 = vmatprep.mubr.bf16.mxu0 0
  %1232 = vmatmul.mubr.bf16.gmra.mrb[0].mxu0 %v693
  %v1233 = vpop.f32.mrb[0].mxu0
  %v1234 = vadd.f32 0.0, %v1233
  %v1235 = vpop.f32.mrb[0].mxu0
  %v1236 = vadd.f32 0.0, %v1235
  %v1237 = vpop.f32.mrb[0].mxu0
  %v1238 = vadd.f32 0.0, %v1237
  %v1239 = vpop.f32.mrb[0].mxu0
  %v1240 = vadd.f32 0.0, %v1239
  %1241 = vmatprep.mubr.bf16.mxu0 0
  %1242 = vmatmul.mubr.bf16.gmra.mrb[0].mxu0 %v696
  %v1243 = vpop.f32.mrb[0].mxu0
  %v1244 = vadd.f32 0.0, %v1243
  %v1245 = vpop.f32.mrb[0].mxu0
  %v1246 = vadd.f32 0.0, %v1245
  %v1247 = vpop.f32.mrb[0].mxu0
  %v1248 = vadd.f32 0.0, %v1247
  %v1249 = vpop.f32.mrb[0].mxu0
  %v1250 = vadd.f32 0.0, %v1249
  %1251 = vmatprep.mubr.bf16.mxu0 0
  %1252 = vmatmul.mubr.bf16.gmra.mrb[0].mxu0 %v699
  %v1253 = vpop.f32.mrb[0].mxu0
  %v1254 = vadd.f32 0.0, %v1253
  %v1255 = vpop.f32.mrb[0].mxu0
  %v1256 = vadd.f32 0.0, %v1255
  %v1257 = vpop.f32.mrb[0].mxu0
  %v1258 = vadd.f32 0.0, %v1257
  %v1259 = vpop.f32.mrb[0].mxu0
  %v1260 = vadd.f32 0.0, %v1259
  %1261 = vmatprep.mubr.bf16.mxu0 0
  %1262 = vmatmul.mubr.bf16.gmra.mrb[0].mxu0 %v702
  %v1263 = vpop.f32.mrb[0].mxu0
  %v1264 = vadd.f32 0.0, %v1263
  %v1265 = vpop.f32.mrb[0].mxu0
  %v1266 = vadd.f32 0.0, %v1265
  %v1267 = vpop.f32.mrb[0].mxu0
  %v1268 = vadd.f32 0.0, %v1267
  %v1269 = vpop.f32.mrb[0].mxu0
  %v1270 = vadd.f32 0.0, %v1269
  %1271 = vmatprep.mubr.bf16.mxu0 0
  %1272 = vmatmul.mubr.bf16.gmra.mrb[0].mxu0 %v705
  %v1273 = vpop.f32.mrb[0].mxu0
  %v1274 = vadd.f32 0.0, %v1273
  %v1275 = vpop.f32.mrb[0].mxu0
  %v1276 = vadd.f32 0.0, %v1275
  %v1277 = vpop.f32.mrb[0].mxu0
  %v1278 = vadd.f32 0.0, %v1277
  %v1279 = vpop.f32.mrb[0].mxu0
  %v1280 = vadd.f32 0.0, %v1279
  %1281 = vmatprep.mubr.bf16.mxu0 0
  %1282 = vmatmul.mubr.bf16.gmra.mrb[0].mxu0 %v708
  %v1283 = vpop.f32.mrb[0].mxu0
  %v1284 = vadd.f32 0.0, %v1283
  %v1285 = vpop.f32.mrb[0].mxu0
  %v1286 = vadd.f32 0.0, %v1285
  %v1287 = vpop.f32.mrb[0].mxu0
  %v1288 = vadd.f32 0.0, %v1287
  %v1289 = vpop.f32.mrb[0].mxu0
  %v1290 = vadd.f32 0.0, %v1289
  %1291 = vmatprep.mubr.bf16.mxu0 0
  %1292 = vmatmul.mubr.bf16.gmra.mrb[0].mxu0 %v711
  %v1293 = vpop.f32.mrb[0].mxu0
  %v1294 = vadd.f32 0.0, %v1293
  %v1295 = vpop.f32.mrb[0].mxu0
  %v1296 = vadd.f32 0.0, %v1295
  %v1297 = vpop.f32.mrb[0].mxu0
  %v1298 = vadd.f32 0.0, %v1297
  %v1299 = vpop.f32.mrb[0].mxu0
  %v1300 = vadd.f32 0.0, %v1299
  %1301 = vmatprep.mubr.bf16.mxu0 0
  %1302 = vmatmul.mubr.bf16.gmra.mrb[0].mxu0 %v714
  %v1303 = vpop.f32.mrb[0].mxu0
  %v1304 = vadd.f32 0.0, %v1303
  %v1305 = vpop.f32.mrb[0].mxu0
  %v1306 = vadd.f32 0.0, %v1305
  %v1307 = vpop.f32.mrb[0].mxu0
  %v1308 = vadd.f32 0.0, %v1307
  %v1309 = vpop.f32.mrb[0].mxu0
  %v1310 = vadd.f32 0.0, %v1309
  %1311 = vmatprep.mubr.bf16.mxu0 0
  %1312 = vmatmul.mubr.bf16.gmra.mrb[0].mxu0 %v717
  %v1313 = vpop.f32.mrb[0].mxu0
  %v1314 = vadd.f32 0.0, %v1313
  %v1315 = vpop.f32.mrb[0].mxu0
  %v1316 = vadd.f32 0.0, %v1315
  %v1317 = vpop.f32.mrb[0].mxu0
  %v1318 = vadd.f32 0.0, %v1317
  %v1319 = vpop.f32.mrb[0].mxu0
  %v1320 = vadd.f32 0.0, %v1319
  %1321 = vmatprep.mubr.bf16.mxu0 0
  %1322 = vmatmul.mubr.bf16.gmra.mrb[0].mxu0 %v720
  %v1323 = vpop.f32.mrb[0].mxu0
  %v1324 = vadd.f32 0.0, %v1323
  %v1325 = vpop.f32.mrb[0].mxu0
  %v1326 = vadd.f32 0.0, %v1325
  %v1327 = vpop.f32.mrb[0].mxu0
  %v1328 = vadd.f32 0.0, %v1327
  %v1329 = vpop.f32.mrb[0].mxu0
  %v1330 = vadd.f32 0.0, %v1329
  %1331 = vmatprep.mubr.bf16.mxu0 0
  %1332 = vmatmul.mubr.bf16.gmra.mrb[0].mxu0 %v723
  %v1333 = vpop.f32.mrb[0].mxu0
  %v1334 = vadd.f32 0.0, %v1333
  %v1335 = vpop.f32.mrb[0].mxu0
  %v1336 = vadd.f32 0.0, %v1335
  %v1337 = vpop.f32.mrb[0].mxu0
  %v1338 = vadd.f32 0.0, %v1337
  %v1339 = vpop.f32.mrb[0].mxu0
  %v1340 = vadd.f32 0.0, %v1339
  %1341 = vmatprep.mubr.bf16.mxu0 0
  %1342 = vmatmul.mubr.bf16.gmra.mrb[0].mxu0 %v726
  %v1343 = vpop.f32.mrb[0].mxu0
  %v1344 = vadd.f32 0.0, %v1343
  %v1345 = vpop.f32.mrb[0].mxu0
  %v1346 = vadd.f32 0.0, %v1345
  %v1347 = vpop.f32.mrb[0].mxu0
  %v1348 = vadd.f32 0.0, %v1347
  %v1349 = vpop.f32.mrb[0].mxu0
  %v1350 = vadd.f32 0.0, %v1349
  %1351 = vmatprep.mubr.bf16.mxu0 0
  %1352 = vmatmul.mubr.bf16.gmra.mrb[0].mxu0 %v729
  %v1353 = vpop.f32.mrb[0].mxu0
  %v1354 = vadd.f32 0.0, %v1353
  %v1355 = vpop.f32.mrb[0].mxu0
  %v1356 = vadd.f32 0.0, %v1355
  %v1357 = vpop.f32.mrb[0].mxu0
  %v1358 = vadd.f32 0.0, %v1357
  %v1359 = vpop.f32.mrb[0].mxu0
  %v1360 = vadd.f32 0.0, %v1359
  %1361 = vmatprep.mubr.bf16.mxu0 0
  %1362 = vmatmul.mubr.bf16.gmra.mrb[0].mxu0 %v732
  %v1363 = vpop.f32.mrb[0].mxu0
  %v1364 = vadd.f32 0.0, %v1363
  %v1365 = vpop.f32.mrb[0].mxu0
  %v1366 = vadd.f32 0.0, %v1365
  %v1367 = vpop.f32.mrb[0].mxu0
  %v1368 = vadd.f32 0.0, %v1367
  %v1369 = vpop.f32.mrb[0].mxu0
  %v1370 = vadd.f32 0.0, %v1369
  %1371 = vmatprep.mubr.bf16.mxu0 0
  %1372 = vmatmul.mubr.bf16.gmra.mrb[0].mxu0 %v735
  %v1373 = vpop.f32.mrb[0].mxu0
  %v1374 = vadd.f32 0.0, %v1373
  %v1375 = vpop.f32.mrb[0].mxu0
  %v1376 = vadd.f32 0.0, %v1375
  %v1377 = vpop.f32.mrb[0].mxu0
  %v1378 = vadd.f32 0.0, %v1377
  %v1379 = vpop.f32.mrb[0].mxu0
  %v1380 = vadd.f32 0.0, %v1379
  %1381 = vmatprep.mubr.bf16.mxu0 0
  %1382 = vmatmul.mubr.bf16.gmra.mrb[0].mxu0 %v738
  %v1383 = vpop.f32.mrb[0].mxu0
  %v1384 = vadd.f32 0.0, %v1383
  %v1385 = vpop.f32.mrb[0].mxu0
  %v1386 = vadd.f32 0.0, %v1385
  %v1387 = vpop.f32.mrb[0].mxu0
  %v1388 = vadd.f32 0.0, %v1387
  %v1389 = vpop.f32.mrb[0].mxu0
  %v1390 = vadd.f32 0.0, %v1389
  %1391 = vmatprep.mubr.bf16.mxu0 0
  %1392 = vmatmul.mubr.bf16.gmra.mrb[0].mxu0 %v741
  %v1393 = vpop.f32.mrb[0].mxu0
  %v1394 = vadd.f32 0.0, %v1393
  %v1395 = vpop.f32.mrb[0].mxu0
  %v1396 = vadd.f32 0.0, %v1395
  %v1397 = vpop.f32.mrb[0].mxu0
  %v1398 = vadd.f32 0.0, %v1397
  %v1399 = vpop.f32.mrb[0].mxu0
  %v1400 = vadd.f32 0.0, %v1399
  %1401 = vmatprep.mubr.bf16.mxu0 0
  %1402 = vmatmul.mubr.bf16.gmra.mrb[0].mxu0 %v744
  %v1403 = vpop.f32.mrb[0].mxu0
  %v1404 = vadd.f32 0.0, %v1403
  %v1405 = vpop.f32.mrb[0].mxu0
  %v1406 = vadd.f32 0.0, %v1405
  %v1407 = vpop.f32.mrb[0].mxu0
  %v1408 = vadd.f32 0.0, %v1407
  %v1409 = vpop.f32.mrb[0].mxu0
  %v1410 = vadd.f32 0.0, %v1409
  %1411 = vmatprep.mubr.bf16.mxu0 0
  %1412 = vmatmul.mubr.bf16.gmra.mrb[0].mxu0 %v747
  %v1413 = vpop.f32.mrb[0].mxu0
  %v1414 = vadd.f32 0.0, %v1413
  %v1415 = vpop.f32.mrb[0].mxu0
  %v1416 = vadd.f32 0.0, %v1415
  %v1417 = vpop.f32.mrb[0].mxu0
  %v1418 = vadd.f32 0.0, %v1417
  %v1419 = vpop.f32.mrb[0].mxu0
  %v1420 = vadd.f32 0.0, %v1419
  %1421 = vdwg.mxu0
  %1422 = vmatprep.subr.bf16.mxu0 %v527
  %1423 = vmatpush1.bf16.msra.mxu0 %v526
  %1424 = vmatprep.subr.bf16.mxu0 %v531
  %1425 = vmatpush1.bf16.msra.mxu0 %v530
  %1426 = vmatprep.subr.bf16.mxu0 %v535
  %1427 = vmatpush1.bf16.msra.mxu0 %v534
  %1428 = vmatprep.subr.bf16.mxu0 %v539
  %1429 = vmatpush1.bf16.msra.mxu0 %v538
  %1430 = vmatprep.subr.bf16.mxu0 0
  %1431 = vmatpush1.bf16.msra.mxu0 0
  %1432 = vmatprep.subr.bf16.mxu0 0
  %1433 = vmatpush1.bf16.msra.mxu0 0
  %1434 = vmatprep.subr.bf16.mxu0 0
  %1435 = vmatpush1.bf16.msra.mxu0 0
  %1436 = vmatprep.subr.bf16.mxu0 0
  %1437 = vmatpush1.bf16.msra.mxu0 0
  %1438 = vmatprep.subr.bf16.mxu0 0
  %1439 = vmatpush1.bf16.msra.mxu0 0
  %1440 = vmatprep.subr.bf16.mxu0 0
  %1441 = vmatpush1.bf16.msra.mxu0 0
  %1442 = vmatprep.subr.bf16.mxu0 0
  %1443 = vmatpush1.bf16.msra.mxu0 0
  %1444 = vmatprep.subr.bf16.mxu0 0
  %1445 = vmatpush1.bf16.msra.mxu0 0
  %1446 = vmatprep.subr.bf16.mxu0 0
  %1447 = vmatpush1.bf16.msra.mxu0 0
  %1448 = vmatprep.subr.bf16.mxu0 0
  %1449 = vmatpush1.bf16.msra.mxu0 0
  %1450 = vmatprep.subr.bf16.mxu0 0
  %1451 = vmatpush1.bf16.msra.mxu0 0
  %1452 = vmatprep.subr.bf16.mxu0 0
  %1453 = vmatpush1.bf16.msra.mxu0 0
  %1454 = vmatprep.mubr.bf16.mxu0 0
  %1455 = vmatmul.mubr.bf16.gmra.mrb[0].mxu0 %v558
  %v1456 = vpop.f32.mrb[0].mxu0
  %v1457 = vadd.f32 0.0, %v1456
  %v1458 = vpop.f32.mrb[0].mxu0
  %v1459 = vadd.f32 0.0, %v1458
  %v1460 = vpop.f32.mrb[0].mxu0
  %v1461 = vadd.f32 0.0, %v1460
  %v1462 = vpop.f32.mrb[0].mxu0
  %v1463 = vadd.f32 0.0, %v1462
  %1464 = vmatprep.mubr.bf16.mxu0 0
  %1465 = vmatmul.mubr.bf16.gmra.mrb[0].mxu0 %v561
  %v1466 = vpop.f32.mrb[0].mxu0
  %v1467 = vadd.f32 0.0, %v1466
  %v1468 = vpop.f32.mrb[0].mxu0
  %v1469 = vadd.f32 0.0, %v1468
  %v1470 = vpop.f32.mrb[0].mxu0
  %v1471 = vadd.f32 0.0, %v1470
  %v1472 = vpop.f32.mrb[0].mxu0
  %v1473 = vadd.f32 0.0, %v1472
  %1474 = vmatprep.mubr.bf16.mxu0 0
  %1475 = vmatmul.mubr.bf16.gmra.mrb[0].mxu0 %v564
  %v1476 = vpop.f32.mrb[0].mxu0
  %v1477 = vadd.f32 0.0, %v1476
  %v1478 = vpop.f32.mrb[0].mxu0
  %v1479 = vadd.f32 0.0, %v1478
  %v1480 = vpop.f32.mrb[0].mxu0
  %v1481 = vadd.f32 0.0, %v1480
  %v1482 = vpop.f32.mrb[0].mxu0
  %v1483 = vadd.f32 0.0, %v1482
  %1484 = vmatprep.mubr.bf16.mxu0 0
  %1485 = vmatmul.mubr.bf16.gmra.mrb[0].mxu0 %v567
  %v1486 = vpop.f32.mrb[0].mxu0
  %v1487 = vadd.f32 0.0, %v1486
  %v1488 = vpop.f32.mrb[0].mxu0
  %v1489 = vadd.f32 0.0, %v1488
  %v1490 = vpop.f32.mrb[0].mxu0
  %v1491 = vadd.f32 0.0, %v1490
  %v1492 = vpop.f32.mrb[0].mxu0
  %v1493 = vadd.f32 0.0, %v1492
  %1494 = vmatprep.mubr.bf16.mxu0 0
  %1495 = vmatmul.mubr.bf16.gmra.mrb[0].mxu0 %v570
  %v1496 = vpop.f32.mrb[0].mxu0
  %v1497 = vadd.f32 0.0, %v1496
  %v1498 = vpop.f32.mrb[0].mxu0
  %v1499 = vadd.f32 0.0, %v1498
  %v1500 = vpop.f32.mrb[0].mxu0
  %v1501 = vadd.f32 0.0, %v1500
  %v1502 = vpop.f32.mrb[0].mxu0
  %v1503 = vadd.f32 0.0, %v1502
  %1504 = vmatprep.mubr.bf16.mxu0 0
  %1505 = vmatmul.mubr.bf16.gmra.mrb[0].mxu0 %v573
  %v1506 = vpop.f32.mrb[0].mxu0
  %v1507 = vadd.f32 0.0, %v1506
  %v1508 = vpop.f32.mrb[0].mxu0
  %v1509 = vadd.f32 0.0, %v1508
  %v1510 = vpop.f32.mrb[0].mxu0
  %v1511 = vadd.f32 0.0, %v1510
  %v1512 = vpop.f32.mrb[0].mxu0
  %v1513 = vadd.f32 0.0, %v1512
  %1514 = vmatprep.mubr.bf16.mxu0 0
  %1515 = vmatmul.mubr.bf16.gmra.mrb[0].mxu0 %v576
  %v1516 = vpop.f32.mrb[0].mxu0
  %v1517 = vadd.f32 0.0, %v1516
  %v1518 = vpop.f32.mrb[0].mxu0
  %v1519 = vadd.f32 0.0, %v1518
  %v1520 = vpop.f32.mrb[0].mxu0
  %v1521 = vadd.f32 0.0, %v1520
  %v1522 = vpop.f32.mrb[0].mxu0
  %v1523 = vadd.f32 0.0, %v1522
  %1524 = vmatprep.mubr.bf16.mxu0 0
  %1525 = vmatmul.mubr.bf16.gmra.mrb[0].mxu0 %v579
  %v1526 = vpop.f32.mrb[0].mxu0
  %v1527 = vadd.f32 0.0, %v1526
  %v1528 = vpop.f32.mrb[0].mxu0
  %v1529 = vadd.f32 0.0, %v1528
  %v1530 = vpop.f32.mrb[0].mxu0
  %v1531 = vadd.f32 0.0, %v1530
  %v1532 = vpop.f32.mrb[0].mxu0
  %v1533 = vadd.f32 0.0, %v1532
  %1534 = vmatprep.mubr.bf16.mxu0 0
  %1535 = vmatmul.mubr.bf16.gmra.mrb[0].mxu0 %v582
  %v1536 = vpop.f32.mrb[0].mxu0
  %v1537 = vadd.f32 0.0, %v1536
  %v1538 = vpop.f32.mrb[0].mxu0
  %v1539 = vadd.f32 0.0, %v1538
  %v1540 = vpop.f32.mrb[0].mxu0
  %v1541 = vadd.f32 0.0, %v1540
  %v1542 = vpop.f32.mrb[0].mxu0
  %v1543 = vadd.f32 0.0, %v1542
  %1544 = vmatprep.mubr.bf16.mxu0 0
  %1545 = vmatmul.mubr.bf16.gmra.mrb[0].mxu0 %v585
  %v1546 = vpop.f32.mrb[0].mxu0
  %v1547 = vadd.f32 0.0, %v1546
  %v1548 = vpop.f32.mrb[0].mxu0
  %v1549 = vadd.f32 0.0, %v1548
  %v1550 = vpop.f32.mrb[0].mxu0
  %v1551 = vadd.f32 0.0, %v1550
  %v1552 = vpop.f32.mrb[0].mxu0
  %v1553 = vadd.f32 0.0, %v1552
  %1554 = vmatprep.mubr.bf16.mxu0 0
  %1555 = vmatmul.mubr.bf16.gmra.mrb[0].mxu0 %v588
  %v1556 = vpop.f32.mrb[0].mxu0
  %v1557 = vadd.f32 0.0, %v1556
  %v1558 = vpop.f32.mrb[0].mxu0
  %v1559 = vadd.f32 0.0, %v1558
  %v1560 = vpop.f32.mrb[0].mxu0
  %v1561 = vadd.f32 0.0, %v1560
  %v1562 = vpop.f32.mrb[0].mxu0
  %v1563 = vadd.f32 0.0, %v1562
  %1564 = vmatprep.mubr.bf16.mxu0 0
  %1565 = vmatmul.mubr.bf16.gmra.mrb[0].mxu0 %v591
  %v1566 = vpop.f32.mrb[0].mxu0
  %v1567 = vadd.f32 0.0, %v1566
  %v1568 = vpop.f32.mrb[0].mxu0
  %v1569 = vadd.f32 0.0, %v1568
  %v1570 = vpop.f32.mrb[0].mxu0
  %v1571 = vadd.f32 0.0, %v1570
  %v1572 = vpop.f32.mrb[0].mxu0
  %v1573 = vadd.f32 0.0, %v1572
  %1574 = vmatprep.mubr.bf16.mxu0 0
  %1575 = vmatmul.mubr.bf16.gmra.mrb[0].mxu0 %v594
  %v1576 = vpop.f32.mrb[0].mxu0
  %v1577 = vadd.f32 0.0, %v1576
  %v1578 = vpop.f32.mrb[0].mxu0
  %v1579 = vadd.f32 0.0, %v1578
  %v1580 = vpop.f32.mrb[0].mxu0
  %v1581 = vadd.f32 0.0, %v1580
  %v1582 = vpop.f32.mrb[0].mxu0
  %v1583 = vadd.f32 0.0, %v1582
  %1584 = vmatprep.mubr.bf16.mxu0 0
  %1585 = vmatmul.mubr.bf16.gmra.mrb[0].mxu0 %v597
  %v1586 = vpop.f32.mrb[0].mxu0
  %v1587 = vadd.f32 0.0, %v1586
  %v1588 = vpop.f32.mrb[0].mxu0
  %v1589 = vadd.f32 0.0, %v1588
  %v1590 = vpop.f32.mrb[0].mxu0
  %v1591 = vadd.f32 0.0, %v1590
  %v1592 = vpop.f32.mrb[0].mxu0
  %v1593 = vadd.f32 0.0, %v1592
  %1594 = vmatprep.mubr.bf16.mxu0 0
  %1595 = vmatmul.mubr.bf16.gmra.mrb[0].mxu0 %v600
  %v1596 = vpop.f32.mrb[0].mxu0
  %v1597 = vadd.f32 0.0, %v1596
  %v1598 = vpop.f32.mrb[0].mxu0
  %v1599 = vadd.f32 0.0, %v1598
  %v1600 = vpop.f32.mrb[0].mxu0
  %v1601 = vadd.f32 0.0, %v1600
  %v1602 = vpop.f32.mrb[0].mxu0
  %v1603 = vadd.f32 0.0, %v1602
  %1604 = vmatprep.mubr.bf16.mxu0 0
  %1605 = vmatmul.mubr.bf16.gmra.mrb[0].mxu0 %v603
  %v1606 = vpop.f32.mrb[0].mxu0
  %v1607 = vadd.f32 0.0, %v1606
  %v1608 = vpop.f32.mrb[0].mxu0
  %v1609 = vadd.f32 0.0, %v1608
  %v1610 = vpop.f32.mrb[0].mxu0
  %v1611 = vadd.f32 0.0, %v1610
  %v1612 = vpop.f32.mrb[0].mxu0
  %v1613 = vadd.f32 0.0, %v1612
  %1614 = vmatprep.mubr.bf16.mxu0 0
  %1615 = vmatmul.mubr.bf16.gmra.mrb[0].mxu0 %v606
  %v1616 = vpop.f32.mrb[0].mxu0
  %v1617 = vadd.f32 0.0, %v1616
  %v1618 = vpop.f32.mrb[0].mxu0
  %v1619 = vadd.f32 0.0, %v1618
  %v1620 = vpop.f32.mrb[0].mxu0
  %v1621 = vadd.f32 0.0, %v1620
  %v1622 = vpop.f32.mrb[0].mxu0
  %v1623 = vadd.f32 0.0, %v1622
  %1624 = vmatprep.mubr.bf16.mxu0 0
  %1625 = vmatmul.mubr.bf16.gmra.mrb[0].mxu0 %v609
  %v1626 = vpop.f32.mrb[0].mxu0
  %v1627 = vadd.f32 0.0, %v1626
  %v1628 = vpop.f32.mrb[0].mxu0
  %v1629 = vadd.f32 0.0, %v1628
  %v1630 = vpop.f32.mrb[0].mxu0
  %v1631 = vadd.f32 0.0, %v1630
  %v1632 = vpop.f32.mrb[0].mxu0
  %v1633 = vadd.f32 0.0, %v1632
  %1634 = vmatprep.mubr.bf16.mxu0 0
  %1635 = vmatmul.mubr.bf16.gmra.mrb[0].mxu0 %v612
  %v1636 = vpop.f32.mrb[0].mxu0
  %v1637 = vadd.f32 0.0, %v1636
  %v1638 = vpop.f32.mrb[0].mxu0
  %v1639 = vadd.f32 0.0, %v1638
  %v1640 = vpop.f32.mrb[0].mxu0
  %v1641 = vadd.f32 0.0, %v1640
  %v1642 = vpop.f32.mrb[0].mxu0
  %v1643 = vadd.f32 0.0, %v1642
  %1644 = vmatprep.mubr.bf16.mxu0 0
  %1645 = vmatmul.mubr.bf16.gmra.mrb[0].mxu0 %v615
  %v1646 = vpop.f32.mrb[0].mxu0
  %v1647 = vadd.f32 0.0, %v1646
  %v1648 = vpop.f32.mrb[0].mxu0
  %v1649 = vadd.f32 0.0, %v1648
  %v1650 = vpop.f32.mrb[0].mxu0
  %v1651 = vadd.f32 0.0, %v1650
  %v1652 = vpop.f32.mrb[0].mxu0
  %v1653 = vadd.f32 0.0, %v1652
  %1654 = vmatprep.mubr.bf16.mxu0 0
  %1655 = vmatmul.mubr.bf16.gmra.mrb[0].mxu0 %v618
  %v1656 = vpop.f32.mrb[0].mxu0
  %v1657 = vadd.f32 0.0, %v1656
  %v1658 = vpop.f32.mrb[0].mxu0
  %v1659 = vadd.f32 0.0, %v1658
  %v1660 = vpop.f32.mrb[0].mxu0
  %v1661 = vadd.f32 0.0, %v1660
  %v1662 = vpop.f32.mrb[0].mxu0
  %v1663 = vadd.f32 0.0, %v1662
  %1664 = vmatprep.mubr.bf16.mxu0 0
  %1665 = vmatmul.mubr.bf16.gmra.mrb[0].mxu0 %v621
  %v1666 = vpop.f32.mrb[0].mxu0
  %v1667 = vadd.f32 0.0, %v1666
  %v1668 = vpop.f32.mrb[0].mxu0
  %v1669 = vadd.f32 0.0, %v1668
  %v1670 = vpop.f32.mrb[0].mxu0
  %v1671 = vadd.f32 0.0, %v1670
  %v1672 = vpop.f32.mrb[0].mxu0
  %v1673 = vadd.f32 0.0, %v1672
  %1674 = vmatprep.mubr.bf16.mxu0 0
  %1675 = vmatmul.mubr.bf16.gmra.mrb[0].mxu0 %v624
  %v1676 = vpop.f32.mrb[0].mxu0
  %v1677 = vadd.f32 0.0, %v1676
  %v1678 = vpop.f32.mrb[0].mxu0
  %v1679 = vadd.f32 0.0, %v1678
  %v1680 = vpop.f32.mrb[0].mxu0
  %v1681 = vadd.f32 0.0, %v1680
  %v1682 = vpop.f32.mrb[0].mxu0
  %v1683 = vadd.f32 0.0, %v1682
  %1684 = vmatprep.mubr.bf16.mxu0 0
  %1685 = vmatmul.mubr.bf16.gmra.mrb[0].mxu0 %v627
  %v1686 = vpop.f32.mrb[0].mxu0
  %v1687 = vadd.f32 0.0, %v1686
  %v1688 = vpop.f32.mrb[0].mxu0
  %v1689 = vadd.f32 0.0, %v1688
  %v1690 = vpop.f32.mrb[0].mxu0
  %v1691 = vadd.f32 0.0, %v1690
  %v1692 = vpop.f32.mrb[0].mxu0
  %v1693 = vadd.f32 0.0, %v1692
  %1694 = vmatprep.mubr.bf16.mxu0 0
  %1695 = vmatmul.mubr.bf16.gmra.mrb[0].mxu0 %v630
  %v1696 = vpop.f32.mrb[0].mxu0
  %v1697 = vadd.f32 0.0, %v1696
  %v1698 = vpop.f32.mrb[0].mxu0
  %v1699 = vadd.f32 0.0, %v1698
  %v1700 = vpop.f32.mrb[0].mxu0
  %v1701 = vadd.f32 0.0, %v1700
  %v1702 = vpop.f32.mrb[0].mxu0
  %v1703 = vadd.f32 0.0, %v1702
  %1704 = vmatprep.mubr.bf16.mxu0 0
  %1705 = vmatmul.mubr.bf16.gmra.mrb[0].mxu0 %v633
  %v1706 = vpop.f32.mrb[0].mxu0
  %v1707 = vadd.f32 0.0, %v1706
  %v1708 = vpop.f32.mrb[0].mxu0
  %v1709 = vadd.f32 0.0, %v1708
  %v1710 = vpop.f32.mrb[0].mxu0
  %v1711 = vadd.f32 0.0, %v1710
  %v1712 = vpop.f32.mrb[0].mxu0
  %v1713 = vadd.f32 0.0, %v1712
  %1714 = vmatprep.mubr.bf16.mxu0 0
  %1715 = vmatmul.mubr.bf16.gmra.mrb[0].mxu0 %v636
  %v1716 = vpop.f32.mrb[0].mxu0
  %v1717 = vadd.f32 0.0, %v1716
  %v1718 = vpop.f32.mrb[0].mxu0
  %v1719 = vadd.f32 0.0, %v1718
  %v1720 = vpop.f32.mrb[0].mxu0
  %v1721 = vadd.f32 0.0, %v1720
  %v1722 = vpop.f32.mrb[0].mxu0
  %v1723 = vadd.f32 0.0, %v1722
  %1724 = vmatprep.mubr.bf16.mxu0 0
  %1725 = vmatmul.mubr.bf16.gmra.mrb[0].mxu0 %v639
  %v1726 = vpop.f32.mrb[0].mxu0
  %v1727 = vadd.f32 0.0, %v1726
  %v1728 = vpop.f32.mrb[0].mxu0
  %v1729 = vadd.f32 0.0, %v1728
  %v1730 = vpop.f32.mrb[0].mxu0
  %v1731 = vadd.f32 0.0, %v1730
  %v1732 = vpop.f32.mrb[0].mxu0
  %v1733 = vadd.f32 0.0, %v1732
  %1734 = vmatprep.mubr.bf16.mxu0 0
  %1735 = vmatmul.mubr.bf16.gmra.mrb[0].mxu0 %v642
  %v1736 = vpop.f32.mrb[0].mxu0
  %v1737 = vadd.f32 0.0, %v1736
  %v1738 = vpop.f32.mrb[0].mxu0
  %v1739 = vadd.f32 0.0, %v1738
  %v1740 = vpop.f32.mrb[0].mxu0
  %v1741 = vadd.f32 0.0, %v1740
  %v1742 = vpop.f32.mrb[0].mxu0
  %v1743 = vadd.f32 0.0, %v1742
  %1744 = vmatprep.mubr.bf16.mxu0 0
  %1745 = vmatmul.mubr.bf16.gmra.mrb[0].mxu0 %v645
  %v1746 = vpop.f32.mrb[0].mxu0
  %v1747 = vadd.f32 0.0, %v1746
  %v1748 = vpop.f32.mrb[0].mxu0
  %v1749 = vadd.f32 0.0, %v1748
  %v1750 = vpop.f32.mrb[0].mxu0
  %v1751 = vadd.f32 0.0, %v1750
  %v1752 = vpop.f32.mrb[0].mxu0
  %v1753 = vadd.f32 0.0, %v1752
  %1754 = vmatprep.mubr.bf16.mxu0 0
  %1755 = vmatmul.mubr.bf16.gmra.mrb[0].mxu0 %v648
  %v1756 = vpop.f32.mrb[0].mxu0
  %v1757 = vadd.f32 0.0, %v1756
  %v1758 = vpop.f32.mrb[0].mxu0
  %v1759 = vadd.f32 0.0, %v1758
  %v1760 = vpop.f32.mrb[0].mxu0
  %v1761 = vadd.f32 0.0, %v1760
  %v1762 = vpop.f32.mrb[0].mxu0
  %v1763 = vadd.f32 0.0, %v1762
  %1764 = vmatprep.mubr.bf16.mxu0 0
  %1765 = vmatmul.mubr.bf16.gmra.mrb[0].mxu0 %v651
  %v1766 = vpop.f32.mrb[0].mxu0
  %v1767 = vadd.f32 0.0, %v1766
  %v1768 = vpop.f32.mrb[0].mxu0
  %v1769 = vadd.f32 0.0, %v1768
  %v1770 = vpop.f32.mrb[0].mxu0
  %v1771 = vadd.f32 0.0, %v1770
  %v1772 = vpop.f32.mrb[0].mxu0
  %v1773 = vadd.f32 0.0, %v1772
  %1774 = vmatprep.mubr.bf16.mxu0 0
  %1775 = vmatmul.mubr.bf16.gmra.mrb[0].mxu0 %v654
  %v1776 = vpop.f32.mrb[0].mxu0
  %v1777 = vadd.f32 0.0, %v1776
  %v1778 = vpop.f32.mrb[0].mxu0
  %v1779 = vadd.f32 0.0, %v1778
  %v1780 = vpop.f32.mrb[0].mxu0
  %v1781 = vadd.f32 0.0, %v1780
  %v1782 = vpop.f32.mrb[0].mxu0
  %v1783 = vadd.f32 0.0, %v1782
  %1784 = vmatprep.mubr.bf16.mxu0 0
  %1785 = vmatmul.mubr.bf16.gmra.mrb[0].mxu0 %v657
  %v1786 = vpop.f32.mrb[0].mxu0
  %v1787 = vadd.f32 0.0, %v1786
  %v1788 = vpop.f32.mrb[0].mxu0
  %v1789 = vadd.f32 0.0, %v1788
  %v1790 = vpop.f32.mrb[0].mxu0
  %v1791 = vadd.f32 0.0, %v1790
  %v1792 = vpop.f32.mrb[0].mxu0
  %v1793 = vadd.f32 0.0, %v1792
  %1794 = vmatprep.mubr.bf16.mxu0 0
  %1795 = vmatmul.mubr.bf16.gmra.mrb[0].mxu0 %v660
  %v1796 = vpop.f32.mrb[0].mxu0
  %v1797 = vadd.f32 0.0, %v1796
  %v1798 = vpop.f32.mrb[0].mxu0
  %v1799 = vadd.f32 0.0, %v1798
  %v1800 = vpop.f32.mrb[0].mxu0
  %v1801 = vadd.f32 0.0, %v1800
  %v1802 = vpop.f32.mrb[0].mxu0
  %v1803 = vadd.f32 0.0, %v1802
  %1804 = vmatprep.mubr.bf16.mxu0 0
  %1805 = vmatmul.mubr.bf16.gmra.mrb[0].mxu0 %v663
  %v1806 = vpop.f32.mrb[0].mxu0
  %v1807 = vadd.f32 0.0, %v1806
  %v1808 = vpop.f32.mrb[0].mxu0
  %v1809 = vadd.f32 0.0, %v1808
  %v1810 = vpop.f32.mrb[0].mxu0
  %v1811 = vadd.f32 0.0, %v1810
  %v1812 = vpop.f32.mrb[0].mxu0
  %v1813 = vadd.f32 0.0, %v1812
  %1814 = vmatprep.mubr.bf16.mxu0 0
  %1815 = vmatmul.mubr.bf16.gmra.mrb[0].mxu0 %v666
  %v1816 = vpop.f32.mrb[0].mxu0
  %v1817 = vadd.f32 0.0, %v1816
  %v1818 = vpop.f32.mrb[0].mxu0
  %v1819 = vadd.f32 0.0, %v1818
  %v1820 = vpop.f32.mrb[0].mxu0
  %v1821 = vadd.f32 0.0, %v1820
  %v1822 = vpop.f32.mrb[0].mxu0
  %v1823 = vadd.f32 0.0, %v1822
  %1824 = vmatprep.mubr.bf16.mxu0 0
  %1825 = vmatmul.mubr.bf16.gmra.mrb[0].mxu0 %v669
  %v1826 = vpop.f32.mrb[0].mxu0
  %v1827 = vadd.f32 0.0, %v1826
  %v1828 = vpop.f32.mrb[0].mxu0
  %v1829 = vadd.f32 0.0, %v1828
  %v1830 = vpop.f32.mrb[0].mxu0
  %v1831 = vadd.f32 0.0, %v1830
  %v1832 = vpop.f32.mrb[0].mxu0
  %v1833 = vadd.f32 0.0, %v1832
  %1834 = vmatprep.mubr.bf16.mxu0 0
  %1835 = vmatmul.mubr.bf16.gmra.mrb[0].mxu0 %v672
  %v1836 = vpop.f32.mrb[0].mxu0
  %v1837 = vadd.f32 0.0, %v1836
  %v1838 = vpop.f32.mrb[0].mxu0
  %v1839 = vadd.f32 0.0, %v1838
  %v1840 = vpop.f32.mrb[0].mxu0
  %v1841 = vadd.f32 0.0, %v1840
  %v1842 = vpop.f32.mrb[0].mxu0
  %v1843 = vadd.f32 0.0, %v1842
  %1844 = vmatprep.mubr.bf16.mxu0 0
  %1845 = vmatmul.mubr.bf16.gmra.mrb[0].mxu0 %v675
  %v1846 = vpop.f32.mrb[0].mxu0
  %v1847 = vadd.f32 0.0, %v1846
  %v1848 = vpop.f32.mrb[0].mxu0
  %v1849 = vadd.f32 0.0, %v1848
  %v1850 = vpop.f32.mrb[0].mxu0
  %v1851 = vadd.f32 0.0, %v1850
  %v1852 = vpop.f32.mrb[0].mxu0
  %v1853 = vadd.f32 0.0, %v1852
  %1854 = vmatprep.mubr.bf16.mxu0 0
  %1855 = vmatmul.mubr.bf16.gmra.mrb[0].mxu0 %v678
  %v1856 = vpop.f32.mrb[0].mxu0
  %v1857 = vadd.f32 0.0, %v1856
  %v1858 = vpop.f32.mrb[0].mxu0
  %v1859 = vadd.f32 0.0, %v1858
  %v1860 = vpop.f32.mrb[0].mxu0
  %v1861 = vadd.f32 0.0, %v1860
  %v1862 = vpop.f32.mrb[0].mxu0
  %v1863 = vadd.f32 0.0, %v1862
  %1864 = vmatprep.mubr.bf16.mxu0 0
  %1865 = vmatmul.mubr.bf16.gmra.mrb[0].mxu0 %v681
  %v1866 = vpop.f32.mrb[0].mxu0
  %v1867 = vadd.f32 0.0, %v1866
  %v1868 = vpop.f32.mrb[0].mxu0
  %v1869 = vadd.f32 0.0, %v1868
  %v1870 = vpop.f32.mrb[0].mxu0
  %v1871 = vadd.f32 0.0, %v1870
  %v1872 = vpop.f32.mrb[0].mxu0
  %v1873 = vadd.f32 0.0, %v1872
  %1874 = vmatprep.mubr.bf16.mxu0 0
  %1875 = vmatmul.mubr.bf16.gmra.mrb[0].mxu0 %v684
  %v1876 = vpop.f32.mrb[0].mxu0
  %v1877 = vadd.f32 0.0, %v1876
  %v1878 = vpop.f32.mrb[0].mxu0
  %v1879 = vadd.f32 0.0, %v1878
  %v1880 = vpop.f32.mrb[0].mxu0
  %v1881 = vadd.f32 0.0, %v1880
  %v1882 = vpop.f32.mrb[0].mxu0
  %v1883 = vadd.f32 0.0, %v1882
  %1884 = vmatprep.mubr.bf16.mxu0 0
  %1885 = vmatmul.mubr.bf16.gmra.mrb[0].mxu0 %v687
  %v1886 = vpop.f32.mrb[0].mxu0
  %v1887 = vadd.f32 0.0, %v1886
  %v1888 = vpop.f32.mrb[0].mxu0
  %v1889 = vadd.f32 0.0, %v1888
  %v1890 = vpop.f32.mrb[0].mxu0
  %v1891 = vadd.f32 0.0, %v1890
  %v1892 = vpop.f32.mrb[0].mxu0
  %v1893 = vadd.f32 0.0, %v1892
  %1894 = vmatprep.mubr.bf16.mxu0 0
  %1895 = vmatmul.mubr.bf16.gmra.mrb[0].mxu0 %v690
  %v1896 = vpop.f32.mrb[0].mxu0
  %v1897 = vadd.f32 0.0, %v1896
  %v1898 = vpop.f32.mrb[0].mxu0
  %v1899 = vadd.f32 0.0, %v1898
  %v1900 = vpop.f32.mrb[0].mxu0
  %v1901 = vadd.f32 0.0, %v1900
  %v1902 = vpop.f32.mrb[0].mxu0
  %v1903 = vadd.f32 0.0, %v1902
  %1904 = vmatprep.mubr.bf16.mxu0 0
  %1905 = vmatmul.mubr.bf16.gmra.mrb[0].mxu0 %v693
  %v1906 = vpop.f32.mrb[0].mxu0
  %v1907 = vadd.f32 0.0, %v1906
  %v1908 = vpop.f32.mrb[0].mxu0
  %v1909 = vadd.f32 0.0, %v1908
  %v1910 = vpop.f32.mrb[0].mxu0
  %v1911 = vadd.f32 0.0, %v1910
  %v1912 = vpop.f32.mrb[0].mxu0
  %v1913 = vadd.f32 0.0, %v1912
  %1914 = vmatprep.mubr.bf16.mxu0 0
  %1915 = vmatmul.mubr.bf16.gmra.mrb[0].mxu0 %v696
  %v1916 = vpop.f32.mrb[0].mxu0
  %v1917 = vadd.f32 0.0, %v1916
  %v1918 = vpop.f32.mrb[0].mxu0
  %v1919 = vadd.f32 0.0, %v1918
  %v1920 = vpop.f32.mrb[0].mxu0
  %v1921 = vadd.f32 0.0, %v1920
  %v1922 = vpop.f32.mrb[0].mxu0
  %v1923 = vadd.f32 0.0, %v1922
  %1924 = vmatprep.mubr.bf16.mxu0 0
  %1925 = vmatmul.mubr.bf16.gmra.mrb[0].mxu0 %v699
  %v1926 = vpop.f32.mrb[0].mxu0
  %v1927 = vadd.f32 0.0, %v1926
  %v1928 = vpop.f32.mrb[0].mxu0
  %v1929 = vadd.f32 0.0, %v1928
  %v1930 = vpop.f32.mrb[0].mxu0
  %v1931 = vadd.f32 0.0, %v1930
  %v1932 = vpop.f32.mrb[0].mxu0
  %v1933 = vadd.f32 0.0, %v1932
  %1934 = vmatprep.mubr.bf16.mxu0 0
  %1935 = vmatmul.mubr.bf16.gmra.mrb[0].mxu0 %v702
  %v1936 = vpop.f32.mrb[0].mxu0
  %v1937 = vadd.f32 0.0, %v1936
  %v1938 = vpop.f32.mrb[0].mxu0
  %v1939 = vadd.f32 0.0, %v1938
  %v1940 = vpop.f32.mrb[0].mxu0
  %v1941 = vadd.f32 0.0, %v1940
  %v1942 = vpop.f32.mrb[0].mxu0
  %v1943 = vadd.f32 0.0, %v1942
  %1944 = vmatprep.mubr.bf16.mxu0 0
  %1945 = vmatmul.mubr.bf16.gmra.mrb[0].mxu0 %v705
  %v1946 = vpop.f32.mrb[0].mxu0
  %v1947 = vadd.f32 0.0, %v1946
  %v1948 = vpop.f32.mrb[0].mxu0
  %v1949 = vadd.f32 0.0, %v1948
  %v1950 = vpop.f32.mrb[0].mxu0
  %v1951 = vadd.f32 0.0, %v1950
  %v1952 = vpop.f32.mrb[0].mxu0
  %v1953 = vadd.f32 0.0, %v1952
  %1954 = vmatprep.mubr.bf16.mxu0 0
  %1955 = vmatmul.mubr.bf16.gmra.mrb[0].mxu0 %v708
  %v1956 = vpop.f32.mrb[0].mxu0
  %v1957 = vadd.f32 0.0, %v1956
  %v1958 = vpop.f32.mrb[0].mxu0
  %v1959 = vadd.f32 0.0, %v1958
  %v1960 = vpop.f32.mrb[0].mxu0
  %v1961 = vadd.f32 0.0, %v1960
  %v1962 = vpop.f32.mrb[0].mxu0
  %v1963 = vadd.f32 0.0, %v1962
  %1964 = vmatprep.mubr.bf16.mxu0 0
  %1965 = vmatmul.mubr.bf16.gmra.mrb[0].mxu0 %v711
  %v1966 = vpop.f32.mrb[0].mxu0
  %v1967 = vadd.f32 0.0, %v1966
  %v1968 = vpop.f32.mrb[0].mxu0
  %v1969 = vadd.f32 0.0, %v1968
  %v1970 = vpop.f32.mrb[0].mxu0
  %v1971 = vadd.f32 0.0, %v1970
  %v1972 = vpop.f32.mrb[0].mxu0
  %v1973 = vadd.f32 0.0, %v1972
  %1974 = vmatprep.mubr.bf16.mxu0 0
  %1975 = vmatmul.mubr.bf16.gmra.mrb[0].mxu0 %v714
  %v1976 = vpop.f32.mrb[0].mxu0
  %v1977 = vadd.f32 0.0, %v1976
  %v1978 = vpop.f32.mrb[0].mxu0
  %v1979 = vadd.f32 0.0, %v1978
  %v1980 = vpop.f32.mrb[0].mxu0
  %v1981 = vadd.f32 0.0, %v1980
  %v1982 = vpop.f32.mrb[0].mxu0
  %v1983 = vadd.f32 0.0, %v1982
  %1984 = vmatprep.mubr.bf16.mxu0 0
  %1985 = vmatmul.mubr.bf16.gmra.mrb[0].mxu0 %v717
  %v1986 = vpop.f32.mrb[0].mxu0
  %v1987 = vadd.f32 0.0, %v1986
  %v1988 = vpop.f32.mrb[0].mxu0
  %v1989 = vadd.f32 0.0, %v1988
  %v1990 = vpop.f32.mrb[0].mxu0
  %v1991 = vadd.f32 0.0, %v1990
  %v1992 = vpop.f32.mrb[0].mxu0
  %v1993 = vadd.f32 0.0, %v1992
  %1994 = vmatprep.mubr.bf16.mxu0 0
  %1995 = vmatmul.mubr.bf16.gmra.mrb[0].mxu0 %v720
  %v1996 = vpop.f32.mrb[0].mxu0
  %v1997 = vadd.f32 0.0, %v1996
  %v1998 = vpop.f32.mrb[0].mxu0
  %v1999 = vadd.f32 0.0, %v1998
  %v2000 = vpop.f32.mrb[0].mxu0
  %v2001 = vadd.f32 0.0, %v2000
  %v2002 = vpop.f32.mrb[0].mxu0
  %v2003 = vadd.f32 0.0, %v2002
  %2004 = vmatprep.mubr.bf16.mxu0 0
  %2005 = vmatmul.mubr.bf16.gmra.mrb[0].mxu0 %v723
  %v2006 = vpop.f32.mrb[0].mxu0
  %v2007 = vadd.f32 0.0, %v2006
  %v2008 = vpop.f32.mrb[0].mxu0
  %v2009 = vadd.f32 0.0, %v2008
  %v2010 = vpop.f32.mrb[0].mxu0
  %v2011 = vadd.f32 0.0, %v2010
  %v2012 = vpop.f32.mrb[0].mxu0
  %v2013 = vadd.f32 0.0, %v2012
  %2014 = vmatprep.mubr.bf16.mxu0 0
  %2015 = vmatmul.mubr.bf16.gmra.mrb[0].mxu0 %v726
  %v2016 = vpop.f32.mrb[0].mxu0
  %v2017 = vadd.f32 0.0, %v2016
  %v2018 = vpop.f32.mrb[0].mxu0
  %v2019 = vadd.f32 0.0, %v2018
  %v2020 = vpop.f32.mrb[0].mxu0
  %v2021 = vadd.f32 0.0, %v2020
  %v2022 = vpop.f32.mrb[0].mxu0
  %v2023 = vadd.f32 0.0, %v2022
  %2024 = vmatprep.mubr.bf16.mxu0 0
  %2025 = vmatmul.mubr.bf16.gmra.mrb[0].mxu0 %v729
  %v2026 = vpop.f32.mrb[0].mxu0
  %v2027 = vadd.f32 0.0, %v2026
  %v2028 = vpop.f32.mrb[0].mxu0
  %v2029 = vadd.f32 0.0, %v2028
  %v2030 = vpop.f32.mrb[0].mxu0
  %v2031 = vadd.f32 0.0, %v2030
  %v2032 = vpop.f32.mrb[0].mxu0
  %v2033 = vadd.f32 0.0, %v2032
  %2034 = vmatprep.mubr.bf16.mxu0 0
  %2035 = vmatmul.mubr.bf16.gmra.mrb[0].mxu0 %v732
  %v2036 = vpop.f32.mrb[0].mxu0
  %v2037 = vadd.f32 0.0, %v2036
  %v2038 = vpop.f32.mrb[0].mxu0
  %v2039 = vadd.f32 0.0, %v2038
  %v2040 = vpop.f32.mrb[0].mxu0
  %v2041 = vadd.f32 0.0, %v2040
  %v2042 = vpop.f32.mrb[0].mxu0
  %v2043 = vadd.f32 0.0, %v2042
  %2044 = vmatprep.mubr.bf16.mxu0 0
  %2045 = vmatmul.mubr.bf16.gmra.mrb[0].mxu0 %v735
  %v2046 = vpop.f32.mrb[0].mxu0
  %v2047 = vadd.f32 0.0, %v2046
  %v2048 = vpop.f32.mrb[0].mxu0
  %v2049 = vadd.f32 0.0, %v2048
  %v2050 = vpop.f32.mrb[0].mxu0
  %v2051 = vadd.f32 0.0, %v2050
  %v2052 = vpop.f32.mrb[0].mxu0
  %v2053 = vadd.f32 0.0, %v2052
  %2054 = vmatprep.mubr.bf16.mxu0 0
  %2055 = vmatmul.mubr.bf16.gmra.mrb[0].mxu0 %v738
  %v2056 = vpop.f32.mrb[0].mxu0
  %v2057 = vadd.f32 0.0, %v2056
  %v2058 = vpop.f32.mrb[0].mxu0
  %v2059 = vadd.f32 0.0, %v2058
  %v2060 = vpop.f32.mrb[0].mxu0
  %v2061 = vadd.f32 0.0, %v2060
  %v2062 = vpop.f32.mrb[0].mxu0
  %v2063 = vadd.f32 0.0, %v2062
  %2064 = vmatprep.mubr.bf16.mxu0 0
  %2065 = vmatmul.mubr.bf16.gmra.mrb[0].mxu0 %v741
  %v2066 = vpop.f32.mrb[0].mxu0
  %v2067 = vadd.f32 0.0, %v2066
  %v2068 = vpop.f32.mrb[0].mxu0
  %v2069 = vadd.f32 0.0, %v2068
  %v2070 = vpop.f32.mrb[0].mxu0
  %v2071 = vadd.f32 0.0, %v2070
  %v2072 = vpop.f32.mrb[0].mxu0
  %v2073 = vadd.f32 0.0, %v2072
  %2074 = vmatprep.mubr.bf16.mxu0 0
  %2075 = vmatmul.mubr.bf16.gmra.mrb[0].mxu0 %v744
  %v2076 = vpop.f32.mrb[0].mxu0
  %v2077 = vadd.f32 0.0, %v2076
  %v2078 = vpop.f32.mrb[0].mxu0
  %v2079 = vadd.f32 0.0, %v2078
  %v2080 = vpop.f32.mrb[0].mxu0
  %v2081 = vadd.f32 0.0, %v2080
  %v2082 = vpop.f32.mrb[0].mxu0
  %v2083 = vadd.f32 0.0, %v2082
  %2084 = vmatprep.mubr.bf16.mxu0 0
  %2085 = vmatmul.mubr.bf16.gmra.mrb[0].mxu0 %v747
  %v2086 = vpop.f32.mrb[0].mxu0
  %v2087 = vadd.f32 0.0, %v2086
  %v2088 = vpop.f32.mrb[0].mxu0
  %v2089 = vadd.f32 0.0, %v2088
  %v2090 = vpop.f32.mrb[0].mxu0
  %v2091 = vadd.f32 0.0, %v2090
  %v2092 = vpop.f32.mrb[0].mxu0
  %v2093 = vadd.f32 0.0, %v2092
  %2094 = vdwg.mxu0
  %2095 = vst [vmem:[%s2] sm:$0xff] %v784
  %2096 = vst [vmem:[%s2 + $0x8] sm:$0xff] %v786
  %2097 = vst [vmem:[%s2 + $0x10] sm:$0xff] %v1457
  %2098 = vst [vmem:[%s2 + $0x18] sm:$0xff] %v1459
  %2099 = vst [vmem:[%s2 + $0x20] sm:$0xff] %v788
  %2100 = vst [vmem:[%s2 + $0x28] sm:$0xff] %v790
  %2101 = vst [vmem:[%s2 + $0x30] sm:$0xff] %v1461
  %2102 = vst [vmem:[%s2 + $0x38] sm:$0xff] %v1463
  %2103 = vst [vmem:[%s2 + $0x40] sm:$0xff] %v794
  %2104 = vst [vmem:[%s2 + $0x48] sm:$0xff] %v796
  %2105 = vst [vmem:[%s2 + $0x50] sm:$0xff] %v1467
  %2106 = vst [vmem:[%s2 + $0x58] sm:$0xff] %v1469
  %2107 = vst [vmem:[%s2 + $0x60] sm:$0xff] %v798
  %2108 = vst [vmem:[%s2 + $0x68] sm:$0xff] %v800
  %2109 = vst [vmem:[%s2 + $0x70] sm:$0xff] %v1471
  %2110 = vst [vmem:[%s2 + $0x78] sm:$0xff] %v1473
  %2111 = vst [vmem:[%s2 + $0x80] sm:$0xff] %v804
  %2112 = vst [vmem:[%s2 + $0x88] sm:$0xff] %v806
  %2113 = vst [vmem:[%s2 + $0x90] sm:$0xff] %v1477
  %2114 = vst [vmem:[%s2 + $0x98] sm:$0xff] %v1479
  %2115 = vst [vmem:[%s2 + $0xa0] sm:$0xff] %v808
  %2116 = vst [vmem:[%s2 + $0xa8] sm:$0xff] %v810
  %2117 = vst [vmem:[%s2 + $0xb0] sm:$0xff] %v1481
  %2118 = vst [vmem:[%s2 + $0xb8] sm:$0xff] %v1483
  %2119 = vst [vmem:[%s2 + $0xc0] sm:$0xff] %v814
  %2120 = vst [vmem:[%s2 + $0xc8] sm:$0xff] %v816
  %2121 = vst [vmem:[%s2 + $0xd0] sm:$0xff] %v1487
  %2122 = vst [vmem:[%s2 + $0xd8] sm:$0xff] %v1489
  %2123 = vst [vmem:[%s2 + $0xe0] sm:$0xff] %v818
  %2124 = vst [vmem:[%s2 + $0xe8] sm:$0xff] %v820
  %2125 = vst [vmem:[%s2 + $0xf0] sm:$0xff] %v1491
  %2126 = vst [vmem:[%s2 + $0xf8] sm:$0xff] %v1493
  %2127 = vst [vmem:[%s2 + $0x100] sm:$0xff] %v824
  %2128 = vst [vmem:[%s2 + $0x108] sm:$0xff] %v826
  %2129 = vst [vmem:[%s2 + $0x110] sm:$0xff] %v1497
  %2130 = vst [vmem:[%s2 + $0x118] sm:$0xff] %v1499
  %2131 = vst [vmem:[%s2 + $0x120] sm:$0xff] %v828
  %2132 = vst [vmem:[%s2 + $0x128] sm:$0xff] %v830
  %2133 = vst [vmem:[%s2 + $0x130] sm:$0xff] %v1501
  %2134 = vst [vmem:[%s2 + $0x138] sm:$0xff] %v1503
  %2135 = vst [vmem:[%s2 + $0x140] sm:$0xff] %v834
  %2136 = vst [vmem:[%s2 + $0x148] sm:$0xff] %v836
  %2137 = vst [vmem:[%s2 + $0x150] sm:$0xff] %v1507
  %2138 = vst [vmem:[%s2 + $0x158] sm:$0xff] %v1509
  %2139 = vst [vmem:[%s2 + $0x160] sm:$0xff] %v838
  %2140 = vst [vmem:[%s2 + $0x168] sm:$0xff] %v840
  %2141 = vst [vmem:[%s2 + $0x170] sm:$0xff] %v1511
  %2142 = vst [vmem:[%s2 + $0x178] sm:$0xff] %v1513
  %2143 = vst [vmem:[%s2 + $0x180] sm:$0xff] %v844
  %2144 = vst [vmem:[%s2 + $0x188] sm:$0xff] %v846
  %2145 = vst [vmem:[%s2 + $0x190] sm:$0xff] %v1517
  %2146 = vst [vmem:[%s2 + $0x198] sm:$0xff] %v1519
  %2147 = vst [vmem:[%s2 + $0x1a0] sm:$0xff] %v848
  %2148 = vst [vmem:[%s2 + $0x1a8] sm:$0xff] %v850
  %2149 = vst [vmem:[%s2 + $0x1b0] sm:$0xff] %v1521
  %2150 = vst [vmem:[%s2 + $0x1b8] sm:$0xff] %v1523
  %2151 = vst [vmem:[%s2 + $0x1c0] sm:$0xff] %v854
  %2152 = vst [vmem:[%s2 + $0x1c8] sm:$0xff] %v856
  %2153 = vst [vmem:[%s2 + $0x1d0] sm:$0xff] %v1527
  %2154 = vst [vmem:[%s2 + $0x1d8] sm:$0xff] %v1529
  %2155 = vst [vmem:[%s2 + $0x1e0] sm:$0xff] %v858
  %2156 = vst [vmem:[%s2 + $0x1e8] sm:$0xff] %v860
  %2157 = vst [vmem:[%s2 + $0x1f0] sm:$0xff] %v1531
  %2158 = vst [vmem:[%s2 + $0x1f8] sm:$0xff] %v1533
  %2159 = vst [vmem:[%s2 + $0x200] sm:$0xff] %v864
  %2160 = vst [vmem:[%s2 + $0x208] sm:$0xff] %v866
  %2161 = vst [vmem:[%s2 + $0x210] sm:$0xff] %v1537
  %2162 = vst [vmem:[%s2 + $0x218] sm:$0xff] %v1539
  %2163 = vst [vmem:[%s2 + $0x220] sm:$0xff] %v868
  %2164 = vst [vmem:[%s2 + $0x228] sm:$0xff] %v870
  %2165 = vst [vmem:[%s2 + $0x230] sm:$0xff] %v1541
  %2166 = vst [vmem:[%s2 + $0x238] sm:$0xff] %v1543
  %2167 = vst [vmem:[%s2 + $0x240] sm:$0xff] %v874
  %2168 = vst [vmem:[%s2 + $0x248] sm:$0xff] %v876
  %2169 = vst [vmem:[%s2 + $0x250] sm:$0xff] %v1547
  %2170 = vst [vmem:[%s2 + $0x258] sm:$0xff] %v1549
  %2171 = vst [vmem:[%s2 + $0x260] sm:$0xff] %v878
  %2172 = vst [vmem:[%s2 + $0x268] sm:$0xff] %v880
  %2173 = vst [vmem:[%s2 + $0x270] sm:$0xff] %v1551
  %2174 = vst [vmem:[%s2 + $0x278] sm:$0xff] %v1553
  %2175 = vst [vmem:[%s2 + $0x280] sm:$0xff] %v884
  %2176 = vst [vmem:[%s2 + $0x288] sm:$0xff] %v886
  %2177 = vst [vmem:[%s2 + $0x290] sm:$0xff] %v1557
  %2178 = vst [vmem:[%s2 + $0x298] sm:$0xff] %v1559
  %2179 = vst [vmem:[%s2 + $0x2a0] sm:$0xff] %v888
  %2180 = vst [vmem:[%s2 + $0x2a8] sm:$0xff] %v890
  %2181 = vst [vmem:[%s2 + $0x2b0] sm:$0xff] %v1561
  %2182 = vst [vmem:[%s2 + $0x2b8] sm:$0xff] %v1563
  %2183 = vst [vmem:[%s2 + $0x2c0] sm:$0xff] %v894
  %2184 = vst [vmem:[%s2 + $0x2c8] sm:$0xff] %v896
  %2185 = vst [vmem:[%s2 + $0x2d0] sm:$0xff] %v1567
  %2186 = vst [vmem:[%s2 + $0x2d8] sm:$0xff] %v1569
  %2187 = vst [vmem:[%s2 + $0x2e0] sm:$0xff] %v898
  %2188 = vst [vmem:[%s2 + $0x2e8] sm:$0xff] %v900
  %2189 = vst [vmem:[%s2 + $0x2f0] sm:$0xff] %v1571
  %2190 = vst [vmem:[%s2 + $0x2f8] sm:$0xff] %v1573
  %2191 = vst [vmem:[%s2 + $0x300] sm:$0xff] %v904
  %2192 = vst [vmem:[%s2 + $0x308] sm:$0xff] %v906
  %2193 = vst [vmem:[%s2 + $0x310] sm:$0xff] %v1577
  %2194 = vst [vmem:[%s2 + $0x318] sm:$0xff] %v1579
  %2195 = vst [vmem:[%s2 + $0x320] sm:$0xff] %v908
  %2196 = vst [vmem:[%s2 + $0x328] sm:$0xff] %v910
  %2197 = vst [vmem:[%s2 + $0x330] sm:$0xff] %v1581
  %2198 = vst [vmem:[%s2 + $0x338] sm:$0xff] %v1583
  %2199 = vst [vmem:[%s2 + $0x340] sm:$0xff] %v914
  %2200 = vst [vmem:[%s2 + $0x348] sm:$0xff] %v916
  %2201 = vst [vmem:[%s2 + $0x350] sm:$0xff] %v1587
  %2202 = vst [vmem:[%s2 + $0x358] sm:$0xff] %v1589
  %2203 = vst [vmem:[%s2 + $0x360] sm:$0xff] %v918
  %2204 = vst [vmem:[%s2 + $0x368] sm:$0xff] %v920
  %2205 = vst [vmem:[%s2 + $0x370] sm:$0xff] %v1591
  %2206 = vst [vmem:[%s2 + $0x378] sm:$0xff] %v1593
  %2207 = vst [vmem:[%s2 + $0x380] sm:$0xff] %v924
  %2208 = vst [vmem:[%s2 + $0x388] sm:$0xff] %v926
  %2209 = vst [vmem:[%s2 + $0x390] sm:$0xff] %v1597
  %2210 = vst [vmem:[%s2 + $0x398] sm:$0xff] %v1599
  %2211 = vst [vmem:[%s2 + $0x3a0] sm:$0xff] %v928
  %2212 = vst [vmem:[%s2 + $0x3a8] sm:$0xff] %v930
  %2213 = vst [vmem:[%s2 + $0x3b0] sm:$0xff] %v1601
  %2214 = vst [vmem:[%s2 + $0x3b8] sm:$0xff] %v1603
  %2215 = vst [vmem:[%s2 + $0x3c0] sm:$0xff] %v934
  %2216 = vst [vmem:[%s2 + $0x3c8] sm:$0xff] %v936
  %2217 = vst [vmem:[%s2 + $0x3d0] sm:$0xff] %v1607
  %2218 = vst [vmem:[%s2 + $0x3d8] sm:$0xff] %v1609
  %2219 = vst [vmem:[%s2 + $0x3e0] sm:$0xff] %v938
  %2220 = vst [vmem:[%s2 + $0x3e8] sm:$0xff] %v940
  %2221 = vst [vmem:[%s2 + $0x3f0] sm:$0xff] %v1611
  %2222 = vst [vmem:[%s2 + $0x3f8] sm:$0xff] %v1613
  %2223 = vst [vmem:[%s2 + $0x400] sm:$0xff] %v944
  %2224 = vst [vmem:[%s2 + $0x408] sm:$0xff] %v946
  %2225 = vst [vmem:[%s2 + $0x410] sm:$0xff] %v1617
  %2226 = vst [vmem:[%s2 + $0x418] sm:$0xff] %v1619
  %2227 = vst [vmem:[%s2 + $0x420] sm:$0xff] %v948
  %2228 = vst [vmem:[%s2 + $0x428] sm:$0xff] %v950
  %2229 = vst [vmem:[%s2 + $0x430] sm:$0xff] %v1621
  %2230 = vst [vmem:[%s2 + $0x438] sm:$0xff] %v1623
  %2231 = vst [vmem:[%s2 + $0x440] sm:$0xff] %v954
  %2232 = vst [vmem:[%s2 + $0x448] sm:$0xff] %v956
  %2233 = vst [vmem:[%s2 + $0x450] sm:$0xff] %v1627
  %2234 = vst [vmem:[%s2 + $0x458] sm:$0xff] %v1629
  %2235 = vst [vmem:[%s2 + $0x460] sm:$0xff] %v958
  %2236 = vst [vmem:[%s2 + $0x468] sm:$0xff] %v960
  %2237 = vst [vmem:[%s2 + $0x470] sm:$0xff] %v1631
  %2238 = vst [vmem:[%s2 + $0x478] sm:$0xff] %v1633
  %2239 = vst [vmem:[%s2 + $0x480] sm:$0xff] %v964
  %2240 = vst [vmem:[%s2 + $0x488] sm:$0xff] %v966
  %2241 = vst [vmem:[%s2 + $0x490] sm:$0xff] %v1637
  %2242 = vst [vmem:[%s2 + $0x498] sm:$0xff] %v1639
  %2243 = vst [vmem:[%s2 + $0x4a0] sm:$0xff] %v968
  %2244 = vst [vmem:[%s2 + $0x4a8] sm:$0xff] %v970
  %2245 = vst [vmem:[%s2 + $0x4b0] sm:$0xff] %v1641
  %2246 = vst [vmem:[%s2 + $0x4b8] sm:$0xff] %v1643
  %2247 = vst [vmem:[%s2 + $0x4c0] sm:$0xff] %v974
  %2248 = vst [vmem:[%s2 + $0x4c8] sm:$0xff] %v976
  %2249 = vst [vmem:[%s2 + $0x4d0] sm:$0xff] %v1647
  %2250 = vst [vmem:[%s2 + $0x4d8] sm:$0xff] %v1649
  %2251 = vst [vmem:[%s2 + $0x4e0] sm:$0xff] %v978
  %2252 = vst [vmem:[%s2 + $0x4e8] sm:$0xff] %v980
  %2253 = vst [vmem:[%s2 + $0x4f0] sm:$0xff] %v1651
  %2254 = vst [vmem:[%s2 + $0x4f8] sm:$0xff] %v1653
  %2255 = vst [vmem:[%s2 + $0x500] sm:$0xff] %v984
  %2256 = vst [vmem:[%s2 + $0x508] sm:$0xff] %v986
  %2257 = vst [vmem:[%s2 + $0x510] sm:$0xff] %v1657
  %2258 = vst [vmem:[%s2 + $0x518] sm:$0xff] %v1659
  %2259 = vst [vmem:[%s2 + $0x520] sm:$0xff] %v988
  %2260 = vst [vmem:[%s2 + $0x528] sm:$0xff] %v990
  %2261 = vst [vmem:[%s2 + $0x530] sm:$0xff] %v1661
  %2262 = vst [vmem:[%s2 + $0x538] sm:$0xff] %v1663
  %2263 = vst [vmem:[%s2 + $0x540] sm:$0xff] %v994
  %2264 = vst [vmem:[%s2 + $0x548] sm:$0xff] %v996
  %2265 = vst [vmem:[%s2 + $0x550] sm:$0xff] %v1667
  %2266 = vst [vmem:[%s2 + $0x558] sm:$0xff] %v1669
  %2267 = vst [vmem:[%s2 + $0x560] sm:$0xff] %v998
  %2268 = vst [vmem:[%s2 + $0x568] sm:$0xff] %v1000
  %2269 = vst [vmem:[%s2 + $0x570] sm:$0xff] %v1671
  %2270 = vst [vmem:[%s2 + $0x578] sm:$0xff] %v1673
  %2271 = vst [vmem:[%s2 + $0x580] sm:$0xff] %v1004
  %2272 = vst [vmem:[%s2 + $0x588] sm:$0xff] %v1006
  %2273 = vst [vmem:[%s2 + $0x590] sm:$0xff] %v1677
  %2274 = vst [vmem:[%s2 + $0x598] sm:$0xff] %v1679
  %2275 = vst [vmem:[%s2 + $0x5a0] sm:$0xff] %v1008
  %2276 = vst [vmem:[%s2 + $0x5a8] sm:$0xff] %v1010
  %2277 = vst [vmem:[%s2 + $0x5b0] sm:$0xff] %v1681
  %2278 = vst [vmem:[%s2 + $0x5b8] sm:$0xff] %v1683
  %2279 = vst [vmem:[%s2 + $0x5c0] sm:$0xff] %v1014
  %2280 = vst [vmem:[%s2 + $0x5c8] sm:$0xff] %v1016
  %2281 = vst [vmem:[%s2 + $0x5d0] sm:$0xff] %v1687
  %2282 = vst [vmem:[%s2 + $0x5d8] sm:$0xff] %v1689
  %2283 = vst [vmem:[%s2 + $0x5e0] sm:$0xff] %v1018
  %2284 = vst [vmem:[%s2 + $0x5e8] sm:$0xff] %v1020
  %2285 = vst [vmem:[%s2 + $0x5f0] sm:$0xff] %v1691
  %2286 = vst [vmem:[%s2 + $0x5f8] sm:$0xff] %v1693
  %2287 = vst [vmem:[%s2 + $0x600] sm:$0xff] %v1024
  %2288 = vst [vmem:[%s2 + $0x608] sm:$0xff] %v1026
  %2289 = vst [vmem:[%s2 + $0x610] sm:$0xff] %v1697
  %2290 = vst [vmem:[%s2 + $0x618] sm:$0xff] %v1699
  %2291 = vst [vmem:[%s2 + $0x620] sm:$0xff] %v1028
  %2292 = vst [vmem:[%s2 + $0x628] sm:$0xff] %v1030
  %2293 = vst [vmem:[%s2 + $0x630] sm:$0xff] %v1701
  %2294 = vst [vmem:[%s2 + $0x638] sm:$0xff] %v1703
  %2295 = vst [vmem:[%s2 + $0x640] sm:$0xff] %v1034
  %2296 = vst [vmem:[%s2 + $0x648] sm:$0xff] %v1036
  %2297 = vst [vmem:[%s2 + $0x650] sm:$0xff] %v1707
  %2298 = vst [vmem:[%s2 + $0x658] sm:$0xff] %v1709
  %2299 = vst [vmem:[%s2 + $0x660] sm:$0xff] %v1038
  %2300 = vst [vmem:[%s2 + $0x668] sm:$0xff] %v1040
  %2301 = vst [vmem:[%s2 + $0x670] sm:$0xff] %v1711
  %2302 = vst [vmem:[%s2 + $0x678] sm:$0xff] %v1713
  %2303 = vst [vmem:[%s2 + $0x680] sm:$0xff] %v1044
  %2304 = vst [vmem:[%s2 + $0x688] sm:$0xff] %v1046
  %2305 = vst [vmem:[%s2 + $0x690] sm:$0xff] %v1717
  %2306 = vst [vmem:[%s2 + $0x698] sm:$0xff] %v1719
  %2307 = vst [vmem:[%s2 + $0x6a0] sm:$0xff] %v1048
  %2308 = vst [vmem:[%s2 + $0x6a8] sm:$0xff] %v1050
  %2309 = vst [vmem:[%s2 + $0x6b0] sm:$0xff] %v1721
  %2310 = vst [vmem:[%s2 + $0x6b8] sm:$0xff] %v1723
  %2311 = vst [vmem:[%s2 + $0x6c0] sm:$0xff] %v1054
  %2312 = vst [vmem:[%s2 + $0x6c8] sm:$0xff] %v1056
  %2313 = vst [vmem:[%s2 + $0x6d0] sm:$0xff] %v1727
  %2314 = vst [vmem:[%s2 + $0x6d8] sm:$0xff] %v1729
  %2315 = vst [vmem:[%s2 + $0x6e0] sm:$0xff] %v1058
  %2316 = vst [vmem:[%s2 + $0x6e8] sm:$0xff] %v1060
  %2317 = vst [vmem:[%s2 + $0x6f0] sm:$0xff] %v1731
  %2318 = vst [vmem:[%s2 + $0x6f8] sm:$0xff] %v1733
  %2319 = vst [vmem:[%s2 + $0x700] sm:$0xff] %v1064
  %2320 = vst [vmem:[%s2 + $0x708] sm:$0xff] %v1066
  %2321 = vst [vmem:[%s2 + $0x710] sm:$0xff] %v1737
  %2322 = vst [vmem:[%s2 + $0x718] sm:$0xff] %v1739
  %2323 = vst [vmem:[%s2 + $0x720] sm:$0xff] %v1068
  %2324 = vst [vmem:[%s2 + $0x728] sm:$0xff] %v1070
  %2325 = vst [vmem:[%s2 + $0x730] sm:$0xff] %v1741
  %2326 = vst [vmem:[%s2 + $0x738] sm:$0xff] %v1743
  %2327 = vst [vmem:[%s2 + $0x740] sm:$0xff] %v1074
  %2328 = vst [vmem:[%s2 + $0x748] sm:$0xff] %v1076
  %2329 = vst [vmem:[%s2 + $0x750] sm:$0xff] %v1747
  %2330 = vst [vmem:[%s2 + $0x758] sm:$0xff] %v1749
  %2331 = vst [vmem:[%s2 + $0x760] sm:$0xff] %v1078
  %2332 = vst [vmem:[%s2 + $0x768] sm:$0xff] %v1080
  %2333 = vst [vmem:[%s2 + $0x770] sm:$0xff] %v1751
  %2334 = vst [vmem:[%s2 + $0x778] sm:$0xff] %v1753
  %2335 = vst [vmem:[%s2 + $0x780] sm:$0xff] %v1084
  %2336 = vst [vmem:[%s2 + $0x788] sm:$0xff] %v1086
  %2337 = vst [vmem:[%s2 + $0x790] sm:$0xff] %v1757
  %2338 = vst [vmem:[%s2 + $0x798] sm:$0xff] %v1759
  %2339 = vst [vmem:[%s2 + $0x7a0] sm:$0xff] %v1088
  %2340 = vst [vmem:[%s2 + $0x7a8] sm:$0xff] %v1090
  %2341 = vst [vmem:[%s2 + $0x7b0] sm:$0xff] %v1761
  %2342 = vst [vmem:[%s2 + $0x7b8] sm:$0xff] %v1763
  %2343 = vst [vmem:[%s2 + $0x7c0] sm:$0xff] %v1094
  %2344 = vst [vmem:[%s2 + $0x7c8] sm:$0xff] %v1096
  %2345 = vst [vmem:[%s2 + $0x7d0] sm:$0xff] %v1767
  %2346 = vst [vmem:[%s2 + $0x7d8] sm:$0xff] %v1769
  %2347 = vst [vmem:[%s2 + $0x7e0] sm:$0xff] %v1098
  %2348 = vst [vmem:[%s2 + $0x7e8] sm:$0xff] %v1100
  %2349 = vst [vmem:[%s2 + $0x7f0] sm:$0xff] %v1771
  %2350 = vst [vmem:[%s2 + $0x7f8] sm:$0xff] %v1773
  %2351 = vst [vmem:[%s2 + $0x800] sm:$0xff] %v1104
  %2352 = vst [vmem:[%s2 + $0x808] sm:$0xff] %v1106
  %2353 = vst [vmem:[%s2 + $0x810] sm:$0xff] %v1777
  %2354 = vst [vmem:[%s2 + $0x818] sm:$0xff] %v1779
  %2355 = vst [vmem:[%s2 + $0x820] sm:$0xff] %v1108
  %2356 = vst [vmem:[%s2 + $0x828] sm:$0xff] %v1110
  %2357 = vst [vmem:[%s2 + $0x830] sm:$0xff] %v1781
  %2358 = vst [vmem:[%s2 + $0x838] sm:$0xff] %v1783
  %2359 = vst [vmem:[%s2 + $0x840] sm:$0xff] %v1114
  %2360 = vst [vmem:[%s2 + $0x848] sm:$0xff] %v1116
  %2361 = vst [vmem:[%s2 + $0x850] sm:$0xff] %v1787
  %2362 = vst [vmem:[%s2 + $0x858] sm:$0xff] %v1789
  %2363 = vst [vmem:[%s2 + $0x860] sm:$0xff] %v1118
  %2364 = vst [vmem:[%s2 + $0x868] sm:$0xff] %v1120
  %2365 = vst [vmem:[%s2 + $0x870] sm:$0xff] %v1791
  %2366 = vst [vmem:[%s2 + $0x878] sm:$0xff] %v1793
  %2367 = vst [vmem:[%s2 + $0x880] sm:$0xff] %v1124
  %2368 = vst [vmem:[%s2 + $0x888] sm:$0xff] %v1126
  %2369 = vst [vmem:[%s2 + $0x890] sm:$0xff] %v1797
  %2370 = vst [vmem:[%s2 + $0x898] sm:$0xff] %v1799
  %2371 = vst [vmem:[%s2 + $0x8a0] sm:$0xff] %v1128
  %2372 = vst [vmem:[%s2 + $0x8a8] sm:$0xff] %v1130
  %2373 = vst [vmem:[%s2 + $0x8b0] sm:$0xff] %v1801
  %2374 = vst [vmem:[%s2 + $0x8b8] sm:$0xff] %v1803
  %2375 = vst [vmem:[%s2 + $0x8c0] sm:$0xff] %v1134
  %2376 = vst [vmem:[%s2 + $0x8c8] sm:$0xff] %v1136
  %2377 = vst [vmem:[%s2 + $0x8d0] sm:$0xff] %v1807
  %2378 = vst [vmem:[%s2 + $0x8d8] sm:$0xff] %v1809
  %2379 = vst [vmem:[%s2 + $0x8e0] sm:$0xff] %v1138
  %2380 = vst [vmem:[%s2 + $0x8e8] sm:$0xff] %v1140
  %2381 = vst [vmem:[%s2 + $0x8f0] sm:$0xff] %v1811
  %2382 = vst [vmem:[%s2 + $0x8f8] sm:$0xff] %v1813
  %2383 = vst [vmem:[%s2 + $0x900] sm:$0xff] %v1144
  %2384 = vst [vmem:[%s2 + $0x908] sm:$0xff] %v1146
  %2385 = vst [vmem:[%s2 + $0x910] sm:$0xff] %v1817
  %2386 = vst [vmem:[%s2 + $0x918] sm:$0xff] %v1819
  %2387 = vst [vmem:[%s2 + $0x920] sm:$0xff] %v1148
  %2388 = vst [vmem:[%s2 + $0x928] sm:$0xff] %v1150
  %2389 = vst [vmem:[%s2 + $0x930] sm:$0xff] %v1821
  %2390 = vst [vmem:[%s2 + $0x938] sm:$0xff] %v1823
  %2391 = vst [vmem:[%s2 + $0x940] sm:$0xff] %v1154
  %2392 = vst [vmem:[%s2 + $0x948] sm:$0xff] %v1156
  %2393 = vst [vmem:[%s2 + $0x950] sm:$0xff] %v1827
  %2394 = vst [vmem:[%s2 + $0x958] sm:$0xff] %v1829
  %2395 = vst [vmem:[%s2 + $0x960] sm:$0xff] %v1158
  %2396 = vst [vmem:[%s2 + $0x968] sm:$0xff] %v1160
  %2397 = vst [vmem:[%s2 + $0x970] sm:$0xff] %v1831
  %2398 = vst [vmem:[%s2 + $0x978] sm:$0xff] %v1833
  %2399 = vst [vmem:[%s2 + $0x980] sm:$0xff] %v1164
  %2400 = vst [vmem:[%s2 + $0x988] sm:$0xff] %v1166
  %2401 = vst [vmem:[%s2 + $0x990] sm:$0xff] %v1837
  %2402 = vst [vmem:[%s2 + $0x998] sm:$0xff] %v1839
  %2403 = vst [vmem:[%s2 + $0x9a0] sm:$0xff] %v1168
  %2404 = vst [vmem:[%s2 + $0x9a8] sm:$0xff] %v1170
  %2405 = vst [vmem:[%s2 + $0x9b0] sm:$0xff] %v1841
  %2406 = vst [vmem:[%s2 + $0x9b8] sm:$0xff] %v1843
  %2407 = vst [vmem:[%s2 + $0x9c0] sm:$0xff] %v1174
  %2408 = vst [vmem:[%s2 + $0x9c8] sm:$0xff] %v1176
  %2409 = vst [vmem:[%s2 + $0x9d0] sm:$0xff] %v1847
  %2410 = vst [vmem:[%s2 + $0x9d8] sm:$0xff] %v1849
  %2411 = vst [vmem:[%s2 + $0x9e0] sm:$0xff] %v1178
  %2412 = vst [vmem:[%s2 + $0x9e8] sm:$0xff] %v1180
  %2413 = vst [vmem:[%s2 + $0x9f0] sm:$0xff] %v1851
  %2414 = vst [vmem:[%s2 + $0x9f8] sm:$0xff] %v1853
  %2415 = vst [vmem:[%s2 + $0xa00] sm:$0xff] %v1184
  %2416 = vst [vmem:[%s2 + $0xa08] sm:$0xff] %v1186
  %2417 = vst [vmem:[%s2 + $0xa10] sm:$0xff] %v1857
  %2418 = vst [vmem:[%s2 + $0xa18] sm:$0xff] %v1859
  %2419 = vst [vmem:[%s2 + $0xa20] sm:$0xff] %v1188
  %2420 = vst [vmem:[%s2 + $0xa28] sm:$0xff] %v1190
  %2421 = vst [vmem:[%s2 + $0xa30] sm:$0xff] %v1861
  %2422 = vst [vmem:[%s2 + $0xa38] sm:$0xff] %v1863
  %2423 = vst [vmem:[%s2 + $0xa40] sm:$0xff] %v1194
  %2424 = vst [vmem:[%s2 + $0xa48] sm:$0xff] %v1196
  %2425 = vst [vmem:[%s2 + $0xa50] sm:$0xff] %v1867
  %2426 = vst [vmem:[%s2 + $0xa58] sm:$0xff] %v1869
  %2427 = vst [vmem:[%s2 + $0xa60] sm:$0xff] %v1198
  %2428 = vst [vmem:[%s2 + $0xa68] sm:$0xff] %v1200
  %2429 = vst [vmem:[%s2 + $0xa70] sm:$0xff] %v1871
  %2430 = vst [vmem:[%s2 + $0xa78] sm:$0xff] %v1873
  %2431 = vst [vmem:[%s2 + $0xa80] sm:$0xff] %v1204
  %2432 = vst [vmem:[%s2 + $0xa88] sm:$0xff] %v1206
  %2433 = vst [vmem:[%s2 + $0xa90] sm:$0xff] %v1877
  %2434 = vst [vmem:[%s2 + $0xa98] sm:$0xff] %v1879
  %2435 = vst [vmem:[%s2 + $0xaa0] sm:$0xff] %v1208
  %2436 = vst [vmem:[%s2 + $0xaa8] sm:$0xff] %v1210
  %2437 = vst [vmem:[%s2 + $0xab0] sm:$0xff] %v1881
  %2438 = vst [vmem:[%s2 + $0xab8] sm:$0xff] %v1883
  %2439 = vst [vmem:[%s2 + $0xac0] sm:$0xff] %v1214
  %2440 = vst [vmem:[%s2 + $0xac8] sm:$0xff] %v1216
  %2441 = vst [vmem:[%s2 + $0xad0] sm:$0xff] %v1887
  %2442 = vst [vmem:[%s2 + $0xad8] sm:$0xff] %v1889
  %2443 = vst [vmem:[%s2 + $0xae0] sm:$0xff] %v1218
  %2444 = vst [vmem:[%s2 + $0xae8] sm:$0xff] %v1220
  %2445 = vst [vmem:[%s2 + $0xaf0] sm:$0xff] %v1891
  %2446 = vst [vmem:[%s2 + $0xaf8] sm:$0xff] %v1893
  %2447 = vst [vmem:[%s2 + $0xb00] sm:$0xff] %v1224
  %2448 = vst [vmem:[%s2 + $0xb08] sm:$0xff] %v1226
  %2449 = vst [vmem:[%s2 + $0xb10] sm:$0xff] %v1897
  %2450 = vst [vmem:[%s2 + $0xb18] sm:$0xff] %v1899
  %2451 = vst [vmem:[%s2 + $0xb20] sm:$0xff] %v1228
  %2452 = vst [vmem:[%s2 + $0xb28] sm:$0xff] %v1230
  %2453 = vst [vmem:[%s2 + $0xb30] sm:$0xff] %v1901
  %2454 = vst [vmem:[%s2 + $0xb38] sm:$0xff] %v1903
  %2455 = vst [vmem:[%s2 + $0xb40] sm:$0xff] %v1234
  %2456 = vst [vmem:[%s2 + $0xb48] sm:$0xff] %v1236
  %2457 = vst [vmem:[%s2 + $0xb50] sm:$0xff] %v1907
  %2458 = vst [vmem:[%s2 + $0xb58] sm:$0xff] %v1909
  %2459 = vst [vmem:[%s2 + $0xb60] sm:$0xff] %v1238
  %2460 = vst [vmem:[%s2 + $0xb68] sm:$0xff] %v1240
  %2461 = vst [vmem:[%s2 + $0xb70] sm:$0xff] %v1911
  %2462 = vst [vmem:[%s2 + $0xb78] sm:$0xff] %v1913
  %2463 = vst [vmem:[%s2 + $0xb80] sm:$0xff] %v1244
  %2464 = vst [vmem:[%s2 + $0xb88] sm:$0xff] %v1246
  %2465 = vst [vmem:[%s2 + $0xb90] sm:$0xff] %v1917
  %2466 = vst [vmem:[%s2 + $0xb98] sm:$0xff] %v1919
  %2467 = vst [vmem:[%s2 + $0xba0] sm:$0xff] %v1248
  %2468 = vst [vmem:[%s2 + $0xba8] sm:$0xff] %v1250
  %2469 = vst [vmem:[%s2 + $0xbb0] sm:$0xff] %v1921
  %2470 = vst [vmem:[%s2 + $0xbb8] sm:$0xff] %v1923
  %2471 = vst [vmem:[%s2 + $0xbc0] sm:$0xff] %v1254
  %2472 = vst [vmem:[%s2 + $0xbc8] sm:$0xff] %v1256
  %2473 = vst [vmem:[%s2 + $0xbd0] sm:$0xff] %v1927
  %2474 = vst [vmem:[%s2 + $0xbd8] sm:$0xff] %v1929
  %2475 = vst [vmem:[%s2 + $0xbe0] sm:$0xff] %v1258
  %2476 = vst [vmem:[%s2 + $0xbe8] sm:$0xff] %v1260
  %2477 = vst [vmem:[%s2 + $0xbf0] sm:$0xff] %v1931
  %2478 = vst [vmem:[%s2 + $0xbf8] sm:$0xff] %v1933
  %2479 = vst [vmem:[%s2 + $0xc00] sm:$0xff] %v1264
  %2480 = vst [vmem:[%s2 + $0xc08] sm:$0xff] %v1266
  %2481 = vst [vmem:[%s2 + $0xc10] sm:$0xff] %v1937
  %2482 = vst [vmem:[%s2 + $0xc18] sm:$0xff] %v1939
  %2483 = vst [vmem:[%s2 + $0xc20] sm:$0xff] %v1268
  %2484 = vst [vmem:[%s2 + $0xc28] sm:$0xff] %v1270
  %2485 = vst [vmem:[%s2 + $0xc30] sm:$0xff] %v1941
  %2486 = vst [vmem:[%s2 + $0xc38] sm:$0xff] %v1943
  %2487 = vst [vmem:[%s2 + $0xc40] sm:$0xff] %v1274
  %2488 = vst [vmem:[%s2 + $0xc48] sm:$0xff] %v1276
  %2489 = vst [vmem:[%s2 + $0xc50] sm:$0xff] %v1947
  %2490 = vst [vmem:[%s2 + $0xc58] sm:$0xff] %v1949
  %2491 = vst [vmem:[%s2 + $0xc60] sm:$0xff] %v1278
  %2492 = vst [vmem:[%s2 + $0xc68] sm:$0xff] %v1280
  %2493 = vst [vmem:[%s2 + $0xc70] sm:$0xff] %v1951
  %2494 = vst [vmem:[%s2 + $0xc78] sm:$0xff] %v1953
  %2495 = vst [vmem:[%s2 + $0xc80] sm:$0xff] %v1284
  %2496 = vst [vmem:[%s2 + $0xc88] sm:$0xff] %v1286
  %2497 = vst [vmem:[%s2 + $0xc90] sm:$0xff] %v1957
  %2498 = vst [vmem:[%s2 + $0xc98] sm:$0xff] %v1959
  %2499 = vst [vmem:[%s2 + $0xca0] sm:$0xff] %v1288
  %2500 = vst [vmem:[%s2 + $0xca8] sm:$0xff] %v1290
  %2501 = vst [vmem:[%s2 + $0xcb0] sm:$0xff] %v1961
  %2502 = vst [vmem:[%s2 + $0xcb8] sm:$0xff] %v1963
  %2503 = vst [vmem:[%s2 + $0xcc0] sm:$0xff] %v1294
  %2504 = vst [vmem:[%s2 + $0xcc8] sm:$0xff] %v1296
  %2505 = vst [vmem:[%s2 + $0xcd0] sm:$0xff] %v1967
  %2506 = vst [vmem:[%s2 + $0xcd8] sm:$0xff] %v1969
  %2507 = vst [vmem:[%s2 + $0xce0] sm:$0xff] %v1298
  %2508 = vst [vmem:[%s2 + $0xce8] sm:$0xff] %v1300
  %2509 = vst [vmem:[%s2 + $0xcf0] sm:$0xff] %v1971
  %2510 = vst [vmem:[%s2 + $0xcf8] sm:$0xff] %v1973
  %2511 = vst [vmem:[%s2 + $0xd00] sm:$0xff] %v1304
  %2512 = vst [vmem:[%s2 + $0xd08] sm:$0xff] %v1306
  %2513 = vst [vmem:[%s2 + $0xd10] sm:$0xff] %v1977
  %2514 = vst [vmem:[%s2 + $0xd18] sm:$0xff] %v1979
  %2515 = vst [vmem:[%s2 + $0xd20] sm:$0xff] %v1308
  %2516 = vst [vmem:[%s2 + $0xd28] sm:$0xff] %v1310
  %2517 = vst [vmem:[%s2 + $0xd30] sm:$0xff] %v1981
  %2518 = vst [vmem:[%s2 + $0xd38] sm:$0xff] %v1983
  %2519 = vst [vmem:[%s2 + $0xd40] sm:$0xff] %v1314
  %2520 = vst [vmem:[%s2 + $0xd48] sm:$0xff] %v1316
  %2521 = vst [vmem:[%s2 + $0xd50] sm:$0xff] %v1987
  %2522 = vst [vmem:[%s2 + $0xd58] sm:$0xff] %v1989
  %2523 = vst [vmem:[%s2 + $0xd60] sm:$0xff] %v1318
  %2524 = vst [vmem:[%s2 + $0xd68] sm:$0xff] %v1320
  %2525 = vst [vmem:[%s2 + $0xd70] sm:$0xff] %v1991
  %2526 = vst [vmem:[%s2 + $0xd78] sm:$0xff] %v1993
  %2527 = vst [vmem:[%s2 + $0xd80] sm:$0xff] %v1324
  %2528 = vst [vmem:[%s2 + $0xd88] sm:$0xff] %v1326
  %2529 = vst [vmem:[%s2 + $0xd90] sm:$0xff] %v1997
  %2530 = vst [vmem:[%s2 + $0xd98] sm:$0xff] %v1999
  %2531 = vst [vmem:[%s2 + $0xda0] sm:$0xff] %v1328
  %2532 = vst [vmem:[%s2 + $0xda8] sm:$0xff] %v1330
  %2533 = vst [vmem:[%s2 + $0xdb0] sm:$0xff] %v2001
  %2534 = vst [vmem:[%s2 + $0xdb8] sm:$0xff] %v2003
  %2535 = vst [vmem:[%s2 + $0xdc0] sm:$0xff] %v1334
  %2536 = vst [vmem:[%s2 + $0xdc8] sm:$0xff] %v1336
  %2537 = vst [vmem:[%s2 + $0xdd0] sm:$0xff] %v2007
  %2538 = vst [vmem:[%s2 + $0xdd8] sm:$0xff] %v2009
  %2539 = vst [vmem:[%s2 + $0xde0] sm:$0xff] %v1338
  %2540 = vst [vmem:[%s2 + $0xde8] sm:$0xff] %v1340
  %2541 = vst [vmem:[%s2 + $0xdf0] sm:$0xff] %v2011
  %2542 = vst [vmem:[%s2 + $0xdf8] sm:$0xff] %v2013
  %2543 = vst [vmem:[%s2 + $0xe00] sm:$0xff] %v1344
  %2544 = vst [vmem:[%s2 + $0xe08] sm:$0xff] %v1346
  %2545 = vst [vmem:[%s2 + $0xe10] sm:$0xff] %v2017
  %2546 = vst [vmem:[%s2 + $0xe18] sm:$0xff] %v2019
  %2547 = vst [vmem:[%s2 + $0xe20] sm:$0xff] %v1348
  %2548 = vst [vmem:[%s2 + $0xe28] sm:$0xff] %v1350
  %2549 = vst [vmem:[%s2 + $0xe30] sm:$0xff] %v2021
  %2550 = vst [vmem:[%s2 + $0xe38] sm:$0xff] %v2023
  %2551 = vst [vmem:[%s2 + $0xe40] sm:$0xff] %v1354
  %2552 = vst [vmem:[%s2 + $0xe48] sm:$0xff] %v1356
  %2553 = vst [vmem:[%s2 + $0xe50] sm:$0xff] %v2027
  %2554 = vst [vmem:[%s2 + $0xe58] sm:$0xff] %v2029
  %2555 = vst [vmem:[%s2 + $0xe60] sm:$0xff] %v1358
  %2556 = vst [vmem:[%s2 + $0xe68] sm:$0xff] %v1360
  %2557 = vst [vmem:[%s2 + $0xe70] sm:$0xff] %v2031
  %2558 = vst [vmem:[%s2 + $0xe78] sm:$0xff] %v2033
  %2559 = vst [vmem:[%s2 + $0xe80] sm:$0xff] %v1364
  %2560 = vst [vmem:[%s2 + $0xe88] sm:$0xff] %v1366
  %2561 = vst [vmem:[%s2 + $0xe90] sm:$0xff] %v2037
  %2562 = vst [vmem:[%s2 + $0xe98] sm:$0xff] %v2039
  %2563 = vst [vmem:[%s2 + $0xea0] sm:$0xff] %v1368
  %2564 = vst [vmem:[%s2 + $0xea8] sm:$0xff] %v1370
  %2565 = vst [vmem:[%s2 + $0xeb0] sm:$0xff] %v2041
  %2566 = vst [vmem:[%s2 + $0xeb8] sm:$0xff] %v2043
  %2567 = vst [vmem:[%s2 + $0xec0] sm:$0xff] %v1374
  %2568 = vst [vmem:[%s2 + $0xec8] sm:$0xff] %v1376
  %2569 = vst [vmem:[%s2 + $0xed0] sm:$0xff] %v2047
  %2570 = vst [vmem:[%s2 + $0xed8] sm:$0xff] %v2049
  %2571 = vst [vmem:[%s2 + $0xee0] sm:$0xff] %v1378
  %2572 = vst [vmem:[%s2 + $0xee8] sm:$0xff] %v1380
  %2573 = vst [vmem:[%s2 + $0xef0] sm:$0xff] %v2051
  %2574 = vst [vmem:[%s2 + $0xef8] sm:$0xff] %v2053
  %2575 = vst [vmem:[%s2 + $0xf00] sm:$0xff] %v1384
  %2576 = vst [vmem:[%s2 + $0xf08] sm:$0xff] %v1386
  %2577 = vst [vmem:[%s2 + $0xf10] sm:$0xff] %v2057
  %2578 = vst [vmem:[%s2 + $0xf18] sm:$0xff] %v2059
  %2579 = vst [vmem:[%s2 + $0xf20] sm:$0xff] %v1388
  %2580 = vst [vmem:[%s2 + $0xf28] sm:$0xff] %v1390
  %2581 = vst [vmem:[%s2 + $0xf30] sm:$0xff] %v2061
  %2582 = vst [vmem:[%s2 + $0xf38] sm:$0xff] %v2063
  %2583 = vst [vmem:[%s2 + $0xf40] sm:$0xff] %v1394
  %2584 = vst [vmem:[%s2 + $0xf48] sm:$0xff] %v1396
  %2585 = vst [vmem:[%s2 + $0xf50] sm:$0xff] %v2067
  %2586 = vst [vmem:[%s2 + $0xf58] sm:$0xff] %v2069
  %2587 = vst [vmem:[%s2 + $0xf60] sm:$0xff] %v1398
  %2588 = vst [vmem:[%s2 + $0xf68] sm:$0xff] %v1400
  %2589 = vst [vmem:[%s2 + $0xf70] sm:$0xff] %v2071
  %2590 = vst [vmem:[%s2 + $0xf78] sm:$0xff] %v2073
  %2591 = vst [vmem:[%s2 + $0xf80] sm:$0xff] %v1404
  %2592 = vst [vmem:[%s2 + $0xf88] sm:$0xff] %v1406
  %2593 = vst [vmem:[%s2 + $0xf90] sm:$0xff] %v2077
  %2594 = vst [vmem:[%s2 + $0xf98] sm:$0xff] %v2079
  %2595 = vst [vmem:[%s2 + $0xfa0] sm:$0xff] %v1408
  %2596 = vst [vmem:[%s2 + $0xfa8] sm:$0xff] %v1410
  %2597 = vst [vmem:[%s2 + $0xfb0] sm:$0xff] %v2081
  %2598 = vst [vmem:[%s2 + $0xfb8] sm:$0xff] %v2083
  %2599 = vst [vmem:[%s2 + $0xfc0] sm:$0xff] %v1414
  %2600 = vst [vmem:[%s2 + $0xfc8] sm:$0xff] %v1416
  %2601 = vst [vmem:[%s2 + $0xfd0] sm:$0xff] %v2087
  %2602 = vst [vmem:[%s2 + $0xfd8] sm:$0xff] %v2089
  %2603 = vst [vmem:[%s2 + $0xfe0] sm:$0xff] %v1418
  %2604 = vst [vmem:[%s2 + $0xfe8] sm:$0xff] %v1420
  %2605 = vst [vmem:[%s2 + $0xff0] sm:$0xff] %v2091
  %2606 = vst [vmem:[%s2 + $0xff8] sm:$0xff] %v2093
  // Predicated region
  $region10: #{generator_forward.8} parent=0 // pred_check
    _
  $region11: #{generator_forward.8} parent=0 // pred_check_branch
    %2608 = sbr.rel (0) target = $region13
  $region12: #{generator_forward.8} parent=0 // pred_region
    _
  $region13: #{generator_forward.8} parent=0 // pred_fallthru
    _
  // Predicated region
  $region14: #{generator_forward.8} parent=0 // pred_check
    _
  $region15: #{generator_forward.8} parent=0 // pred_check_branch
    %2610 = sbr.rel (0) target = $region17
  $region16: #{generator_forward.8} parent=0 // pred_region
    _
  $region17: #{generator_forward.8} parent=0 // pred_fallthru
    _

// kernel: generator_forward.9
$region0: #{generator_forward.9}
  #allocation0 [shape = 'u32[]', space=smem, size = 0x4, offset = 0x4, fixed_abs, tag = 'smem constant byte address 0x4 - core index']
  #allocation1 [shape = 'u32[144,128]{1,0:T(1,128)}', space=vmem, size = 0x12000, scoped, tag = 'internal scratch']
  %s0 = inlined_call_operand.vmem [shape: bf16[16,32], index: 0, kind: input, shape index: {}]
  %s1 = inlined_call_operand.vmem [shape: bf16[32,4096], index: 1, kind: input, shape index: {}]
  %s2 = inlined_call_operand.vmem [shape: f32[16,4096], index: 2, kind: output, shape index: {}]
  %s3 = sld [smem:[#allocation0]]
  $region18: #{generator_forward.9} parent=0
    _
  %s5 = ssub.s32 1, %s3
  %s6 = scalar_select 0, %s5, %s3
  // Predicated region
  $region2: #{generator_forward.9} parent=0 // pred_check
    _
  $region3: #{generator_forward.9} parent=0 // pred_check_branch
    %8 = sbr.rel (0) target = $region5
  $region4: #{generator_forward.9} parent=0 // pred_region
    _
  $region5: #{generator_forward.9} parent=0 // pred_fallthru
    _
  // Predicated region
  $region6: #{generator_forward.9} parent=0 // pred_check
    _
  $region7: #{generator_forward.9} parent=0 // pred_check_branch
    %10 = sbr.rel (0) target = $region9
  $region8: #{generator_forward.9} parent=0 // pred_region
    _
  $region9: #{generator_forward.9} parent=0 // pred_fallthru
    _
  %v12 = vld [vmem:[%s0] sm:$0xf]
  %v13 = vld [vmem:[%s0 + $0x4] sm:$0xf]
  %v14 = vld [vmem:[%s1] sm:$0xff]
  %v15 = vld [vmem:[%s1 + $0x8] sm:$0xff]
  %v16 = vld [vmem:[%s1 + $0x10] sm:$0xff]
  %v17 = vld [vmem:[%s1 + $0x18] sm:$0xff]
  %v18 = vld [vmem:[%s1 + $0x20] sm:$0xff]
  %v19 = vld [vmem:[%s1 + $0x28] sm:$0xff]
  %v20 = vld [vmem:[%s1 + $0x30] sm:$0xff]
  %v21 = vld [vmem:[%s1 + $0x38] sm:$0xff]
  %v22 = vld [vmem:[%s1 + $0x40] sm:$0xff]
  %v23 = vld [vmem:[%s1 + $0x48] sm:$0xff]
  %v24 = vld [vmem:[%s1 + $0x50] sm:$0xff]
  %v25 = vld [vmem:[%s1 + $0x58] sm:$0xff]
  %v26 = vld [vmem:[%s1 + $0x60] sm:$0xff]
  %v27 = vld [vmem:[%s1 + $0x68] sm:$0xff]
  %v28 = vld [vmem:[%s1 + $0x70] sm:$0xff]
  %v29 = vld [vmem:[%s1 + $0x78] sm:$0xff]
  %v30 = vld [vmem:[%s1 + $0x80] sm:$0xff]
  %v31 = vld [vmem:[%s1 + $0x88] sm:$0xff]
  %v32 = vld [vmem:[%s1 + $0x90] sm:$0xff]
  %v33 = vld [vmem:[%s1 + $0x98] sm:$0xff]
  %v34 = vld [vmem:[%s1 + $0xa0] sm:$0xff]
  %v35 = vld [vmem:[%s1 + $0xa8] sm:$0xff]
  %v36 = vld [vmem:[%s1 + $0xb0] sm:$0xff]
  %v37 = vld [vmem:[%s1 + $0xb8] sm:$0xff]
  %v38 = vld [vmem:[%s1 + $0xc0] sm:$0xff]
  %v39 = vld [vmem:[%s1 + $0xc8] sm:$0xff]
  %v40 = vld [vmem:[%s1 + $0xd0] sm:$0xff]
  %v41 = vld [vmem:[%s1 + $0xd8] sm:$0xff]
  %v42 = vld [vmem:[%s1 + $0xe0] sm:$0xff]
  %v43 = vld [vmem:[%s1 + $0xe8] sm:$0xff]
  %v44 = vld [vmem:[%s1 + $0xf0] sm:$0xff]
  %v45 = vld [vmem:[%s1 + $0xf8] sm:$0xff]
  %v46 = vld [vmem:[%s1 + $0x100] sm:$0xff]
  %v47 = vld [vmem:[%s1 + $0x108] sm:$0xff]
  %v48 = vld [vmem:[%s1 + $0x110] sm:$0xff]
  %v49 = vld [vmem:[%s1 + $0x118] sm:$0xff]
  %v50 = vld [vmem:[%s1 + $0x120] sm:$0xff]
  %v51 = vld [vmem:[%s1 + $0x128] sm:$0xff]
  %v52 = vld [vmem:[%s1 + $0x130] sm:$0xff]
  %v53 = vld [vmem:[%s1 + $0x138] sm:$0xff]
  %v54 = vld [vmem:[%s1 + $0x140] sm:$0xff]
  %v55 = vld [vmem:[%s1 + $0x148] sm:$0xff]
  %v56 = vld [vmem:[%s1 + $0x150] sm:$0xff]
  %v57 = vld [vmem:[%s1 + $0x158] sm:$0xff]
  %v58 = vld [vmem:[%s1 + $0x160] sm:$0xff]
  %v59 = vld [vmem:[%s1 + $0x168] sm:$0xff]
  %v60 = vld [vmem:[%s1 + $0x170] sm:$0xff]
  %v61 = vld [vmem:[%s1 + $0x178] sm:$0xff]
  %v62 = vld [vmem:[%s1 + $0x180] sm:$0xff]
  %v63 = vld [vmem:[%s1 + $0x188] sm:$0xff]
  %v64 = vld [vmem:[%s1 + $0x190] sm:$0xff]
  %v65 = vld [vmem:[%s1 + $0x198] sm:$0xff]
  %v66 = vld [vmem:[%s1 + $0x1a0] sm:$0xff]
  %v67 = vld [vmem:[%s1 + $0x1a8] sm:$0xff]
  %v68 = vld [vmem:[%s1 + $0x1b0] sm:$0xff]
  %v69 = vld [vmem:[%s1 + $0x1b8] sm:$0xff]
  %v70 = vld [vmem:[%s1 + $0x1c0] sm:$0xff]
  %v71 = vld [vmem:[%s1 + $0x1c8] sm:$0xff]
  %v72 = vld [vmem:[%s1 + $0x1d0] sm:$0xff]
  %v73 = vld [vmem:[%s1 + $0x1d8] sm:$0xff]
  %v74 = vld [vmem:[%s1 + $0x1e0] sm:$0xff]
  %v75 = vld [vmem:[%s1 + $0x1e8] sm:$0xff]
  %v76 = vld [vmem:[%s1 + $0x1f0] sm:$0xff]
  %v77 = vld [vmem:[%s1 + $0x1f8] sm:$0xff]
  %v80 = vunpack.c.l.b16 %v12
  %v81 = vunpack.c.l.b16 %v13
  %v82 = vpack.c.b16 %v81, %v80
  %v147 = vunpack.c.l.b16 %v14
  %v148 = vunpack.c.h.b16 %v14
  %v149 = vunpack.c.l.b16 %v15
  %v150 = vunpack.c.h.b16 %v15
  %v151 = vunpack.c.l.b16 %v16
  %v152 = vunpack.c.h.b16 %v16
  %v153 = vunpack.c.l.b16 %v17
  %v154 = vunpack.c.h.b16 %v17
  %v155 = vunpack.c.l.b16 %v18
  %v156 = vunpack.c.h.b16 %v18
  %v157 = vunpack.c.l.b16 %v19
  %v158 = vunpack.c.h.b16 %v19
  %v159 = vunpack.c.l.b16 %v20
  %v160 = vunpack.c.h.b16 %v20
  %v161 = vunpack.c.l.b16 %v21
  %v162 = vunpack.c.h.b16 %v21
  %v163 = vunpack.c.l.b16 %v22
  %v164 = vunpack.c.h.b16 %v22
  %v165 = vunpack.c.l.b16 %v23
  %v166 = vunpack.c.h.b16 %v23
  %v167 = vunpack.c.l.b16 %v24
  %v168 = vunpack.c.h.b16 %v24
  %v169 = vunpack.c.l.b16 %v25
  %v170 = vunpack.c.h.b16 %v25
  %v171 = vunpack.c.l.b16 %v26
  %v172 = vunpack.c.h.b16 %v26
  %v173 = vunpack.c.l.b16 %v27
  %v174 = vunpack.c.h.b16 %v27
  %v175 = vunpack.c.l.b16 %v28
  %v176 = vunpack.c.h.b16 %v28
  %v177 = vunpack.c.l.b16 %v29
  %v178 = vunpack.c.h.b16 %v29
  %v179 = vunpack.c.l.b16 %v30
  %v180 = vunpack.c.h.b16 %v30
  %v181 = vunpack.c.l.b16 %v31
  %v182 = vunpack.c.h.b16 %v31
  %v183 = vunpack.c.l.b16 %v32
  %v184 = vunpack.c.h.b16 %v32
  %v185 = vunpack.c.l.b16 %v33
  %v186 = vunpack.c.h.b16 %v33
  %v187 = vunpack.c.l.b16 %v34
  %v188 = vunpack.c.h.b16 %v34
  %v189 = vunpack.c.l.b16 %v35
  %v190 = vunpack.c.h.b16 %v35
  %v191 = vunpack.c.l.b16 %v36
  %v192 = vunpack.c.h.b16 %v36
  %v193 = vunpack.c.l.b16 %v37
  %v194 = vunpack.c.h.b16 %v37
  %v195 = vunpack.c.l.b16 %v38
  %v196 = vunpack.c.h.b16 %v38
  %v197 = vunpack.c.l.b16 %v39
  %v198 = vunpack.c.h.b16 %v39
  %v199 = vunpack.c.l.b16 %v40
  %v200 = vunpack.c.h.b16 %v40
  %v201 = vunpack.c.l.b16 %v41
  %v202 = vunpack.c.h.b16 %v41
  %v203 = vunpack.c.l.b16 %v42
  %v204 = vunpack.c.h.b16 %v42
  %v205 = vunpack.c.l.b16 %v43
  %v206 = vunpack.c.h.b16 %v43
  %v207 = vunpack.c.l.b16 %v44
  %v208 = vunpack.c.h.b16 %v44
  %v209 = vunpack.c.l.b16 %v45
  %v210 = vunpack.c.h.b16 %v45
  %v211 = vunpack.c.l.b16 %v46
  %v212 = vunpack.c.h.b16 %v46
  %v213 = vunpack.c.l.b16 %v47
  %v214 = vunpack.c.h.b16 %v47
  %v215 = vunpack.c.l.b16 %v48
  %v216 = vunpack.c.h.b16 %v48
  %v217 = vunpack.c.l.b16 %v49
  %v218 = vunpack.c.h.b16 %v49
  %v219 = vunpack.c.l.b16 %v50
  %v220 = vunpack.c.h.b16 %v50
  %v221 = vunpack.c.l.b16 %v51
  %v222 = vunpack.c.h.b16 %v51
  %v223 = vunpack.c.l.b16 %v52
  %v224 = vunpack.c.h.b16 %v52
  %v225 = vunpack.c.l.b16 %v53
  %v226 = vunpack.c.h.b16 %v53
  %v227 = vunpack.c.l.b16 %v54
  %v228 = vunpack.c.h.b16 %v54
  %v229 = vunpack.c.l.b16 %v55
  %v230 = vunpack.c.h.b16 %v55
  %v231 = vunpack.c.l.b16 %v56
  %v232 = vunpack.c.h.b16 %v56
  %v233 = vunpack.c.l.b16 %v57
  %v234 = vunpack.c.h.b16 %v57
  %v235 = vunpack.c.l.b16 %v58
  %v236 = vunpack.c.h.b16 %v58
  %v237 = vunpack.c.l.b16 %v59
  %v238 = vunpack.c.h.b16 %v59
  %v239 = vunpack.c.l.b16 %v60
  %v240 = vunpack.c.h.b16 %v60
  %v241 = vunpack.c.l.b16 %v61
  %v242 = vunpack.c.h.b16 %v61
  %v243 = vunpack.c.l.b16 %v62
  %v244 = vunpack.c.h.b16 %v62
  %v245 = vunpack.c.l.b16 %v63
  %v246 = vunpack.c.h.b16 %v63
  %v247 = vunpack.c.l.b16 %v64
  %v248 = vunpack.c.h.b16 %v64
  %v249 = vunpack.c.l.b16 %v65
  %v250 = vunpack.c.h.b16 %v65
  %v251 = vunpack.c.l.b16 %v66
  %v252 = vunpack.c.h.b16 %v66
  %v253 = vunpack.c.l.b16 %v67
  %v254 = vunpack.c.h.b16 %v67
  %v255 = vunpack.c.l.b16 %v68
  %v256 = vunpack.c.h.b16 %v68
  %v257 = vunpack.c.l.b16 %v69
  %v258 = vunpack.c.h.b16 %v69
  %v259 = vunpack.c.l.b16 %v70
  %v260 = vunpack.c.h.b16 %v70
  %v261 = vunpack.c.l.b16 %v71
  %v262 = vunpack.c.h.b16 %v71
  %v263 = vunpack.c.l.b16 %v72
  %v264 = vunpack.c.h.b16 %v72
  %v265 = vunpack.c.l.b16 %v73
  %v266 = vunpack.c.h.b16 %v73
  %v267 = vunpack.c.l.b16 %v74
  %v268 = vunpack.c.h.b16 %v74
  %v269 = vunpack.c.l.b16 %v75
  %v270 = vunpack.c.h.b16 %v75
  %v271 = vunpack.c.l.b16 %v76
  %v272 = vunpack.c.h.b16 %v76
  %v273 = vunpack.c.l.b16 %v77
  %v274 = vunpack.c.h.b16 %v77
  %v275 = vpack.c.b16 %v179, %v147
  %v276 = vpack.c.b16 %v180, %v148
  %v277 = vpack.c.b16 %v181, %v149
  %v278 = vpack.c.b16 %v182, %v150
  %v279 = vpack.c.b16 %v183, %v151
  %v280 = vpack.c.b16 %v184, %v152
  %v281 = vpack.c.b16 %v185, %v153
  %v282 = vpack.c.b16 %v186, %v154
  %v283 = vpack.c.b16 %v187, %v155
  %v284 = vpack.c.b16 %v188, %v156
  %v285 = vpack.c.b16 %v189, %v157
  %v286 = vpack.c.b16 %v190, %v158
  %v287 = vpack.c.b16 %v191, %v159
  %v288 = vpack.c.b16 %v192, %v160
  %v289 = vpack.c.b16 %v193, %v161
  %v290 = vpack.c.b16 %v194, %v162
  %v291 = vpack.c.b16 %v195, %v163
  %v292 = vpack.c.b16 %v196, %v164
  %v293 = vpack.c.b16 %v197, %v165
  %v294 = vpack.c.b16 %v198, %v166
  %v295 = vpack.c.b16 %v199, %v167
  %v296 = vpack.c.b16 %v200, %v168
  %v297 = vpack.c.b16 %v201, %v169
  %v298 = vpack.c.b16 %v202, %v170
  %v299 = vpack.c.b16 %v203, %v171
  %v300 = vpack.c.b16 %v204, %v172
  %v301 = vpack.c.b16 %v205, %v173
  %v302 = vpack.c.b16 %v206, %v174
  %v303 = vpack.c.b16 %v207, %v175
  %v304 = vpack.c.b16 %v208, %v176
  %v305 = vpack.c.b16 %v209, %v177
  %v306 = vpack.c.b16 %v210, %v178
  %v307 = vpack.c.b16 %v243, %v211
  %v308 = vpack.c.b16 %v244, %v212
  %v309 = vpack.c.b16 %v245, %v213
  %v310 = vpack.c.b16 %v246, %v214
  %v311 = vpack.c.b16 %v247, %v215
  %v312 = vpack.c.b16 %v248, %v216
  %v313 = vpack.c.b16 %v249, %v217
  %v314 = vpack.c.b16 %v250, %v218
  %v315 = vpack.c.b16 %v251, %v219
  %v316 = vpack.c.b16 %v252, %v220
  %v317 = vpack.c.b16 %v253, %v221
  %v318 = vpack.c.b16 %v254, %v222
  %v319 = vpack.c.b16 %v255, %v223
  %v320 = vpack.c.b16 %v256, %v224
  %v321 = vpack.c.b16 %v257, %v225
  %v322 = vpack.c.b16 %v258, %v226
  %v323 = vpack.c.b16 %v259, %v227
  %v324 = vpack.c.b16 %v260, %v228
  %v325 = vpack.c.b16 %v261, %v229
  %v326 = vpack.c.b16 %v262, %v230
  %v327 = vpack.c.b16 %v263, %v231
  %v328 = vpack.c.b16 %v264, %v232
  %v329 = vpack.c.b16 %v265, %v233
  %v330 = vpack.c.b16 %v266, %v234
  %v331 = vpack.c.b16 %v267, %v235
  %v332 = vpack.c.b16 %v268, %v236
  %v333 = vpack.c.b16 %v269, %v237
  %v334 = vpack.c.b16 %v270, %v238
  %v335 = vpack.c.b16 %v271, %v239
  %v336 = vpack.c.b16 %v272, %v240
  %v337 = vpack.c.b16 %v273, %v241
  %v338 = vpack.c.b16 %v274, %v242
  %vm403 = vcmask 261120
  %v405 = vsel %vm403, %v82, 0
  %407 = vmatprep.subr.bf16.mxu0 %v276
  %408 = vmatpush1.bf16.msra.mxu0 %v275
  %409 = vmatprep.subr.bf16.mxu0 %v308
  %410 = vmatpush1.bf16.msra.mxu0 %v307
  %411 = vmatprep.subr.bf16.mxu0 0
  %412 = vmatpush1.bf16.msra.mxu0 0
  %413 = vmatprep.subr.bf16.mxu0 0
  %414 = vmatpush1.bf16.msra.mxu0 0
  %415 = vmatprep.subr.bf16.mxu0 0
  %416 = vmatpush1.bf16.msra.mxu0 0
  %417 = vmatprep.subr.bf16.mxu0 0
  %418 = vmatpush1.bf16.msra.mxu0 0
  %419 = vmatprep.subr.bf16.mxu0 0
  %420 = vmatpush1.bf16.msra.mxu0 0
  %421 = vmatprep.subr.bf16.mxu0 0
  %422 = vmatpush1.bf16.msra.mxu0 0
  %423 = vmatprep.subr.bf16.mxu0 0
  %424 = vmatpush1.bf16.msra.mxu0 0
  %425 = vmatprep.subr.bf16.mxu0 0
  %426 = vmatpush1.bf16.msra.mxu0 0
  %427 = vmatprep.subr.bf16.mxu0 0
  %428 = vmatpush1.bf16.msra.mxu0 0
  %429 = vmatprep.subr.bf16.mxu0 0
  %430 = vmatpush1.bf16.msra.mxu0 0
  %431 = vmatprep.subr.bf16.mxu0 0
  %432 = vmatpush1.bf16.msra.mxu0 0
  %433 = vmatprep.subr.bf16.mxu0 0
  %434 = vmatpush1.bf16.msra.mxu0 0
  %435 = vmatprep.subr.bf16.mxu0 0
  %436 = vmatpush1.bf16.msra.mxu0 0
  %437 = vmatprep.subr.bf16.mxu0 0
  %438 = vmatpush1.bf16.msra.mxu0 0
  %439 = vmatprep.mubr.bf16.mxu0 0
  %440 = vmatmul.mubr.bf16.gmra.mrb[0].mxu0 %v405
  %v441 = vpop.f32.mrb[0].mxu0
  %v442 = vadd.f32 0.0, %v441
  %v443 = vpop.f32.mrb[0].mxu0
  %v444 = vadd.f32 0.0, %v443
  %v445 = vpop.f32.mrb[0].mxu0
  %v446 = vadd.f32 0.0, %v445
  %v447 = vpop.f32.mrb[0].mxu0
  %v448 = vadd.f32 0.0, %v447
  %449 = vdwg.mxu0
  %450 = vmatprep.subr.bf16.mxu0 %v278
  %451 = vmatpush1.bf16.msra.mxu0 %v277
  %452 = vmatprep.subr.bf16.mxu0 %v310
  %453 = vmatpush1.bf16.msra.mxu0 %v309
  %454 = vmatprep.subr.bf16.mxu0 0
  %455 = vmatpush1.bf16.msra.mxu0 0
  %456 = vmatprep.subr.bf16.mxu0 0
  %457 = vmatpush1.bf16.msra.mxu0 0
  %458 = vmatprep.subr.bf16.mxu0 0
  %459 = vmatpush1.bf16.msra.mxu0 0
  %460 = vmatprep.subr.bf16.mxu0 0
  %461 = vmatpush1.bf16.msra.mxu0 0
  %462 = vmatprep.subr.bf16.mxu0 0
  %463 = vmatpush1.bf16.msra.mxu0 0
  %464 = vmatprep.subr.bf16.mxu0 0
  %465 = vmatpush1.bf16.msra.mxu0 0
  %466 = vmatprep.subr.bf16.mxu0 0
  %467 = vmatpush1.bf16.msra.mxu0 0
  %468 = vmatprep.subr.bf16.mxu0 0
  %469 = vmatpush1.bf16.msra.mxu0 0
  %470 = vmatprep.subr.bf16.mxu0 0
  %471 = vmatpush1.bf16.msra.mxu0 0
  %472 = vmatprep.subr.bf16.mxu0 0
  %473 = vmatpush1.bf16.msra.mxu0 0
  %474 = vmatprep.subr.bf16.mxu0 0
  %475 = vmatpush1.bf16.msra.mxu0 0
  %476 = vmatprep.subr.bf16.mxu0 0
  %477 = vmatpush1.bf16.msra.mxu0 0
  %478 = vmatprep.subr.bf16.mxu0 0
  %479 = vmatpush1.bf16.msra.mxu0 0
  %480 = vmatprep.subr.bf16.mxu0 0
  %481 = vmatpush1.bf16.msra.mxu0 0
  %482 = vmatprep.mubr.bf16.mxu0 0
  %483 = vmatmul.mubr.bf16.gmra.mrb[0].mxu0 %v405
  %v484 = vpop.f32.mrb[0].mxu0
  %v485 = vadd.f32 0.0, %v484
  %v486 = vpop.f32.mrb[0].mxu0
  %v487 = vadd.f32 0.0, %v486
  %v488 = vpop.f32.mrb[0].mxu0
  %v489 = vadd.f32 0.0, %v488
  %v490 = vpop.f32.mrb[0].mxu0
  %v491 = vadd.f32 0.0, %v490
  %492 = vdwg.mxu0
  %493 = vmatprep.subr.bf16.mxu0 %v280
  %494 = vmatpush1.bf16.msra.mxu0 %v279
  %495 = vmatprep.subr.bf16.mxu0 %v312
  %496 = vmatpush1.bf16.msra.mxu0 %v311
  %497 = vmatprep.subr.bf16.mxu0 0
  %498 = vmatpush1.bf16.msra.mxu0 0
  %499 = vmatprep.subr.bf16.mxu0 0
  %500 = vmatpush1.bf16.msra.mxu0 0
  %501 = vmatprep.subr.bf16.mxu0 0
  %502 = vmatpush1.bf16.msra.mxu0 0
  %503 = vmatprep.subr.bf16.mxu0 0
  %504 = vmatpush1.bf16.msra.mxu0 0
  %505 = vmatprep.subr.bf16.mxu0 0
  %506 = vmatpush1.bf16.msra.mxu0 0
  %507 = vmatprep.subr.bf16.mxu0 0
  %508 = vmatpush1.bf16.msra.mxu0 0
  %509 = vmatprep.subr.bf16.mxu0 0
  %510 = vmatpush1.bf16.msra.mxu0 0
  %511 = vmatprep.subr.bf16.mxu0 0
  %512 = vmatpush1.bf16.msra.mxu0 0
  %513 = vmatprep.subr.bf16.mxu0 0
  %514 = vmatpush1.bf16.msra.mxu0 0
  %515 = vmatprep.subr.bf16.mxu0 0
  %516 = vmatpush1.bf16.msra.mxu0 0
  %517 = vmatprep.subr.bf16.mxu0 0
  %518 = vmatpush1.bf16.msra.mxu0 0
  %519 = vmatprep.subr.bf16.mxu0 0
  %520 = vmatpush1.bf16.msra.mxu0 0
  %521 = vmatprep.subr.bf16.mxu0 0
  %522 = vmatpush1.bf16.msra.mxu0 0
  %523 = vmatprep.subr.bf16.mxu0 0
  %524 = vmatpush1.bf16.msra.mxu0 0
  %525 = vmatprep.mubr.bf16.mxu0 0
  %526 = vmatmul.mubr.bf16.gmra.mrb[0].mxu0 %v405
  %v527 = vpop.f32.mrb[0].mxu0
  %v528 = vadd.f32 0.0, %v527
  %v529 = vpop.f32.mrb[0].mxu0
  %v530 = vadd.f32 0.0, %v529
  %v531 = vpop.f32.mrb[0].mxu0
  %v532 = vadd.f32 0.0, %v531
  %v533 = vpop.f32.mrb[0].mxu0
  %v534 = vadd.f32 0.0, %v533
  %535 = vdwg.mxu0
  %536 = vmatprep.subr.bf16.mxu0 %v282
  %537 = vmatpush1.bf16.msra.mxu0 %v281
  %538 = vmatprep.subr.bf16.mxu0 %v314
  %539 = vmatpush1.bf16.msra.mxu0 %v313
  %540 = vmatprep.subr.bf16.mxu0 0
  %541 = vmatpush1.bf16.msra.mxu0 0
  %542 = vmatprep.subr.bf16.mxu0 0
  %543 = vmatpush1.bf16.msra.mxu0 0
  %544 = vmatprep.subr.bf16.mxu0 0
  %545 = vmatpush1.bf16.msra.mxu0 0
  %546 = vmatprep.subr.bf16.mxu0 0
  %547 = vmatpush1.bf16.msra.mxu0 0
  %548 = vmatprep.subr.bf16.mxu0 0
  %549 = vmatpush1.bf16.msra.mxu0 0
  %550 = vmatprep.subr.bf16.mxu0 0
  %551 = vmatpush1.bf16.msra.mxu0 0
  %552 = vmatprep.subr.bf16.mxu0 0
  %553 = vmatpush1.bf16.msra.mxu0 0
  %554 = vmatprep.subr.bf16.mxu0 0
  %555 = vmatpush1.bf16.msra.mxu0 0
  %556 = vmatprep.subr.bf16.mxu0 0
  %557 = vmatpush1.bf16.msra.mxu0 0
  %558 = vmatprep.subr.bf16.mxu0 0
  %559 = vmatpush1.bf16.msra.mxu0 0
  %560 = vmatprep.subr.bf16.mxu0 0
  %561 = vmatpush1.bf16.msra.mxu0 0
  %562 = vmatprep.subr.bf16.mxu0 0
  %563 = vmatpush1.bf16.msra.mxu0 0
  %564 = vmatprep.subr.bf16.mxu0 0
  %565 = vmatpush1.bf16.msra.mxu0 0
  %566 = vmatprep.subr.bf16.mxu0 0
  %567 = vmatpush1.bf16.msra.mxu0 0
  %568 = vmatprep.mubr.bf16.mxu0 0
  %569 = vmatmul.mubr.bf16.gmra.mrb[0].mxu0 %v405
  %v570 = vpop.f32.mrb[0].mxu0
  %v571 = vadd.f32 0.0, %v570
  %v572 = vpop.f32.mrb[0].mxu0
  %v573 = vadd.f32 0.0, %v572
  %v574 = vpop.f32.mrb[0].mxu0
  %v575 = vadd.f32 0.0, %v574
  %v576 = vpop.f32.mrb[0].mxu0
  %v577 = vadd.f32 0.0, %v576
  %578 = vdwg.mxu0
  %579 = vmatprep.subr.bf16.mxu0 %v284
  %580 = vmatpush1.bf16.msra.mxu0 %v283
  %581 = vmatprep.subr.bf16.mxu0 %v316
  %582 = vmatpush1.bf16.msra.mxu0 %v315
  %583 = vmatprep.subr.bf16.mxu0 0
  %584 = vmatpush1.bf16.msra.mxu0 0
  %585 = vmatprep.subr.bf16.mxu0 0
  %586 = vmatpush1.bf16.msra.mxu0 0
  %587 = vmatprep.subr.bf16.mxu0 0
  %588 = vmatpush1.bf16.msra.mxu0 0
  %589 = vmatprep.subr.bf16.mxu0 0
  %590 = vmatpush1.bf16.msra.mxu0 0
  %591 = vmatprep.subr.bf16.mxu0 0
  %592 = vmatpush1.bf16.msra.mxu0 0
  %593 = vmatprep.subr.bf16.mxu0 0
  %594 = vmatpush1.bf16.msra.mxu0 0
  %595 = vmatprep.subr.bf16.mxu0 0
  %596 = vmatpush1.bf16.msra.mxu0 0
  %597 = vmatprep.subr.bf16.mxu0 0
  %598 = vmatpush1.bf16.msra.mxu0 0
  %599 = vmatprep.subr.bf16.mxu0 0
  %600 = vmatpush1.bf16.msra.mxu0 0
  %601 = vmatprep.subr.bf16.mxu0 0
  %602 = vmatpush1.bf16.msra.mxu0 0
  %603 = vmatprep.subr.bf16.mxu0 0
  %604 = vmatpush1.bf16.msra.mxu0 0
  %605 = vmatprep.subr.bf16.mxu0 0
  %606 = vmatpush1.bf16.msra.mxu0 0
  %607 = vmatprep.subr.bf16.mxu0 0
  %608 = vmatpush1.bf16.msra.mxu0 0
  %609 = vmatprep.subr.bf16.mxu0 0
  %610 = vmatpush1.bf16.msra.mxu0 0
  %611 = vmatprep.mubr.bf16.mxu0 0
  %612 = vmatmul.mubr.bf16.gmra.mrb[0].mxu0 %v405
  %v613 = vpop.f32.mrb[0].mxu0
  %v614 = vadd.f32 0.0, %v613
  %v615 = vpop.f32.mrb[0].mxu0
  %v616 = vadd.f32 0.0, %v615
  %v617 = vpop.f32.mrb[0].mxu0
  %v618 = vadd.f32 0.0, %v617
  %v619 = vpop.f32.mrb[0].mxu0
  %v620 = vadd.f32 0.0, %v619
  %621 = vdwg.mxu0
  %622 = vmatprep.subr.bf16.mxu0 %v286
  %623 = vmatpush1.bf16.msra.mxu0 %v285
  %624 = vmatprep.subr.bf16.mxu0 %v318
  %625 = vmatpush1.bf16.msra.mxu0 %v317
  %626 = vmatprep.subr.bf16.mxu0 0
  %627 = vmatpush1.bf16.msra.mxu0 0
  %628 = vmatprep.subr.bf16.mxu0 0
  %629 = vmatpush1.bf16.msra.mxu0 0
  %630 = vmatprep.subr.bf16.mxu0 0
  %631 = vmatpush1.bf16.msra.mxu0 0
  %632 = vmatprep.subr.bf16.mxu0 0
  %633 = vmatpush1.bf16.msra.mxu0 0
  %634 = vmatprep.subr.bf16.mxu0 0
  %635 = vmatpush1.bf16.msra.mxu0 0
  %636 = vmatprep.subr.bf16.mxu0 0
  %637 = vmatpush1.bf16.msra.mxu0 0
  %638 = vmatprep.subr.bf16.mxu0 0
  %639 = vmatpush1.bf16.msra.mxu0 0
  %640 = vmatprep.subr.bf16.mxu0 0
  %641 = vmatpush1.bf16.msra.mxu0 0
  %642 = vmatprep.subr.bf16.mxu0 0
  %643 = vmatpush1.bf16.msra.mxu0 0
  %644 = vmatprep.subr.bf16.mxu0 0
  %645 = vmatpush1.bf16.msra.mxu0 0
  %646 = vmatprep.subr.bf16.mxu0 0
  %647 = vmatpush1.bf16.msra.mxu0 0
  %648 = vmatprep.subr.bf16.mxu0 0
  %649 = vmatpush1.bf16.msra.mxu0 0
  %650 = vmatprep.subr.bf16.mxu0 0
  %651 = vmatpush1.bf16.msra.mxu0 0
  %652 = vmatprep.subr.bf16.mxu0 0
  %653 = vmatpush1.bf16.msra.mxu0 0
  %654 = vmatprep.mubr.bf16.mxu0 0
  %655 = vmatmul.mubr.bf16.gmra.mrb[0].mxu0 %v405
  %v656 = vpop.f32.mrb[0].mxu0
  %v657 = vadd.f32 0.0, %v656
  %v658 = vpop.f32.mrb[0].mxu0
  %v659 = vadd.f32 0.0, %v658
  %v660 = vpop.f32.mrb[0].mxu0
  %v661 = vadd.f32 0.0, %v660
  %v662 = vpop.f32.mrb[0].mxu0
  %v663 = vadd.f32 0.0, %v662
  %664 = vdwg.mxu0
  %665 = vmatprep.subr.bf16.mxu0 %v288
  %666 = vmatpush1.bf16.msra.mxu0 %v287
  %667 = vmatprep.subr.bf16.mxu0 %v320
  %668 = vmatpush1.bf16.msra.mxu0 %v319
  %669 = vmatprep.subr.bf16.mxu0 0
  %670 = vmatpush1.bf16.msra.mxu0 0
  %671 = vmatprep.subr.bf16.mxu0 0
  %672 = vmatpush1.bf16.msra.mxu0 0
  %673 = vmatprep.subr.bf16.mxu0 0
  %674 = vmatpush1.bf16.msra.mxu0 0
  %675 = vmatprep.subr.bf16.mxu0 0
  %676 = vmatpush1.bf16.msra.mxu0 0
  %677 = vmatprep.subr.bf16.mxu0 0
  %678 = vmatpush1.bf16.msra.mxu0 0
  %679 = vmatprep.subr.bf16.mxu0 0
  %680 = vmatpush1.bf16.msra.mxu0 0
  %681 = vmatprep.subr.bf16.mxu0 0
  %682 = vmatpush1.bf16.msra.mxu0 0
  %683 = vmatprep.subr.bf16.mxu0 0
  %684 = vmatpush1.bf16.msra.mxu0 0
  %685 = vmatprep.subr.bf16.mxu0 0
  %686 = vmatpush1.bf16.msra.mxu0 0
  %687 = vmatprep.subr.bf16.mxu0 0
  %688 = vmatpush1.bf16.msra.mxu0 0
  %689 = vmatprep.subr.bf16.mxu0 0
  %690 = vmatpush1.bf16.msra.mxu0 0
  %691 = vmatprep.subr.bf16.mxu0 0
  %692 = vmatpush1.bf16.msra.mxu0 0
  %693 = vmatprep.subr.bf16.mxu0 0
  %694 = vmatpush1.bf16.msra.mxu0 0
  %695 = vmatprep.subr.bf16.mxu0 0
  %696 = vmatpush1.bf16.msra.mxu0 0
  %697 = vmatprep.mubr.bf16.mxu0 0
  %698 = vmatmul.mubr.bf16.gmra.mrb[0].mxu0 %v405
  %v699 = vpop.f32.mrb[0].mxu0
  %v700 = vadd.f32 0.0, %v699
  %v701 = vpop.f32.mrb[0].mxu0
  %v702 = vadd.f32 0.0, %v701
  %v703 = vpop.f32.mrb[0].mxu0
  %v704 = vadd.f32 0.0, %v703
  %v705 = vpop.f32.mrb[0].mxu0
  %v706 = vadd.f32 0.0, %v705
  %707 = vdwg.mxu0
  %708 = vmatprep.subr.bf16.mxu0 %v290
  %709 = vmatpush1.bf16.msra.mxu0 %v289
  %710 = vmatprep.subr.bf16.mxu0 %v322
  %711 = vmatpush1.bf16.msra.mxu0 %v321
  %712 = vmatprep.subr.bf16.mxu0 0
  %713 = vmatpush1.bf16.msra.mxu0 0
  %714 = vmatprep.subr.bf16.mxu0 0
  %715 = vmatpush1.bf16.msra.mxu0 0
  %716 = vmatprep.subr.bf16.mxu0 0
  %717 = vmatpush1.bf16.msra.mxu0 0
  %718 = vmatprep.subr.bf16.mxu0 0
  %719 = vmatpush1.bf16.msra.mxu0 0
  %720 = vmatprep.subr.bf16.mxu0 0
  %721 = vmatpush1.bf16.msra.mxu0 0
  %722 = vmatprep.subr.bf16.mxu0 0
  %723 = vmatpush1.bf16.msra.mxu0 0
  %724 = vmatprep.subr.bf16.mxu0 0
  %725 = vmatpush1.bf16.msra.mxu0 0
  %726 = vmatprep.subr.bf16.mxu0 0
  %727 = vmatpush1.bf16.msra.mxu0 0
  %728 = vmatprep.subr.bf16.mxu0 0
  %729 = vmatpush1.bf16.msra.mxu0 0
  %730 = vmatprep.subr.bf16.mxu0 0
  %731 = vmatpush1.bf16.msra.mxu0 0
  %732 = vmatprep.subr.bf16.mxu0 0
  %733 = vmatpush1.bf16.msra.mxu0 0
  %734 = vmatprep.subr.bf16.mxu0 0
  %735 = vmatpush1.bf16.msra.mxu0 0
  %736 = vmatprep.subr.bf16.mxu0 0
  %737 = vmatpush1.bf16.msra.mxu0 0
  %738 = vmatprep.subr.bf16.mxu0 0
  %739 = vmatpush1.bf16.msra.mxu0 0
  %740 = vmatprep.mubr.bf16.mxu0 0
  %741 = vmatmul.mubr.bf16.gmra.mrb[0].mxu0 %v405
  %v742 = vpop.f32.mrb[0].mxu0
  %v743 = vadd.f32 0.0, %v742
  %v744 = vpop.f32.mrb[0].mxu0
  %v745 = vadd.f32 0.0, %v744
  %v746 = vpop.f32.mrb[0].mxu0
  %v747 = vadd.f32 0.0, %v746
  %v748 = vpop.f32.mrb[0].mxu0
  %v749 = vadd.f32 0.0, %v748
  %750 = vdwg.mxu0
  %751 = vmatprep.subr.bf16.mxu0 %v292
  %752 = vmatpush1.bf16.msra.mxu0 %v291
  %753 = vmatprep.subr.bf16.mxu0 %v324
  %754 = vmatpush1.bf16.msra.mxu0 %v323
  %755 = vmatprep.subr.bf16.mxu0 0
  %756 = vmatpush1.bf16.msra.mxu0 0
  %757 = vmatprep.subr.bf16.mxu0 0
  %758 = vmatpush1.bf16.msra.mxu0 0
  %759 = vmatprep.subr.bf16.mxu0 0
  %760 = vmatpush1.bf16.msra.mxu0 0
  %761 = vmatprep.subr.bf16.mxu0 0
  %762 = vmatpush1.bf16.msra.mxu0 0
  %763 = vmatprep.subr.bf16.mxu0 0
  %764 = vmatpush1.bf16.msra.mxu0 0
  %765 = vmatprep.subr.bf16.mxu0 0
  %766 = vmatpush1.bf16.msra.mxu0 0
  %767 = vmatprep.subr.bf16.mxu0 0
  %768 = vmatpush1.bf16.msra.mxu0 0
  %769 = vmatprep.subr.bf16.mxu0 0
  %770 = vmatpush1.bf16.msra.mxu0 0
  %771 = vmatprep.subr.bf16.mxu0 0
  %772 = vmatpush1.bf16.msra.mxu0 0
  %773 = vmatprep.subr.bf16.mxu0 0
  %774 = vmatpush1.bf16.msra.mxu0 0
  %775 = vmatprep.subr.bf16.mxu0 0
  %776 = vmatpush1.bf16.msra.mxu0 0
  %777 = vmatprep.subr.bf16.mxu0 0
  %778 = vmatpush1.bf16.msra.mxu0 0
  %779 = vmatprep.subr.bf16.mxu0 0
  %780 = vmatpush1.bf16.msra.mxu0 0
  %781 = vmatprep.subr.bf16.mxu0 0
  %782 = vmatpush1.bf16.msra.mxu0 0
  %783 = vmatprep.mubr.bf16.mxu0 0
  %784 = vmatmul.mubr.bf16.gmra.mrb[0].mxu0 %v405
  %v785 = vpop.f32.mrb[0].mxu0
  %v786 = vadd.f32 0.0, %v785
  %v787 = vpop.f32.mrb[0].mxu0
  %v788 = vadd.f32 0.0, %v787
  %v789 = vpop.f32.mrb[0].mxu0
  %v790 = vadd.f32 0.0, %v789
  %v791 = vpop.f32.mrb[0].mxu0
  %v792 = vadd.f32 0.0, %v791
  %793 = vdwg.mxu0
  %794 = vmatprep.subr.bf16.mxu0 %v294
  %795 = vmatpush1.bf16.msra.mxu0 %v293
  %796 = vmatprep.subr.bf16.mxu0 %v326
  %797 = vmatpush1.bf16.msra.mxu0 %v325
  %798 = vmatprep.subr.bf16.mxu0 0
  %799 = vmatpush1.bf16.msra.mxu0 0
  %800 = vmatprep.subr.bf16.mxu0 0
  %801 = vmatpush1.bf16.msra.mxu0 0
  %802 = vmatprep.subr.bf16.mxu0 0
  %803 = vmatpush1.bf16.msra.mxu0 0
  %804 = vmatprep.subr.bf16.mxu0 0
  %805 = vmatpush1.bf16.msra.mxu0 0
  %806 = vmatprep.subr.bf16.mxu0 0
  %807 = vmatpush1.bf16.msra.mxu0 0
  %808 = vmatprep.subr.bf16.mxu0 0
  %809 = vmatpush1.bf16.msra.mxu0 0
  %810 = vmatprep.subr.bf16.mxu0 0
  %811 = vmatpush1.bf16.msra.mxu0 0
  %812 = vmatprep.subr.bf16.mxu0 0
  %813 = vmatpush1.bf16.msra.mxu0 0
  %814 = vmatprep.subr.bf16.mxu0 0
  %815 = vmatpush1.bf16.msra.mxu0 0
  %816 = vmatprep.subr.bf16.mxu0 0
  %817 = vmatpush1.bf16.msra.mxu0 0
  %818 = vmatprep.subr.bf16.mxu0 0
  %819 = vmatpush1.bf16.msra.mxu0 0
  %820 = vmatprep.subr.bf16.mxu0 0
  %821 = vmatpush1.bf16.msra.mxu0 0
  %822 = vmatprep.subr.bf16.mxu0 0
  %823 = vmatpush1.bf16.msra.mxu0 0
  %824 = vmatprep.subr.bf16.mxu0 0
  %825 = vmatpush1.bf16.msra.mxu0 0
  %826 = vmatprep.mubr.bf16.mxu0 0
  %827 = vmatmul.mubr.bf16.gmra.mrb[0].mxu0 %v405
  %v828 = vpop.f32.mrb[0].mxu0
  %v829 = vadd.f32 0.0, %v828
  %v830 = vpop.f32.mrb[0].mxu0
  %v831 = vadd.f32 0.0, %v830
  %v832 = vpop.f32.mrb[0].mxu0
  %v833 = vadd.f32 0.0, %v832
  %v834 = vpop.f32.mrb[0].mxu0
  %v835 = vadd.f32 0.0, %v834
  %836 = vdwg.mxu0
  %837 = vmatprep.subr.bf16.mxu0 %v296
  %838 = vmatpush1.bf16.msra.mxu0 %v295
  %839 = vmatprep.subr.bf16.mxu0 %v328
  %840 = vmatpush1.bf16.msra.mxu0 %v327
  %841 = vmatprep.subr.bf16.mxu0 0
  %842 = vmatpush1.bf16.msra.mxu0 0
  %843 = vmatprep.subr.bf16.mxu0 0
  %844 = vmatpush1.bf16.msra.mxu0 0
  %845 = vmatprep.subr.bf16.mxu0 0
  %846 = vmatpush1.bf16.msra.mxu0 0
  %847 = vmatprep.subr.bf16.mxu0 0
  %848 = vmatpush1.bf16.msra.mxu0 0
  %849 = vmatprep.subr.bf16.mxu0 0
  %850 = vmatpush1.bf16.msra.mxu0 0
  %851 = vmatprep.subr.bf16.mxu0 0
  %852 = vmatpush1.bf16.msra.mxu0 0
  %853 = vmatprep.subr.bf16.mxu0 0
  %854 = vmatpush1.bf16.msra.mxu0 0
  %855 = vmatprep.subr.bf16.mxu0 0
  %856 = vmatpush1.bf16.msra.mxu0 0
  %857 = vmatprep.subr.bf16.mxu0 0
  %858 = vmatpush1.bf16.msra.mxu0 0
  %859 = vmatprep.subr.bf16.mxu0 0
  %860 = vmatpush1.bf16.msra.mxu0 0
  %861 = vmatprep.subr.bf16.mxu0 0
  %862 = vmatpush1.bf16.msra.mxu0 0
  %863 = vmatprep.subr.bf16.mxu0 0
  %864 = vmatpush1.bf16.msra.mxu0 0
  %865 = vmatprep.subr.bf16.mxu0 0
  %866 = vmatpush1.bf16.msra.mxu0 0
  %867 = vmatprep.subr.bf16.mxu0 0
  %868 = vmatpush1.bf16.msra.mxu0 0
  %869 = vmatprep.mubr.bf16.mxu0 0
  %870 = vmatmul.mubr.bf16.gmra.mrb[0].mxu0 %v405
  %v871 = vpop.f32.mrb[0].mxu0
  %v872 = vadd.f32 0.0, %v871
  %v873 = vpop.f32.mrb[0].mxu0
  %v874 = vadd.f32 0.0, %v873
  %v875 = vpop.f32.mrb[0].mxu0
  %v876 = vadd.f32 0.0, %v875
  %v877 = vpop.f32.mrb[0].mxu0
  %v878 = vadd.f32 0.0, %v877
  %879 = vdwg.mxu0
  %880 = vmatprep.subr.bf16.mxu0 %v298
  %881 = vmatpush1.bf16.msra.mxu0 %v297
  %882 = vmatprep.subr.bf16.mxu0 %v330
  %883 = vmatpush1.bf16.msra.mxu0 %v329
  %884 = vmatprep.subr.bf16.mxu0 0
  %885 = vmatpush1.bf16.msra.mxu0 0
  %886 = vmatprep.subr.bf16.mxu0 0
  %887 = vmatpush1.bf16.msra.mxu0 0
  %888 = vmatprep.subr.bf16.mxu0 0
  %889 = vmatpush1.bf16.msra.mxu0 0
  %890 = vmatprep.subr.bf16.mxu0 0
  %891 = vmatpush1.bf16.msra.mxu0 0
  %892 = vmatprep.subr.bf16.mxu0 0
  %893 = vmatpush1.bf16.msra.mxu0 0
  %894 = vmatprep.subr.bf16.mxu0 0
  %895 = vmatpush1.bf16.msra.mxu0 0
  %896 = vmatprep.subr.bf16.mxu0 0
  %897 = vmatpush1.bf16.msra.mxu0 0
  %898 = vmatprep.subr.bf16.mxu0 0
  %899 = vmatpush1.bf16.msra.mxu0 0
  %900 = vmatprep.subr.bf16.mxu0 0
  %901 = vmatpush1.bf16.msra.mxu0 0
  %902 = vmatprep.subr.bf16.mxu0 0
  %903 = vmatpush1.bf16.msra.mxu0 0
  %904 = vmatprep.subr.bf16.mxu0 0
  %905 = vmatpush1.bf16.msra.mxu0 0
  %906 = vmatprep.subr.bf16.mxu0 0
  %907 = vmatpush1.bf16.msra.mxu0 0
  %908 = vmatprep.subr.bf16.mxu0 0
  %909 = vmatpush1.bf16.msra.mxu0 0
  %910 = vmatprep.subr.bf16.mxu0 0
  %911 = vmatpush1.bf16.msra.mxu0 0
  %912 = vmatprep.mubr.bf16.mxu0 0
  %913 = vmatmul.mubr.bf16.gmra.mrb[0].mxu0 %v405
  %v914 = vpop.f32.mrb[0].mxu0
  %v915 = vadd.f32 0.0, %v914
  %v916 = vpop.f32.mrb[0].mxu0
  %v917 = vadd.f32 0.0, %v916
  %v918 = vpop.f32.mrb[0].mxu0
  %v919 = vadd.f32 0.0, %v918
  %v920 = vpop.f32.mrb[0].mxu0
  %v921 = vadd.f32 0.0, %v920
  %922 = vdwg.mxu0
  %923 = vmatprep.subr.bf16.mxu0 %v300
  %924 = vmatpush1.bf16.msra.mxu0 %v299
  %925 = vmatprep.subr.bf16.mxu0 %v332
  %926 = vmatpush1.bf16.msra.mxu0 %v331
  %927 = vmatprep.subr.bf16.mxu0 0
  %928 = vmatpush1.bf16.msra.mxu0 0
  %929 = vmatprep.subr.bf16.mxu0 0
  %930 = vmatpush1.bf16.msra.mxu0 0
  %931 = vmatprep.subr.bf16.mxu0 0
  %932 = vmatpush1.bf16.msra.mxu0 0
  %933 = vmatprep.subr.bf16.mxu0 0
  %934 = vmatpush1.bf16.msra.mxu0 0
  %935 = vmatprep.subr.bf16.mxu0 0
  %936 = vmatpush1.bf16.msra.mxu0 0
  %937 = vmatprep.subr.bf16.mxu0 0
  %938 = vmatpush1.bf16.msra.mxu0 0
  %939 = vmatprep.subr.bf16.mxu0 0
  %940 = vmatpush1.bf16.msra.mxu0 0
  %941 = vmatprep.subr.bf16.mxu0 0
  %942 = vmatpush1.bf16.msra.mxu0 0
  %943 = vmatprep.subr.bf16.mxu0 0
  %944 = vmatpush1.bf16.msra.mxu0 0
  %945 = vmatprep.subr.bf16.mxu0 0
  %946 = vmatpush1.bf16.msra.mxu0 0
  %947 = vmatprep.subr.bf16.mxu0 0
  %948 = vmatpush1.bf16.msra.mxu0 0
  %949 = vmatprep.subr.bf16.mxu0 0
  %950 = vmatpush1.bf16.msra.mxu0 0
  %951 = vmatprep.subr.bf16.mxu0 0
  %952 = vmatpush1.bf16.msra.mxu0 0
  %953 = vmatprep.subr.bf16.mxu0 0
  %954 = vmatpush1.bf16.msra.mxu0 0
  %955 = vmatprep.mubr.bf16.mxu0 0
  %956 = vmatmul.mubr.bf16.gmra.mrb[0].mxu0 %v405
  %v957 = vpop.f32.mrb[0].mxu0
  %v958 = vadd.f32 0.0, %v957
  %v959 = vpop.f32.mrb[0].mxu0
  %v960 = vadd.f32 0.0, %v959
  %v961 = vpop.f32.mrb[0].mxu0
  %v962 = vadd.f32 0.0, %v961
  %v963 = vpop.f32.mrb[0].mxu0
  %v964 = vadd.f32 0.0, %v963
  %965 = vdwg.mxu0
  %966 = vmatprep.subr.bf16.mxu0 %v302
  %967 = vmatpush1.bf16.msra.mxu0 %v301
  %968 = vmatprep.subr.bf16.mxu0 %v334
  %969 = vmatpush1.bf16.msra.mxu0 %v333
  %970 = vmatprep.subr.bf16.mxu0 0
  %971 = vmatpush1.bf16.msra.mxu0 0
  %972 = vmatprep.subr.bf16.mxu0 0
  %973 = vmatpush1.bf16.msra.mxu0 0
  %974 = vmatprep.subr.bf16.mxu0 0
  %975 = vmatpush1.bf16.msra.mxu0 0
  %976 = vmatprep.subr.bf16.mxu0 0
  %977 = vmatpush1.bf16.msra.mxu0 0
  %978 = vmatprep.subr.bf16.mxu0 0
  %979 = vmatpush1.bf16.msra.mxu0 0
  %980 = vmatprep.subr.bf16.mxu0 0
  %981 = vmatpush1.bf16.msra.mxu0 0
  %982 = vmatprep.subr.bf16.mxu0 0
  %983 = vmatpush1.bf16.msra.mxu0 0
  %984 = vmatprep.subr.bf16.mxu0 0
  %985 = vmatpush1.bf16.msra.mxu0 0
  %986 = vmatprep.subr.bf16.mxu0 0
  %987 = vmatpush1.bf16.msra.mxu0 0
  %988 = vmatprep.subr.bf16.mxu0 0
  %989 = vmatpush1.bf16.msra.mxu0 0
  %990 = vmatprep.subr.bf16.mxu0 0
  %991 = vmatpush1.bf16.msra.mxu0 0
  %992 = vmatprep.subr.bf16.mxu0 0
  %993 = vmatpush1.bf16.msra.mxu0 0
  %994 = vmatprep.subr.bf16.mxu0 0
  %995 = vmatpush1.bf16.msra.mxu0 0
  %996 = vmatprep.subr.bf16.mxu0 0
  %997 = vmatpush1.bf16.msra.mxu0 0
  %998 = vmatprep.mubr.bf16.mxu0 0
  %999 = vmatmul.mubr.bf16.gmra.mrb[0].mxu0 %v405
  %v1000 = vpop.f32.mrb[0].mxu0
  %v1001 = vadd.f32 0.0, %v1000
  %v1002 = vpop.f32.mrb[0].mxu0
  %v1003 = vadd.f32 0.0, %v1002
  %v1004 = vpop.f32.mrb[0].mxu0
  %v1005 = vadd.f32 0.0, %v1004
  %v1006 = vpop.f32.mrb[0].mxu0
  %v1007 = vadd.f32 0.0, %v1006
  %1008 = vdwg.mxu0
  %1009 = vmatprep.subr.bf16.mxu0 %v304
  %1010 = vmatpush1.bf16.msra.mxu0 %v303
  %1011 = vmatprep.subr.bf16.mxu0 %v336
  %1012 = vmatpush1.bf16.msra.mxu0 %v335
  %1013 = vmatprep.subr.bf16.mxu0 0
  %1014 = vmatpush1.bf16.msra.mxu0 0
  %1015 = vmatprep.subr.bf16.mxu0 0
  %1016 = vmatpush1.bf16.msra.mxu0 0
  %1017 = vmatprep.subr.bf16.mxu0 0
  %1018 = vmatpush1.bf16.msra.mxu0 0
  %1019 = vmatprep.subr.bf16.mxu0 0
  %1020 = vmatpush1.bf16.msra.mxu0 0
  %1021 = vmatprep.subr.bf16.mxu0 0
  %1022 = vmatpush1.bf16.msra.mxu0 0
  %1023 = vmatprep.subr.bf16.mxu0 0
  %1024 = vmatpush1.bf16.msra.mxu0 0
  %1025 = vmatprep.subr.bf16.mxu0 0
  %1026 = vmatpush1.bf16.msra.mxu0 0
  %1027 = vmatprep.subr.bf16.mxu0 0
  %1028 = vmatpush1.bf16.msra.mxu0 0
  %1029 = vmatprep.subr.bf16.mxu0 0
  %1030 = vmatpush1.bf16.msra.mxu0 0
  %1031 = vmatprep.subr.bf16.mxu0 0
  %1032 = vmatpush1.bf16.msra.mxu0 0
  %1033 = vmatprep.subr.bf16.mxu0 0
  %1034 = vmatpush1.bf16.msra.mxu0 0
  %1035 = vmatprep.subr.bf16.mxu0 0
  %1036 = vmatpush1.bf16.msra.mxu0 0
  %1037 = vmatprep.subr.bf16.mxu0 0
  %1038 = vmatpush1.bf16.msra.mxu0 0
  %1039 = vmatprep.subr.bf16.mxu0 0
  %1040 = vmatpush1.bf16.msra.mxu0 0
  %1041 = vmatprep.mubr.bf16.mxu0 0
  %1042 = vmatmul.mubr.bf16.gmra.mrb[0].mxu0 %v405
  %v1043 = vpop.f32.mrb[0].mxu0
  %v1044 = vadd.f32 0.0, %v1043
  %v1045 = vpop.f32.mrb[0].mxu0
  %v1046 = vadd.f32 0.0, %v1045
  %v1047 = vpop.f32.mrb[0].mxu0
  %v1048 = vadd.f32 0.0, %v1047
  %v1049 = vpop.f32.mrb[0].mxu0
  %v1050 = vadd.f32 0.0, %v1049
  %1051 = vdwg.mxu0
  %1052 = vmatprep.subr.bf16.mxu0 %v306
  %1053 = vmatpush1.bf16.msra.mxu0 %v305
  %1054 = vmatprep.subr.bf16.mxu0 %v338
  %1055 = vmatpush1.bf16.msra.mxu0 %v337
  %1056 = vmatprep.subr.bf16.mxu0 0
  %1057 = vmatpush1.bf16.msra.mxu0 0
  %1058 = vmatprep.subr.bf16.mxu0 0
  %1059 = vmatpush1.bf16.msra.mxu0 0
  %1060 = vmatprep.subr.bf16.mxu0 0
  %1061 = vmatpush1.bf16.msra.mxu0 0
  %1062 = vmatprep.subr.bf16.mxu0 0
  %1063 = vmatpush1.bf16.msra.mxu0 0
  %1064 = vmatprep.subr.bf16.mxu0 0
  %1065 = vmatpush1.bf16.msra.mxu0 0
  %1066 = vmatprep.subr.bf16.mxu0 0
  %1067 = vmatpush1.bf16.msra.mxu0 0
  %1068 = vmatprep.subr.bf16.mxu0 0
  %1069 = vmatpush1.bf16.msra.mxu0 0
  %1070 = vmatprep.subr.bf16.mxu0 0
  %1071 = vmatpush1.bf16.msra.mxu0 0
  %1072 = vmatprep.subr.bf16.mxu0 0
  %1073 = vmatpush1.bf16.msra.mxu0 0
  %1074 = vmatprep.subr.bf16.mxu0 0
  %1075 = vmatpush1.bf16.msra.mxu0 0
  %1076 = vmatprep.subr.bf16.mxu0 0
  %1077 = vmatpush1.bf16.msra.mxu0 0
  %1078 = vmatprep.subr.bf16.mxu0 0
  %1079 = vmatpush1.bf16.msra.mxu0 0
  %1080 = vmatprep.subr.bf16.mxu0 0
  %1081 = vmatpush1.bf16.msra.mxu0 0
  %1082 = vmatprep.subr.bf16.mxu0 0
  %1083 = vmatpush1.bf16.msra.mxu0 0
  %1084 = vmatprep.mubr.bf16.mxu0 0
  %1085 = vmatmul.mubr.bf16.gmra.mrb[0].mxu0 %v405
  %v1086 = vpop.f32.mrb[0].mxu0
  %v1087 = vadd.f32 0.0, %v1086
  %v1088 = vpop.f32.mrb[0].mxu0
  %v1089 = vadd.f32 0.0, %v1088
  %v1090 = vpop.f32.mrb[0].mxu0
  %v1091 = vadd.f32 0.0, %v1090
  %v1092 = vpop.f32.mrb[0].mxu0
  %v1093 = vadd.f32 0.0, %v1092
  %1094 = vdwg.mxu0
  %1095 = vst [vmem:[%s2] sm:$0xff] %v442
  %1096 = vst [vmem:[%s2 + $0x8] sm:$0xff] %v444
  %1097 = vst [vmem:[%s2 + $0x10] sm:$0xff] %v485
  %1098 = vst [vmem:[%s2 + $0x18] sm:$0xff] %v487
  %1099 = vst [vmem:[%s2 + $0x20] sm:$0xff] %v528
  %1100 = vst [vmem:[%s2 + $0x28] sm:$0xff] %v530
  %1101 = vst [vmem:[%s2 + $0x30] sm:$0xff] %v571
  %1102 = vst [vmem:[%s2 + $0x38] sm:$0xff] %v573
  %1103 = vst [vmem:[%s2 + $0x40] sm:$0xff] %v614
  %1104 = vst [vmem:[%s2 + $0x48] sm:$0xff] %v616
  %1105 = vst [vmem:[%s2 + $0x50] sm:$0xff] %v657
  %1106 = vst [vmem:[%s2 + $0x58] sm:$0xff] %v659
  %1107 = vst [vmem:[%s2 + $0x60] sm:$0xff] %v700
  %1108 = vst [vmem:[%s2 + $0x68] sm:$0xff] %v702
  %1109 = vst [vmem:[%s2 + $0x70] sm:$0xff] %v743
  %1110 = vst [vmem:[%s2 + $0x78] sm:$0xff] %v745
  %1111 = vst [vmem:[%s2 + $0x80] sm:$0xff] %v786
  %1112 = vst [vmem:[%s2 + $0x88] sm:$0xff] %v788
  %1113 = vst [vmem:[%s2 + $0x90] sm:$0xff] %v829
  %1114 = vst [vmem:[%s2 + $0x98] sm:$0xff] %v831
  %1115 = vst [vmem:[%s2 + $0xa0] sm:$0xff] %v872
  %1116 = vst [vmem:[%s2 + $0xa8] sm:$0xff] %v874
  %1117 = vst [vmem:[%s2 + $0xb0] sm:$0xff] %v915
  %1118 = vst [vmem:[%s2 + $0xb8] sm:$0xff] %v917
  %1119 = vst [vmem:[%s2 + $0xc0] sm:$0xff] %v958
  %1120 = vst [vmem:[%s2 + $0xc8] sm:$0xff] %v960
  %1121 = vst [vmem:[%s2 + $0xd0] sm:$0xff] %v1001
  %1122 = vst [vmem:[%s2 + $0xd8] sm:$0xff] %v1003
  %1123 = vst [vmem:[%s2 + $0xe0] sm:$0xff] %v1044
  %1124 = vst [vmem:[%s2 + $0xe8] sm:$0xff] %v1046
  %1125 = vst [vmem:[%s2 + $0xf0] sm:$0xff] %v1087
  %1126 = vst [vmem:[%s2 + $0xf8] sm:$0xff] %v1089
  %1127 = vst [vmem:[%s2 + $0x100] sm:$0xff] %v446
  %1128 = vst [vmem:[%s2 + $0x108] sm:$0xff] %v448
  %1129 = vst [vmem:[%s2 + $0x110] sm:$0xff] %v489
  %1130 = vst [vmem:[%s2 + $0x118] sm:$0xff] %v491
  %1131 = vst [vmem:[%s2 + $0x120] sm:$0xff] %v532
  %1132 = vst [vmem:[%s2 + $0x128] sm:$0xff] %v534
  %1133 = vst [vmem:[%s2 + $0x130] sm:$0xff] %v575
  %1134 = vst [vmem:[%s2 + $0x138] sm:$0xff] %v577
  %1135 = vst [vmem:[%s2 + $0x140] sm:$0xff] %v618
  %1136 = vst [vmem:[%s2 + $0x148] sm:$0xff] %v620
  %1137 = vst [vmem:[%s2 + $0x150] sm:$0xff] %v661
  %1138 = vst [vmem:[%s2 + $0x158] sm:$0xff] %v663
  %1139 = vst [vmem:[%s2 + $0x160] sm:$0xff] %v704
  %1140 = vst [vmem:[%s2 + $0x168] sm:$0xff] %v706
  %1141 = vst [vmem:[%s2 + $0x170] sm:$0xff] %v747
  %1142 = vst [vmem:[%s2 + $0x178] sm:$0xff] %v749
  %1143 = vst [vmem:[%s2 + $0x180] sm:$0xff] %v790
  %1144 = vst [vmem:[%s2 + $0x188] sm:$0xff] %v792
  %1145 = vst [vmem:[%s2 + $0x190] sm:$0xff] %v833
  %1146 = vst [vmem:[%s2 + $0x198] sm:$0xff] %v835
  %1147 = vst [vmem:[%s2 + $0x1a0] sm:$0xff] %v876
  %1148 = vst [vmem:[%s2 + $0x1a8] sm:$0xff] %v878
  %1149 = vst [vmem:[%s2 + $0x1b0] sm:$0xff] %v919
  %1150 = vst [vmem:[%s2 + $0x1b8] sm:$0xff] %v921
  %1151 = vst [vmem:[%s2 + $0x1c0] sm:$0xff] %v962
  %1152 = vst [vmem:[%s2 + $0x1c8] sm:$0xff] %v964
  %1153 = vst [vmem:[%s2 + $0x1d0] sm:$0xff] %v1005
  %1154 = vst [vmem:[%s2 + $0x1d8] sm:$0xff] %v1007
  %1155 = vst [vmem:[%s2 + $0x1e0] sm:$0xff] %v1048
  %1156 = vst [vmem:[%s2 + $0x1e8] sm:$0xff] %v1050
  %1157 = vst [vmem:[%s2 + $0x1f0] sm:$0xff] %v1091
  %1158 = vst [vmem:[%s2 + $0x1f8] sm:$0xff] %v1093
  // Predicated region
  $region10: #{generator_forward.9} parent=0 // pred_check
    _
  $region11: #{generator_forward.9} parent=0 // pred_check_branch
    %1160 = sbr.rel (0) target = $region13
  $region12: #{generator_forward.9} parent=0 // pred_region
    _
  $region13: #{generator_forward.9} parent=0 // pred_fallthru
    _
  // Predicated region
  $region14: #{generator_forward.9} parent=0 // pred_check
    _
  $region15: #{generator_forward.9} parent=0 // pred_check_branch
    %1162 = sbr.rel (0) target = $region17
  $region16: #{generator_forward.9} parent=0 // pred_region
    _
  $region17: #{generator_forward.9} parent=0 // pred_fallthru
    _

</llo_original>
